<compile_context>
chip_gen: v6e
topology: v6e:2x2x1
jax: 0.10.0
libtpu: 0.0.40
codegen_flags: <defaults>
</compile_context>

<pallas_src>
import functools
import math

import jax
import jax.numpy as jnp
from jax import lax
from jax.experimental import pallas as pl
from jax.experimental.pallas import tpu as pltpu


def _round_up(x, m):
    return ((x + m - 1) // m) * m


def _pad_to(a, shape):
    pads = [(0, t - s) for s, t in zip(a.shape, shape)]
    if all(p == (0, 0) for p in pads):
        return a
    return jnp.pad(a, pads)


def _pick_tq(lq: int) -> int:
    """Query-tile rows: multiple of 16 for small Lq, multiple of 256 (<=512)
    minimizing total padded rows for large Lq."""
    lq = max(int(lq), 1)
    if lq <= 512:
        return _round_up(lq, 16)
    best_tq, best_total = None, None
    for cand in (512, 256):          # prefer the larger tile on ties
        total = -(-lq // cand) * cand
        if best_total is None or total < best_total:
            best_tq, best_total = cand, total
    return best_tq


# ----- wrapper-side head-stripe layout helpers (run once per weight set) -----

def _stripe_cols(wt, in_pad, n_heads, d_head, dh_pad):
    """wt: (in_dim, n_heads*d_head) -> (in_pad, n_heads*dh_pad); head h's
    d_head columns land at the 128-aligned stripe [h*dh_pad, h*dh_pad+d_head)."""
    in_dim = wt.shape[0]
    w3 = wt.reshape(in_dim, n_heads, d_head)
    w3 = jnp.pad(w3, ((0, in_pad - in_dim), (0, 0), (0, dh_pad - d_head)))
    return w3.reshape(in_pad, n_heads * dh_pad)


def _stripe_rows(wt, out_pad, n_heads, d_head, dh_pad):
    """wt: (n_heads*d_head, out_dim) -> (n_heads*dh_pad, out_pad); head h's
    d_head rows land at the 128-aligned row stripe, zeros elsewhere."""
    out_dim = wt.shape[1]
    w3 = wt.reshape(n_heads, d_head, out_dim)
    w3 = jnp.pad(w3, ((0, 0), (0, dh_pad - d_head), (0, out_pad - out_dim)))
    return w3.reshape(n_heads * dh_pad, out_pad)


def _stripe_bias(b, n_heads, d_head, dh_pad):
    b2 = jnp.reshape(b, (n_heads, d_head))
    b2 = jnp.pad(b2, ((0, 0), (0, dh_pad - d_head)))
    return b2.reshape(1, n_heads * dh_pad)


# --------------------------------- kernel -----------------------------------

def cross_attention_kernel(x_ref, y_ref,
                           wqt_ref, bq_ref,
                           wkt_ref, bk_ref,
                           wvt_ref, bv_ref,
                           wot_ref, bo_ref,
                           o_ref,
                           k_sc, v_sc, attn_sc,
                           *, n_heads: int, dh_pad: int,
                           lkv: int, lkv_pad: int):
    qi = pl.program_id(1)

    # K / V projections: once per batch element.  The q-tile axis is innermost
    # and "arbitrary" (executed in order), so qi == 0 runs before the other
    # q-tiles of this batch element and the scratch persists across them.
    @pl.when(qi == 0)
    def _():
        y = y_ref[...]                                                  # (Lkv_p, Cp) bf16
        k = jnp.dot(y, wkt_ref[...], preferred_element_type=jnp.float32) + bk_ref[...]
        v = jnp.dot(y, wvt_ref[...], preferred_element_type=jnp.float32) + bv_ref[...]
        k_sc[...] = k.astype(k_sc.dtype)
        v_sc[...] = v.astype(v_sc.dtype)

    # Q projection for this q-tile.  1/sqrt(d_head) is pre-folded into Wq/bq;
    # q stays an SSA value (no scratch round-trip).
    x = x_ref[...]                                                      # (tq, Ein) bf16
    q = (jnp.dot(x, wqt_ref[...], preferred_element_type=jnp.float32)
         + bq_ref[...]).astype(jnp.bfloat16)                            # (tq, Es)

    # Additive key-padding bias, computed ONCE per grid step (hoisted out of
    # the head loop): padded key columns get -1e30 before the softmax.
    if lkv_pad != lkv:
        kv_idx = lax.broadcasted_iota(jnp.int32, (1, lkv_pad), 1)
        kpad_bias = jnp.where(kv_idx < lkv, 0.0, -1e30).astype(jnp.float32)
    else:
        kpad_bias = None

    # Per-head attention.  Every head occupies its own 128-lane-aligned stripe,
    # so all slices / stores below are full-vreg and unmasked.
    for h in range(n_heads):
        lo = h * dh_pad
        hi = lo + dh_pad
        qh = q[:, lo:hi]                                                # (tq,    dh_p) bf16
        kh = k_sc[:, lo:hi]                                             # (Lkv_p, dh_p) bf16
        vh = v_sc[:, lo:hi]                                             # (Lkv_p, dh_p) bf16

        # scores: contract the (zero-padded) head dim of q and k.
        s = lax.dot_general(qh, kh, (((1,), (1,)), ((), ())),
                            preferred_element_type=jnp.float32)         # (tq, Lkv_p)
        if kpad_bias is not None:
            s = s + kpad_bias

        m = jnp.max(s, axis=-1, keepdims=True)
        p = jnp.exp(s - m)                                              # unnormalized probs
        l = jnp.sum(p, axis=-1, keepdims=True)
        o_h = jnp.dot(p.astype(vh.dtype), vh,
                      preferred_element_type=jnp.float32)               # (tq, dh_p)
        # deferred softmax normalization via the EUP reciprocal (off the VALU path)
        o_h = o_h * pl.reciprocal(l, approx=True)
        attn_sc[:, lo:hi] = o_h.astype(attn_sc.dtype)                   # aligned, unmasked store

    # Single, lane-dense output projection over the striped head outputs
    # (padded stripe rows of Wo^T are zero, so they contribute nothing).
    out = jnp.dot(attn_sc[...], wot_ref[...],
                  preferred_element_type=jnp.float32) + bo_ref[...]
    o_ref[...] = out.astype(o_ref.dtype)


# -------------------------------- wrapper ------------------------------------

def cross_attention(x, y, params, n_heads):
    B, Lq, E = x.shape
    _, Lkv, C = y.shape
    assert E % n_heads == 0, "d_embed must be divisible by n_heads"
    d_head = E // n_heads
    wq, bq, wk, bk, wv, bv, wo, bo = params

    # ----- tiled / padded sizes ----------------------------------------------
    dh_p = _round_up(d_head, 128)              # per-head 128-lane stripe width
    Es = n_heads * dh_p                        # striped q/k/v feature width
    tq = _pick_tq(Lq)
    Lq_p = _round_up(Lq, tq)
    nq = Lq_p // tq
    Lkv_p = _round_up(Lkv, 128) if Lkv <= 128 else _round_up(Lkv, 256)
    Ein = _round_up(E, 128)                    # q-proj contraction width
    Cp = _round_up(C, 128)                     # k/v-proj contraction width
    Eo = _round_up(E, 128)                     # lane-dense output width
    cdt = jnp.bfloat16                         # MXU operand dtype
    out_dtype = x.dtype                        # bf16 in production -> bf16 writeback
    scale = 1.0 / math.sqrt(d_head)
    f32 = jnp.float32

    # ----- wrapper-side layout work (in production: done once at load time) --
    x_p = _pad_to(x, (B, Lq_p, Ein)).astype(cdt)
    y_p = _pad_to(y, (B, Lkv_p, Cp)).astype(cdt)

    wqt = _stripe_cols(jnp.transpose(wq).astype(f32) * scale,
                       Ein, n_heads, d_head, dh_p).astype(cdt)          # (Ein, Es)
    wkt = _stripe_cols(jnp.transpose(wk).astype(f32),
                       Cp, n_heads, d_head, dh_p).astype(cdt)           # (Cp,  Es)
    wvt = _stripe_cols(jnp.transpose(wv).astype(f32),
                       Cp, n_heads, d_head, dh_p).astype(cdt)           # (Cp,  Es)
    wot = _stripe_rows(jnp.transpose(wo).astype(f32),
                       Eo, n_heads, d_head, dh_p).astype(cdt)           # (Es,  Eo)

    bq_s = _stripe_bias(bq.astype(f32) * scale, n_heads, d_head, dh_p)  # (1, Es)
    bk_s = _stripe_bias(bk.astype(f32), n_heads, d_head, dh_p)          # (1, Es)
    bv_s = _stripe_bias(bv.astype(f32), n_heads, d_head, dh_p)          # (1, Es)
    bo_p = _pad_to(jnp.reshape(bo, (1, E)).astype(f32), (1, Eo))        # (1, Eo)

    kernel = functools.partial(cross_attention_kernel,
                               n_heads=n_heads, dh_pad=dh_p,
                               lkv=Lkv, lkv_pad=Lkv_p)
    const2d = lambda b, i: (0, 0)

    def _run(single_buffer_weights: bool):
        # Never-changing weights/biases don't need double buffering.
        wkw = ({"pipeline_mode": pl.Buffered(1)} if single_buffer_weights else {})

        # ----- explicit VMEM budget (no fudge; capped under physical VMEM) ---
        obytes = jnp.dtype(out_dtype).itemsize
        est = 0
        est += 2 * tq * Ein * 2                       # double-buffered x blocks (bf16)
        est += 2 * Lkv_p * Cp * 2                     # double-buffered y blocks (bf16)
        est += 2 * tq * Eo * obytes                   # double-buffered out blocks
        w_bytes = (Ein * Es + 2 * Cp * Es + Es * Eo) * 2 + (3 * Es + Eo) * 4
        est += w_bytes * (1 if single_buffer_weights else 2)
        est += (2 * Lkv_p + tq) * Es * 2              # k / v / attn scratch (bf16)
        try:
            phys = int(pltpu.get_tpu_info().vmem_capacity_bytes)
        except Exception:
            phys = 64 * 2 ** 20                       # v7x: smallest physical VMEM
        vmem_limit = int(min(max(est + max(est // 4, 4 * 2 ** 20), 16 * 2 ** 20),
                             phys - 12 * 2 ** 20))

        call = pl.pallas_call(
            kernel,
            out_shape=jax.ShapeDtypeStruct((B, Lq_p, Eo), out_dtype),
            grid_spec=pltpu.PrefetchScalarGridSpec(
                num_scalar_prefetch=0,
                grid=(B, nq),
                in_specs=[
                    pl.BlockSpec((pl.Squeezed(), tq, Ein),
                                 lambda b, i: (b, i, 0)),                # x
                    pl.BlockSpec((pl.Squeezed(), Lkv_p, Cp),
                                 lambda b, i: (b, 0, 0)),                # y
                    pl.BlockSpec((Ein, Es), const2d, **wkw),  # Wq^T (striped, scaled)
                    pl.BlockSpec((1, Es), const2d, **wkw),    # bq (striped, scaled)
                    pl.BlockSpec((Cp, Es), const2d, **wkw),   # Wk^T (striped)
                    pl.BlockSpec((1, Es), const2d, **wkw),    # bk
                    pl.BlockSpec((Cp, Es), const2d, **wkw),   # Wv^T (striped)
                    pl.BlockSpec((1, Es), const2d, **wkw),    # bv
                    pl.BlockSpec((Es, Eo), const2d, **wkw),   # Wo^T (striped rows)
                    pl.BlockSpec((1, Eo), const2d, **wkw),    # bo
                ],
                out_specs=pl.BlockSpec((pl.Squeezed(), tq, Eo),
                                       lambda b, i: (b, i, 0)),
                scratch_shapes=[
                    pltpu.VMEM((Lkv_p, Es), cdt),   # K (striped), per batch element
                    pltpu.VMEM((Lkv_p, Es), cdt),   # V (striped), per batch element
                    pltpu.VMEM((tq, Es), cdt),      # assembled head outputs
                ],
            ),
            compiler_params=pltpu.CompilerParams(
                # batch is megacore-parallel; the q-tile axis must stay "arbitrary"
                # so the per-batch K/V scratch written at q-tile 0 is reused in order.
                # (On v7x with B == 1, precompute K/V outside the kernel so a
                #  parallel axis can fill both TensorCores.)
                dimension_semantics=("parallel", "arbitrary"),
                vmem_limit_bytes=vmem_limit,
            ),
        )
        return call(x_p, y_p, wqt, bq_s, wkt, bk_s, wvt, bv_s, wot, bo_p)

    try:
        out = _run(True)
    except Exception:
        # Older JAX builds without BlockSpec pipeline_mode / Buffered(1) support:
        # fall back to default double-buffered weights (correct, just uses more VMEM).
        out = _run(False)

    return out[:, :Lq, :E]


def cross_attention_ref(x, y, params, n_heads):
    """Pure-JAX (f32) reference mirroring the PyTorch forward exactly."""
    wq, bq, wk, bk, wv, bv, wo, bo = params
    B, Lq, d_embed = x.shape
    d_head = d_embed // n_heads

    q = x @ wq.T + bq.reshape(1, d_embed)
    k = y @ wk.T + bk.reshape(1, d_embed)
    v = y @ wv.T + bv.reshape(1, d_embed)

    q = q.reshape(B, -1, n_heads, d_head).transpose(0, 2, 1, 3)
    k = k.reshape(B, -1, n_heads, d_head).transpose(0, 2, 1, 3)
    v = v.reshape(B, -1, n_heads, d_head).transpose(0, 2, 1, 3)

    w = (q @ jnp.swapaxes(k, -1, -2)) / math.sqrt(d_head)
    w = jax.nn.softmax(w, axis=-1)
    out = w @ v
    out = out.transpose(0, 2, 1, 3).reshape(B, Lq, d_embed)
    return out @ wo.T + bo.reshape(1, d_embed)


if __name__ == "__main__":
    # Small shapes consistent with the module's forward.
    B, Lq, Lkv = 2, 16, 8
    d_embed, d_cross, n_heads = 32, 16, 4

    key = jax.random.PRNGKey(0)
    keys = jax.random.split(key, 10)

    x = jax.random.normal(keys[0], (B, Lq, d_embed), dtype=jnp.float32)
    y = jax.random.normal(keys[1], (B, Lkv, d_cross), dtype=jnp.float32)

    def init_linear(kw, kb, out_f, in_f):
        bound = 1.0 / math.sqrt(in_f)
        w = jax.random.uniform(kw, (out_f, in_f), jnp.float32, -bound, bound)
        b = jax.random.uniform(kb, (1, out_f), jnp.float32, -bound, bound)
        return w, b

    wq, bq = init_linear(keys[2], keys[3], d_embed, d_embed)
    wk, bk = init_linear(keys[4], keys[5], d_embed, d_cross)
    wv, bv = init_linear(keys[6], keys[7], d_embed, d_cross)
    wo, bo = init_linear(keys[8], keys[9], d_embed, d_embed)
    params = (wq, bq, wk, bk, wv, bv, wo, bo)

    out = jax.block_until_ready(cross_attention(x, y, params, n_heads))
    ref = jax.block_until_ready(cross_attention_ref(x, y, params, n_heads))

    assert out.shape == (B, Lq, d_embed)
    assert out.dtype == x.dtype
    max_err = float(jnp.max(jnp.abs(out.astype(jnp.float32) - ref)))
    # Kernel uses bf16 MXU operands (f32 accumulation) vs. a pure-f32 reference.
    assert max_err < 5e-2, f"mismatch vs JAX reference: max |err| = {max_err}"

    print("KERNEL_OK")
</pallas_src>

<mosaic_0001>
module attributes {stable_mosaic.version = 11 : i64} {
  func.func @cross_attention_kernel(%arg0: i32, %arg1: i32, %arg2: memref<1x16x128xbf16, #tpu.memory_space<vmem>>, %arg3: memref<1x128x128xbf16, #tpu.memory_space<vmem>>, %arg4: memref<128x512xbf16, #tpu.memory_space<vmem>>, %arg5: memref<1x512xf32, #tpu.memory_space<vmem>>, %arg6: memref<128x512xbf16, #tpu.memory_space<vmem>>, %arg7: memref<1x512xf32, #tpu.memory_space<vmem>>, %arg8: memref<128x512xbf16, #tpu.memory_space<vmem>>, %arg9: memref<1x512xf32, #tpu.memory_space<vmem>>, %arg10: memref<512x128xbf16, #tpu.memory_space<vmem>>, %arg11: memref<1x128xf32, #tpu.memory_space<vmem>>, %arg12: memref<1x16x128xf32, #tpu.memory_space<vmem>>, %arg13: memref<128x512xbf16, #tpu.memory_space<vmem>>, %arg14: memref<128x512xbf16, #tpu.memory_space<vmem>>, %arg15: memref<16x512xbf16, #tpu.memory_space<vmem>>) attributes {dimension_semantics = [#tpu.dimension_semantics<parallel>, #tpu.dimension_semantics<arbitrary>], iteration_bounds = array<i64: 2, 1>, scalar_prefetch = 0 : i64, scratch_operands = 3 : i64, tpu.core_type = #tpu.core_type<tc>, window_params = [{transform_indices = @transform_0, window_bounds = array<i64: 1, 16, 128>}, {transform_indices = @transform_1, window_bounds = array<i64: 1, 128, 128>}, {pipeline_mode = #tpu.pipeline_mode<synchronous>, transform_indices = @transform_2, window_bounds = array<i64: 128, 512>}, {pipeline_mode = #tpu.pipeline_mode<synchronous>, transform_indices = @transform_3, window_bounds = array<i64: 1, 512>}, {pipeline_mode = #tpu.pipeline_mode<synchronous>, transform_indices = @transform_4, window_bounds = array<i64: 128, 512>}, {pipeline_mode = #tpu.pipeline_mode<synchronous>, transform_indices = @transform_5, window_bounds = array<i64: 1, 512>}, {pipeline_mode = #tpu.pipeline_mode<synchronous>, transform_indices = @transform_6, window_bounds = array<i64: 128, 512>}, {pipeline_mode = #tpu.pipeline_mode<synchronous>, transform_indices = @transform_7, window_bounds = array<i64: 1, 512>}, {pipeline_mode = #tpu.pipeline_mode<synchronous>, transform_indices = @transform_8, window_bounds = array<i64: 512, 128>}, {pipeline_mode = #tpu.pipeline_mode<synchronous>, transform_indices = @transform_9, window_bounds = array<i64: 1, 128>}, {transform_indices = @transform_10, window_bounds = array<i64: 1, 16, 128>}]} {
    %c0_i32 = arith.constant 0 : i32
    %0 = arith.cmpi eq, %arg1, %c0_i32 : i32
    %1 = arith.extui %0 : i1 to i32
    %c0_i32_0 = arith.constant 0 : i32
    %2 = arith.cmpi ne, %1, %c0_i32_0 : i32
    scf.if %2 {
      %c0_56 = arith.constant 0 : index
      %c0_57 = arith.constant 0 : index
      %c0_58 = arith.constant 0 : index
      %106 = vector.load %arg3[%c0_56, %c0_57, %c0_58] : memref<1x128x128xbf16, #tpu.memory_space<vmem>>, vector<1x128x128xbf16>
      %107 = vector.shape_cast %106 : vector<1x128x128xbf16> to vector<128x128xbf16>
      %c0_59 = arith.constant 0 : index
      %c0_60 = arith.constant 0 : index
      %108 = vector.load %arg6[%c0_59, %c0_60] : memref<128x512xbf16, #tpu.memory_space<vmem>>, vector<128x512xbf16>
      %cst_61 = arith.constant dense<0.000000e+00> : vector<128x512xf32>
      %109 = tpu.matmul %107, %108, %cst_61 {dimension_numbers = #tpu.dot_dimension_numbers<[1], [0], [0], [1], [0, 0, 1, 1], [], []>} : vector<128x128xbf16>, vector<128x512xbf16>, vector<128x512xf32> -> vector<128x512xf32>
      %c0_62 = arith.constant 0 : index
      %c0_63 = arith.constant 0 : index
      %110 = vector.load %arg7[%c0_62, %c0_63] : memref<1x512xf32, #tpu.memory_space<vmem>>, vector<1x512xf32>
      %111 = vector.broadcast %110 : vector<1x512xf32> to vector<128x512xf32>
      %112 = arith.addf %109, %111 : vector<128x512xf32>
      %c0_64 = arith.constant 0 : index
      %c0_65 = arith.constant 0 : index
      %113 = vector.load %arg8[%c0_64, %c0_65] : memref<128x512xbf16, #tpu.memory_space<vmem>>, vector<128x512xbf16>
      %cst_66 = arith.constant dense<0.000000e+00> : vector<128x512xf32>
      %114 = tpu.matmul %107, %113, %cst_66 {dimension_numbers = #tpu.dot_dimension_numbers<[1], [0], [0], [1], [0, 0, 1, 1], [], []>} : vector<128x128xbf16>, vector<128x512xbf16>, vector<128x512xf32> -> vector<128x512xf32>
      %c0_67 = arith.constant 0 : index
      %c0_68 = arith.constant 0 : index
      %115 = vector.load %arg9[%c0_67, %c0_68] : memref<1x512xf32, #tpu.memory_space<vmem>>, vector<1x512xf32>
      %116 = vector.broadcast %115 : vector<1x512xf32> to vector<128x512xf32>
      %117 = arith.addf %114, %116 : vector<128x512xf32>
      %118 = arith.truncf %112 : vector<128x512xf32> to vector<128x512xbf16>
      %c0_69 = arith.constant 0 : index
      %c0_70 = arith.constant 0 : index
      %119 = vector.load %arg13[%c0_69, %c0_70] : memref<128x512xbf16, #tpu.memory_space<vmem>>, vector<128x512xbf16>
      tpu.vector_store %arg13[%c0_69, %c0_70], %118 {strides = array<i32>} : memref<128x512xbf16, #tpu.memory_space<vmem>>, vector<128x512xbf16>,
      %120 = arith.truncf %117 : vector<128x512xf32> to vector<128x512xbf16>
      %c0_71 = arith.constant 0 : index
      %c0_72 = arith.constant 0 : index
      %121 = vector.load %arg14[%c0_71, %c0_72] : memref<128x512xbf16, #tpu.memory_space<vmem>>, vector<128x512xbf16>
      tpu.vector_store %arg14[%c0_71, %c0_72], %120 {strides = array<i32>} : memref<128x512xbf16, #tpu.memory_space<vmem>>, vector<128x512xbf16>,
    } else {
    }
    %c0 = arith.constant 0 : index
    %c0_1 = arith.constant 0 : index
    %c0_2 = arith.constant 0 : index
    %3 = vector.load %arg2[%c0, %c0_1, %c0_2] : memref<1x16x128xbf16, #tpu.memory_space<vmem>>, vector<1x16x128xbf16>
    %4 = vector.shape_cast %3 : vector<1x16x128xbf16> to vector<16x128xbf16>
    %c0_3 = arith.constant 0 : index
    %c0_4 = arith.constant 0 : index
    %5 = vector.load %arg4[%c0_3, %c0_4] : memref<128x512xbf16, #tpu.memory_space<vmem>>, vector<128x512xbf16>
    %cst = arith.constant dense<0.000000e+00> : vector<16x512xf32>
    %6 = tpu.matmul %4, %5, %cst {dimension_numbers = #tpu.dot_dimension_numbers<[1], [0], [0], [1], [0, 0, 1, 1], [], []>} : vector<16x128xbf16>, vector<128x512xbf16>, vector<16x512xf32> -> vector<16x512xf32>
    %c0_5 = arith.constant 0 : index
    %c0_6 = arith.constant 0 : index
    %7 = vector.load %arg5[%c0_5, %c0_6] : memref<1x512xf32, #tpu.memory_space<vmem>>, vector<1x512xf32>
    %8 = vector.broadcast %7 : vector<1x512xf32> to vector<16x512xf32>
    %9 = arith.addf %6, %8 : vector<16x512xf32>
    %10 = arith.truncf %9 : vector<16x512xf32> to vector<16x512xbf16>
    %11 = tpu.iota {dimensions = array<i32: 1>} : vector<1x128xi32>
    %c8_i32 = arith.constant 8 : i32
    %12 = vector.broadcast %c8_i32 : i32 to vector<1x128xi32>
    %13 = arith.cmpi slt, %11, %12 : vector<1x128xi32>
    %cst_7 = arith.constant 0.000000e+00 : f32
    %cst_8 = arith.constant -1.000000e+30 : f32
    %14 = vector.broadcast %cst_7 : f32 to vector<1x128xf32>
    %15 = vector.broadcast %cst_8 : f32 to vector<1x128xf32>
    %16 = arith.select %13, %14, %15 : vector<1x128xi1>, vector<1x128xf32>
    %17 = vector.extract_strided_slice %10 {offsets = [0, 0], sizes = [16, 128], strides = [1, 1]} : vector<16x512xbf16> to vector<16x128xbf16>
    %c0_9 = arith.constant 0 : index
    %c0_10 = arith.constant 0 : index
    %18 = vector.load %arg13[%c0_9, %c0_10] : memref<128x512xbf16, #tpu.memory_space<vmem>>, vector<128x128xbf16>
    %c0_11 = arith.constant 0 : index
    %c0_12 = arith.constant 0 : index
    %19 = vector.load %arg14[%c0_11, %c0_12] : memref<128x512xbf16, #tpu.memory_space<vmem>>, vector<128x128xbf16>
    %cst_13 = arith.constant dense<0.000000e+00> : vector<16x128xf32>
    %20 = tpu.matmul %17, %18, %cst_13 {dimension_numbers = #tpu.dot_dimension_numbers<[1], [1], [0], [0], [0, 0, 1, 0], [], []>} : vector<16x128xbf16>, vector<128x128xbf16>, vector<16x128xf32> -> vector<16x128xf32>
    %21 = vector.broadcast %16 : vector<1x128xf32> to vector<16x128xf32>
    %22 = arith.addf %20, %21 : vector<16x128xf32>
    %cst_14 = arith.constant dense<0xFF800000> : vector<16xf32>
    %23 = vector.multi_reduction <maximumf>, %22, %cst_14 [1] : vector<16x128xf32> to vector<16xf32>
    %24 = vector.shape_cast %23 : vector<16xf32> to vector<16x1xf32>
    %25 = vector.broadcast %24 : vector<16x1xf32> to vector<16x128xf32>
    %26 = arith.subf %22, %25 : vector<16x128xf32>
    %27 = math.exp %26 : vector<16x128xf32>
    %cst_15 = arith.constant dense<0.000000e+00> : vector<16xf32>
    %28 = vector.multi_reduction <add>, %27, %cst_15 [1] : vector<16x128xf32> to vector<16xf32>
    %29 = vector.shape_cast %28 : vector<16xf32> to vector<16x1xf32>
    %30 = arith.truncf %27 : vector<16x128xf32> to vector<16x128xbf16>
    %cst_16 = arith.constant dense<0.000000e+00> : vector<16x128xf32>
    %31 = tpu.matmul %30, %19, %cst_16 {dimension_numbers = #tpu.dot_dimension_numbers<[1], [0], [0], [1], [0, 0, 1, 1], [], []>} : vector<16x128xbf16>, vector<128x128xbf16>, vector<16x128xf32> -> vector<16x128xf32>
    %32 = tpu.reciprocal %29 {approx = true} : vector<16x1xf32> -> vector<16x1xf32>
    %33 = vector.broadcast %32 : vector<16x1xf32> to vector<16x128xf32>
    %34 = arith.mulf %31, %33 : vector<16x128xf32>
    %35 = arith.truncf %34 : vector<16x128xf32> to vector<16x128xbf16>
    %c0_17 = arith.constant 0 : index
    %c0_18 = arith.constant 0 : index
    %36 = vector.load %arg15[%c0_17, %c0_18] : memref<16x512xbf16, #tpu.memory_space<vmem>>, vector<16x128xbf16>
    tpu.vector_store %arg15[%c0_17, %c0_18], %35 {strides = array<i32>} : memref<16x512xbf16, #tpu.memory_space<vmem>>, vector<16x128xbf16>,
    %37 = vector.extract_strided_slice %10 {offsets = [0, 128], sizes = [16, 128], strides = [1, 1]} : vector<16x512xbf16> to vector<16x128xbf16>
    %c0_19 = arith.constant 0 : index
    %c128 = arith.constant 128 : index
    %38 = vector.load %arg13[%c0_19, %c128] : memref<128x512xbf16, #tpu.memory_space<vmem>>, vector<128x128xbf16>
    %c0_20 = arith.constant 0 : index
    %c128_21 = arith.constant 128 : index
    %39 = vector.load %arg14[%c0_20, %c128_21] : memref<128x512xbf16, #tpu.memory_space<vmem>>, vector<128x128xbf16>
    %cst_22 = arith.constant dense<0.000000e+00> : vector<16x128xf32>
    %40 = tpu.matmul %37, %38, %cst_22 {dimension_numbers = #tpu.dot_dimension_numbers<[1], [1], [0], [0], [0, 0, 1, 0], [], []>} : vector<16x128xbf16>, vector<128x128xbf16>, vector<16x128xf32> -> vector<16x128xf32>
    %41 = vector.broadcast %16 : vector<1x128xf32> to vector<16x128xf32>
    %42 = arith.addf %40, %41 : vector<16x128xf32>
    %cst_23 = arith.constant dense<0xFF800000> : vector<16xf32>
    %43 = vector.multi_reduction <maximumf>, %42, %cst_23 [1] : vector<16x128xf32> to vector<16xf32>
    %44 = vector.shape_cast %43 : vector<16xf32> to vector<16x1xf32>
    %45 = vector.broadcast %44 : vector<16x1xf32> to vector<16x128xf32>
    %46 = arith.subf %42, %45 : vector<16x128xf32>
    %47 = math.exp %46 : vector<16x128xf32>
    %cst_24 = arith.constant dense<0.000000e+00> : vector<16xf32>
    %48 = vector.multi_reduction <add>, %47, %cst_24 [1] : vector<16x128xf32> to vector<16xf32>
    %49 = vector.shape_cast %48 : vector<16xf32> to vector<16x1xf32>
    %50 = arith.truncf %47 : vector<16x128xf32> to vector<16x128xbf16>
    %cst_25 = arith.constant dense<0.000000e+00> : vector<16x128xf32>
    %51 = tpu.matmul %50, %39, %cst_25 {dimension_numbers = #tpu.dot_dimension_numbers<[1], [0], [0], [1], [0, 0, 1, 1], [], []>} : vector<16x128xbf16>, vector<128x128xbf16>, vector<16x128xf32> -> vector<16x128xf32>
    %52 = tpu.reciprocal %49 {approx = true} : vector<16x1xf32> -> vector<16x1xf32>
    %53 = vector.broadcast %52 : vector<16x1xf32> to vector<16x128xf32>
    %54 = arith.mulf %51, %53 : vector<16x128xf32>
    %55 = arith.truncf %54 : vector<16x128xf32> to vector<16x128xbf16>
    %c0_26 = arith.constant 0 : index
    %c128_27 = arith.constant 128 : index
    %56 = vector.load %arg15[%c0_26, %c128_27] : memref<16x512xbf16, #tpu.memory_space<vmem>>, vector<16x128xbf16>
    tpu.vector_store %arg15[%c0_26, %c128_27], %55 {strides = array<i32>} : memref<16x512xbf16, #tpu.memory_space<vmem>>, vector<16x128xbf16>,
    %57 = vector.extract_strided_slice %10 {offsets = [0, 256], sizes = [16, 128], strides = [1, 1]} : vector<16x512xbf16> to vector<16x128xbf16>
    %c0_28 = arith.constant 0 : index
    %c256 = arith.constant 256 : index
    %58 = vector.load %arg13[%c0_28, %c256] : memref<128x512xbf16, #tpu.memory_space<vmem>>, vector<128x128xbf16>
    %c0_29 = arith.constant 0 : index
    %c256_30 = arith.constant 256 : index
    %59 = vector.load %arg14[%c0_29, %c256_30] : memref<128x512xbf16, #tpu.memory_space<vmem>>, vector<128x128xbf16>
    %cst_31 = arith.constant dense<0.000000e+00> : vector<16x128xf32>
    %60 = tpu.matmul %57, %58, %cst_31 {dimension_numbers = #tpu.dot_dimension_numbers<[1], [1], [0], [0], [0, 0, 1, 0], [], []>} : vector<16x128xbf16>, vector<128x128xbf16>, vector<16x128xf32> -> vector<16x128xf32>
    %61 = vector.broadcast %16 : vector<1x128xf32> to vector<16x128xf32>
    %62 = arith.addf %60, %61 : vector<16x128xf32>
    %cst_32 = arith.constant dense<0xFF800000> : vector<16xf32>
    %63 = vector.multi_reduction <maximumf>, %62, %cst_32 [1] : vector<16x128xf32> to vector<16xf32>
    %64 = vector.shape_cast %63 : vector<16xf32> to vector<16x1xf32>
    %65 = vector.broadcast %64 : vector<16x1xf32> to vector<16x128xf32>
    %66 = arith.subf %62, %65 : vector<16x128xf32>
    %67 = math.exp %66 : vector<16x128xf32>
    %cst_33 = arith.constant dense<0.000000e+00> : vector<16xf32>
    %68 = vector.multi_reduction <add>, %67, %cst_33 [1] : vector<16x128xf32> to vector<16xf32>
    %69 = vector.shape_cast %68 : vector<16xf32> to vector<16x1xf32>
    %70 = arith.truncf %67 : vector<16x128xf32> to vector<16x128xbf16>
    %cst_34 = arith.constant dense<0.000000e+00> : vector<16x128xf32>
    %71 = tpu.matmul %70, %59, %cst_34 {dimension_numbers = #tpu.dot_dimension_numbers<[1], [0], [0], [1], [0, 0, 1, 1], [], []>} : vector<16x128xbf16>, vector<128x128xbf16>, vector<16x128xf32> -> vector<16x128xf32>
    %72 = tpu.reciprocal %69 {approx = true} : vector<16x1xf32> -> vector<16x1xf32>
    %73 = vector.broadcast %72 : vector<16x1xf32> to vector<16x128xf32>
    %74 = arith.mulf %71, %73 : vector<16x128xf32>
    %75 = arith.truncf %74 : vector<16x128xf32> to vector<16x128xbf16>
    %c0_35 = arith.constant 0 : index
    %c256_36 = arith.constant 256 : index
    %76 = vector.load %arg15[%c0_35, %c256_36] : memref<16x512xbf16, #tpu.memory_space<vmem>>, vector<16x128xbf16>
    tpu.vector_store %arg15[%c0_35, %c256_36], %75 {strides = array<i32>} : memref<16x512xbf16, #tpu.memory_space<vmem>>, vector<16x128xbf16>,
    %77 = vector.extract_strided_slice %10 {offsets = [0, 384], sizes = [16, 128], strides = [1, 1]} : vector<16x512xbf16> to vector<16x128xbf16>
    %c0_37 = arith.constant 0 : index
    %c384 = arith.constant 384 : index
    %78 = vector.load %arg13[%c0_37, %c384] : memref<128x512xbf16, #tpu.memory_space<vmem>>, vector<128x128xbf16>
    %c0_38 = arith.constant 0 : index
    %c384_39 = arith.constant 384 : index
    %79 = vector.load %arg14[%c0_38, %c384_39] : memref<128x512xbf16, #tpu.memory_space<vmem>>, vector<128x128xbf16>
    %cst_40 = arith.constant dense<0.000000e+00> : vector<16x128xf32>
    %80 = tpu.matmul %77, %78, %cst_40 {dimension_numbers = #tpu.dot_dimension_numbers<[1], [1], [0], [0], [0, 0, 1, 0], [], []>} : vector<16x128xbf16>, vector<128x128xbf16>, vector<16x128xf32> -> vector<16x128xf32>
    %81 = vector.broadcast %16 : vector<1x128xf32> to vector<16x128xf32>
    %82 = arith.addf %80, %81 : vector<16x128xf32>
    %cst_41 = arith.constant dense<0xFF800000> : vector<16xf32>
    %83 = vector.multi_reduction <maximumf>, %82, %cst_41 [1] : vector<16x128xf32> to vector<16xf32>
    %84 = vector.shape_cast %83 : vector<16xf32> to vector<16x1xf32>
    %85 = vector.broadcast %84 : vector<16x1xf32> to vector<16x128xf32>
    %86 = arith.subf %82, %85 : vector<16x128xf32>
    %87 = math.exp %86 : vector<16x128xf32>
    %cst_42 = arith.constant dense<0.000000e+00> : vector<16xf32>
    %88 = vector.multi_reduction <add>, %87, %cst_42 [1] : vector<16x128xf32> to vector<16xf32>
    %89 = vector.shape_cast %88 : vector<16xf32> to vector<16x1xf32>
    %90 = arith.truncf %87 : vector<16x128xf32> to vector<16x128xbf16>
    %cst_43 = arith.constant dense<0.000000e+00> : vector<16x128xf32>
    %91 = tpu.matmul %90, %79, %cst_43 {dimension_numbers = #tpu.dot_dimension_numbers<[1], [0], [0], [1], [0, 0, 1, 1], [], []>} : vector<16x128xbf16>, vector<128x128xbf16>, vector<16x128xf32> -> vector<16x128xf32>
    %92 = tpu.reciprocal %89 {approx = true} : vector<16x1xf32> -> vector<16x1xf32>
    %93 = vector.broadcast %92 : vector<16x1xf32> to vector<16x128xf32>
    %94 = arith.mulf %91, %93 : vector<16x128xf32>
    %95 = arith.truncf %94 : vector<16x128xf32> to vector<16x128xbf16>
    %c0_44 = arith.constant 0 : index
    %c384_45 = arith.constant 384 : index
    %96 = vector.load %arg15[%c0_44, %c384_45] : memref<16x512xbf16, #tpu.memory_space<vmem>>, vector<16x128xbf16>
    tpu.vector_store %arg15[%c0_44, %c384_45], %95 {strides = array<i32>} : memref<16x512xbf16, #tpu.memory_space<vmem>>, vector<16x128xbf16>,
    %c0_46 = arith.constant 0 : index
    %c0_47 = arith.constant 0 : index
    %97 = vector.load %arg15[%c0_46, %c0_47] : memref<16x512xbf16, #tpu.memory_space<vmem>>, vector<16x512xbf16>
    %c0_48 = arith.constant 0 : index
    %c0_49 = arith.constant 0 : index
    %98 = vector.load %arg10[%c0_48, %c0_49] : memref<512x128xbf16, #tpu.memory_space<vmem>>, vector<512x128xbf16>
    %cst_50 = arith.constant dense<0.000000e+00> : vector<16x128xf32>
    %99 = tpu.matmul %97, %98, %cst_50 {dimension_numbers = #tpu.dot_dimension_numbers<[1], [0], [0], [1], [0, 0, 1, 1], [], []>} : vector<16x512xbf16>, vector<512x128xbf16>, vector<16x128xf32> -> vector<16x128xf32>
    %c0_51 = arith.constant 0 : index
    %c0_52 = arith.constant 0 : index
    %100 = vector.load %arg11[%c0_51, %c0_52] : memref<1x128xf32, #tpu.memory_space<vmem>>, vector<1x128xf32>
    %101 = vector.broadcast %100 : vector<1x128xf32> to vector<16x128xf32>
    %102 = arith.addf %99, %101 : vector<16x128xf32>
    %c0_53 = arith.constant 0 : index
    %c0_54 = arith.constant 0 : index
    %c0_55 = arith.constant 0 : index
    %103 = vector.load %arg12[%c0_53, %c0_54, %c0_55] : memref<1x16x128xf32, #tpu.memory_space<vmem>>, vector<1x16x128xf32>
    %104 = vector.shape_cast %103 : vector<1x16x128xf32> to vector<16x128xf32>
    %105 = vector.shape_cast %102 : vector<16x128xf32> to vector<1x16x128xf32>
    tpu.vector_store %arg12[%c0_53, %c0_54, %c0_55], %105 {strides = array<i32>} : memref<1x16x128xf32, #tpu.memory_space<vmem>>, vector<1x16x128xf32>,
    return
  }
  func.func @transform_0(%arg0: i32, %arg1: i32) -> (i32, i32, i32) {
    %c0_i32 = arith.constant 0 : i32
    %c0_i32_0 = arith.constant 0 : i32
    return %arg0, %arg1, %c0_i32 : i32, i32, i32
  }
  func.func @transform_1(%arg0: i32, %arg1: i32) -> (i32, i32, i32) {
    %c0_i32 = arith.constant 0 : i32
    %c0_i32_0 = arith.constant 0 : i32
    %c0_i32_1 = arith.constant 0 : i32
    return %arg0, %c0_i32, %c0_i32_0 : i32, i32, i32
  }
  func.func @transform_2(%arg0: i32, %arg1: i32) -> (i32, i32) {
    %c0_i32 = arith.constant 0 : i32
    %c0_i32_0 = arith.constant 0 : i32
    %c0_i32_1 = arith.constant 0 : i32
    return %c0_i32, %c0_i32_0 : i32, i32
  }
  func.func @transform_3(%arg0: i32, %arg1: i32) -> (i32, i32) {
    %c0_i32 = arith.constant 0 : i32
    %c0_i32_0 = arith.constant 0 : i32
    %c0_i32_1 = arith.constant 0 : i32
    return %c0_i32, %c0_i32_0 : i32, i32
  }
  func.func @transform_4(%arg0: i32, %arg1: i32) -> (i32, i32) {
    %c0_i32 = arith.constant 0 : i32
    %c0_i32_0 = arith.constant 0 : i32
    %c0_i32_1 = arith.constant 0 : i32
    return %c0_i32, %c0_i32_0 : i32, i32
  }
  func.func @transform_5(%arg0: i32, %arg1: i32) -> (i32, i32) {
    %c0_i32 = arith.constant 0 : i32
    %c0_i32_0 = arith.constant 0 : i32
    %c0_i32_1 = arith.constant 0 : i32
    return %c0_i32, %c0_i32_0 : i32, i32
  }
  func.func @transform_6(%arg0: i32, %arg1: i32) -> (i32, i32) {
    %c0_i32 = arith.constant 0 : i32
    %c0_i32_0 = arith.constant 0 : i32
    %c0_i32_1 = arith.constant 0 : i32
    return %c0_i32, %c0_i32_0 : i32, i32
  }
  func.func @transform_7(%arg0: i32, %arg1: i32) -> (i32, i32) {
    %c0_i32 = arith.constant 0 : i32
    %c0_i32_0 = arith.constant 0 : i32
    %c0_i32_1 = arith.constant 0 : i32
    return %c0_i32, %c0_i32_0 : i32, i32
  }
  func.func @transform_8(%arg0: i32, %arg1: i32) -> (i32, i32) {
    %c0_i32 = arith.constant 0 : i32
    %c0_i32_0 = arith.constant 0 : i32
    %c0_i32_1 = arith.constant 0 : i32
    return %c0_i32, %c0_i32_0 : i32, i32
  }
  func.func @transform_9(%arg0: i32, %arg1: i32) -> (i32, i32) {
    %c0_i32 = arith.constant 0 : i32
    %c0_i32_0 = arith.constant 0 : i32
    %c0_i32_1 = arith.constant 0 : i32
    return %c0_i32, %c0_i32_0 : i32, i32
  }
  func.func @transform_10(%arg0: i32, %arg1: i32) -> (i32, i32, i32) {
    %c0_i32 = arith.constant 0 : i32
    %c0_i32_0 = arith.constant 0 : i32
    return %arg0, %arg1, %c0_i32 : i32, i32, i32
  }
}

module attributes {stable_mosaic.version = 11 : i64} {
  func.func @cross_attention_kernel(%arg0: i32, %arg1: i32, %arg2: memref<1x16x128xbf16, #tpu.memory_space<vmem>>, %arg3: memref<1x128x128xbf16, #tpu.memory_space<vmem>>, %arg4: memref<128x512xbf16, #tpu.memory_space<vmem>>, %arg5: memref<1x512xf32, #tpu.memory_space<vmem>>, %arg6: memref<128x512xbf16, #tpu.memory_space<vmem>>, %arg7: memref<1x512xf32, #tpu.memory_space<vmem>>, %arg8: memref<128x512xbf16, #tpu.memory_space<vmem>>, %arg9: memref<1x512xf32, #tpu.memory_space<vmem>>, %arg10: memref<512x128xbf16, #tpu.memory_space<vmem>>, %arg11: memref<1x128xf32, #tpu.memory_space<vmem>>, %arg12: memref<1x16x128xf32, #tpu.memory_space<vmem>>, %arg13: memref<128x512xbf16, #tpu.memory_space<vmem>>, %arg14: memref<128x512xbf16, #tpu.memory_space<vmem>>, %arg15: memref<16x512xbf16, #tpu.memory_space<vmem>>) attributes {dimension_semantics = [#tpu.dimension_semantics<parallel>, #tpu.dimension_semantics<arbitrary>], iteration_bounds = array<i64: 2, 1>, scalar_prefetch = 0 : i64, scratch_operands = 3 : i64, tpu.core_type = #tpu.core_type<tc>, window_params = [{transform_indices = @transform_0, window_bounds = array<i64: 1, 16, 128>}, {transform_indices = @transform_1, window_bounds = array<i64: 1, 128, 128>}, {pipeline_mode = #tpu.pipeline_mode<synchronous>, transform_indices = @transform_2, window_bounds = array<i64: 128, 512>}, {pipeline_mode = #tpu.pipeline_mode<synchronous>, transform_indices = @transform_3, window_bounds = array<i64: 1, 512>}, {pipeline_mode = #tpu.pipeline_mode<synchronous>, transform_indices = @transform_4, window_bounds = array<i64: 128, 512>}, {pipeline_mode = #tpu.pipeline_mode<synchronous>, transform_indices = @transform_5, window_bounds = array<i64: 1, 512>}, {pipeline_mode = #tpu.pipeline_mode<synchronous>, transform_indices = @transform_6, window_bounds = array<i64: 128, 512>}, {pipeline_mode = #tpu.pipeline_mode<synchronous>, transform_indices = @transform_7, window_bounds = array<i64: 1, 512>}, {pipeline_mode = #tpu.pipeline_mode<synchronous>, transform_indices = @transform_8, window_bounds = array<i64: 512, 128>}, {pipeline_mode = #tpu.pipeline_mode<synchronous>, transform_indices = @transform_9, window_bounds = array<i64: 1, 128>}, {transform_indices = @transform_10, window_bounds = array<i64: 1, 16, 128>}]} {
    %c0_i32 = arith.constant 0 : i32
    %0 = arith.cmpi eq, %arg1, %c0_i32 : i32
    %1 = arith.extui %0 : i1 to i32
    %c0_i32_0 = arith.constant 0 : i32
    %2 = arith.cmpi ne, %1, %c0_i32_0 : i32
    scf.if %2 {
      %c0_56 = arith.constant 0 : index
      %c0_57 = arith.constant 0 : index
      %c0_58 = arith.constant 0 : index
      %106 = vector.load %arg3[%c0_56, %c0_57, %c0_58] : memref<1x128x128xbf16, #tpu.memory_space<vmem>>, vector<1x128x128xbf16>
      %107 = vector.shape_cast %106 : vector<1x128x128xbf16> to vector<128x128xbf16>
      %c0_59 = arith.constant 0 : index
      %c0_60 = arith.constant 0 : index
      %108 = vector.load %arg6[%c0_59, %c0_60] : memref<128x512xbf16, #tpu.memory_space<vmem>>, vector<128x512xbf16>
      %cst_61 = arith.constant dense<0.000000e+00> : vector<128x512xf32>
      %109 = tpu.matmul %107, %108, %cst_61 {dimension_numbers = #tpu.dot_dimension_numbers<[1], [0], [0], [1], [0, 0, 1, 1], [], []>} : vector<128x128xbf16>, vector<128x512xbf16>, vector<128x512xf32> -> vector<128x512xf32>
      %c0_62 = arith.constant 0 : index
      %c0_63 = arith.constant 0 : index
      %110 = vector.load %arg7[%c0_62, %c0_63] : memref<1x512xf32, #tpu.memory_space<vmem>>, vector<1x512xf32>
      %111 = vector.broadcast %110 : vector<1x512xf32> to vector<128x512xf32>
      %112 = arith.addf %109, %111 : vector<128x512xf32>
      %c0_64 = arith.constant 0 : index
      %c0_65 = arith.constant 0 : index
      %113 = vector.load %arg8[%c0_64, %c0_65] : memref<128x512xbf16, #tpu.memory_space<vmem>>, vector<128x512xbf16>
      %cst_66 = arith.constant dense<0.000000e+00> : vector<128x512xf32>
      %114 = tpu.matmul %107, %113, %cst_66 {dimension_numbers = #tpu.dot_dimension_numbers<[1], [0], [0], [1], [0, 0, 1, 1], [], []>} : vector<128x128xbf16>, vector<128x512xbf16>, vector<128x512xf32> -> vector<128x512xf32>
      %c0_67 = arith.constant 0 : index
      %c0_68 = arith.constant 0 : index
      %115 = vector.load %arg9[%c0_67, %c0_68] : memref<1x512xf32, #tpu.memory_space<vmem>>, vector<1x512xf32>
      %116 = vector.broadcast %115 : vector<1x512xf32> to vector<128x512xf32>
      %117 = arith.addf %114, %116 : vector<128x512xf32>
      %118 = arith.truncf %112 : vector<128x512xf32> to vector<128x512xbf16>
      %c0_69 = arith.constant 0 : index
      %c0_70 = arith.constant 0 : index
      %119 = vector.load %arg13[%c0_69, %c0_70] : memref<128x512xbf16, #tpu.memory_space<vmem>>, vector<128x512xbf16>
      tpu.vector_store %arg13[%c0_69, %c0_70], %118 {strides = array<i32>} : memref<128x512xbf16, #tpu.memory_space<vmem>>, vector<128x512xbf16>,
      %120 = arith.truncf %117 : vector<128x512xf32> to vector<128x512xbf16>
      %c0_71 = arith.constant 0 : index
      %c0_72 = arith.constant 0 : index
      %121 = vector.load %arg14[%c0_71, %c0_72] : memref<128x512xbf16, #tpu.memory_space<vmem>>, vector<128x512xbf16>
      tpu.vector_store %arg14[%c0_71, %c0_72], %120 {strides = array<i32>} : memref<128x512xbf16, #tpu.memory_space<vmem>>, vector<128x512xbf16>,
    } else {
    }
    %c0 = arith.constant 0 : index
    %c0_1 = arith.constant 0 : index
    %c0_2 = arith.constant 0 : index
    %3 = vector.load %arg2[%c0, %c0_1, %c0_2] : memref<1x16x128xbf16, #tpu.memory_space<vmem>>, vector<1x16x128xbf16>
    %4 = vector.shape_cast %3 : vector<1x16x128xbf16> to vector<16x128xbf16>
    %c0_3 = arith.constant 0 : index
    %c0_4 = arith.constant 0 : index
    %5 = vector.load %arg4[%c0_3, %c0_4] : memref<128x512xbf16, #tpu.memory_space<vmem>>, vector<128x512xbf16>
    %cst = arith.constant dense<0.000000e+00> : vector<16x512xf32>
    %6 = tpu.matmul %4, %5, %cst {dimension_numbers = #tpu.dot_dimension_numbers<[1], [0], [0], [1], [0, 0, 1, 1], [], []>} : vector<16x128xbf16>, vector<128x512xbf16>, vector<16x512xf32> -> vector<16x512xf32>
    %c0_5 = arith.constant 0 : index
    %c0_6 = arith.constant 0 : index
    %7 = vector.load %arg5[%c0_5, %c0_6] : memref<1x512xf32, #tpu.memory_space<vmem>>, vector<1x512xf32>
    %8 = vector.broadcast %7 : vector<1x512xf32> to vector<16x512xf32>
    %9 = arith.addf %6, %8 : vector<16x512xf32>
    %10 = arith.truncf %9 : vector<16x512xf32> to vector<16x512xbf16>
    %11 = tpu.iota {dimensions = array<i32: 1>} : vector<1x128xi32>
    %c8_i32 = arith.constant 8 : i32
    %12 = vector.broadcast %c8_i32 : i32 to vector<1x128xi32>
    %13 = arith.cmpi slt, %11, %12 : vector<1x128xi32>
    %cst_7 = arith.constant 0.000000e+00 : f32
    %cst_8 = arith.constant -1.000000e+30 : f32
    %14 = vector.broadcast %cst_7 : f32 to vector<1x128xf32>
    %15 = vector.broadcast %cst_8 : f32 to vector<1x128xf32>
    %16 = arith.select %13, %14, %15 : vector<1x128xi1>, vector<1x128xf32>
    %17 = vector.extract_strided_slice %10 {offsets = [0, 0], sizes = [16, 128], strides = [1, 1]} : vector<16x512xbf16> to vector<16x128xbf16>
    %c0_9 = arith.constant 0 : index
    %c0_10 = arith.constant 0 : index
    %18 = vector.load %arg13[%c0_9, %c0_10] : memref<128x512xbf16, #tpu.memory_space<vmem>>, vector<128x128xbf16>
    %c0_11 = arith.constant 0 : index
    %c0_12 = arith.constant 0 : index
    %19 = vector.load %arg14[%c0_11, %c0_12] : memref<128x512xbf16, #tpu.memory_space<vmem>>, vector<128x128xbf16>
    %cst_13 = arith.constant dense<0.000000e+00> : vector<16x128xf32>
    %20 = tpu.matmul %17, %18, %cst_13 {dimension_numbers = #tpu.dot_dimension_numbers<[1], [1], [0], [0], [0, 0, 1, 0], [], []>} : vector<16x128xbf16>, vector<128x128xbf16>, vector<16x128xf32> -> vector<16x128xf32>
    %21 = vector.broadcast %16 : vector<1x128xf32> to vector<16x128xf32>
    %22 = arith.addf %20, %21 : vector<16x128xf32>
    %cst_14 = arith.constant dense<0xFF800000> : vector<16xf32>
    %23 = vector.multi_reduction <maximumf>, %22, %cst_14 [1] : vector<16x128xf32> to vector<16xf32>
    %24 = vector.shape_cast %23 : vector<16xf32> to vector<16x1xf32>
    %25 = vector.broadcast %24 : vector<16x1xf32> to vector<16x128xf32>
    %26 = arith.subf %22, %25 : vector<16x128xf32>
    %27 = math.exp %26 : vector<16x128xf32>
    %cst_15 = arith.constant dense<0.000000e+00> : vector<16xf32>
    %28 = vector.multi_reduction <add>, %27, %cst_15 [1] : vector<16x128xf32> to vector<16xf32>
    %29 = vector.shape_cast %28 : vector<16xf32> to vector<16x1xf32>
    %30 = arith.truncf %27 : vector<16x128xf32> to vector<16x128xbf16>
    %cst_16 = arith.constant dense<0.000000e+00> : vector<16x128xf32>
    %31 = tpu.matmul %30, %19, %cst_16 {dimension_numbers = #tpu.dot_dimension_numbers<[1], [0], [0], [1], [0, 0, 1, 1], [], []>} : vector<16x128xbf16>, vector<128x128xbf16>, vector<16x128xf32> -> vector<16x128xf32>
    %32 = tpu.reciprocal %29 {approx = true} : vector<16x1xf32> -> vector<16x1xf32>
    %33 = vector.broadcast %32 : vector<16x1xf32> to vector<16x128xf32>
    %34 = arith.mulf %31, %33 : vector<16x128xf32>
    %35 = arith.truncf %34 : vector<16x128xf32> to vector<16x128xbf16>
    %c0_17 = arith.constant 0 : index
    %c0_18 = arith.constant 0 : index
    %36 = vector.load %arg15[%c0_17, %c0_18] : memref<16x512xbf16, #tpu.memory_space<vmem>>, vector<16x128xbf16>
    tpu.vector_store %arg15[%c0_17, %c0_18], %35 {strides = array<i32>} : memref<16x512xbf16, #tpu.memory_space<vmem>>, vector<16x128xbf16>,
    %37 = vector.extract_strided_slice %10 {offsets = [0, 128], sizes = [16, 128], strides = [1, 1]} : vector<16x512xbf16> to vector<16x128xbf16>
    %c0_19 = arith.constant 0 : index
    %c128 = arith.constant 128 : index
    %38 = vector.load %arg13[%c0_19, %c128] : memref<128x512xbf16, #tpu.memory_space<vmem>>, vector<128x128xbf16>
    %c0_20 = arith.constant 0 : index
    %c128_21 = arith.constant 128 : index
    %39 = vector.load %arg14[%c0_20, %c128_21] : memref<128x512xbf16, #tpu.memory_space<vmem>>, vector<128x128xbf16>
    %cst_22 = arith.constant dense<0.000000e+00> : vector<16x128xf32>
    %40 = tpu.matmul %37, %38, %cst_22 {dimension_numbers = #tpu.dot_dimension_numbers<[1], [1], [0], [0], [0, 0, 1, 0], [], []>} : vector<16x128xbf16>, vector<128x128xbf16>, vector<16x128xf32> -> vector<16x128xf32>
    %41 = vector.broadcast %16 : vector<1x128xf32> to vector<16x128xf32>
    %42 = arith.addf %40, %41 : vector<16x128xf32>
    %cst_23 = arith.constant dense<0xFF800000> : vector<16xf32>
    %43 = vector.multi_reduction <maximumf>, %42, %cst_23 [1] : vector<16x128xf32> to vector<16xf32>
    %44 = vector.shape_cast %43 : vector<16xf32> to vector<16x1xf32>
    %45 = vector.broadcast %44 : vector<16x1xf32> to vector<16x128xf32>
    %46 = arith.subf %42, %45 : vector<16x128xf32>
    %47 = math.exp %46 : vector<16x128xf32>
    %cst_24 = arith.constant dense<0.000000e+00> : vector<16xf32>
    %48 = vector.multi_reduction <add>, %47, %cst_24 [1] : vector<16x128xf32> to vector<16xf32>
    %49 = vector.shape_cast %48 : vector<16xf32> to vector<16x1xf32>
    %50 = arith.truncf %47 : vector<16x128xf32> to vector<16x128xbf16>
    %cst_25 = arith.constant dense<0.000000e+00> : vector<16x128xf32>
    %51 = tpu.matmul %50, %39, %cst_25 {dimension_numbers = #tpu.dot_dimension_numbers<[1], [0], [0], [1], [0, 0, 1, 1], [], []>} : vector<16x128xbf16>, vector<128x128xbf16>, vector<16x128xf32> -> vector<16x128xf32>
    %52 = tpu.reciprocal %49 {approx = true} : vector<16x1xf32> -> vector<16x1xf32>
    %53 = vector.broadcast %52 : vector<16x1xf32> to vector<16x128xf32>
    %54 = arith.mulf %51, %53 : vector<16x128xf32>
    %55 = arith.truncf %54 : vector<16x128xf32> to vector<16x128xbf16>
    %c0_26 = arith.constant 0 : index
    %c128_27 = arith.constant 128 : index
    %56 = vector.load %arg15[%c0_26, %c128_27] : memref<16x512xbf16, #tpu.memory_space<vmem>>, vector<16x128xbf16>
    tpu.vector_store %arg15[%c0_26, %c128_27], %55 {strides = array<i32>} : memref<16x512xbf16, #tpu.memory_space<vmem>>, vector<16x128xbf16>,
    %57 = vector.extract_strided_slice %10 {offsets = [0, 256], sizes = [16, 128], strides = [1, 1]} : vector<16x512xbf16> to vector<16x128xbf16>
    %c0_28 = arith.constant 0 : index
    %c256 = arith.constant 256 : index
    %58 = vector.load %arg13[%c0_28, %c256] : memref<128x512xbf16, #tpu.memory_space<vmem>>, vector<128x128xbf16>
    %c0_29 = arith.constant 0 : index
    %c256_30 = arith.constant 256 : index
    %59 = vector.load %arg14[%c0_29, %c256_30] : memref<128x512xbf16, #tpu.memory_space<vmem>>, vector<128x128xbf16>
    %cst_31 = arith.constant dense<0.000000e+00> : vector<16x128xf32>
    %60 = tpu.matmul %57, %58, %cst_31 {dimension_numbers = #tpu.dot_dimension_numbers<[1], [1], [0], [0], [0, 0, 1, 0], [], []>} : vector<16x128xbf16>, vector<128x128xbf16>, vector<16x128xf32> -> vector<16x128xf32>
    %61 = vector.broadcast %16 : vector<1x128xf32> to vector<16x128xf32>
    %62 = arith.addf %60, %61 : vector<16x128xf32>
    %cst_32 = arith.constant dense<0xFF800000> : vector<16xf32>
    %63 = vector.multi_reduction <maximumf>, %62, %cst_32 [1] : vector<16x128xf32> to vector<16xf32>
    %64 = vector.shape_cast %63 : vector<16xf32> to vector<16x1xf32>
    %65 = vector.broadcast %64 : vector<16x1xf32> to vector<16x128xf32>
    %66 = arith.subf %62, %65 : vector<16x128xf32>
    %67 = math.exp %66 : vector<16x128xf32>
    %cst_33 = arith.constant dense<0.000000e+00> : vector<16xf32>
    %68 = vector.multi_reduction <add>, %67, %cst_33 [1] : vector<16x128xf32> to vector<16xf32>
    %69 = vector.shape_cast %68 : vector<16xf32> to vector<16x1xf32>
    %70 = arith.truncf %67 : vector<16x128xf32> to vector<16x128xbf16>
    %cst_34 = arith.constant dense<0.000000e+00> : vector<16x128xf32>
    %71 = tpu.matmul %70, %59, %cst_34 {dimension_numbers = #tpu.dot_dimension_numbers<[1], [0], [0], [1], [0, 0, 1, 1], [], []>} : vector<16x128xbf16>, vector<128x128xbf16>, vector<16x128xf32> -> vector<16x128xf32>
    %72 = tpu.reciprocal %69 {approx = true} : vector<16x1xf32> -> vector<16x1xf32>
    %73 = vector.broadcast %72 : vector<16x1xf32> to vector<16x128xf32>
    %74 = arith.mulf %71, %73 : vector<16x128xf32>
    %75 = arith.truncf %74 : vector<16x128xf32> to vector<16x128xbf16>
    %c0_35 = arith.constant 0 : index
    %c256_36 = arith.constant 256 : index
    %76 = vector.load %arg15[%c0_35, %c256_36] : memref<16x512xbf16, #tpu.memory_space<vmem>>, vector<16x128xbf16>
    tpu.vector_store %arg15[%c0_35, %c256_36], %75 {strides = array<i32>} : memref<16x512xbf16, #tpu.memory_space<vmem>>, vector<16x128xbf16>,
    %77 = vector.extract_strided_slice %10 {offsets = [0, 384], sizes = [16, 128], strides = [1, 1]} : vector<16x512xbf16> to vector<16x128xbf16>
    %c0_37 = arith.constant 0 : index
    %c384 = arith.constant 384 : index
    %78 = vector.load %arg13[%c0_37, %c384] : memref<128x512xbf16, #tpu.memory_space<vmem>>, vector<128x128xbf16>
    %c0_38 = arith.constant 0 : index
    %c384_39 = arith.constant 384 : index
    %79 = vector.load %arg14[%c0_38, %c384_39] : memref<128x512xbf16, #tpu.memory_space<vmem>>, vector<128x128xbf16>
    %cst_40 = arith.constant dense<0.000000e+00> : vector<16x128xf32>
    %80 = tpu.matmul %77, %78, %cst_40 {dimension_numbers = #tpu.dot_dimension_numbers<[1], [1], [0], [0], [0, 0, 1, 0], [], []>} : vector<16x128xbf16>, vector<128x128xbf16>, vector<16x128xf32> -> vector<16x128xf32>
    %81 = vector.broadcast %16 : vector<1x128xf32> to vector<16x128xf32>
    %82 = arith.addf %80, %81 : vector<16x128xf32>
    %cst_41 = arith.constant dense<0xFF800000> : vector<16xf32>
    %83 = vector.multi_reduction <maximumf>, %82, %cst_41 [1] : vector<16x128xf32> to vector<16xf32>
    %84 = vector.shape_cast %83 : vector<16xf32> to vector<16x1xf32>
    %85 = vector.broadcast %84 : vector<16x1xf32> to vector<16x128xf32>
    %86 = arith.subf %82, %85 : vector<16x128xf32>
    %87 = math.exp %86 : vector<16x128xf32>
    %cst_42 = arith.constant dense<0.000000e+00> : vector<16xf32>
    %88 = vector.multi_reduction <add>, %87, %cst_42 [1] : vector<16x128xf32> to vector<16xf32>
    %89 = vector.shape_cast %88 : vector<16xf32> to vector<16x1xf32>
    %90 = arith.truncf %87 : vector<16x128xf32> to vector<16x128xbf16>
    %cst_43 = arith.constant dense<0.000000e+00> : vector<16x128xf32>
    %91 = tpu.matmul %90, %79, %cst_43 {dimension_numbers = #tpu.dot_dimension_numbers<[1], [0], [0], [1], [0, 0, 1, 1], [], []>} : vector<16x128xbf16>, vector<128x128xbf16>, vector<16x128xf32> -> vector<16x128xf32>
    %92 = tpu.reciprocal %89 {approx = true} : vector<16x1xf32> -> vector<16x1xf32>
    %93 = vector.broadcast %92 : vector<16x1xf32> to vector<16x128xf32>
    %94 = arith.mulf %91, %93 : vector<16x128xf32>
    %95 = arith.truncf %94 : vector<16x128xf32> to vector<16x128xbf16>
    %c0_44 = arith.constant 0 : index
    %c384_45 = arith.constant 384 : index
    %96 = vector.load %arg15[%c0_44, %c384_45] : memref<16x512xbf16, #tpu.memory_space<vmem>>, vector<16x128xbf16>
    tpu.vector_store %arg15[%c0_44, %c384_45], %95 {strides = array<i32>} : memref<16x512xbf16, #tpu.memory_space<vmem>>, vector<16x128xbf16>,
    %c0_46 = arith.constant 0 : index
    %c0_47 = arith.constant 0 : index
    %97 = vector.load %arg15[%c0_46, %c0_47] : memref<16x512xbf16, #tpu.memory_space<vmem>>, vector<16x512xbf16>
    %c0_48 = arith.constant 0 : index
    %c0_49 = arith.constant 0 : index
    %98 = vector.load %arg10[%c0_48, %c0_49] : memref<512x128xbf16, #tpu.memory_space<vmem>>, vector<512x128xbf16>
    %cst_50 = arith.constant dense<0.000000e+00> : vector<16x128xf32>
    %99 = tpu.matmul %97, %98, %cst_50 {dimension_numbers = #tpu.dot_dimension_numbers<[1], [0], [0], [1], [0, 0, 1, 1], [], []>} : vector<16x512xbf16>, vector<512x128xbf16>, vector<16x128xf32> -> vector<16x128xf32>
    %c0_51 = arith.constant 0 : index
    %c0_52 = arith.constant 0 : index
    %100 = vector.load %arg11[%c0_51, %c0_52] : memref<1x128xf32, #tpu.memory_space<vmem>>, vector<1x128xf32>
    %101 = vector.broadcast %100 : vector<1x128xf32> to vector<16x128xf32>
    %102 = arith.addf %99, %101 : vector<16x128xf32>
    %c0_53 = arith.constant 0 : index
    %c0_54 = arith.constant 0 : index
    %c0_55 = arith.constant 0 : index
    %103 = vector.load %arg12[%c0_53, %c0_54, %c0_55] : memref<1x16x128xf32, #tpu.memory_space<vmem>>, vector<1x16x128xf32>
    %104 = vector.shape_cast %103 : vector<1x16x128xf32> to vector<16x128xf32>
    %105 = vector.shape_cast %102 : vector<16x128xf32> to vector<1x16x128xf32>
    tpu.vector_store %arg12[%c0_53, %c0_54, %c0_55], %105 {strides = array<i32>} : memref<1x16x128xf32, #tpu.memory_space<vmem>>, vector<1x16x128xf32>,
    return
  }
  func.func @transform_0(%arg0: i32, %arg1: i32) -> (i32, i32, i32) {
    %c0_i32 = arith.constant 0 : i32
    %c0_i32_0 = arith.constant 0 : i32
    return %arg0, %arg1, %c0_i32 : i32, i32, i32
  }
  func.func @transform_1(%arg0: i32, %arg1: i32) -> (i32, i32, i32) {
    %c0_i32 = arith.constant 0 : i32
    %c0_i32_0 = arith.constant 0 : i32
    %c0_i32_1 = arith.constant 0 : i32
    return %arg0, %c0_i32, %c0_i32_0 : i32, i32, i32
  }
  func.func @transform_2(%arg0: i32, %arg1: i32) -> (i32, i32) {
    %c0_i32 = arith.constant 0 : i32
    %c0_i32_0 = arith.constant 0 : i32
    %c0_i32_1 = arith.constant 0 : i32
    return %c0_i32, %c0_i32_0 : i32, i32
  }
  func.func @transform_3(%arg0: i32, %arg1: i32) -> (i32, i32) {
    %c0_i32 = arith.constant 0 : i32
    %c0_i32_0 = arith.constant 0 : i32
    %c0_i32_1 = arith.constant 0 : i32
    return %c0_i32, %c0_i32_0 : i32, i32
  }
  func.func @transform_4(%arg0: i32, %arg1: i32) -> (i32, i32) {
    %c0_i32 = arith.constant 0 : i32
    %c0_i32_0 = arith.constant 0 : i32
    %c0_i32_1 = arith.constant 0 : i32
    return %c0_i32, %c0_i32_0 : i32, i32
  }
  func.func @transform_5(%arg0: i32, %arg1: i32) -> (i32, i32) {
    %c0_i32 = arith.constant 0 : i32
    %c0_i32_0 = arith.constant 0 : i32
    %c0_i32_1 = arith.constant 0 : i32
    return %c0_i32, %c0_i32_0 : i32, i32
  }
  func.func @transform_6(%arg0: i32, %arg1: i32) -> (i32, i32) {
    %c0_i32 = arith.constant 0 : i32
    %c0_i32_0 = arith.constant 0 : i32
    %c0_i32_1 = arith.constant 0 : i32
    return %c0_i32, %c0_i32_0 : i32, i32
  }
  func.func @transform_7(%arg0: i32, %arg1: i32) -> (i32, i32) {
    %c0_i32 = arith.constant 0 : i32
    %c0_i32_0 = arith.constant 0 : i32
    %c0_i32_1 = arith.constant 0 : i32
    return %c0_i32, %c0_i32_0 : i32, i32
  }
  func.func @transform_8(%arg0: i32, %arg1: i32) -> (i32, i32) {
    %c0_i32 = arith.constant 0 : i32
    %c0_i32_0 = arith.constant 0 : i32
    %c0_i32_1 = arith.constant 0 : i32
    return %c0_i32, %c0_i32_0 : i32, i32
  }
  func.func @transform_9(%arg0: i32, %arg1: i32) -> (i32, i32) {
    %c0_i32 = arith.constant 0 : i32
    %c0_i32_0 = arith.constant 0 : i32
    %c0_i32_1 = arith.constant 0 : i32
    return %c0_i32, %c0_i32_0 : i32, i32
  }
  func.func @transform_10(%arg0: i32, %arg1: i32) -> (i32, i32, i32) {
    %c0_i32 = arith.constant 0 : i32
    %c0_i32_0 = arith.constant 0 : i32
    return %arg0, %arg1, %c0_i32 : i32, i32, i32
  }
}

</mosaic_0001>

<llo_original>
// kernel: tpu_custom_call.1
$region0: #{tpu_custom_call.1}
  #allocation0 [shape = 'u32[]', space=smem, size = 0x4, offset = 0x4, fixed_abs, tag = 'smem constant byte address 0x4 - core index']
  #allocation1 [shape = 'u32[144,128]{1,0:T(1,128)}', space=vmem, size = 0x12000, scoped, tag = 'internal scratch']
  #allocation2 [shape = 'bf16[128,512]{1,0:T(8,128)(2,1)}', space=vmem, size = 0x20000, scoped, tag = 'scratch operand']
  #allocation3 [shape = 'bf16[128,512]{1,0:T(8,128)(2,1)}', space=vmem, size = 0x20000, scoped, tag = 'scratch operand']
  #allocation4 [shape = 'bf16[16,512]{1,0:T(8,128)(2,1)}', space=vmem, size = 0x4000, scoped, tag = 'scratch operand']
  %s0 = inlined_call_operand.hbm [shape: bf16[2,16,128], index: 0, kind: input, shape index: {}]
  %s1 = inlined_call_operand.hbm [shape: bf16[2,128,128], index: 1, kind: input, shape index: {}]
  %s2 = inlined_call_operand.hbm [shape: bf16[128,512], index: 2, kind: input, shape index: {}]
  %s3 = inlined_call_operand.vmem [shape: f32[1,512], index: 3, kind: input, shape index: {}]
  %s4 = inlined_call_operand.hbm [shape: bf16[128,512], index: 4, kind: input, shape index: {}]
  %s5 = inlined_call_operand.vmem [shape: f32[1,512], index: 5, kind: input, shape index: {}]
  %s6 = inlined_call_operand.hbm [shape: bf16[128,512], index: 6, kind: input, shape index: {}]
  %s7 = inlined_call_operand.vmem [shape: f32[1,512], index: 7, kind: input, shape index: {}]
  %s8 = inlined_call_operand.hbm [shape: bf16[512,128], index: 8, kind: input, shape index: {}]
  %s9 = inlined_call_operand.vmem [shape: f32[1,128], index: 9, kind: input, shape index: {}]
  %s10 = inlined_call_operand.hbm [shape: f32[2,16,128], index: 10, kind: output, shape index: {}]
  %s11 = sld [smem:[#allocation0]]
  $region101: #{tpu_custom_call.1} parent=0
    _
  %s13 = ssub.s32 1, %s11
  %s14 = scalar_select 0, %s13, %s11
  $region1: #{tpu_custom_call.1} parent=0
    #allocation5 [shape = 'u8[8192]{0}', space=vmem, size = 0x2000, scoped, tag = 'input window, operand 0']
    #allocation6 [shape = 's32[2]{0}', space=sflag, size = 0x8, scoped, tag = 'scoped memory for tpu_custom_call.1']
    #allocation7 [shape = 's32[2]{0}', space=sflag, size = 0x8, scoped, tag = 'scoped memory for tpu_custom_call.1']
    #allocation8 [shape = 'u8[65536]{0}', space=vmem, size = 0x10000, scoped, tag = 'input window, operand 1']
    #allocation9 [shape = 's32[2]{0}', space=sflag, size = 0x8, scoped, tag = 'scoped memory for tpu_custom_call.1']
    #allocation10 [shape = 'u8[131072]{0}', space=vmem, size = 0x20000, scoped, tag = 'input window, operand 2, single buffered']
    #allocation11 [shape = 'u8[131072]{0}', space=vmem, size = 0x20000, scoped, tag = 'input window, operand 4, single buffered']
    #allocation12 [shape = 's32[1]{0}', space=sflag, size = 0x4, scoped, tag = 'scoped memory for tpu_custom_call.1']
    #allocation13 [shape = 'u8[131072]{0}', space=vmem, size = 0x20000, scoped, tag = 'input window, operand 6, single buffered']
    #allocation14 [shape = 'u8[131072]{0}', space=vmem, size = 0x20000, scoped, tag = 'input window, operand 8, single buffered']
    #allocation15 [shape = 's32[1]{0}', space=sflag, size = 0x4, scoped, tag = 'scoped memory for tpu_custom_call.1']
    #allocation16 [shape = 'u8[16384]{0}', space=vmem, size = 0x4000, scoped, tag = 'output window, operand 0']
    %15 = vsyncpa [#allocation6], 0
    %s16 = scalar_lea.sflag [#allocation6], 1
    %17 = vsyncpa %s16, 0
    %18 = vsyncpa [#allocation9], 0
    %s19 = scalar_lea.sflag [#allocation9], 1
    %20 = vsyncpa %s19, 0
    %21 = vsyncpa [#allocation12], 0
    %22 = vsyncpa [#allocation15], 0
    %23 = vsyncpa [#allocation7], 0
    %s24 = scalar_lea.sflag [#allocation7], 1
    %25 = vsyncpa %s24, 0
    loop: start=0, step=1, limit=4
    $region2: #{tpu_custom_call.1} parent=1 // loop_pre_header
      _
    $region3: #{tpu_custom_call.1} parent=1 // loop_header
      %s27 = sphi 0, %s31
      %p28 = scmp.ge.s32.totalorder %s27, 4
      %s34 = sphi 0, %s46
      %s35 = sphi 0, %s42
      %s36 = sphi 0, %s34
      %s37 = sphi 0, %s35
      %s38 = sphi 0, %s36
      %s39 = sphi 0, %s37
      %s51 = sphi 0, %s53
      %s54 = sphi 0, %s51
      %s55 = sphi 0, %s54
      %s71 = sphi 0, %s55
      %s77 = sphi 0, %s79
      %s80 = sphi 0, %s77
      %s81 = sphi 0, %s80
      %s97 = sphi 0, %s81
      %s101 = sphi 0, %s101
      %s103 = sphi 0, %s101
      %s104 = sphi 0, %s103
      %s118 = sphi 0, %s104
      %s122 = sphi 0, %s122
      %s124 = sphi 0, %s122
      %s125 = sphi 0, %s124
      %s139 = sphi 0, %s125
      %s143 = sphi 0, %s143
      %s145 = sphi 0, %s143
      %s146 = sphi 0, %s145
      %s160 = sphi 0, %s146
      %s164 = sphi 0, %s164
      %s166 = sphi 0, %s164
      %s167 = sphi 0, %s166
      %s181 = sphi 0, %s167
      %s185 = sphi 0, %s185
      %s187 = sphi 0, %s185
      %s188 = sphi 0, %s187
      %s202 = sphi 0, %s188
      %s206 = sphi 0, %s206
      %s208 = sphi 0, %s206
      %s209 = sphi 0, %s208
      %s223 = sphi 0, %s209
      %s227 = sphi 0, %s227
      %s229 = sphi 0, %s227
      %s230 = sphi 0, %s229
      %s244 = sphi 0, %s230
      %s248 = sphi 0, %s248
      %s250 = sphi 0, %s248
      %s251 = sphi 0, %s250
      %s265 = sphi 0, %s251
      %s273 = sphi 0, %s275
      %s276 = sphi 0, %s273
      %s277 = sphi 0, %s276
      %s293 = sphi 0, %s277
    $region4: #{tpu_custom_call.1} parent=1 // loop_header_branch
      %30 = sbr.rel (%p28) target = $region8
    $region5: #{tpu_custom_call.1} parent=1 // loop_body
      %s32 = ssub.s32 %s27, 1
      %s33 = ssub.s32 %s27, 2
      %s40 = sadd.s32 1, %s35
      %p41 = scmp.ge.s32.totalorder %s40, 1
      %s42 = scalar_select %p41, 0, %s40
      %s43 = sadd.s32 1, %s34
      %s44 = scalar_select %p41, %s43, %s34
      %p45 = scmp.ge.s32.totalorder %s44, 2
      %s46 = scalar_select %p45, 0, %s44
      %s47 = ssub.s32 %s34, %s46
      %s48 = ssub.s32 %s35, %s42
      %s49 = sor.u32 %s47, %s48
      %p50 = scmp.eq.s32.totalorder %s49, 0
      %s52 = sadd.s32 %s51, 1
      %s53 = scalar_select %p50, %s51, %s52
      %p56 = pneg %p50
      %p57 = scmp.eq.s32.totalorder %s27, 1
      %p58 = por %p56, %p57
      %p59 = scmp.ne.s32.totalorder %s51, %s54
      %p60 = scmp.eq.s32.totalorder %s27, 0
      %p61 = por %p59, %p60
      %p62 = scmp.ne.s32.totalorder %s51, %s54
      %p63 = scmp.eq.s32.totalorder %s32, 1
      %p64 = por %p62, %p63
      %p65 = scmp.ne.s32.totalorder %s54, %s55
      %p66 = scmp.eq.s32.totalorder %s32, 0
      %p67 = por %p65, %p66
      %p68 = scmp.ne.s32.totalorder %s54, %s55
      %p69 = scmp.eq.s32.totalorder %s33, 1
      %p70 = por %p68, %p69
      %p72 = scmp.ne.s32.totalorder %s55, %s71
      %p73 = scmp.eq.s32.totalorder %s33, 0
      %p74 = por %p72, %p73
      %s75 = ssub.s32 %s34, %s46
      %p76 = scmp.eq.s32.totalorder %s75, 0
      %s78 = sadd.s32 %s77, 1
      %s79 = scalar_select %p76, %s77, %s78
      %p82 = pneg %p76
      %p83 = scmp.eq.s32.totalorder %s27, 1
      %p84 = por %p82, %p83
      %p85 = scmp.ne.s32.totalorder %s77, %s80
      %p86 = scmp.eq.s32.totalorder %s27, 0
      %p87 = por %p85, %p86
      %p88 = scmp.ne.s32.totalorder %s77, %s80
      %p89 = scmp.eq.s32.totalorder %s32, 1
      %p90 = por %p88, %p89
      %p91 = scmp.ne.s32.totalorder %s80, %s81
      %p92 = scmp.eq.s32.totalorder %s32, 0
      %p93 = por %p91, %p92
      %p94 = scmp.ne.s32.totalorder %s80, %s81
      %p95 = scmp.eq.s32.totalorder %s33, 1
      %p96 = por %p94, %p95
      %p98 = scmp.ne.s32.totalorder %s81, %s97
      %p99 = scmp.eq.s32.totalorder %s33, 0
      %p100 = por %p98, %p99
      %s102 = sadd.s32 %s101, 1
      %p105 = scmp.eq.s32.totalorder %s27, 1
      %p106 = scmp.ne.s32.totalorder %s101, %s103
      %p107 = scmp.eq.s32.totalorder %s27, 0
      %p108 = por %p106, %p107
      %p109 = scmp.ne.s32.totalorder %s101, %s103
      %p110 = scmp.eq.s32.totalorder %s32, 1
      %p111 = por %p109, %p110
      %p112 = scmp.ne.s32.totalorder %s103, %s104
      %p113 = scmp.eq.s32.totalorder %s32, 0
      %p114 = por %p112, %p113
      %p115 = scmp.ne.s32.totalorder %s103, %s104
      %p116 = scmp.eq.s32.totalorder %s33, 1
      %p117 = por %p115, %p116
      %p119 = scmp.ne.s32.totalorder %s104, %s118
      %p120 = scmp.eq.s32.totalorder %s33, 0
      %p121 = por %p119, %p120
      %s123 = sadd.s32 %s122, 1
      %p126 = scmp.eq.s32.totalorder %s27, 1
      %p127 = scmp.ne.s32.totalorder %s122, %s124
      %p128 = scmp.eq.s32.totalorder %s27, 0
      %p129 = por %p127, %p128
      %p130 = scmp.ne.s32.totalorder %s122, %s124
      %p131 = scmp.eq.s32.totalorder %s32, 1
      %p132 = por %p130, %p131
      %p133 = scmp.ne.s32.totalorder %s124, %s125
      %p134 = scmp.eq.s32.totalorder %s32, 0
      %p135 = por %p133, %p134
      %p136 = scmp.ne.s32.totalorder %s124, %s125
      %p137 = scmp.eq.s32.totalorder %s33, 1
      %p138 = por %p136, %p137
      %p140 = scmp.ne.s32.totalorder %s125, %s139
      %p141 = scmp.eq.s32.totalorder %s33, 0
      %p142 = por %p140, %p141
      %s144 = sadd.s32 %s143, 1
      %p147 = scmp.eq.s32.totalorder %s27, 1
      %p148 = scmp.ne.s32.totalorder %s143, %s145
      %p149 = scmp.eq.s32.totalorder %s27, 0
      %p150 = por %p148, %p149
      %p151 = scmp.ne.s32.totalorder %s143, %s145
      %p152 = scmp.eq.s32.totalorder %s32, 1
      %p153 = por %p151, %p152
      %p154 = scmp.ne.s32.totalorder %s145, %s146
      %p155 = scmp.eq.s32.totalorder %s32, 0
      %p156 = por %p154, %p155
      %p157 = scmp.ne.s32.totalorder %s145, %s146
      %p158 = scmp.eq.s32.totalorder %s33, 1
      %p159 = por %p157, %p158
      %p161 = scmp.ne.s32.totalorder %s146, %s160
      %p162 = scmp.eq.s32.totalorder %s33, 0
      %p163 = por %p161, %p162
      %s165 = sadd.s32 %s164, 1
      %p168 = scmp.eq.s32.totalorder %s27, 1
      %p169 = scmp.ne.s32.totalorder %s164, %s166
      %p170 = scmp.eq.s32.totalorder %s27, 0
      %p171 = por %p169, %p170
      %p172 = scmp.ne.s32.totalorder %s164, %s166
      %p173 = scmp.eq.s32.totalorder %s32, 1
      %p174 = por %p172, %p173
      %p175 = scmp.ne.s32.totalorder %s166, %s167
      %p176 = scmp.eq.s32.totalorder %s32, 0
      %p177 = por %p175, %p176
      %p178 = scmp.ne.s32.totalorder %s166, %s167
      %p179 = scmp.eq.s32.totalorder %s33, 1
      %p180 = por %p178, %p179
      %p182 = scmp.ne.s32.totalorder %s167, %s181
      %p183 = scmp.eq.s32.totalorder %s33, 0
      %p184 = por %p182, %p183
      %s186 = sadd.s32 %s185, 1
      %p189 = scmp.eq.s32.totalorder %s27, 1
      %p190 = scmp.ne.s32.totalorder %s185, %s187
      %p191 = scmp.eq.s32.totalorder %s27, 0
      %p192 = por %p190, %p191
      %p193 = scmp.ne.s32.totalorder %s185, %s187
      %p194 = scmp.eq.s32.totalorder %s32, 1
      %p195 = por %p193, %p194
      %p196 = scmp.ne.s32.totalorder %s187, %s188
      %p197 = scmp.eq.s32.totalorder %s32, 0
      %p198 = por %p196, %p197
      %p199 = scmp.ne.s32.totalorder %s187, %s188
      %p200 = scmp.eq.s32.totalorder %s33, 1
      %p201 = por %p199, %p200
      %p203 = scmp.ne.s32.totalorder %s188, %s202
      %p204 = scmp.eq.s32.totalorder %s33, 0
      %p205 = por %p203, %p204
      %s207 = sadd.s32 %s206, 1
      %p210 = scmp.eq.s32.totalorder %s27, 1
      %p211 = scmp.ne.s32.totalorder %s206, %s208
      %p212 = scmp.eq.s32.totalorder %s27, 0
      %p213 = por %p211, %p212
      %p214 = scmp.ne.s32.totalorder %s206, %s208
      %p215 = scmp.eq.s32.totalorder %s32, 1
      %p216 = por %p214, %p215
      %p217 = scmp.ne.s32.totalorder %s208, %s209
      %p218 = scmp.eq.s32.totalorder %s32, 0
      %p219 = por %p217, %p218
      %p220 = scmp.ne.s32.totalorder %s208, %s209
      %p221 = scmp.eq.s32.totalorder %s33, 1
      %p222 = por %p220, %p221
      %p224 = scmp.ne.s32.totalorder %s209, %s223
      %p225 = scmp.eq.s32.totalorder %s33, 0
      %p226 = por %p224, %p225
      %s228 = sadd.s32 %s227, 1
      %p231 = scmp.eq.s32.totalorder %s27, 1
      %p232 = scmp.ne.s32.totalorder %s227, %s229
      %p233 = scmp.eq.s32.totalorder %s27, 0
      %p234 = por %p232, %p233
      %p235 = scmp.ne.s32.totalorder %s227, %s229
      %p236 = scmp.eq.s32.totalorder %s32, 1
      %p237 = por %p235, %p236
      %p238 = scmp.ne.s32.totalorder %s229, %s230
      %p239 = scmp.eq.s32.totalorder %s32, 0
      %p240 = por %p238, %p239
      %p241 = scmp.ne.s32.totalorder %s229, %s230
      %p242 = scmp.eq.s32.totalorder %s33, 1
      %p243 = por %p241, %p242
      %p245 = scmp.ne.s32.totalorder %s230, %s244
      %p246 = scmp.eq.s32.totalorder %s33, 0
      %p247 = por %p245, %p246
      %s249 = sadd.s32 %s248, 1
      %p252 = scmp.eq.s32.totalorder %s27, 1
      %p253 = scmp.ne.s32.totalorder %s248, %s250
      %p254 = scmp.eq.s32.totalorder %s27, 0
      %p255 = por %p253, %p254
      %p256 = scmp.ne.s32.totalorder %s248, %s250
      %p257 = scmp.eq.s32.totalorder %s32, 1
      %p258 = por %p256, %p257
      %p259 = scmp.ne.s32.totalorder %s250, %s251
      %p260 = scmp.eq.s32.totalorder %s32, 0
      %p261 = por %p259, %p260
      %p262 = scmp.ne.s32.totalorder %s250, %s251
      %p263 = scmp.eq.s32.totalorder %s33, 1
      %p264 = por %p262, %p263
      %p266 = scmp.ne.s32.totalorder %s251, %s265
      %p267 = scmp.eq.s32.totalorder %s33, 0
      %p268 = por %p266, %p267
      %s269 = ssub.s32 %s34, %s46
      %s270 = ssub.s32 %s35, %s42
      %s271 = sor.u32 %s269, %s270
      %p272 = scmp.eq.s32.totalorder %s271, 0
      %s274 = sadd.s32 %s273, 1
      %s275 = scalar_select %p272, %s273, %s274
      %p278 = pneg %p272
      %p279 = scmp.eq.s32.totalorder %s27, 1
      %p280 = por %p278, %p279
      %p281 = scmp.ne.s32.totalorder %s273, %s276
      %p282 = scmp.eq.s32.totalorder %s27, 0
      %p283 = por %p281, %p282
      %p284 = scmp.ne.s32.totalorder %s273, %s276
      %p285 = scmp.eq.s32.totalorder %s32, 1
      %p286 = por %p284, %p285
      %p287 = scmp.ne.s32.totalorder %s276, %s277
      %p288 = scmp.eq.s32.totalorder %s32, 0
      %p289 = por %p287, %p288
      %p290 = scmp.ne.s32.totalorder %s276, %s277
      %p291 = scmp.eq.s32.totalorder %s33, 1
      %p292 = por %p290, %p291
      %p294 = scmp.ne.s32.totalorder %s277, %s293
      %p295 = scmp.eq.s32.totalorder %s33, 0
      %p296 = por %p294, %p295
      %p297 = scmp.le.s32.totalorder 1, %s27
      %p298 = scmp.lt.s32.totalorder %s27, 3
      %p299 = pnand %p297, %p298
      %p300 = pneg %p299
      // Predicated region
      $region9: #{tpu_custom_call.1} parent=5 // pred_check
        _
      $region10: #{tpu_custom_call.1} parent=5 // pred_check_branch
        %302 = sbr.rel (%p299) target = $region12
      $region11: #{tpu_custom_call.1} parent=5 // pred_region
        %s303 = ssub.s32 %s27, 1
        // Predicated region
        $region13: #{tpu_custom_call.1} parent=11 // pred_check
          %p304 = pneg %p114
        $region14: #{tpu_custom_call.1} parent=11 // pred_check_branch
          %306 = sbr.rel (%p304) target = $region16
        $region15: #{tpu_custom_call.1} parent=11 // pred_region
          %s308 = ssub.s32 4096, 4096
          %309 = vsyncadd [#allocation9], %s308
          %s310 = sshll.u32 [#allocation10], 4
          %s311 = int_to_ptr.vmem [resolvable:$true] %s310
          %316 = dma.hbm_to_vmem [thread:$0]  %s2, 4096, %s311, [#allocation9], 256, 256, 16
        $region16: #{tpu_custom_call.1} parent=11 // pred_fallthru
          _
        // Predicated region
        $region17: #{tpu_custom_call.1} parent=11 // pred_check
          %p317 = pneg %p135
        $region18: #{tpu_custom_call.1} parent=11 // pred_check_branch
          %319 = sbr.rel (%p317) target = $region20
        $region19: #{tpu_custom_call.1} parent=11 // pred_region
          _
        $region20: #{tpu_custom_call.1} parent=11 // pred_fallthru
          _
        // Predicated region
        $region21: #{tpu_custom_call.1} parent=11 // pred_check
          %p320 = pneg %p156
        $region22: #{tpu_custom_call.1} parent=11 // pred_check_branch
          %322 = sbr.rel (%p320) target = $region24
        $region23: #{tpu_custom_call.1} parent=11 // pred_region
          %s324 = ssub.s32 4096, 4096
          %325 = vsyncadd [#allocation12], %s324
          %s326 = sshll.u32 [#allocation11], 4
          %s327 = int_to_ptr.vmem [resolvable:$true] %s326
          %332 = dma.hbm_to_vmem [thread:$0]  %s4, 4096, %s327, [#allocation12], 256, 256, 16
        $region24: #{tpu_custom_call.1} parent=11 // pred_fallthru
          _
        // Predicated region
        $region25: #{tpu_custom_call.1} parent=11 // pred_check
          %p333 = pneg %p177
        $region26: #{tpu_custom_call.1} parent=11 // pred_check_branch
          %335 = sbr.rel (%p333) target = $region28
        $region27: #{tpu_custom_call.1} parent=11 // pred_region
          _
        $region28: #{tpu_custom_call.1} parent=11 // pred_fallthru
          _
        // Predicated region
        $region29: #{tpu_custom_call.1} parent=11 // pred_check
          %p336 = pneg %p198
        $region30: #{tpu_custom_call.1} parent=11 // pred_check_branch
          %338 = sbr.rel (%p336) target = $region32
        $region31: #{tpu_custom_call.1} parent=11 // pred_region
          %s340 = ssub.s32 4096, 4096
          %341 = vsyncadd [#allocation12], %s340
          %s342 = sshll.u32 [#allocation13], 4
          %s343 = int_to_ptr.vmem [resolvable:$true] %s342
          %348 = dma.hbm_to_vmem [thread:$0]  %s6, 4096, %s343, [#allocation12], 256, 256, 16
        $region32: #{tpu_custom_call.1} parent=11 // pred_fallthru
          _
        // Predicated region
        $region33: #{tpu_custom_call.1} parent=11 // pred_check
          %p349 = pneg %p219
        $region34: #{tpu_custom_call.1} parent=11 // pred_check_branch
          %351 = sbr.rel (%p349) target = $region36
        $region35: #{tpu_custom_call.1} parent=11 // pred_region
          _
        $region36: #{tpu_custom_call.1} parent=11 // pred_fallthru
          _
        // Predicated region
        $region37: #{tpu_custom_call.1} parent=11 // pred_check
          %p352 = pneg %p240
        $region38: #{tpu_custom_call.1} parent=11 // pred_check_branch
          %354 = sbr.rel (%p352) target = $region40
        $region39: #{tpu_custom_call.1} parent=11 // pred_region
          %s356 = ssub.s32 4096, 4096
          %357 = vsyncadd [#allocation15], %s356
          %s358 = sshll.u32 [#allocation14], 4
          %s359 = int_to_ptr.vmem [resolvable:$true] %s358
          %364 = dma.hbm_to_vmem [thread:$0]  %s8, 4096, %s359, [#allocation15], 64, 64, 4
        $region40: #{tpu_custom_call.1} parent=11 // pred_fallthru
          _
        // Predicated region
        $region41: #{tpu_custom_call.1} parent=11 // pred_check
          %p365 = pneg %p261
        $region42: #{tpu_custom_call.1} parent=11 // pred_check_branch
          %367 = sbr.rel (%p365) target = $region44
        $region43: #{tpu_custom_call.1} parent=11 // pred_region
          _
        $region44: #{tpu_custom_call.1} parent=11 // pred_fallthru
          _
      $region12: #{tpu_custom_call.1} parent=5 // pred_fallthru
        _
      %p368 = scmp.lt.s32.totalorder %s27, 2
      // Predicated region
      $region45: #{tpu_custom_call.1} parent=5 // pred_check
        %p369 = pneg %p368
      $region46: #{tpu_custom_call.1} parent=5 // pred_check_branch
        %371 = sbr.rel (%p369) target = $region48
      $region47: #{tpu_custom_call.1} parent=5 // pred_region
        // Predicated region
        $region49: #{tpu_custom_call.1} parent=47 // pred_check
          %p372 = pneg %p61
        $region50: #{tpu_custom_call.1} parent=47 // pred_check_branch
          %374 = sbr.rel (%p372) target = $region52
        $region51: #{tpu_custom_call.1} parent=47 // pred_region
          %s375 = sand.u32 %s51, 1
          %s376 = scalar_lea.sflag [#allocation6], %s375
          %s377 = sand.u32 %s51, 1
          %s378 = smul.addr %s377, 8
          %s379 = scalar_lea.vmem [#allocation5], %s378
          %s380 = smul.u32 2, %s35
          %s382 = ssub.s32 128, 128
          %383 = vsyncadd %s376, %s382
          %s384 = smul.addr %s34, 2
          %s385 = sadd.s32 %s380, %s384
          %s386 = smul.addr %s385, 64
          %s387 = scalar_lea.hbm %s0, %s386
          %s388 = sshll.u32 %s379, 4
          %s389 = int_to_ptr.vmem [resolvable:$true] %s388
          %394 = dma.hbm_to_vmem [thread:$0]  %s387, 128, %s389, %s376, 64, 64, 4
        $region52: #{tpu_custom_call.1} parent=47 // pred_fallthru
          _
        // Predicated region
        $region53: #{tpu_custom_call.1} parent=47 // pred_check
          %p395 = pneg %p87
        $region54: #{tpu_custom_call.1} parent=47 // pred_check_branch
          %397 = sbr.rel (%p395) target = $region56
        $region55: #{tpu_custom_call.1} parent=47 // pred_region
          %s398 = sand.u32 %s27, 1
          %s399 = scalar_lea.sflag [#allocation9], %s398
          %s400 = sand.u32 %s77, 1
          %s401 = smul.addr %s400, 64
          %s402 = scalar_lea.vmem [#allocation8], %s401
          %s404 = ssub.s32 1024, 1024
          %405 = vsyncadd %s399, %s404
          %s406 = smul.addr %s34, 16
          %s407 = smul.addr %s406, 64
          %s408 = scalar_lea.hbm %s1, %s407
          %s409 = sshll.u32 %s402, 4
          %s410 = int_to_ptr.vmem [resolvable:$true] %s409
          %415 = dma.hbm_to_vmem [thread:$0]  %s408, 1024, %s410, %s399, 64, 64, 4
        $region56: #{tpu_custom_call.1} parent=47 // pred_fallthru
          _
      $region48: #{tpu_custom_call.1} parent=5 // pred_fallthru
        _
      %p416 = scmp.le.s32.totalorder 1, %s27
      %p417 = scmp.lt.s32.totalorder %s27, 3
      %p418 = pnand %p416, %p417
      %p419 = pneg %p418
      // Predicated region
      $region57: #{tpu_custom_call.1} parent=5 // pred_check
        _
      $region58: #{tpu_custom_call.1} parent=5 // pred_check_branch
        %421 = sbr.rel (%p418) target = $region60
      $region59: #{tpu_custom_call.1} parent=5 // pred_region
        %s422 = ssub.s32 %s27, 1
        %s423 = sand.u32 %s54, 1
        %s424 = scalar_lea.sflag [#allocation6], %s423
        %s425 = sand.u32 %s54, 1
        %s426 = smul.addr %s425, 8
        %s427 = scalar_lea.vmem [#allocation5], %s426
        // Predicated region
        $region61: #{tpu_custom_call.1} parent=59 // pred_check
          %p428 = pneg %p67
        $region62: #{tpu_custom_call.1} parent=59 // pred_check_branch
          %430 = sbr.rel (%p428) target = $region64
        $region63: #{tpu_custom_call.1} parent=59 // pred_region
          %431 = dma.done %s424, 128
        $region64: #{tpu_custom_call.1} parent=59 // pred_fallthru
          _
        %s432 = sand.u32 %s32, 1
        %s433 = scalar_lea.sflag [#allocation9], %s432
        %s434 = sand.u32 %s80, 1
        %s435 = smul.addr %s434, 64
        %s436 = scalar_lea.vmem [#allocation8], %s435
        // Predicated region
        $region65: #{tpu_custom_call.1} parent=59 // pred_check
          %p437 = pneg %p93
        $region66: #{tpu_custom_call.1} parent=59 // pred_check_branch
          %439 = sbr.rel (%p437) target = $region68
        $region67: #{tpu_custom_call.1} parent=59 // pred_region
          %440 = dma.done %s433, 1024
        $region68: #{tpu_custom_call.1} parent=59 // pred_fallthru
          _
        // Predicated region
        $region69: #{tpu_custom_call.1} parent=59 // pred_check
          %p441 = pneg %p114
        $region70: #{tpu_custom_call.1} parent=59 // pred_check_branch
          %443 = sbr.rel (%p441) target = $region72
        $region71: #{tpu_custom_call.1} parent=59 // pred_region
          %444 = dma.done [#allocation9], 4096
        $region72: #{tpu_custom_call.1} parent=59 // pred_fallthru
          _
        // Predicated region
        $region73: #{tpu_custom_call.1} parent=59 // pred_check
          %p445 = pneg %p156
        $region74: #{tpu_custom_call.1} parent=59 // pred_check_branch
          %447 = sbr.rel (%p445) target = $region76
        $region75: #{tpu_custom_call.1} parent=59 // pred_region
          %448 = dma.done [#allocation12], 4096
        $region76: #{tpu_custom_call.1} parent=59 // pred_fallthru
          _
        // Predicated region
        $region77: #{tpu_custom_call.1} parent=59 // pred_check
          %p449 = pneg %p198
        $region78: #{tpu_custom_call.1} parent=59 // pred_check_branch
          %451 = sbr.rel (%p449) target = $region80
        $region79: #{tpu_custom_call.1} parent=59 // pred_region
          %452 = dma.done [#allocation12], 4096
        $region80: #{tpu_custom_call.1} parent=59 // pred_fallthru
          _
        // Predicated region
        $region81: #{tpu_custom_call.1} parent=59 // pred_check
          %p453 = pneg %p240
        $region82: #{tpu_custom_call.1} parent=59 // pred_check_branch
          %455 = sbr.rel (%p453) target = $region84
        $region83: #{tpu_custom_call.1} parent=59 // pred_region
          %456 = dma.done [#allocation15], 4096
        $region84: #{tpu_custom_call.1} parent=59 // pred_fallthru
          _
        %s457 = sand.u32 %s54, 1
        %s458 = scalar_lea.sflag [#allocation6], %s457
        %s459 = sand.u32 %s54, 1
        %s460 = smul.addr %s459, 8
        %s461 = scalar_lea.vmem [#allocation5], %s460
        %p462 = pneg %p67
        %p463 = pneg %p64
        %s464 = sand.u32 %s32, 1
        %s465 = scalar_lea.sflag [#allocation9], %s464
        %s466 = sand.u32 %s80, 1
        %s467 = smul.addr %s466, 64
        %s468 = scalar_lea.vmem [#allocation8], %s467
        %p469 = pneg %p93
        %p470 = pneg %p90
        %p471 = pneg %p114
        %p472 = pneg %p111
        %p473 = pneg %p135
        %p474 = pneg %p132
        %p475 = pneg %p156
        %p476 = pneg %p153
        %p477 = pneg %p177
        %p478 = pneg %p174
        %p479 = pneg %p198
        %p480 = pneg %p195
        %p481 = pneg %p219
        %p482 = pneg %p216
        %p483 = pneg %p240
        %p484 = pneg %p237
        %p485 = pneg %p261
        %p486 = pneg %p258
        %p487 = pneg %p289
        %p488 = pneg %p286
        %s489 = sand.u32 %s276, 1
        %s490 = scalar_lea.sflag [#allocation7], %s489
        %s491 = sand.u32 %s276, 1
        %s492 = smul.addr %s491, 16
        %s493 = scalar_lea.vmem [#allocation16], %s492
        %s494 = smul.u32 2, %s37
        %s495 = smul.u32 2, %s37
        %p497 = scmp.eq.s32.totalorder %s37, 0
        // Predicated region
        $region85: #{tpu_custom_call.1} parent=59 // pred_check
          %p498 = pneg %p497
        $region86: #{tpu_custom_call.1} parent=59 // pred_check_branch
          %500 = sbr.rel (%p498) target = $region88
        $region87: #{tpu_custom_call.1} parent=59 // pred_region
          %v501 = vld [vmem:[%s436] sm:$0xf]
          %v502 = vld [vmem:[%s436 + $0x4] sm:$0xf]
          %v503 = vld [vmem:[%s436 + $0x8] sm:$0xf]
          %v504 = vld [vmem:[%s436 + $0xc] sm:$0xf]
          %v505 = vld [vmem:[%s436 + $0x10] sm:$0xf]
          %v506 = vld [vmem:[%s436 + $0x14] sm:$0xf]
          %v507 = vld [vmem:[%s436 + $0x18] sm:$0xf]
          %v508 = vld [vmem:[%s436 + $0x1c] sm:$0xf]
          %v509 = vld [vmem:[%s436 + $0x20] sm:$0xf]
          %v510 = vld [vmem:[%s436 + $0x24] sm:$0xf]
          %v511 = vld [vmem:[%s436 + $0x28] sm:$0xf]
          %v512 = vld [vmem:[%s436 + $0x2c] sm:$0xf]
          %v513 = vld [vmem:[%s436 + $0x30] sm:$0xf]
          %v514 = vld [vmem:[%s436 + $0x34] sm:$0xf]
          %v515 = vld [vmem:[%s436 + $0x38] sm:$0xf]
          %v516 = vld [vmem:[%s436 + $0x3c] sm:$0xf]
          %v517 = vld [vmem:[#allocation11] sm:$0xff]
          %v518 = vld [vmem:[#allocation11 + $0x8] sm:$0xff]
          %v519 = vld [vmem:[#allocation11 + $0x10] sm:$0xff]
          %v520 = vld [vmem:[#allocation11 + $0x18] sm:$0xff]
          %v521 = vld [vmem:[#allocation11 + $0x20] sm:$0xff]
          %v522 = vld [vmem:[#allocation11 + $0x28] sm:$0xff]
          %v523 = vld [vmem:[#allocation11 + $0x30] sm:$0xff]
          %v524 = vld [vmem:[#allocation11 + $0x38] sm:$0xff]
          %v525 = vld [vmem:[#allocation11 + $0x40] sm:$0xff]
          %v526 = vld [vmem:[#allocation11 + $0x48] sm:$0xff]
          %v527 = vld [vmem:[#allocation11 + $0x50] sm:$0xff]
          %v528 = vld [vmem:[#allocation11 + $0x58] sm:$0xff]
          %v529 = vld [vmem:[#allocation11 + $0x60] sm:$0xff]
          %v530 = vld [vmem:[#allocation11 + $0x68] sm:$0xff]
          %v531 = vld [vmem:[#allocation11 + $0x70] sm:$0xff]
          %v532 = vld [vmem:[#allocation11 + $0x78] sm:$0xff]
          %v533 = vld [vmem:[#allocation11 + $0x80] sm:$0xff]
          %v534 = vld [vmem:[#allocation11 + $0x88] sm:$0xff]
          %v535 = vld [vmem:[#allocation11 + $0x90] sm:$0xff]
          %v536 = vld [vmem:[#allocation11 + $0x98] sm:$0xff]
          %v537 = vld [vmem:[#allocation11 + $0xa0] sm:$0xff]
          %v538 = vld [vmem:[#allocation11 + $0xa8] sm:$0xff]
          %v539 = vld [vmem:[#allocation11 + $0xb0] sm:$0xff]
          %v540 = vld [vmem:[#allocation11 + $0xb8] sm:$0xff]
          %v541 = vld [vmem:[#allocation11 + $0xc0] sm:$0xff]
          %v542 = vld [vmem:[#allocation11 + $0xc8] sm:$0xff]
          %v543 = vld [vmem:[#allocation11 + $0xd0] sm:$0xff]
          %v544 = vld [vmem:[#allocation11 + $0xd8] sm:$0xff]
          %v545 = vld [vmem:[#allocation11 + $0xe0] sm:$0xff]
          %v546 = vld [vmem:[#allocation11 + $0xe8] sm:$0xff]
          %v547 = vld [vmem:[#allocation11 + $0xf0] sm:$0xff]
          %v548 = vld [vmem:[#allocation11 + $0xf8] sm:$0xff]
          %v549 = vld [vmem:[%s5] sm:$0xf]
          %v551 = vlaneseq
          %v552 = vshrl.u32 %v551, 7
          %v553 = vsub.s32 0, %v552
          %v554 = vrot.slane %v549, %v553
          %v555 = vlaneseq
          %v556 = vshrl.u32 %v555, 7
          %v557 = vsub.s32 1, %v556
          %v558 = vrot.slane %v549, %v557
          %v559 = vlaneseq
          %v560 = vshrl.u32 %v559, 7
          %v561 = vsub.s32 2, %v560
          %v562 = vrot.slane %v549, %v561
          %v563 = vlaneseq
          %v564 = vshrl.u32 %v563, 7
          %v565 = vsub.s32 3, %v564
          %v566 = vrot.slane %v549, %v565
          %v587 = vunpack.c.l.b16 %v501
          %v588 = vunpack.c.l.b16 %v502
          %v589 = vunpack.c.l.b16 %v503
          %v590 = vunpack.c.l.b16 %v504
          %v591 = vunpack.c.l.b16 %v505
          %v592 = vunpack.c.l.b16 %v506
          %v593 = vunpack.c.l.b16 %v507
          %v594 = vunpack.c.l.b16 %v508
          %v595 = vunpack.c.l.b16 %v509
          %v596 = vunpack.c.l.b16 %v510
          %v597 = vunpack.c.l.b16 %v511
          %v598 = vunpack.c.l.b16 %v512
          %v599 = vunpack.c.l.b16 %v513
          %v600 = vunpack.c.l.b16 %v514
          %v601 = vunpack.c.l.b16 %v515
          %v602 = vunpack.c.l.b16 %v516
          %v603 = vpack.c.b16 %v588, %v587
          %v604 = vpack.c.b16 %v590, %v589
          %v605 = vpack.c.b16 %v592, %v591
          %v606 = vpack.c.b16 %v594, %v593
          %v607 = vpack.c.b16 %v596, %v595
          %v608 = vpack.c.b16 %v598, %v597
          %v609 = vpack.c.b16 %v600, %v599
          %v610 = vpack.c.b16 %v602, %v601
          %v651 = vunpack.c.l.b16 %v517
          %v652 = vunpack.c.h.b16 %v517
          %v653 = vunpack.c.l.b16 %v518
          %v654 = vunpack.c.h.b16 %v518
          %v655 = vunpack.c.l.b16 %v519
          %v656 = vunpack.c.h.b16 %v519
          %v657 = vunpack.c.l.b16 %v520
          %v658 = vunpack.c.h.b16 %v520
          %v659 = vunpack.c.l.b16 %v521
          %v660 = vunpack.c.h.b16 %v521
          %v661 = vunpack.c.l.b16 %v522
          %v662 = vunpack.c.h.b16 %v522
          %v663 = vunpack.c.l.b16 %v523
          %v664 = vunpack.c.h.b16 %v523
          %v665 = vunpack.c.l.b16 %v524
          %v666 = vunpack.c.h.b16 %v524
          %v667 = vunpack.c.l.b16 %v525
          %v668 = vunpack.c.h.b16 %v525
          %v669 = vunpack.c.l.b16 %v526
          %v670 = vunpack.c.h.b16 %v526
          %v671 = vunpack.c.l.b16 %v527
          %v672 = vunpack.c.h.b16 %v527
          %v673 = vunpack.c.l.b16 %v528
          %v674 = vunpack.c.h.b16 %v528
          %v675 = vunpack.c.l.b16 %v529
          %v676 = vunpack.c.h.b16 %v529
          %v677 = vunpack.c.l.b16 %v530
          %v678 = vunpack.c.h.b16 %v530
          %v679 = vunpack.c.l.b16 %v531
          %v680 = vunpack.c.h.b16 %v531
          %v681 = vunpack.c.l.b16 %v532
          %v682 = vunpack.c.h.b16 %v532
          %v683 = vunpack.c.l.b16 %v533
          %v684 = vunpack.c.h.b16 %v533
          %v685 = vunpack.c.l.b16 %v534
          %v686 = vunpack.c.h.b16 %v534
          %v687 = vunpack.c.l.b16 %v535
          %v688 = vunpack.c.h.b16 %v535
          %v689 = vunpack.c.l.b16 %v536
          %v690 = vunpack.c.h.b16 %v536
          %v691 = vunpack.c.l.b16 %v537
          %v692 = vunpack.c.h.b16 %v537
          %v693 = vunpack.c.l.b16 %v538
          %v694 = vunpack.c.h.b16 %v538
          %v695 = vunpack.c.l.b16 %v539
          %v696 = vunpack.c.h.b16 %v539
          %v697 = vunpack.c.l.b16 %v540
          %v698 = vunpack.c.h.b16 %v540
          %v699 = vunpack.c.l.b16 %v541
          %v700 = vunpack.c.h.b16 %v541
          %v701 = vunpack.c.l.b16 %v542
          %v702 = vunpack.c.h.b16 %v542
          %v703 = vunpack.c.l.b16 %v543
          %v704 = vunpack.c.h.b16 %v543
          %v705 = vunpack.c.l.b16 %v544
          %v706 = vunpack.c.h.b16 %v544
          %v707 = vunpack.c.l.b16 %v545
          %v708 = vunpack.c.h.b16 %v545
          %v709 = vunpack.c.l.b16 %v546
          %v710 = vunpack.c.h.b16 %v546
          %v711 = vunpack.c.l.b16 %v547
          %v712 = vunpack.c.h.b16 %v547
          %v713 = vunpack.c.l.b16 %v548
          %v714 = vunpack.c.h.b16 %v548
          %v715 = vpack.c.b16 %v655, %v651
          %v716 = vpack.c.b16 %v656, %v652
          %v717 = vpack.c.b16 %v657, %v653
          %v718 = vpack.c.b16 %v658, %v654
          %v719 = vpack.c.b16 %v663, %v659
          %v720 = vpack.c.b16 %v664, %v660
          %v721 = vpack.c.b16 %v665, %v661
          %v722 = vpack.c.b16 %v666, %v662
          %v723 = vpack.c.b16 %v671, %v667
          %v724 = vpack.c.b16 %v672, %v668
          %v725 = vpack.c.b16 %v673, %v669
          %v726 = vpack.c.b16 %v674, %v670
          %v727 = vpack.c.b16 %v679, %v675
          %v728 = vpack.c.b16 %v680, %v676
          %v729 = vpack.c.b16 %v681, %v677
          %v730 = vpack.c.b16 %v682, %v678
          %v731 = vpack.c.b16 %v687, %v683
          %v732 = vpack.c.b16 %v688, %v684
          %v733 = vpack.c.b16 %v689, %v685
          %v734 = vpack.c.b16 %v690, %v686
          %v735 = vpack.c.b16 %v695, %v691
          %v736 = vpack.c.b16 %v696, %v692
          %v737 = vpack.c.b16 %v697, %v693
          %v738 = vpack.c.b16 %v698, %v694
          %v739 = vpack.c.b16 %v703, %v699
          %v740 = vpack.c.b16 %v704, %v700
          %v741 = vpack.c.b16 %v705, %v701
          %v742 = vpack.c.b16 %v706, %v702
          %v743 = vpack.c.b16 %v711, %v707
          %v744 = vpack.c.b16 %v712, %v708
          %v745 = vpack.c.b16 %v713, %v709
          %v746 = vpack.c.b16 %v714, %v710
          %779 = vmatprep.subr.bf16.mxu0 %v744
          %780 = vmatpush1.bf16.msra.mxu0 %v743
          %781 = vmatprep.subr.bf16.mxu0 %v740
          %782 = vmatpush1.bf16.msra.mxu0 %v739
          %783 = vmatprep.subr.bf16.mxu0 %v736
          %784 = vmatpush1.bf16.msra.mxu0 %v735
          %785 = vmatprep.subr.bf16.mxu0 %v732
          %786 = vmatpush1.bf16.msra.mxu0 %v731
          %787 = vmatprep.subr.bf16.mxu0 %v728
          %788 = vmatpush1.bf16.msra.mxu0 %v727
          %789 = vmatprep.subr.bf16.mxu0 %v724
          %790 = vmatpush1.bf16.msra.mxu0 %v723
          %791 = vmatprep.subr.bf16.mxu0 %v720
          %792 = vmatpush1.bf16.msra.mxu0 %v719
          %793 = vmatprep.subr.bf16.mxu0 %v716
          %794 = vmatpush1.bf16.msra.mxu0 %v715
          %795 = vmatprep.subr.bf16.mxu0 0
          %796 = vmatpush2.bf16.msra.mxu0 0
          %797 = vmatprep.subr.bf16.mxu0 0
          %798 = vmatpush2.bf16.msra.mxu0 0
          %799 = vmatprep.subr.bf16.mxu0 0
          %800 = vmatpush2.bf16.msra.mxu0 0
          %801 = vmatprep.subr.bf16.mxu0 0
          %802 = vmatpush2.bf16.msra.mxu0 0
          %803 = vmatprep.subr.bf16.mxu0 0
          %804 = vmatpush2.bf16.msra.mxu0 0
          %805 = vmatprep.subr.bf16.mxu0 0
          %806 = vmatpush2.bf16.msra.mxu0 0
          %807 = vmatprep.subr.bf16.mxu0 0
          %808 = vmatpush2.bf16.msra.mxu0 0
          %809 = vmatprep.subr.bf16.mxu0 0
          %810 = vmatpush2.bf16.msra.mxu0 0
          %811 = vmatprep.mubr.bf16.mxu0 0
          %812 = vmatmul.mubr.bf16.gmra.mxu0 %v603
          %v813 = vpop.f32.mrf.mxu0
          %v814 = vadd.f32 %v554, %v813
          %v815 = vpop.f32.mrf.mxu0
          %v816 = vadd.f32 %v558, %v815
          %v817 = vpop.f32.mrf.mxu0
          %v818 = vadd.f32 %v554, %v817
          %v819 = vpop.f32.mrf.mxu0
          %v820 = vadd.f32 %v558, %v819
          %821 = vmatprep.mubr.bf16.mxu0 0
          %822 = vmatmul.mubr.bf16.gmra.mxu0 %v604
          %v823 = vpop.f32.mrf.mxu0
          %v824 = vadd.f32 %v554, %v823
          %v825 = vpop.f32.mrf.mxu0
          %v826 = vadd.f32 %v558, %v825
          %v827 = vpop.f32.mrf.mxu0
          %v828 = vadd.f32 %v554, %v827
          %v829 = vpop.f32.mrf.mxu0
          %v830 = vadd.f32 %v558, %v829
          %831 = vmatprep.mubr.bf16.mxu0 0
          %832 = vmatmul.mubr.bf16.gmra.mxu0 %v605
          %v833 = vpop.f32.mrf.mxu0
          %v834 = vadd.f32 %v554, %v833
          %v835 = vpop.f32.mrf.mxu0
          %v836 = vadd.f32 %v558, %v835
          %v837 = vpop.f32.mrf.mxu0
          %v838 = vadd.f32 %v554, %v837
          %v839 = vpop.f32.mrf.mxu0
          %v840 = vadd.f32 %v558, %v839
          %841 = vmatprep.mubr.bf16.mxu0 0
          %842 = vmatmul.mubr.bf16.gmra.mxu0 %v606
          %v843 = vpop.f32.mrf.mxu0
          %v844 = vadd.f32 %v554, %v843
          %v845 = vpop.f32.mrf.mxu0
          %v846 = vadd.f32 %v558, %v845
          %v847 = vpop.f32.mrf.mxu0
          %v848 = vadd.f32 %v554, %v847
          %v849 = vpop.f32.mrf.mxu0
          %v850 = vadd.f32 %v558, %v849
          %851 = vmatprep.mubr.bf16.mxu0 0
          %852 = vmatmul.mubr.bf16.gmra.mxu0 %v607
          %v853 = vpop.f32.mrf.mxu0
          %v854 = vadd.f32 %v554, %v853
          %v855 = vpop.f32.mrf.mxu0
          %v856 = vadd.f32 %v558, %v855
          %v857 = vpop.f32.mrf.mxu0
          %v858 = vadd.f32 %v554, %v857
          %v859 = vpop.f32.mrf.mxu0
          %v860 = vadd.f32 %v558, %v859
          %861 = vmatprep.mubr.bf16.mxu0 0
          %862 = vmatmul.mubr.bf16.gmra.mxu0 %v608
          %v863 = vpop.f32.mrf.mxu0
          %v864 = vadd.f32 %v554, %v863
          %v865 = vpop.f32.mrf.mxu0
          %v866 = vadd.f32 %v558, %v865
          %v867 = vpop.f32.mrf.mxu0
          %v868 = vadd.f32 %v554, %v867
          %v869 = vpop.f32.mrf.mxu0
          %v870 = vadd.f32 %v558, %v869
          %871 = vmatprep.mubr.bf16.mxu0 0
          %872 = vmatmul.mubr.bf16.gmra.mxu0 %v609
          %v873 = vpop.f32.mrf.mxu0
          %v874 = vadd.f32 %v554, %v873
          %v875 = vpop.f32.mrf.mxu0
          %v876 = vadd.f32 %v558, %v875
          %v877 = vpop.f32.mrf.mxu0
          %v878 = vadd.f32 %v554, %v877
          %v879 = vpop.f32.mrf.mxu0
          %v880 = vadd.f32 %v558, %v879
          %881 = vmatprep.mubr.bf16.mxu0 0
          %882 = vmatmul.mubr.bf16.gmra.mxu0 %v610
          %v883 = vpop.f32.mrf.mxu0
          %v884 = vadd.f32 %v554, %v883
          %v885 = vpop.f32.mrf.mxu0
          %v886 = vadd.f32 %v558, %v885
          %v887 = vpop.f32.mrf.mxu0
          %v888 = vadd.f32 %v554, %v887
          %v889 = vpop.f32.mrf.mxu0
          %v890 = vadd.f32 %v558, %v889
          %891 = vdwg.mxu0
          %892 = vmatprep.subr.bf16.mxu0 %v746
          %893 = vmatpush1.bf16.msra.mxu0 %v745
          %894 = vmatprep.subr.bf16.mxu0 %v742
          %895 = vmatpush1.bf16.msra.mxu0 %v741
          %896 = vmatprep.subr.bf16.mxu0 %v738
          %897 = vmatpush1.bf16.msra.mxu0 %v737
          %898 = vmatprep.subr.bf16.mxu0 %v734
          %899 = vmatpush1.bf16.msra.mxu0 %v733
          %900 = vmatprep.subr.bf16.mxu0 %v730
          %901 = vmatpush1.bf16.msra.mxu0 %v729
          %902 = vmatprep.subr.bf16.mxu0 %v726
          %903 = vmatpush1.bf16.msra.mxu0 %v725
          %904 = vmatprep.subr.bf16.mxu0 %v722
          %905 = vmatpush1.bf16.msra.mxu0 %v721
          %906 = vmatprep.subr.bf16.mxu0 %v718
          %907 = vmatpush1.bf16.msra.mxu0 %v717
          %908 = vmatprep.subr.bf16.mxu0 0
          %909 = vmatpush2.bf16.msra.mxu0 0
          %910 = vmatprep.subr.bf16.mxu0 0
          %911 = vmatpush2.bf16.msra.mxu0 0
          %912 = vmatprep.subr.bf16.mxu0 0
          %913 = vmatpush2.bf16.msra.mxu0 0
          %914 = vmatprep.subr.bf16.mxu0 0
          %915 = vmatpush2.bf16.msra.mxu0 0
          %916 = vmatprep.subr.bf16.mxu0 0
          %917 = vmatpush2.bf16.msra.mxu0 0
          %918 = vmatprep.subr.bf16.mxu0 0
          %919 = vmatpush2.bf16.msra.mxu0 0
          %920 = vmatprep.subr.bf16.mxu0 0
          %921 = vmatpush2.bf16.msra.mxu0 0
          %922 = vmatprep.subr.bf16.mxu0 0
          %923 = vmatpush2.bf16.msra.mxu0 0
          %924 = vmatprep.mubr.bf16.mxu0 0
          %925 = vmatmul.mubr.bf16.gmra.mxu0 %v603
          %v926 = vpop.f32.mrf.mxu0
          %v927 = vadd.f32 %v562, %v926
          %v928 = vpop.f32.mrf.mxu0
          %v929 = vadd.f32 %v566, %v928
          %v930 = vpop.f32.mrf.mxu0
          %v931 = vadd.f32 %v562, %v930
          %v932 = vpop.f32.mrf.mxu0
          %v933 = vadd.f32 %v566, %v932
          %934 = vmatprep.mubr.bf16.mxu0 0
          %935 = vmatmul.mubr.bf16.gmra.mxu0 %v604
          %v936 = vpop.f32.mrf.mxu0
          %v937 = vadd.f32 %v562, %v936
          %v938 = vpop.f32.mrf.mxu0
          %v939 = vadd.f32 %v566, %v938
          %v940 = vpop.f32.mrf.mxu0
          %v941 = vadd.f32 %v562, %v940
          %v942 = vpop.f32.mrf.mxu0
          %v943 = vadd.f32 %v566, %v942
          %944 = vmatprep.mubr.bf16.mxu0 0
          %945 = vmatmul.mubr.bf16.gmra.mxu0 %v605
          %v946 = vpop.f32.mrf.mxu0
          %v947 = vadd.f32 %v562, %v946
          %v948 = vpop.f32.mrf.mxu0
          %v949 = vadd.f32 %v566, %v948
          %v950 = vpop.f32.mrf.mxu0
          %v951 = vadd.f32 %v562, %v950
          %v952 = vpop.f32.mrf.mxu0
          %v953 = vadd.f32 %v566, %v952
          %954 = vmatprep.mubr.bf16.mxu0 0
          %955 = vmatmul.mubr.bf16.gmra.mxu0 %v606
          %v956 = vpop.f32.mrf.mxu0
          %v957 = vadd.f32 %v562, %v956
          %v958 = vpop.f32.mrf.mxu0
          %v959 = vadd.f32 %v566, %v958
          %v960 = vpop.f32.mrf.mxu0
          %v961 = vadd.f32 %v562, %v960
          %v962 = vpop.f32.mrf.mxu0
          %v963 = vadd.f32 %v566, %v962
          %964 = vmatprep.mubr.bf16.mxu0 0
          %965 = vmatmul.mubr.bf16.gmra.mxu0 %v607
          %v966 = vpop.f32.mrf.mxu0
          %v967 = vadd.f32 %v562, %v966
          %v968 = vpop.f32.mrf.mxu0
          %v969 = vadd.f32 %v566, %v968
          %v970 = vpop.f32.mrf.mxu0
          %v971 = vadd.f32 %v562, %v970
          %v972 = vpop.f32.mrf.mxu0
          %v973 = vadd.f32 %v566, %v972
          %974 = vmatprep.mubr.bf16.mxu0 0
          %975 = vmatmul.mubr.bf16.gmra.mxu0 %v608
          %v976 = vpop.f32.mrf.mxu0
          %v977 = vadd.f32 %v562, %v976
          %v978 = vpop.f32.mrf.mxu0
          %v979 = vadd.f32 %v566, %v978
          %v980 = vpop.f32.mrf.mxu0
          %v981 = vadd.f32 %v562, %v980
          %v982 = vpop.f32.mrf.mxu0
          %v983 = vadd.f32 %v566, %v982
          %984 = vmatprep.mubr.bf16.mxu0 0
          %985 = vmatmul.mubr.bf16.gmra.mxu0 %v609
          %v986 = vpop.f32.mrf.mxu0
          %v987 = vadd.f32 %v562, %v986
          %v988 = vpop.f32.mrf.mxu0
          %v989 = vadd.f32 %v566, %v988
          %v990 = vpop.f32.mrf.mxu0
          %v991 = vadd.f32 %v562, %v990
          %v992 = vpop.f32.mrf.mxu0
          %v993 = vadd.f32 %v566, %v992
          %994 = vmatprep.mubr.bf16.mxu0 0
          %995 = vmatmul.mubr.bf16.gmra.mxu0 %v610
          %v996 = vpop.f32.mrf.mxu0
          %v997 = vadd.f32 %v562, %v996
          %v998 = vpop.f32.mrf.mxu0
          %v999 = vadd.f32 %v566, %v998
          %v1000 = vpop.f32.mrf.mxu0
          %v1001 = vadd.f32 %v562, %v1000
          %v1002 = vpop.f32.mrf.mxu0
          %v1003 = vadd.f32 %v566, %v1002
          %1004 = vdwg.mxu0
          %v1005 = vld [vmem:[#allocation13] sm:$0xff]
          %v1006 = vld [vmem:[#allocation13 + $0x8] sm:$0xff]
          %v1007 = vld [vmem:[#allocation13 + $0x10] sm:$0xff]
          %v1008 = vld [vmem:[#allocation13 + $0x18] sm:$0xff]
          %v1009 = vld [vmem:[#allocation13 + $0x20] sm:$0xff]
          %v1010 = vld [vmem:[#allocation13 + $0x28] sm:$0xff]
          %v1011 = vld [vmem:[#allocation13 + $0x30] sm:$0xff]
          %v1012 = vld [vmem:[#allocation13 + $0x38] sm:$0xff]
          %v1013 = vld [vmem:[#allocation13 + $0x40] sm:$0xff]
          %v1014 = vld [vmem:[#allocation13 + $0x48] sm:$0xff]
          %v1015 = vld [vmem:[#allocation13 + $0x50] sm:$0xff]
          %v1016 = vld [vmem:[#allocation13 + $0x58] sm:$0xff]
          %v1017 = vld [vmem:[#allocation13 + $0x60] sm:$0xff]
          %v1018 = vld [vmem:[#allocation13 + $0x68] sm:$0xff]
          %v1019 = vld [vmem:[#allocation13 + $0x70] sm:$0xff]
          %v1020 = vld [vmem:[#allocation13 + $0x78] sm:$0xff]
          %v1021 = vld [vmem:[#allocation13 + $0x80] sm:$0xff]
          %v1022 = vld [vmem:[#allocation13 + $0x88] sm:$0xff]
          %v1023 = vld [vmem:[#allocation13 + $0x90] sm:$0xff]
          %v1024 = vld [vmem:[#allocation13 + $0x98] sm:$0xff]
          %v1025 = vld [vmem:[#allocation13 + $0xa0] sm:$0xff]
          %v1026 = vld [vmem:[#allocation13 + $0xa8] sm:$0xff]
          %v1027 = vld [vmem:[#allocation13 + $0xb0] sm:$0xff]
          %v1028 = vld [vmem:[#allocation13 + $0xb8] sm:$0xff]
          %v1029 = vld [vmem:[#allocation13 + $0xc0] sm:$0xff]
          %v1030 = vld [vmem:[#allocation13 + $0xc8] sm:$0xff]
          %v1031 = vld [vmem:[#allocation13 + $0xd0] sm:$0xff]
          %v1032 = vld [vmem:[#allocation13 + $0xd8] sm:$0xff]
          %v1033 = vld [vmem:[#allocation13 + $0xe0] sm:$0xff]
          %v1034 = vld [vmem:[#allocation13 + $0xe8] sm:$0xff]
          %v1035 = vld [vmem:[#allocation13 + $0xf0] sm:$0xff]
          %v1036 = vld [vmem:[#allocation13 + $0xf8] sm:$0xff]
          %v1037 = vld [vmem:[%s7] sm:$0xf]
          %v1039 = vlaneseq
          %v1040 = vshrl.u32 %v1039, 7
          %v1041 = vsub.s32 0, %v1040
          %v1042 = vrot.slane %v1037, %v1041
          %v1043 = vlaneseq
          %v1044 = vshrl.u32 %v1043, 7
          %v1045 = vsub.s32 1, %v1044
          %v1046 = vrot.slane %v1037, %v1045
          %v1047 = vlaneseq
          %v1048 = vshrl.u32 %v1047, 7
          %v1049 = vsub.s32 2, %v1048
          %v1050 = vrot.slane %v1037, %v1049
          %v1051 = vlaneseq
          %v1052 = vshrl.u32 %v1051, 7
          %v1053 = vsub.s32 3, %v1052
          %v1054 = vrot.slane %v1037, %v1053
          %v1091 = vunpack.c.l.b16 %v1005
          %v1092 = vunpack.c.h.b16 %v1005
          %v1093 = vunpack.c.l.b16 %v1006
          %v1094 = vunpack.c.h.b16 %v1006
          %v1095 = vunpack.c.l.b16 %v1007
          %v1096 = vunpack.c.h.b16 %v1007
          %v1097 = vunpack.c.l.b16 %v1008
          %v1098 = vunpack.c.h.b16 %v1008
          %v1099 = vunpack.c.l.b16 %v1009
          %v1100 = vunpack.c.h.b16 %v1009
          %v1101 = vunpack.c.l.b16 %v1010
          %v1102 = vunpack.c.h.b16 %v1010
          %v1103 = vunpack.c.l.b16 %v1011
          %v1104 = vunpack.c.h.b16 %v1011
          %v1105 = vunpack.c.l.b16 %v1012
          %v1106 = vunpack.c.h.b16 %v1012
          %v1107 = vunpack.c.l.b16 %v1013
          %v1108 = vunpack.c.h.b16 %v1013
          %v1109 = vunpack.c.l.b16 %v1014
          %v1110 = vunpack.c.h.b16 %v1014
          %v1111 = vunpack.c.l.b16 %v1015
          %v1112 = vunpack.c.h.b16 %v1015
          %v1113 = vunpack.c.l.b16 %v1016
          %v1114 = vunpack.c.h.b16 %v1016
          %v1115 = vunpack.c.l.b16 %v1017
          %v1116 = vunpack.c.h.b16 %v1017
          %v1117 = vunpack.c.l.b16 %v1018
          %v1118 = vunpack.c.h.b16 %v1018
          %v1119 = vunpack.c.l.b16 %v1019
          %v1120 = vunpack.c.h.b16 %v1019
          %v1121 = vunpack.c.l.b16 %v1020
          %v1122 = vunpack.c.h.b16 %v1020
          %v1123 = vunpack.c.l.b16 %v1021
          %v1124 = vunpack.c.h.b16 %v1021
          %v1125 = vunpack.c.l.b16 %v1022
          %v1126 = vunpack.c.h.b16 %v1022
          %v1127 = vunpack.c.l.b16 %v1023
          %v1128 = vunpack.c.h.b16 %v1023
          %v1129 = vunpack.c.l.b16 %v1024
          %v1130 = vunpack.c.h.b16 %v1024
          %v1131 = vunpack.c.l.b16 %v1025
          %v1132 = vunpack.c.h.b16 %v1025
          %v1133 = vunpack.c.l.b16 %v1026
          %v1134 = vunpack.c.h.b16 %v1026
          %v1135 = vunpack.c.l.b16 %v1027
          %v1136 = vunpack.c.h.b16 %v1027
          %v1137 = vunpack.c.l.b16 %v1028
          %v1138 = vunpack.c.h.b16 %v1028
          %v1139 = vunpack.c.l.b16 %v1029
          %v1140 = vunpack.c.h.b16 %v1029
          %v1141 = vunpack.c.l.b16 %v1030
          %v1142 = vunpack.c.h.b16 %v1030
          %v1143 = vunpack.c.l.b16 %v1031
          %v1144 = vunpack.c.h.b16 %v1031
          %v1145 = vunpack.c.l.b16 %v1032
          %v1146 = vunpack.c.h.b16 %v1032
          %v1147 = vunpack.c.l.b16 %v1033
          %v1148 = vunpack.c.h.b16 %v1033
          %v1149 = vunpack.c.l.b16 %v1034
          %v1150 = vunpack.c.h.b16 %v1034
          %v1151 = vunpack.c.l.b16 %v1035
          %v1152 = vunpack.c.h.b16 %v1035
          %v1153 = vunpack.c.l.b16 %v1036
          %v1154 = vunpack.c.h.b16 %v1036
          %v1155 = vpack.c.b16 %v1095, %v1091
          %v1156 = vpack.c.b16 %v1096, %v1092
          %v1157 = vpack.c.b16 %v1097, %v1093
          %v1158 = vpack.c.b16 %v1098, %v1094
          %v1159 = vpack.c.b16 %v1103, %v1099
          %v1160 = vpack.c.b16 %v1104, %v1100
          %v1161 = vpack.c.b16 %v1105, %v1101
          %v1162 = vpack.c.b16 %v1106, %v1102
          %v1163 = vpack.c.b16 %v1111, %v1107
          %v1164 = vpack.c.b16 %v1112, %v1108
          %v1165 = vpack.c.b16 %v1113, %v1109
          %v1166 = vpack.c.b16 %v1114, %v1110
          %v1167 = vpack.c.b16 %v1119, %v1115
          %v1168 = vpack.c.b16 %v1120, %v1116
          %v1169 = vpack.c.b16 %v1121, %v1117
          %v1170 = vpack.c.b16 %v1122, %v1118
          %v1171 = vpack.c.b16 %v1127, %v1123
          %v1172 = vpack.c.b16 %v1128, %v1124
          %v1173 = vpack.c.b16 %v1129, %v1125
          %v1174 = vpack.c.b16 %v1130, %v1126
          %v1175 = vpack.c.b16 %v1135, %v1131
          %v1176 = vpack.c.b16 %v1136, %v1132
          %v1177 = vpack.c.b16 %v1137, %v1133
          %v1178 = vpack.c.b16 %v1138, %v1134
          %v1179 = vpack.c.b16 %v1143, %v1139
          %v1180 = vpack.c.b16 %v1144, %v1140
          %v1181 = vpack.c.b16 %v1145, %v1141
          %v1182 = vpack.c.b16 %v1146, %v1142
          %v1183 = vpack.c.b16 %v1151, %v1147
          %v1184 = vpack.c.b16 %v1152, %v1148
          %v1185 = vpack.c.b16 %v1153, %v1149
          %v1186 = vpack.c.b16 %v1154, %v1150
          %1219 = vmatprep.subr.bf16.mxu0 %v1184
          %1220 = vmatpush1.bf16.msra.mxu0 %v1183
          %1221 = vmatprep.subr.bf16.mxu0 %v1180
          %1222 = vmatpush1.bf16.msra.mxu0 %v1179
          %1223 = vmatprep.subr.bf16.mxu0 %v1176
          %1224 = vmatpush1.bf16.msra.mxu0 %v1175
          %1225 = vmatprep.subr.bf16.mxu0 %v1172
          %1226 = vmatpush1.bf16.msra.mxu0 %v1171
          %1227 = vmatprep.subr.bf16.mxu0 %v1168
          %1228 = vmatpush1.bf16.msra.mxu0 %v1167
          %1229 = vmatprep.subr.bf16.mxu0 %v1164
          %1230 = vmatpush1.bf16.msra.mxu0 %v1163
          %1231 = vmatprep.subr.bf16.mxu0 %v1160
          %1232 = vmatpush1.bf16.msra.mxu0 %v1159
          %1233 = vmatprep.subr.bf16.mxu0 %v1156
          %1234 = vmatpush1.bf16.msra.mxu0 %v1155
          %1235 = vmatprep.subr.bf16.mxu0 0
          %1236 = vmatpush2.bf16.msra.mxu0 0
          %1237 = vmatprep.subr.bf16.mxu0 0
          %1238 = vmatpush2.bf16.msra.mxu0 0
          %1239 = vmatprep.subr.bf16.mxu0 0
          %1240 = vmatpush2.bf16.msra.mxu0 0
          %1241 = vmatprep.subr.bf16.mxu0 0
          %1242 = vmatpush2.bf16.msra.mxu0 0
          %1243 = vmatprep.subr.bf16.mxu0 0
          %1244 = vmatpush2.bf16.msra.mxu0 0
          %1245 = vmatprep.subr.bf16.mxu0 0
          %1246 = vmatpush2.bf16.msra.mxu0 0
          %1247 = vmatprep.subr.bf16.mxu0 0
          %1248 = vmatpush2.bf16.msra.mxu0 0
          %1249 = vmatprep.subr.bf16.mxu0 0
          %1250 = vmatpush2.bf16.msra.mxu0 0
          %1251 = vmatprep.mubr.bf16.mxu0 0
          %1252 = vmatmul.mubr.bf16.gmra.mxu0 %v603
          %v1253 = vpop.f32.mrf.mxu0
          %v1254 = vadd.f32 %v1042, %v1253
          %v1255 = vpop.f32.mrf.mxu0
          %v1256 = vadd.f32 %v1046, %v1255
          %v1257 = vpop.f32.mrf.mxu0
          %v1258 = vadd.f32 %v1042, %v1257
          %v1259 = vpop.f32.mrf.mxu0
          %v1260 = vadd.f32 %v1046, %v1259
          %1261 = vmatprep.mubr.bf16.mxu0 0
          %1262 = vmatmul.mubr.bf16.gmra.mxu0 %v604
          %v1263 = vpop.f32.mrf.mxu0
          %v1264 = vadd.f32 %v1042, %v1263
          %v1265 = vpop.f32.mrf.mxu0
          %v1266 = vadd.f32 %v1046, %v1265
          %v1267 = vpop.f32.mrf.mxu0
          %v1268 = vadd.f32 %v1042, %v1267
          %v1269 = vpop.f32.mrf.mxu0
          %v1270 = vadd.f32 %v1046, %v1269
          %1271 = vmatprep.mubr.bf16.mxu0 0
          %1272 = vmatmul.mubr.bf16.gmra.mxu0 %v605
          %v1273 = vpop.f32.mrf.mxu0
          %v1274 = vadd.f32 %v1042, %v1273
          %v1275 = vpop.f32.mrf.mxu0
          %v1276 = vadd.f32 %v1046, %v1275
          %v1277 = vpop.f32.mrf.mxu0
          %v1278 = vadd.f32 %v1042, %v1277
          %v1279 = vpop.f32.mrf.mxu0
          %v1280 = vadd.f32 %v1046, %v1279
          %1281 = vmatprep.mubr.bf16.mxu0 0
          %1282 = vmatmul.mubr.bf16.gmra.mxu0 %v606
          %v1283 = vpop.f32.mrf.mxu0
          %v1284 = vadd.f32 %v1042, %v1283
          %v1285 = vpop.f32.mrf.mxu0
          %v1286 = vadd.f32 %v1046, %v1285
          %v1287 = vpop.f32.mrf.mxu0
          %v1288 = vadd.f32 %v1042, %v1287
          %v1289 = vpop.f32.mrf.mxu0
          %v1290 = vadd.f32 %v1046, %v1289
          %1291 = vmatprep.mubr.bf16.mxu0 0
          %1292 = vmatmul.mubr.bf16.gmra.mxu0 %v607
          %v1293 = vpop.f32.mrf.mxu0
          %v1294 = vadd.f32 %v1042, %v1293
          %v1295 = vpop.f32.mrf.mxu0
          %v1296 = vadd.f32 %v1046, %v1295
          %v1297 = vpop.f32.mrf.mxu0
          %v1298 = vadd.f32 %v1042, %v1297
          %v1299 = vpop.f32.mrf.mxu0
          %v1300 = vadd.f32 %v1046, %v1299
          %1301 = vmatprep.mubr.bf16.mxu0 0
          %1302 = vmatmul.mubr.bf16.gmra.mxu0 %v608
          %v1303 = vpop.f32.mrf.mxu0
          %v1304 = vadd.f32 %v1042, %v1303
          %v1305 = vpop.f32.mrf.mxu0
          %v1306 = vadd.f32 %v1046, %v1305
          %v1307 = vpop.f32.mrf.mxu0
          %v1308 = vadd.f32 %v1042, %v1307
          %v1309 = vpop.f32.mrf.mxu0
          %v1310 = vadd.f32 %v1046, %v1309
          %1311 = vmatprep.mubr.bf16.mxu0 0
          %1312 = vmatmul.mubr.bf16.gmra.mxu0 %v609
          %v1313 = vpop.f32.mrf.mxu0
          %v1314 = vadd.f32 %v1042, %v1313
          %v1315 = vpop.f32.mrf.mxu0
          %v1316 = vadd.f32 %v1046, %v1315
          %v1317 = vpop.f32.mrf.mxu0
          %v1318 = vadd.f32 %v1042, %v1317
          %v1319 = vpop.f32.mrf.mxu0
          %v1320 = vadd.f32 %v1046, %v1319
          %1321 = vmatprep.mubr.bf16.mxu0 0
          %1322 = vmatmul.mubr.bf16.gmra.mxu0 %v610
          %v1323 = vpop.f32.mrf.mxu0
          %v1324 = vadd.f32 %v1042, %v1323
          %v1325 = vpop.f32.mrf.mxu0
          %v1326 = vadd.f32 %v1046, %v1325
          %v1327 = vpop.f32.mrf.mxu0
          %v1328 = vadd.f32 %v1042, %v1327
          %v1329 = vpop.f32.mrf.mxu0
          %v1330 = vadd.f32 %v1046, %v1329
          %1331 = vdwg.mxu0
          %1332 = vmatprep.subr.bf16.mxu0 %v1186
          %1333 = vmatpush1.bf16.msra.mxu0 %v1185
          %1334 = vmatprep.subr.bf16.mxu0 %v1182
          %1335 = vmatpush1.bf16.msra.mxu0 %v1181
          %1336 = vmatprep.subr.bf16.mxu0 %v1178
          %1337 = vmatpush1.bf16.msra.mxu0 %v1177
          %1338 = vmatprep.subr.bf16.mxu0 %v1174
          %1339 = vmatpush1.bf16.msra.mxu0 %v1173
          %1340 = vmatprep.subr.bf16.mxu0 %v1170
          %1341 = vmatpush1.bf16.msra.mxu0 %v1169
          %1342 = vmatprep.subr.bf16.mxu0 %v1166
          %1343 = vmatpush1.bf16.msra.mxu0 %v1165
          %1344 = vmatprep.subr.bf16.mxu0 %v1162
          %1345 = vmatpush1.bf16.msra.mxu0 %v1161
          %1346 = vmatprep.subr.bf16.mxu0 %v1158
          %1347 = vmatpush1.bf16.msra.mxu0 %v1157
          %1348 = vmatprep.subr.bf16.mxu0 0
          %1349 = vmatpush2.bf16.msra.mxu0 0
          %1350 = vmatprep.subr.bf16.mxu0 0
          %1351 = vmatpush2.bf16.msra.mxu0 0
          %1352 = vmatprep.subr.bf16.mxu0 0
          %1353 = vmatpush2.bf16.msra.mxu0 0
          %1354 = vmatprep.subr.bf16.mxu0 0
          %1355 = vmatpush2.bf16.msra.mxu0 0
          %1356 = vmatprep.subr.bf16.mxu0 0
          %1357 = vmatpush2.bf16.msra.mxu0 0
          %1358 = vmatprep.subr.bf16.mxu0 0
          %1359 = vmatpush2.bf16.msra.mxu0 0
          %1360 = vmatprep.subr.bf16.mxu0 0
          %1361 = vmatpush2.bf16.msra.mxu0 0
          %1362 = vmatprep.subr.bf16.mxu0 0
          %1363 = vmatpush2.bf16.msra.mxu0 0
          %1364 = vmatprep.mubr.bf16.mxu0 0
          %1365 = vmatmul.mubr.bf16.gmra.mxu0 %v603
          %v1366 = vpop.f32.mrf.mxu0
          %v1367 = vadd.f32 %v1050, %v1366
          %v1368 = vpop.f32.mrf.mxu0
          %v1369 = vadd.f32 %v1054, %v1368
          %v1370 = vpop.f32.mrf.mxu0
          %v1371 = vadd.f32 %v1050, %v1370
          %v1372 = vpop.f32.mrf.mxu0
          %v1373 = vadd.f32 %v1054, %v1372
          %1374 = vmatprep.mubr.bf16.mxu0 0
          %1375 = vmatmul.mubr.bf16.gmra.mxu0 %v604
          %v1376 = vpop.f32.mrf.mxu0
          %v1377 = vadd.f32 %v1050, %v1376
          %v1378 = vpop.f32.mrf.mxu0
          %v1379 = vadd.f32 %v1054, %v1378
          %v1380 = vpop.f32.mrf.mxu0
          %v1381 = vadd.f32 %v1050, %v1380
          %v1382 = vpop.f32.mrf.mxu0
          %v1383 = vadd.f32 %v1054, %v1382
          %1384 = vmatprep.mubr.bf16.mxu0 0
          %1385 = vmatmul.mubr.bf16.gmra.mxu0 %v605
          %v1386 = vpop.f32.mrf.mxu0
          %v1387 = vadd.f32 %v1050, %v1386
          %v1388 = vpop.f32.mrf.mxu0
          %v1389 = vadd.f32 %v1054, %v1388
          %v1390 = vpop.f32.mrf.mxu0
          %v1391 = vadd.f32 %v1050, %v1390
          %v1392 = vpop.f32.mrf.mxu0
          %v1393 = vadd.f32 %v1054, %v1392
          %1394 = vmatprep.mubr.bf16.mxu0 0
          %1395 = vmatmul.mubr.bf16.gmra.mxu0 %v606
          %v1396 = vpop.f32.mrf.mxu0
          %v1397 = vadd.f32 %v1050, %v1396
          %v1398 = vpop.f32.mrf.mxu0
          %v1399 = vadd.f32 %v1054, %v1398
          %v1400 = vpop.f32.mrf.mxu0
          %v1401 = vadd.f32 %v1050, %v1400
          %v1402 = vpop.f32.mrf.mxu0
          %v1403 = vadd.f32 %v1054, %v1402
          %1404 = vmatprep.mubr.bf16.mxu0 0
          %1405 = vmatmul.mubr.bf16.gmra.mxu0 %v607
          %v1406 = vpop.f32.mrf.mxu0
          %v1407 = vadd.f32 %v1050, %v1406
          %v1408 = vpop.f32.mrf.mxu0
          %v1409 = vadd.f32 %v1054, %v1408
          %v1410 = vpop.f32.mrf.mxu0
          %v1411 = vadd.f32 %v1050, %v1410
          %v1412 = vpop.f32.mrf.mxu0
          %v1413 = vadd.f32 %v1054, %v1412
          %1414 = vmatprep.mubr.bf16.mxu0 0
          %1415 = vmatmul.mubr.bf16.gmra.mxu0 %v608
          %v1416 = vpop.f32.mrf.mxu0
          %v1417 = vadd.f32 %v1050, %v1416
          %v1418 = vpop.f32.mrf.mxu0
          %v1419 = vadd.f32 %v1054, %v1418
          %v1420 = vpop.f32.mrf.mxu0
          %v1421 = vadd.f32 %v1050, %v1420
          %v1422 = vpop.f32.mrf.mxu0
          %v1423 = vadd.f32 %v1054, %v1422
          %1424 = vmatprep.mubr.bf16.mxu0 0
          %1425 = vmatmul.mubr.bf16.gmra.mxu0 %v609
          %v1426 = vpop.f32.mrf.mxu0
          %v1427 = vadd.f32 %v1050, %v1426
          %v1428 = vpop.f32.mrf.mxu0
          %v1429 = vadd.f32 %v1054, %v1428
          %v1430 = vpop.f32.mrf.mxu0
          %v1431 = vadd.f32 %v1050, %v1430
          %v1432 = vpop.f32.mrf.mxu0
          %v1433 = vadd.f32 %v1054, %v1432
          %1434 = vmatprep.mubr.bf16.mxu0 0
          %1435 = vmatmul.mubr.bf16.gmra.mxu0 %v610
          %v1436 = vpop.f32.mrf.mxu0
          %v1437 = vadd.f32 %v1050, %v1436
          %v1438 = vpop.f32.mrf.mxu0
          %v1439 = vadd.f32 %v1054, %v1438
          %v1440 = vpop.f32.mrf.mxu0
          %v1441 = vadd.f32 %v1050, %v1440
          %v1442 = vpop.f32.mrf.mxu0
          %v1443 = vadd.f32 %v1054, %v1442
          %1444 = vdwg.mxu0
          %v1445 = vpack.c.bf16 %v818, %v814
          %v1446 = vpack.c.bf16 %v820, %v816
          %v1447 = vpack.c.bf16 %v931, %v927
          %v1448 = vpack.c.bf16 %v933, %v929
          %v1449 = vpack.c.bf16 %v828, %v824
          %v1450 = vpack.c.bf16 %v830, %v826
          %v1451 = vpack.c.bf16 %v941, %v937
          %v1452 = vpack.c.bf16 %v943, %v939
          %v1453 = vpack.c.bf16 %v838, %v834
          %v1454 = vpack.c.bf16 %v840, %v836
          %v1455 = vpack.c.bf16 %v951, %v947
          %v1456 = vpack.c.bf16 %v953, %v949
          %v1457 = vpack.c.bf16 %v848, %v844
          %v1458 = vpack.c.bf16 %v850, %v846
          %v1459 = vpack.c.bf16 %v961, %v957
          %v1460 = vpack.c.bf16 %v963, %v959
          %v1461 = vpack.c.bf16 %v858, %v854
          %v1462 = vpack.c.bf16 %v860, %v856
          %v1463 = vpack.c.bf16 %v971, %v967
          %v1464 = vpack.c.bf16 %v973, %v969
          %v1465 = vpack.c.bf16 %v868, %v864
          %v1466 = vpack.c.bf16 %v870, %v866
          %v1467 = vpack.c.bf16 %v981, %v977
          %v1468 = vpack.c.bf16 %v983, %v979
          %v1469 = vpack.c.bf16 %v878, %v874
          %v1470 = vpack.c.bf16 %v880, %v876
          %v1471 = vpack.c.bf16 %v991, %v987
          %v1472 = vpack.c.bf16 %v993, %v989
          %v1473 = vpack.c.bf16 %v888, %v884
          %v1474 = vpack.c.bf16 %v890, %v886
          %v1475 = vpack.c.bf16 %v1001, %v997
          %v1476 = vpack.c.bf16 %v1003, %v999
          %v1509 = vunpack.c.l.b16 %v1445
          %v1510 = vunpack.c.l.b16 %v1446
          %v1511 = vunpack.c.l.b16 %v1447
          %v1512 = vunpack.c.l.b16 %v1448
          %v1513 = vunpack.c.h.b16 %v1445
          %v1514 = vunpack.c.h.b16 %v1446
          %v1515 = vunpack.c.h.b16 %v1447
          %v1516 = vunpack.c.h.b16 %v1448
          %v1517 = vunpack.c.l.b16 %v1449
          %v1518 = vunpack.c.l.b16 %v1450
          %v1519 = vunpack.c.l.b16 %v1451
          %v1520 = vunpack.c.l.b16 %v1452
          %v1521 = vunpack.c.h.b16 %v1449
          %v1522 = vunpack.c.h.b16 %v1450
          %v1523 = vunpack.c.h.b16 %v1451
          %v1524 = vunpack.c.h.b16 %v1452
          %v1525 = vunpack.c.l.b16 %v1453
          %v1526 = vunpack.c.l.b16 %v1454
          %v1527 = vunpack.c.l.b16 %v1455
          %v1528 = vunpack.c.l.b16 %v1456
          %v1529 = vunpack.c.h.b16 %v1453
          %v1530 = vunpack.c.h.b16 %v1454
          %v1531 = vunpack.c.h.b16 %v1455
          %v1532 = vunpack.c.h.b16 %v1456
          %v1533 = vunpack.c.l.b16 %v1457
          %v1534 = vunpack.c.l.b16 %v1458
          %v1535 = vunpack.c.l.b16 %v1459
          %v1536 = vunpack.c.l.b16 %v1460
          %v1537 = vunpack.c.h.b16 %v1457
          %v1538 = vunpack.c.h.b16 %v1458
          %v1539 = vunpack.c.h.b16 %v1459
          %v1540 = vunpack.c.h.b16 %v1460
          %v1541 = vunpack.c.l.b16 %v1461
          %v1542 = vunpack.c.l.b16 %v1462
          %v1543 = vunpack.c.l.b16 %v1463
          %v1544 = vunpack.c.l.b16 %v1464
          %v1545 = vunpack.c.h.b16 %v1461
          %v1546 = vunpack.c.h.b16 %v1462
          %v1547 = vunpack.c.h.b16 %v1463
          %v1548 = vunpack.c.h.b16 %v1464
          %v1549 = vunpack.c.l.b16 %v1465
          %v1550 = vunpack.c.l.b16 %v1466
          %v1551 = vunpack.c.l.b16 %v1467
          %v1552 = vunpack.c.l.b16 %v1468
          %v1553 = vunpack.c.h.b16 %v1465
          %v1554 = vunpack.c.h.b16 %v1466
          %v1555 = vunpack.c.h.b16 %v1467
          %v1556 = vunpack.c.h.b16 %v1468
          %v1557 = vunpack.c.l.b16 %v1469
          %v1558 = vunpack.c.l.b16 %v1470
          %v1559 = vunpack.c.l.b16 %v1471
          %v1560 = vunpack.c.l.b16 %v1472
          %v1561 = vunpack.c.h.b16 %v1469
          %v1562 = vunpack.c.h.b16 %v1470
          %v1563 = vunpack.c.h.b16 %v1471
          %v1564 = vunpack.c.h.b16 %v1472
          %v1565 = vunpack.c.l.b16 %v1473
          %v1566 = vunpack.c.l.b16 %v1474
          %v1567 = vunpack.c.l.b16 %v1475
          %v1568 = vunpack.c.l.b16 %v1476
          %v1569 = vunpack.c.h.b16 %v1473
          %v1570 = vunpack.c.h.b16 %v1474
          %v1571 = vunpack.c.h.b16 %v1475
          %v1572 = vunpack.c.h.b16 %v1476
          %v1573 = vpack.c.b16 %v1510, %v1509
          %v1574 = vpack.c.b16 %v1512, %v1511
          %v1575 = vpack.c.b16 %v1514, %v1513
          %v1576 = vpack.c.b16 %v1516, %v1515
          %v1577 = vpack.c.b16 %v1518, %v1517
          %v1578 = vpack.c.b16 %v1520, %v1519
          %v1579 = vpack.c.b16 %v1522, %v1521
          %v1580 = vpack.c.b16 %v1524, %v1523
          %v1581 = vpack.c.b16 %v1526, %v1525
          %v1582 = vpack.c.b16 %v1528, %v1527
          %v1583 = vpack.c.b16 %v1530, %v1529
          %v1584 = vpack.c.b16 %v1532, %v1531
          %v1585 = vpack.c.b16 %v1534, %v1533
          %v1586 = vpack.c.b16 %v1536, %v1535
          %v1587 = vpack.c.b16 %v1538, %v1537
          %v1588 = vpack.c.b16 %v1540, %v1539
          %v1589 = vpack.c.b16 %v1542, %v1541
          %v1590 = vpack.c.b16 %v1544, %v1543
          %v1591 = vpack.c.b16 %v1546, %v1545
          %v1592 = vpack.c.b16 %v1548, %v1547
          %v1593 = vpack.c.b16 %v1550, %v1549
          %v1594 = vpack.c.b16 %v1552, %v1551
          %v1595 = vpack.c.b16 %v1554, %v1553
          %v1596 = vpack.c.b16 %v1556, %v1555
          %v1597 = vpack.c.b16 %v1558, %v1557
          %v1598 = vpack.c.b16 %v1560, %v1559
          %v1599 = vpack.c.b16 %v1562, %v1561
          %v1600 = vpack.c.b16 %v1564, %v1563
          %v1601 = vpack.c.b16 %v1566, %v1565
          %v1602 = vpack.c.b16 %v1568, %v1567
          %v1603 = vpack.c.b16 %v1570, %v1569
          %v1604 = vpack.c.b16 %v1572, %v1571
          %1637 = vst [vmem:[#allocation2] sm:$0xff] %v1573
          %1638 = vst [vmem:[#allocation2 + $0x8] sm:$0xff] %v1574
          %1639 = vst [vmem:[#allocation2 + $0x10] sm:$0xff] %v1575
          %1640 = vst [vmem:[#allocation2 + $0x18] sm:$0xff] %v1576
          %1641 = vst [vmem:[#allocation2 + $0x20] sm:$0xff] %v1577
          %1642 = vst [vmem:[#allocation2 + $0x28] sm:$0xff] %v1578
          %1643 = vst [vmem:[#allocation2 + $0x30] sm:$0xff] %v1579
          %1644 = vst [vmem:[#allocation2 + $0x38] sm:$0xff] %v1580
          %1645 = vst [vmem:[#allocation2 + $0x40] sm:$0xff] %v1581
          %1646 = vst [vmem:[#allocation2 + $0x48] sm:$0xff] %v1582
          %1647 = vst [vmem:[#allocation2 + $0x50] sm:$0xff] %v1583
          %1648 = vst [vmem:[#allocation2 + $0x58] sm:$0xff] %v1584
          %1649 = vst [vmem:[#allocation2 + $0x60] sm:$0xff] %v1585
          %1650 = vst [vmem:[#allocation2 + $0x68] sm:$0xff] %v1586
          %1651 = vst [vmem:[#allocation2 + $0x70] sm:$0xff] %v1587
          %1652 = vst [vmem:[#allocation2 + $0x78] sm:$0xff] %v1588
          %1653 = vst [vmem:[#allocation2 + $0x80] sm:$0xff] %v1589
          %1654 = vst [vmem:[#allocation2 + $0x88] sm:$0xff] %v1590
          %1655 = vst [vmem:[#allocation2 + $0x90] sm:$0xff] %v1591
          %1656 = vst [vmem:[#allocation2 + $0x98] sm:$0xff] %v1592
          %1657 = vst [vmem:[#allocation2 + $0xa0] sm:$0xff] %v1593
          %1658 = vst [vmem:[#allocation2 + $0xa8] sm:$0xff] %v1594
          %1659 = vst [vmem:[#allocation2 + $0xb0] sm:$0xff] %v1595
          %1660 = vst [vmem:[#allocation2 + $0xb8] sm:$0xff] %v1596
          %1661 = vst [vmem:[#allocation2 + $0xc0] sm:$0xff] %v1597
          %1662 = vst [vmem:[#allocation2 + $0xc8] sm:$0xff] %v1598
          %1663 = vst [vmem:[#allocation2 + $0xd0] sm:$0xff] %v1599
          %1664 = vst [vmem:[#allocation2 + $0xd8] sm:$0xff] %v1600
          %1665 = vst [vmem:[#allocation2 + $0xe0] sm:$0xff] %v1601
          %1666 = vst [vmem:[#allocation2 + $0xe8] sm:$0xff] %v1602
          %1667 = vst [vmem:[#allocation2 + $0xf0] sm:$0xff] %v1603
          %1668 = vst [vmem:[#allocation2 + $0xf8] sm:$0xff] %v1604
          %v1669 = vpack.c.bf16 %v1258, %v1254
          %v1670 = vpack.c.bf16 %v1260, %v1256
          %v1671 = vpack.c.bf16 %v1371, %v1367
          %v1672 = vpack.c.bf16 %v1373, %v1369
          %v1673 = vpack.c.bf16 %v1268, %v1264
          %v1674 = vpack.c.bf16 %v1270, %v1266
          %v1675 = vpack.c.bf16 %v1381, %v1377
          %v1676 = vpack.c.bf16 %v1383, %v1379
          %v1677 = vpack.c.bf16 %v1278, %v1274
          %v1678 = vpack.c.bf16 %v1280, %v1276
          %v1679 = vpack.c.bf16 %v1391, %v1387
          %v1680 = vpack.c.bf16 %v1393, %v1389
          %v1681 = vpack.c.bf16 %v1288, %v1284
          %v1682 = vpack.c.bf16 %v1290, %v1286
          %v1683 = vpack.c.bf16 %v1401, %v1397
          %v1684 = vpack.c.bf16 %v1403, %v1399
          %v1685 = vpack.c.bf16 %v1298, %v1294
          %v1686 = vpack.c.bf16 %v1300, %v1296
          %v1687 = vpack.c.bf16 %v1411, %v1407
          %v1688 = vpack.c.bf16 %v1413, %v1409
          %v1689 = vpack.c.bf16 %v1308, %v1304
          %v1690 = vpack.c.bf16 %v1310, %v1306
          %v1691 = vpack.c.bf16 %v1421, %v1417
          %v1692 = vpack.c.bf16 %v1423, %v1419
          %v1693 = vpack.c.bf16 %v1318, %v1314
          %v1694 = vpack.c.bf16 %v1320, %v1316
          %v1695 = vpack.c.bf16 %v1431, %v1427
          %v1696 = vpack.c.bf16 %v1433, %v1429
          %v1697 = vpack.c.bf16 %v1328, %v1324
          %v1698 = vpack.c.bf16 %v1330, %v1326
          %v1699 = vpack.c.bf16 %v1441, %v1437
          %v1700 = vpack.c.bf16 %v1443, %v1439
          %v1733 = vunpack.c.l.b16 %v1669
          %v1734 = vunpack.c.l.b16 %v1670
          %v1735 = vunpack.c.l.b16 %v1671
          %v1736 = vunpack.c.l.b16 %v1672
          %v1737 = vunpack.c.h.b16 %v1669
          %v1738 = vunpack.c.h.b16 %v1670
          %v1739 = vunpack.c.h.b16 %v1671
          %v1740 = vunpack.c.h.b16 %v1672
          %v1741 = vunpack.c.l.b16 %v1673
          %v1742 = vunpack.c.l.b16 %v1674
          %v1743 = vunpack.c.l.b16 %v1675
          %v1744 = vunpack.c.l.b16 %v1676
          %v1745 = vunpack.c.h.b16 %v1673
          %v1746 = vunpack.c.h.b16 %v1674
          %v1747 = vunpack.c.h.b16 %v1675
          %v1748 = vunpack.c.h.b16 %v1676
          %v1749 = vunpack.c.l.b16 %v1677
          %v1750 = vunpack.c.l.b16 %v1678
          %v1751 = vunpack.c.l.b16 %v1679
          %v1752 = vunpack.c.l.b16 %v1680
          %v1753 = vunpack.c.h.b16 %v1677
          %v1754 = vunpack.c.h.b16 %v1678
          %v1755 = vunpack.c.h.b16 %v1679
          %v1756 = vunpack.c.h.b16 %v1680
          %v1757 = vunpack.c.l.b16 %v1681
          %v1758 = vunpack.c.l.b16 %v1682
          %v1759 = vunpack.c.l.b16 %v1683
          %v1760 = vunpack.c.l.b16 %v1684
          %v1761 = vunpack.c.h.b16 %v1681
          %v1762 = vunpack.c.h.b16 %v1682
          %v1763 = vunpack.c.h.b16 %v1683
          %v1764 = vunpack.c.h.b16 %v1684
          %v1765 = vunpack.c.l.b16 %v1685
          %v1766 = vunpack.c.l.b16 %v1686
          %v1767 = vunpack.c.l.b16 %v1687
          %v1768 = vunpack.c.l.b16 %v1688
          %v1769 = vunpack.c.h.b16 %v1685
          %v1770 = vunpack.c.h.b16 %v1686
          %v1771 = vunpack.c.h.b16 %v1687
          %v1772 = vunpack.c.h.b16 %v1688
          %v1773 = vunpack.c.l.b16 %v1689
          %v1774 = vunpack.c.l.b16 %v1690
          %v1775 = vunpack.c.l.b16 %v1691
          %v1776 = vunpack.c.l.b16 %v1692
          %v1777 = vunpack.c.h.b16 %v1689
          %v1778 = vunpack.c.h.b16 %v1690
          %v1779 = vunpack.c.h.b16 %v1691
          %v1780 = vunpack.c.h.b16 %v1692
          %v1781 = vunpack.c.l.b16 %v1693
          %v1782 = vunpack.c.l.b16 %v1694
          %v1783 = vunpack.c.l.b16 %v1695
          %v1784 = vunpack.c.l.b16 %v1696
          %v1785 = vunpack.c.h.b16 %v1693
          %v1786 = vunpack.c.h.b16 %v1694
          %v1787 = vunpack.c.h.b16 %v1695
          %v1788 = vunpack.c.h.b16 %v1696
          %v1789 = vunpack.c.l.b16 %v1697
          %v1790 = vunpack.c.l.b16 %v1698
          %v1791 = vunpack.c.l.b16 %v1699
          %v1792 = vunpack.c.l.b16 %v1700
          %v1793 = vunpack.c.h.b16 %v1697
          %v1794 = vunpack.c.h.b16 %v1698
          %v1795 = vunpack.c.h.b16 %v1699
          %v1796 = vunpack.c.h.b16 %v1700
          %v1797 = vpack.c.b16 %v1734, %v1733
          %v1798 = vpack.c.b16 %v1736, %v1735
          %v1799 = vpack.c.b16 %v1738, %v1737
          %v1800 = vpack.c.b16 %v1740, %v1739
          %v1801 = vpack.c.b16 %v1742, %v1741
          %v1802 = vpack.c.b16 %v1744, %v1743
          %v1803 = vpack.c.b16 %v1746, %v1745
          %v1804 = vpack.c.b16 %v1748, %v1747
          %v1805 = vpack.c.b16 %v1750, %v1749
          %v1806 = vpack.c.b16 %v1752, %v1751
          %v1807 = vpack.c.b16 %v1754, %v1753
          %v1808 = vpack.c.b16 %v1756, %v1755
          %v1809 = vpack.c.b16 %v1758, %v1757
          %v1810 = vpack.c.b16 %v1760, %v1759
          %v1811 = vpack.c.b16 %v1762, %v1761
          %v1812 = vpack.c.b16 %v1764, %v1763
          %v1813 = vpack.c.b16 %v1766, %v1765
          %v1814 = vpack.c.b16 %v1768, %v1767
          %v1815 = vpack.c.b16 %v1770, %v1769
          %v1816 = vpack.c.b16 %v1772, %v1771
          %v1817 = vpack.c.b16 %v1774, %v1773
          %v1818 = vpack.c.b16 %v1776, %v1775
          %v1819 = vpack.c.b16 %v1778, %v1777
          %v1820 = vpack.c.b16 %v1780, %v1779
          %v1821 = vpack.c.b16 %v1782, %v1781
          %v1822 = vpack.c.b16 %v1784, %v1783
          %v1823 = vpack.c.b16 %v1786, %v1785
          %v1824 = vpack.c.b16 %v1788, %v1787
          %v1825 = vpack.c.b16 %v1790, %v1789
          %v1826 = vpack.c.b16 %v1792, %v1791
          %v1827 = vpack.c.b16 %v1794, %v1793
          %v1828 = vpack.c.b16 %v1796, %v1795
          %1861 = vst [vmem:[#allocation3] sm:$0xff] %v1797
          %1862 = vst [vmem:[#allocation3 + $0x8] sm:$0xff] %v1798
          %1863 = vst [vmem:[#allocation3 + $0x10] sm:$0xff] %v1799
          %1864 = vst [vmem:[#allocation3 + $0x18] sm:$0xff] %v1800
          %1865 = vst [vmem:[#allocation3 + $0x20] sm:$0xff] %v1801
          %1866 = vst [vmem:[#allocation3 + $0x28] sm:$0xff] %v1802
          %1867 = vst [vmem:[#allocation3 + $0x30] sm:$0xff] %v1803
          %1868 = vst [vmem:[#allocation3 + $0x38] sm:$0xff] %v1804
          %1869 = vst [vmem:[#allocation3 + $0x40] sm:$0xff] %v1805
          %1870 = vst [vmem:[#allocation3 + $0x48] sm:$0xff] %v1806
          %1871 = vst [vmem:[#allocation3 + $0x50] sm:$0xff] %v1807
          %1872 = vst [vmem:[#allocation3 + $0x58] sm:$0xff] %v1808
          %1873 = vst [vmem:[#allocation3 + $0x60] sm:$0xff] %v1809
          %1874 = vst [vmem:[#allocation3 + $0x68] sm:$0xff] %v1810
          %1875 = vst [vmem:[#allocation3 + $0x70] sm:$0xff] %v1811
          %1876 = vst [vmem:[#allocation3 + $0x78] sm:$0xff] %v1812
          %1877 = vst [vmem:[#allocation3 + $0x80] sm:$0xff] %v1813
          %1878 = vst [vmem:[#allocation3 + $0x88] sm:$0xff] %v1814
          %1879 = vst [vmem:[#allocation3 + $0x90] sm:$0xff] %v1815
          %1880 = vst [vmem:[#allocation3 + $0x98] sm:$0xff] %v1816
          %1881 = vst [vmem:[#allocation3 + $0xa0] sm:$0xff] %v1817
          %1882 = vst [vmem:[#allocation3 + $0xa8] sm:$0xff] %v1818
          %1883 = vst [vmem:[#allocation3 + $0xb0] sm:$0xff] %v1819
          %1884 = vst [vmem:[#allocation3 + $0xb8] sm:$0xff] %v1820
          %1885 = vst [vmem:[#allocation3 + $0xc0] sm:$0xff] %v1821
          %1886 = vst [vmem:[#allocation3 + $0xc8] sm:$0xff] %v1822
          %1887 = vst [vmem:[#allocation3 + $0xd0] sm:$0xff] %v1823
          %1888 = vst [vmem:[#allocation3 + $0xd8] sm:$0xff] %v1824
          %1889 = vst [vmem:[#allocation3 + $0xe0] sm:$0xff] %v1825
          %1890 = vst [vmem:[#allocation3 + $0xe8] sm:$0xff] %v1826
          %1891 = vst [vmem:[#allocation3 + $0xf0] sm:$0xff] %v1827
          %1892 = vst [vmem:[#allocation3 + $0xf8] sm:$0xff] %v1828
        $region88: #{tpu_custom_call.1} parent=59 // pred_fallthru
          _
        %v1893 = vld [vmem:[%s427] sm:$0xf]
        %v1894 = vld [vmem:[%s427 + $0x4] sm:$0xf]
        %v1895 = vld [vmem:[#allocation10] sm:$0xff]
        %v1896 = vld [vmem:[#allocation10 + $0x8] sm:$0xff]
        %v1897 = vld [vmem:[#allocation10 + $0x10] sm:$0xff]
        %v1898 = vld [vmem:[#allocation10 + $0x18] sm:$0xff]
        %v1899 = vld [vmem:[#allocation10 + $0x20] sm:$0xff]
        %v1900 = vld [vmem:[#allocation10 + $0x28] sm:$0xff]
        %v1901 = vld [vmem:[#allocation10 + $0x30] sm:$0xff]
        %v1902 = vld [vmem:[#allocation10 + $0x38] sm:$0xff]
        %v1903 = vld [vmem:[#allocation10 + $0x40] sm:$0xff]
        %v1904 = vld [vmem:[#allocation10 + $0x48] sm:$0xff]
        %v1905 = vld [vmem:[#allocation10 + $0x50] sm:$0xff]
        %v1906 = vld [vmem:[#allocation10 + $0x58] sm:$0xff]
        %v1907 = vld [vmem:[#allocation10 + $0x60] sm:$0xff]
        %v1908 = vld [vmem:[#allocation10 + $0x68] sm:$0xff]
        %v1909 = vld [vmem:[#allocation10 + $0x70] sm:$0xff]
        %v1910 = vld [vmem:[#allocation10 + $0x78] sm:$0xff]
        %v1911 = vld [vmem:[#allocation10 + $0x80] sm:$0xff]
        %v1912 = vld [vmem:[#allocation10 + $0x88] sm:$0xff]
        %v1913 = vld [vmem:[#allocation10 + $0x90] sm:$0xff]
        %v1914 = vld [vmem:[#allocation10 + $0x98] sm:$0xff]
        %v1915 = vld [vmem:[#allocation10 + $0xa0] sm:$0xff]
        %v1916 = vld [vmem:[#allocation10 + $0xa8] sm:$0xff]
        %v1917 = vld [vmem:[#allocation10 + $0xb0] sm:$0xff]
        %v1918 = vld [vmem:[#allocation10 + $0xb8] sm:$0xff]
        %v1919 = vld [vmem:[#allocation10 + $0xc0] sm:$0xff]
        %v1920 = vld [vmem:[#allocation10 + $0xc8] sm:$0xff]
        %v1921 = vld [vmem:[#allocation10 + $0xd0] sm:$0xff]
        %v1922 = vld [vmem:[#allocation10 + $0xd8] sm:$0xff]
        %v1923 = vld [vmem:[#allocation10 + $0xe0] sm:$0xff]
        %v1924 = vld [vmem:[#allocation10 + $0xe8] sm:$0xff]
        %v1925 = vld [vmem:[#allocation10 + $0xf0] sm:$0xff]
        %v1926 = vld [vmem:[#allocation10 + $0xf8] sm:$0xff]
        %v1927 = vld [vmem:[%s3] sm:$0xf]
        %v1929 = vlaneseq
        %v1930 = vshrl.u32 %v1929, 7
        %v1931 = vsub.s32 0, %v1930
        %v1932 = vrot.slane %v1927, %v1931
        %v1933 = vlaneseq
        %v1934 = vshrl.u32 %v1933, 7
        %v1935 = vsub.s32 1, %v1934
        %v1936 = vrot.slane %v1927, %v1935
        %v1937 = vlaneseq
        %v1938 = vshrl.u32 %v1937, 7
        %v1939 = vsub.s32 2, %v1938
        %v1940 = vrot.slane %v1927, %v1939
        %v1941 = vlaneseq
        %v1942 = vshrl.u32 %v1941, 7
        %v1943 = vsub.s32 3, %v1942
        %v1944 = vrot.slane %v1927, %v1943
        %v1951 = vunpack.c.l.b16 %v1893
        %v1952 = vunpack.c.l.b16 %v1894
        %v1953 = vpack.c.b16 %v1952, %v1951
        %v1987 = vunpack.c.l.b16 %v1895
        %v1988 = vunpack.c.h.b16 %v1895
        %v1989 = vunpack.c.l.b16 %v1896
        %v1990 = vunpack.c.h.b16 %v1896
        %v1991 = vunpack.c.l.b16 %v1897
        %v1992 = vunpack.c.h.b16 %v1897
        %v1993 = vunpack.c.l.b16 %v1898
        %v1994 = vunpack.c.h.b16 %v1898
        %v1995 = vunpack.c.l.b16 %v1899
        %v1996 = vunpack.c.h.b16 %v1899
        %v1997 = vunpack.c.l.b16 %v1900
        %v1998 = vunpack.c.h.b16 %v1900
        %v1999 = vunpack.c.l.b16 %v1901
        %v2000 = vunpack.c.h.b16 %v1901
        %v2001 = vunpack.c.l.b16 %v1902
        %v2002 = vunpack.c.h.b16 %v1902
        %v2003 = vunpack.c.l.b16 %v1903
        %v2004 = vunpack.c.h.b16 %v1903
        %v2005 = vunpack.c.l.b16 %v1904
        %v2006 = vunpack.c.h.b16 %v1904
        %v2007 = vunpack.c.l.b16 %v1905
        %v2008 = vunpack.c.h.b16 %v1905
        %v2009 = vunpack.c.l.b16 %v1906
        %v2010 = vunpack.c.h.b16 %v1906
        %v2011 = vunpack.c.l.b16 %v1907
        %v2012 = vunpack.c.h.b16 %v1907
        %v2013 = vunpack.c.l.b16 %v1908
        %v2014 = vunpack.c.h.b16 %v1908
        %v2015 = vunpack.c.l.b16 %v1909
        %v2016 = vunpack.c.h.b16 %v1909
        %v2017 = vunpack.c.l.b16 %v1910
        %v2018 = vunpack.c.h.b16 %v1910
        %v2019 = vunpack.c.l.b16 %v1911
        %v2020 = vunpack.c.h.b16 %v1911
        %v2021 = vunpack.c.l.b16 %v1912
        %v2022 = vunpack.c.h.b16 %v1912
        %v2023 = vunpack.c.l.b16 %v1913
        %v2024 = vunpack.c.h.b16 %v1913
        %v2025 = vunpack.c.l.b16 %v1914
        %v2026 = vunpack.c.h.b16 %v1914
        %v2027 = vunpack.c.l.b16 %v1915
        %v2028 = vunpack.c.h.b16 %v1915
        %v2029 = vunpack.c.l.b16 %v1916
        %v2030 = vunpack.c.h.b16 %v1916
        %v2031 = vunpack.c.l.b16 %v1917
        %v2032 = vunpack.c.h.b16 %v1917
        %v2033 = vunpack.c.l.b16 %v1918
        %v2034 = vunpack.c.h.b16 %v1918
        %v2035 = vunpack.c.l.b16 %v1919
        %v2036 = vunpack.c.h.b16 %v1919
        %v2037 = vunpack.c.l.b16 %v1920
        %v2038 = vunpack.c.h.b16 %v1920
        %v2039 = vunpack.c.l.b16 %v1921
        %v2040 = vunpack.c.h.b16 %v1921
        %v2041 = vunpack.c.l.b16 %v1922
        %v2042 = vunpack.c.h.b16 %v1922
        %v2043 = vunpack.c.l.b16 %v1923
        %v2044 = vunpack.c.h.b16 %v1923
        %v2045 = vunpack.c.l.b16 %v1924
        %v2046 = vunpack.c.h.b16 %v1924
        %v2047 = vunpack.c.l.b16 %v1925
        %v2048 = vunpack.c.h.b16 %v1925
        %v2049 = vunpack.c.l.b16 %v1926
        %v2050 = vunpack.c.h.b16 %v1926
        %v2051 = vpack.c.b16 %v1991, %v1987
        %v2052 = vpack.c.b16 %v1992, %v1988
        %v2053 = vpack.c.b16 %v1993, %v1989
        %v2054 = vpack.c.b16 %v1994, %v1990
        %v2055 = vpack.c.b16 %v1999, %v1995
        %v2056 = vpack.c.b16 %v2000, %v1996
        %v2057 = vpack.c.b16 %v2001, %v1997
        %v2058 = vpack.c.b16 %v2002, %v1998
        %v2059 = vpack.c.b16 %v2007, %v2003
        %v2060 = vpack.c.b16 %v2008, %v2004
        %v2061 = vpack.c.b16 %v2009, %v2005
        %v2062 = vpack.c.b16 %v2010, %v2006
        %v2063 = vpack.c.b16 %v2015, %v2011
        %v2064 = vpack.c.b16 %v2016, %v2012
        %v2065 = vpack.c.b16 %v2017, %v2013
        %v2066 = vpack.c.b16 %v2018, %v2014
        %v2067 = vpack.c.b16 %v2023, %v2019
        %v2068 = vpack.c.b16 %v2024, %v2020
        %v2069 = vpack.c.b16 %v2025, %v2021
        %v2070 = vpack.c.b16 %v2026, %v2022
        %v2071 = vpack.c.b16 %v2031, %v2027
        %v2072 = vpack.c.b16 %v2032, %v2028
        %v2073 = vpack.c.b16 %v2033, %v2029
        %v2074 = vpack.c.b16 %v2034, %v2030
        %v2075 = vpack.c.b16 %v2039, %v2035
        %v2076 = vpack.c.b16 %v2040, %v2036
        %v2077 = vpack.c.b16 %v2041, %v2037
        %v2078 = vpack.c.b16 %v2042, %v2038
        %v2079 = vpack.c.b16 %v2047, %v2043
        %v2080 = vpack.c.b16 %v2048, %v2044
        %v2081 = vpack.c.b16 %v2049, %v2045
        %v2082 = vpack.c.b16 %v2050, %v2046
        %2115 = vmatprep.subr.bf16.mxu0 %v2080
        %2116 = vmatpush1.bf16.msra.mxu0 %v2079
        %2117 = vmatprep.subr.bf16.mxu0 %v2076
        %2118 = vmatpush1.bf16.msra.mxu0 %v2075
        %2119 = vmatprep.subr.bf16.mxu0 %v2072
        %2120 = vmatpush1.bf16.msra.mxu0 %v2071
        %2121 = vmatprep.subr.bf16.mxu0 %v2068
        %2122 = vmatpush1.bf16.msra.mxu0 %v2067
        %2123 = vmatprep.subr.bf16.mxu0 %v2064
        %2124 = vmatpush1.bf16.msra.mxu0 %v2063
        %2125 = vmatprep.subr.bf16.mxu0 %v2060
        %2126 = vmatpush1.bf16.msra.mxu0 %v2059
        %2127 = vmatprep.subr.bf16.mxu0 %v2056
        %2128 = vmatpush1.bf16.msra.mxu0 %v2055
        %2129 = vmatprep.subr.bf16.mxu0 %v2052
        %2130 = vmatpush1.bf16.msra.mxu0 %v2051
        %2131 = vmatprep.subr.bf16.mxu0 0
        %2132 = vmatpush2.bf16.msra.mxu0 0
        %2133 = vmatprep.subr.bf16.mxu0 0
        %2134 = vmatpush2.bf16.msra.mxu0 0
        %2135 = vmatprep.subr.bf16.mxu0 0
        %2136 = vmatpush2.bf16.msra.mxu0 0
        %2137 = vmatprep.subr.bf16.mxu0 0
        %2138 = vmatpush2.bf16.msra.mxu0 0
        %2139 = vmatprep.subr.bf16.mxu0 0
        %2140 = vmatpush2.bf16.msra.mxu0 0
        %2141 = vmatprep.subr.bf16.mxu0 0
        %2142 = vmatpush2.bf16.msra.mxu0 0
        %2143 = vmatprep.subr.bf16.mxu0 0
        %2144 = vmatpush2.bf16.msra.mxu0 0
        %2145 = vmatprep.subr.bf16.mxu0 0
        %2146 = vmatpush2.bf16.msra.mxu0 0
        %2147 = vmatprep.mubr.bf16.mxu0 0
        %2148 = vmatmul.mubr.bf16.gmra.mxu0 %v1953
        %v2149 = vpop.f32.mrf.mxu0
        %v2150 = vadd.f32 %v1932, %v2149
        %v2151 = vpop.f32.mrf.mxu0
        %v2152 = vadd.f32 %v1936, %v2151
        %v2153 = vpop.f32.mrf.mxu0
        %v2154 = vadd.f32 %v1932, %v2153
        %v2155 = vpop.f32.mrf.mxu0
        %v2156 = vadd.f32 %v1936, %v2155
        %2157 = vdwg.mxu0
        %2158 = vmatprep.subr.bf16.mxu0 %v2082
        %2159 = vmatpush1.bf16.msra.mxu0 %v2081
        %2160 = vmatprep.subr.bf16.mxu0 %v2078
        %2161 = vmatpush1.bf16.msra.mxu0 %v2077
        %2162 = vmatprep.subr.bf16.mxu0 %v2074
        %2163 = vmatpush1.bf16.msra.mxu0 %v2073
        %2164 = vmatprep.subr.bf16.mxu0 %v2070
        %2165 = vmatpush1.bf16.msra.mxu0 %v2069
        %2166 = vmatprep.subr.bf16.mxu0 %v2066
        %2167 = vmatpush1.bf16.msra.mxu0 %v2065
        %2168 = vmatprep.subr.bf16.mxu0 %v2062
        %2169 = vmatpush1.bf16.msra.mxu0 %v2061
        %2170 = vmatprep.subr.bf16.mxu0 %v2058
        %2171 = vmatpush1.bf16.msra.mxu0 %v2057
        %2172 = vmatprep.subr.bf16.mxu0 %v2054
        %2173 = vmatpush1.bf16.msra.mxu0 %v2053
        %2174 = vmatprep.subr.bf16.mxu0 0
        %2175 = vmatpush2.bf16.msra.mxu0 0
        %2176 = vmatprep.subr.bf16.mxu0 0
        %2177 = vmatpush2.bf16.msra.mxu0 0
        %2178 = vmatprep.subr.bf16.mxu0 0
        %2179 = vmatpush2.bf16.msra.mxu0 0
        %2180 = vmatprep.subr.bf16.mxu0 0
        %2181 = vmatpush2.bf16.msra.mxu0 0
        %2182 = vmatprep.subr.bf16.mxu0 0
        %2183 = vmatpush2.bf16.msra.mxu0 0
        %2184 = vmatprep.subr.bf16.mxu0 0
        %2185 = vmatpush2.bf16.msra.mxu0 0
        %2186 = vmatprep.subr.bf16.mxu0 0
        %2187 = vmatpush2.bf16.msra.mxu0 0
        %2188 = vmatprep.subr.bf16.mxu0 0
        %2189 = vmatpush2.bf16.msra.mxu0 0
        %2190 = vmatprep.mubr.bf16.mxu0 0
        %2191 = vmatmul.mubr.bf16.gmra.mxu0 %v1953
        %v2192 = vpop.f32.mrf.mxu0
        %v2193 = vadd.f32 %v1940, %v2192
        %v2194 = vpop.f32.mrf.mxu0
        %v2195 = vadd.f32 %v1944, %v2194
        %v2196 = vpop.f32.mrf.mxu0
        %v2197 = vadd.f32 %v1940, %v2196
        %v2198 = vpop.f32.mrf.mxu0
        %v2199 = vadd.f32 %v1944, %v2198
        %2200 = vdwg.mxu0
        %v2201 = vpack.c.bf16 %v2154, %v2150
        %v2202 = vpack.c.bf16 %v2156, %v2152
        %v2203 = vpack.c.bf16 %v2197, %v2193
        %v2204 = vpack.c.bf16 %v2199, %v2195
        %v2205 = vlaneseq
        %v2206 = vand.u32 %v2205, 127
        %vm2207 = vcmp.lt.s32.totalorder %v2206, 8
        %v2208 = vsel %vm2207, 0.0, -1e+30
        %v2209 = vld [vmem:[#allocation2] sm:$0xf]
        %v2210 = vld [vmem:[#allocation2 + $0x10] sm:$0xf]
        %v2211 = vld [vmem:[#allocation2 + $0x20] sm:$0xf]
        %v2212 = vld [vmem:[#allocation2 + $0x30] sm:$0xf]
        %v2213 = vld [vmem:[#allocation2 + $0x40] sm:$0xf]
        %v2214 = vld [vmem:[#allocation2 + $0x50] sm:$0xf]
        %v2215 = vld [vmem:[#allocation2 + $0x60] sm:$0xf]
        %v2216 = vld [vmem:[#allocation2 + $0x70] sm:$0xf]
        %v2217 = vld [vmem:[#allocation2 + $0x80] sm:$0xf]
        %v2218 = vld [vmem:[#allocation2 + $0x90] sm:$0xf]
        %v2219 = vld [vmem:[#allocation2 + $0xa0] sm:$0xf]
        %v2220 = vld [vmem:[#allocation2 + $0xb0] sm:$0xf]
        %v2221 = vld [vmem:[#allocation2 + $0xc0] sm:$0xf]
        %v2222 = vld [vmem:[#allocation2 + $0xd0] sm:$0xf]
        %v2223 = vld [vmem:[#allocation2 + $0xe0] sm:$0xf]
        %v2224 = vld [vmem:[#allocation2 + $0xf0] sm:$0xf]
        %v2225 = vld [vmem:[#allocation3] sm:$0xf]
        %v2226 = vld [vmem:[#allocation3 + $0x10] sm:$0xf]
        %v2227 = vld [vmem:[#allocation3 + $0x20] sm:$0xf]
        %v2228 = vld [vmem:[#allocation3 + $0x30] sm:$0xf]
        %v2229 = vld [vmem:[#allocation3 + $0x40] sm:$0xf]
        %v2230 = vld [vmem:[#allocation3 + $0x50] sm:$0xf]
        %v2231 = vld [vmem:[#allocation3 + $0x60] sm:$0xf]
        %v2232 = vld [vmem:[#allocation3 + $0x70] sm:$0xf]
        %v2233 = vld [vmem:[#allocation3 + $0x80] sm:$0xf]
        %v2234 = vld [vmem:[#allocation3 + $0x90] sm:$0xf]
        %v2235 = vld [vmem:[#allocation3 + $0xa0] sm:$0xf]
        %v2236 = vld [vmem:[#allocation3 + $0xb0] sm:$0xf]
        %v2237 = vld [vmem:[#allocation3 + $0xc0] sm:$0xf]
        %v2238 = vld [vmem:[#allocation3 + $0xd0] sm:$0xf]
        %v2239 = vld [vmem:[#allocation3 + $0xe0] sm:$0xf]
        %v2240 = vld [vmem:[#allocation3 + $0xf0] sm:$0xf]
        %v2257 = vunpack.c.l.b16 %v2209
        %v2258 = vunpack.c.l.b16 %v2210
        %v2259 = vunpack.c.l.b16 %v2211
        %v2260 = vunpack.c.l.b16 %v2212
        %v2261 = vunpack.c.l.b16 %v2213
        %v2262 = vunpack.c.l.b16 %v2214
        %v2263 = vunpack.c.l.b16 %v2215
        %v2264 = vunpack.c.l.b16 %v2216
        %v2265 = vunpack.c.l.b16 %v2217
        %v2266 = vunpack.c.l.b16 %v2218
        %v2267 = vunpack.c.l.b16 %v2219
        %v2268 = vunpack.c.l.b16 %v2220
        %v2269 = vunpack.c.l.b16 %v2221
        %v2270 = vunpack.c.l.b16 %v2222
        %v2271 = vunpack.c.l.b16 %v2223
        %v2272 = vunpack.c.l.b16 %v2224
        %v2273 = vpack.c.b16 %v2258, %v2257
        %v2274 = vpack.c.b16 %v2260, %v2259
        %v2275 = vpack.c.b16 %v2262, %v2261
        %v2276 = vpack.c.b16 %v2264, %v2263
        %v2277 = vpack.c.b16 %v2266, %v2265
        %v2278 = vpack.c.b16 %v2268, %v2267
        %v2279 = vpack.c.b16 %v2270, %v2269
        %v2280 = vpack.c.b16 %v2272, %v2271
        %2289 = vmatprep.subr.bf16.mxu0 0
        %2290 = vmatpush1.bf16.xpose.msra.mxu0 %v2280
        %2291 = vmatprep.subr.bf16.mxu0 0
        %2292 = vmatpush1.bf16.xpose.msra.mxu0 %v2279
        %2293 = vmatprep.subr.bf16.mxu0 0
        %2294 = vmatpush1.bf16.xpose.msra.mxu0 %v2278
        %2295 = vmatprep.subr.bf16.mxu0 0
        %2296 = vmatpush1.bf16.xpose.msra.mxu0 %v2277
        %2297 = vmatprep.subr.bf16.mxu0 0
        %2298 = vmatpush1.bf16.xpose.msra.mxu0 %v2276
        %2299 = vmatprep.subr.bf16.mxu0 0
        %2300 = vmatpush1.bf16.xpose.msra.mxu0 %v2275
        %2301 = vmatprep.subr.bf16.mxu0 0
        %2302 = vmatpush1.bf16.xpose.msra.mxu0 %v2274
        %2303 = vmatprep.subr.bf16.mxu0 0
        %2304 = vmatpush1.bf16.xpose.msra.mxu0 %v2273
        %2305 = vmatprep.subr.bf16.mxu0 0
        %2306 = vmatpush2.bf16.xpose.msra.mxu0 0
        %2307 = vmatprep.subr.bf16.mxu0 0
        %2308 = vmatpush2.bf16.xpose.msra.mxu0 0
        %2309 = vmatprep.subr.bf16.mxu0 0
        %2310 = vmatpush2.bf16.xpose.msra.mxu0 0
        %2311 = vmatprep.subr.bf16.mxu0 0
        %2312 = vmatpush2.bf16.xpose.msra.mxu0 0
        %2313 = vmatprep.subr.bf16.mxu0 0
        %2314 = vmatpush2.bf16.xpose.msra.mxu0 0
        %2315 = vmatprep.subr.bf16.mxu0 0
        %2316 = vmatpush2.bf16.xpose.msra.mxu0 0
        %2317 = vmatprep.subr.bf16.mxu0 0
        %2318 = vmatpush2.bf16.xpose.msra.mxu0 0
        %2319 = vmatprep.subr.bf16.mxu0 0
        %2320 = vmatpush2.bf16.xpose.msra.mxu0 0
        %2321 = vmatprep.mubr.bf16.mxu0 0
        %2322 = vmatmul.mubr.bf16.gmra.mxu0 %v2201
        %v2323 = vpop.f32.mrf.mxu0
        %v2324 = vadd.f32 %v2208, %v2323
        %v2325 = vpop.f32.mrf.mxu0
        %v2326 = vpop.f32.mrf.mxu0
        %v2327 = vadd.f32 %v2208, %v2326
        %v2328 = vpop.f32.mrf.mxu0
        %2329 = vdwg.mxu0
        %2330 = vmax.xlane.f32.xlu0 %v2324
        %v2331 = vpop.xlane.xlu0 %2330
        %2332 = vmax.xlane.f32.xlu0 %v2327
        %v2333 = vpop.xlane.xlu0 %2332
        %v2334 = vsub.f32 %v2324, %v2331
        %v2335 = vsub.f32 %v2327, %v2333
        %v2336 = vmul.f32 %v2334, 1.442695
        %v2337 = vpow.pop %v2336
        %v2338 = vmul.f32 %v2335, 1.442695
        %v2339 = vpow.pop %v2338
        %2340 = vadd.xlane.f32.xlu0 %v2337
        %v2341 = vpop.xlane.xlu0 %2340
        %2342 = vadd.xlane.f32.xlu0 %v2339
        %v2343 = vpop.xlane.xlu0 %2342
        %v2344 = vpack.c.bf16 %v2339, %v2337
        %v2361 = vunpack.c.l.b16 %v2225
        %v2362 = vunpack.c.l.b16 %v2226
        %v2363 = vunpack.c.l.b16 %v2227
        %v2364 = vunpack.c.l.b16 %v2228
        %v2365 = vunpack.c.l.b16 %v2229
        %v2366 = vunpack.c.l.b16 %v2230
        %v2367 = vunpack.c.l.b16 %v2231
        %v2368 = vunpack.c.l.b16 %v2232
        %v2369 = vunpack.c.l.b16 %v2233
        %v2370 = vunpack.c.l.b16 %v2234
        %v2371 = vunpack.c.l.b16 %v2235
        %v2372 = vunpack.c.l.b16 %v2236
        %v2373 = vunpack.c.l.b16 %v2237
        %v2374 = vunpack.c.l.b16 %v2238
        %v2375 = vunpack.c.l.b16 %v2239
        %v2376 = vunpack.c.l.b16 %v2240
        %v2377 = vpack.c.b16 %v2362, %v2361
        %v2378 = vpack.c.b16 %v2364, %v2363
        %v2379 = vpack.c.b16 %v2366, %v2365
        %v2380 = vpack.c.b16 %v2368, %v2367
        %v2381 = vpack.c.b16 %v2370, %v2369
        %v2382 = vpack.c.b16 %v2372, %v2371
        %v2383 = vpack.c.b16 %v2374, %v2373
        %v2384 = vpack.c.b16 %v2376, %v2375
        %2393 = vmatprep.subr.bf16.mxu0 0
        %2394 = vmatpush1.bf16.msra.mxu0 %v2384
        %2395 = vmatprep.subr.bf16.mxu0 0
        %2396 = vmatpush1.bf16.msra.mxu0 %v2383
        %2397 = vmatprep.subr.bf16.mxu0 0
        %2398 = vmatpush1.bf16.msra.mxu0 %v2382
        %2399 = vmatprep.subr.bf16.mxu0 0
        %2400 = vmatpush1.bf16.msra.mxu0 %v2381
        %2401 = vmatprep.subr.bf16.mxu0 0
        %2402 = vmatpush1.bf16.msra.mxu0 %v2380
        %2403 = vmatprep.subr.bf16.mxu0 0
        %2404 = vmatpush1.bf16.msra.mxu0 %v2379
        %2405 = vmatprep.subr.bf16.mxu0 0
        %2406 = vmatpush1.bf16.msra.mxu0 %v2378
        %2407 = vmatprep.subr.bf16.mxu0 0
        %2408 = vmatpush1.bf16.msra.mxu0 %v2377
        %2409 = vmatprep.subr.bf16.mxu0 0
        %2410 = vmatpush2.bf16.msra.mxu0 0
        %2411 = vmatprep.subr.bf16.mxu0 0
        %2412 = vmatpush2.bf16.msra.mxu0 0
        %2413 = vmatprep.subr.bf16.mxu0 0
        %2414 = vmatpush2.bf16.msra.mxu0 0
        %2415 = vmatprep.subr.bf16.mxu0 0
        %2416 = vmatpush2.bf16.msra.mxu0 0
        %2417 = vmatprep.subr.bf16.mxu0 0
        %2418 = vmatpush2.bf16.msra.mxu0 0
        %2419 = vmatprep.subr.bf16.mxu0 0
        %2420 = vmatpush2.bf16.msra.mxu0 0
        %2421 = vmatprep.subr.bf16.mxu0 0
        %2422 = vmatpush2.bf16.msra.mxu0 0
        %2423 = vmatprep.subr.bf16.mxu0 0
        %2424 = vmatpush2.bf16.msra.mxu0 0
        %2425 = vmatprep.mubr.bf16.mxu0 0
        %2426 = vmatmul.mubr.bf16.gmra.mxu0 %v2344
        %v2427 = vpop.f32.mrf.mxu0
        %v2428 = vadd.f32 0.0, %v2427
        %v2429 = vpop.f32.mrf.mxu0
        %v2430 = vpop.f32.mrf.mxu0
        %v2431 = vadd.f32 0.0, %v2430
        %v2432 = vpop.f32.mrf.mxu0
        %2433 = vdwg.mxu0
        %v2434 = vrcp.pop %v2341
        %v2435 = vrcp.pop %v2343
        %v2436 = vmul.f32 %v2428, %v2434
        %v2437 = vmul.f32 %v2431, %v2435
        %v2438 = vpack.c.bf16 %v2437, %v2436
        %v2440 = vunpack.c.l.b16 %v2438
        %v2441 = vunpack.c.h.b16 %v2438
        %v2442 = vpack.c.b16 %v2440, %v2440
        %v2443 = vpack.c.b16 %v2441, %v2441
        %2446 = vst [vmem:[#allocation4] sm:$0xf] %v2442
        %2447 = vst [vmem:[#allocation4 + $0x10] sm:$0xf] %v2443
        %v2448 = vld [vmem:[#allocation2 + $0x4] sm:$0xf]
        %v2449 = vld [vmem:[#allocation2 + $0x14] sm:$0xf]
        %v2450 = vld [vmem:[#allocation2 + $0x24] sm:$0xf]
        %v2451 = vld [vmem:[#allocation2 + $0x34] sm:$0xf]
        %v2452 = vld [vmem:[#allocation2 + $0x44] sm:$0xf]
        %v2453 = vld [vmem:[#allocation2 + $0x54] sm:$0xf]
        %v2454 = vld [vmem:[#allocation2 + $0x64] sm:$0xf]
        %v2455 = vld [vmem:[#allocation2 + $0x74] sm:$0xf]
        %v2456 = vld [vmem:[#allocation2 + $0x84] sm:$0xf]
        %v2457 = vld [vmem:[#allocation2 + $0x94] sm:$0xf]
        %v2458 = vld [vmem:[#allocation2 + $0xa4] sm:$0xf]
        %v2459 = vld [vmem:[#allocation2 + $0xb4] sm:$0xf]
        %v2460 = vld [vmem:[#allocation2 + $0xc4] sm:$0xf]
        %v2461 = vld [vmem:[#allocation2 + $0xd4] sm:$0xf]
        %v2462 = vld [vmem:[#allocation2 + $0xe4] sm:$0xf]
        %v2463 = vld [vmem:[#allocation2 + $0xf4] sm:$0xf]
        %v2464 = vld [vmem:[#allocation3 + $0x4] sm:$0xf]
        %v2465 = vld [vmem:[#allocation3 + $0x14] sm:$0xf]
        %v2466 = vld [vmem:[#allocation3 + $0x24] sm:$0xf]
        %v2467 = vld [vmem:[#allocation3 + $0x34] sm:$0xf]
        %v2468 = vld [vmem:[#allocation3 + $0x44] sm:$0xf]
        %v2469 = vld [vmem:[#allocation3 + $0x54] sm:$0xf]
        %v2470 = vld [vmem:[#allocation3 + $0x64] sm:$0xf]
        %v2471 = vld [vmem:[#allocation3 + $0x74] sm:$0xf]
        %v2472 = vld [vmem:[#allocation3 + $0x84] sm:$0xf]
        %v2473 = vld [vmem:[#allocation3 + $0x94] sm:$0xf]
        %v2474 = vld [vmem:[#allocation3 + $0xa4] sm:$0xf]
        %v2475 = vld [vmem:[#allocation3 + $0xb4] sm:$0xf]
        %v2476 = vld [vmem:[#allocation3 + $0xc4] sm:$0xf]
        %v2477 = vld [vmem:[#allocation3 + $0xd4] sm:$0xf]
        %v2478 = vld [vmem:[#allocation3 + $0xe4] sm:$0xf]
        %v2479 = vld [vmem:[#allocation3 + $0xf4] sm:$0xf]
        %v2496 = vunpack.c.l.b16 %v2448
        %v2497 = vunpack.c.l.b16 %v2449
        %v2498 = vunpack.c.l.b16 %v2450
        %v2499 = vunpack.c.l.b16 %v2451
        %v2500 = vunpack.c.l.b16 %v2452
        %v2501 = vunpack.c.l.b16 %v2453
        %v2502 = vunpack.c.l.b16 %v2454
        %v2503 = vunpack.c.l.b16 %v2455
        %v2504 = vunpack.c.l.b16 %v2456
        %v2505 = vunpack.c.l.b16 %v2457
        %v2506 = vunpack.c.l.b16 %v2458
        %v2507 = vunpack.c.l.b16 %v2459
        %v2508 = vunpack.c.l.b16 %v2460
        %v2509 = vunpack.c.l.b16 %v2461
        %v2510 = vunpack.c.l.b16 %v2462
        %v2511 = vunpack.c.l.b16 %v2463
        %v2512 = vpack.c.b16 %v2497, %v2496
        %v2513 = vpack.c.b16 %v2499, %v2498
        %v2514 = vpack.c.b16 %v2501, %v2500
        %v2515 = vpack.c.b16 %v2503, %v2502
        %v2516 = vpack.c.b16 %v2505, %v2504
        %v2517 = vpack.c.b16 %v2507, %v2506
        %v2518 = vpack.c.b16 %v2509, %v2508
        %v2519 = vpack.c.b16 %v2511, %v2510
        %2528 = vmatprep.subr.bf16.mxu0 0
        %2529 = vmatpush1.bf16.xpose.msra.mxu0 %v2519
        %2530 = vmatprep.subr.bf16.mxu0 0
        %2531 = vmatpush1.bf16.xpose.msra.mxu0 %v2518
        %2532 = vmatprep.subr.bf16.mxu0 0
        %2533 = vmatpush1.bf16.xpose.msra.mxu0 %v2517
        %2534 = vmatprep.subr.bf16.mxu0 0
        %2535 = vmatpush1.bf16.xpose.msra.mxu0 %v2516
        %2536 = vmatprep.subr.bf16.mxu0 0
        %2537 = vmatpush1.bf16.xpose.msra.mxu0 %v2515
        %2538 = vmatprep.subr.bf16.mxu0 0
        %2539 = vmatpush1.bf16.xpose.msra.mxu0 %v2514
        %2540 = vmatprep.subr.bf16.mxu0 0
        %2541 = vmatpush1.bf16.xpose.msra.mxu0 %v2513
        %2542 = vmatprep.subr.bf16.mxu0 0
        %2543 = vmatpush1.bf16.xpose.msra.mxu0 %v2512
        %2544 = vmatprep.subr.bf16.mxu0 0
        %2545 = vmatpush2.bf16.xpose.msra.mxu0 0
        %2546 = vmatprep.subr.bf16.mxu0 0
        %2547 = vmatpush2.bf16.xpose.msra.mxu0 0
        %2548 = vmatprep.subr.bf16.mxu0 0
        %2549 = vmatpush2.bf16.xpose.msra.mxu0 0
        %2550 = vmatprep.subr.bf16.mxu0 0
        %2551 = vmatpush2.bf16.xpose.msra.mxu0 0
        %2552 = vmatprep.subr.bf16.mxu0 0
        %2553 = vmatpush2.bf16.xpose.msra.mxu0 0
        %2554 = vmatprep.subr.bf16.mxu0 0
        %2555 = vmatpush2.bf16.xpose.msra.mxu0 0
        %2556 = vmatprep.subr.bf16.mxu0 0
        %2557 = vmatpush2.bf16.xpose.msra.mxu0 0
        %2558 = vmatprep.subr.bf16.mxu0 0
        %2559 = vmatpush2.bf16.xpose.msra.mxu0 0
        %2560 = vmatprep.mubr.bf16.mxu0 0
        %2561 = vmatmul.mubr.bf16.gmra.mxu0 %v2202
        %v2562 = vpop.f32.mrf.mxu0
        %v2563 = vadd.f32 %v2208, %v2562
        %v2564 = vpop.f32.mrf.mxu0
        %v2565 = vpop.f32.mrf.mxu0
        %v2566 = vadd.f32 %v2208, %v2565
        %v2567 = vpop.f32.mrf.mxu0
        %2568 = vdwg.mxu0
        %2569 = vmax.xlane.f32.xlu0 %v2563
        %v2570 = vpop.xlane.xlu0 %2569
        %2571 = vmax.xlane.f32.xlu0 %v2566
        %v2572 = vpop.xlane.xlu0 %2571
        %v2573 = vsub.f32 %v2563, %v2570
        %v2574 = vsub.f32 %v2566, %v2572
        %v2575 = vmul.f32 %v2573, 1.442695
        %v2576 = vpow.pop %v2575
        %v2577 = vmul.f32 %v2574, 1.442695
        %v2578 = vpow.pop %v2577
        %2579 = vadd.xlane.f32.xlu0 %v2576
        %v2580 = vpop.xlane.xlu0 %2579
        %2581 = vadd.xlane.f32.xlu0 %v2578
        %v2582 = vpop.xlane.xlu0 %2581
        %v2583 = vpack.c.bf16 %v2578, %v2576
        %v2600 = vunpack.c.l.b16 %v2464
        %v2601 = vunpack.c.l.b16 %v2465
        %v2602 = vunpack.c.l.b16 %v2466
        %v2603 = vunpack.c.l.b16 %v2467
        %v2604 = vunpack.c.l.b16 %v2468
        %v2605 = vunpack.c.l.b16 %v2469
        %v2606 = vunpack.c.l.b16 %v2470
        %v2607 = vunpack.c.l.b16 %v2471
        %v2608 = vunpack.c.l.b16 %v2472
        %v2609 = vunpack.c.l.b16 %v2473
        %v2610 = vunpack.c.l.b16 %v2474
        %v2611 = vunpack.c.l.b16 %v2475
        %v2612 = vunpack.c.l.b16 %v2476
        %v2613 = vunpack.c.l.b16 %v2477
        %v2614 = vunpack.c.l.b16 %v2478
        %v2615 = vunpack.c.l.b16 %v2479
        %v2616 = vpack.c.b16 %v2601, %v2600
        %v2617 = vpack.c.b16 %v2603, %v2602
        %v2618 = vpack.c.b16 %v2605, %v2604
        %v2619 = vpack.c.b16 %v2607, %v2606
        %v2620 = vpack.c.b16 %v2609, %v2608
        %v2621 = vpack.c.b16 %v2611, %v2610
        %v2622 = vpack.c.b16 %v2613, %v2612
        %v2623 = vpack.c.b16 %v2615, %v2614
        %2632 = vmatprep.subr.bf16.mxu0 0
        %2633 = vmatpush1.bf16.msra.mxu0 %v2623
        %2634 = vmatprep.subr.bf16.mxu0 0
        %2635 = vmatpush1.bf16.msra.mxu0 %v2622
        %2636 = vmatprep.subr.bf16.mxu0 0
        %2637 = vmatpush1.bf16.msra.mxu0 %v2621
        %2638 = vmatprep.subr.bf16.mxu0 0
        %2639 = vmatpush1.bf16.msra.mxu0 %v2620
        %2640 = vmatprep.subr.bf16.mxu0 0
        %2641 = vmatpush1.bf16.msra.mxu0 %v2619
        %2642 = vmatprep.subr.bf16.mxu0 0
        %2643 = vmatpush1.bf16.msra.mxu0 %v2618
        %2644 = vmatprep.subr.bf16.mxu0 0
        %2645 = vmatpush1.bf16.msra.mxu0 %v2617
        %2646 = vmatprep.subr.bf16.mxu0 0
        %2647 = vmatpush1.bf16.msra.mxu0 %v2616
        %2648 = vmatprep.subr.bf16.mxu0 0
        %2649 = vmatpush2.bf16.msra.mxu0 0
        %2650 = vmatprep.subr.bf16.mxu0 0
        %2651 = vmatpush2.bf16.msra.mxu0 0
        %2652 = vmatprep.subr.bf16.mxu0 0
        %2653 = vmatpush2.bf16.msra.mxu0 0
        %2654 = vmatprep.subr.bf16.mxu0 0
        %2655 = vmatpush2.bf16.msra.mxu0 0
        %2656 = vmatprep.subr.bf16.mxu0 0
        %2657 = vmatpush2.bf16.msra.mxu0 0
        %2658 = vmatprep.subr.bf16.mxu0 0
        %2659 = vmatpush2.bf16.msra.mxu0 0
        %2660 = vmatprep.subr.bf16.mxu0 0
        %2661 = vmatpush2.bf16.msra.mxu0 0
        %2662 = vmatprep.subr.bf16.mxu0 0
        %2663 = vmatpush2.bf16.msra.mxu0 0
        %2664 = vmatprep.mubr.bf16.mxu0 0
        %2665 = vmatmul.mubr.bf16.gmra.mxu0 %v2583
        %v2666 = vpop.f32.mrf.mxu0
        %v2667 = vadd.f32 0.0, %v2666
        %v2668 = vpop.f32.mrf.mxu0
        %v2669 = vpop.f32.mrf.mxu0
        %v2670 = vadd.f32 0.0, %v2669
        %v2671 = vpop.f32.mrf.mxu0
        %2672 = vdwg.mxu0
        %v2673 = vrcp.pop %v2580
        %v2674 = vrcp.pop %v2582
        %v2675 = vmul.f32 %v2667, %v2673
        %v2676 = vmul.f32 %v2670, %v2674
        %v2677 = vpack.c.bf16 %v2676, %v2675
        %v2679 = vunpack.c.l.b16 %v2677
        %v2680 = vunpack.c.h.b16 %v2677
        %v2681 = vpack.c.b16 %v2679, %v2679
        %v2682 = vpack.c.b16 %v2680, %v2680
        %2685 = vst [vmem:[#allocation4 + $0x4] sm:$0xf] %v2681
        %2686 = vst [vmem:[#allocation4 + $0x14] sm:$0xf] %v2682
        %v2687 = vld [vmem:[#allocation2 + $0x8] sm:$0xf]
        %v2688 = vld [vmem:[#allocation2 + $0x18] sm:$0xf]
        %v2689 = vld [vmem:[#allocation2 + $0x28] sm:$0xf]
        %v2690 = vld [vmem:[#allocation2 + $0x38] sm:$0xf]
        %v2691 = vld [vmem:[#allocation2 + $0x48] sm:$0xf]
        %v2692 = vld [vmem:[#allocation2 + $0x58] sm:$0xf]
        %v2693 = vld [vmem:[#allocation2 + $0x68] sm:$0xf]
        %v2694 = vld [vmem:[#allocation2 + $0x78] sm:$0xf]
        %v2695 = vld [vmem:[#allocation2 + $0x88] sm:$0xf]
        %v2696 = vld [vmem:[#allocation2 + $0x98] sm:$0xf]
        %v2697 = vld [vmem:[#allocation2 + $0xa8] sm:$0xf]
        %v2698 = vld [vmem:[#allocation2 + $0xb8] sm:$0xf]
        %v2699 = vld [vmem:[#allocation2 + $0xc8] sm:$0xf]
        %v2700 = vld [vmem:[#allocation2 + $0xd8] sm:$0xf]
        %v2701 = vld [vmem:[#allocation2 + $0xe8] sm:$0xf]
        %v2702 = vld [vmem:[#allocation2 + $0xf8] sm:$0xf]
        %v2703 = vld [vmem:[#allocation3 + $0x8] sm:$0xf]
        %v2704 = vld [vmem:[#allocation3 + $0x18] sm:$0xf]
        %v2705 = vld [vmem:[#allocation3 + $0x28] sm:$0xf]
        %v2706 = vld [vmem:[#allocation3 + $0x38] sm:$0xf]
        %v2707 = vld [vmem:[#allocation3 + $0x48] sm:$0xf]
        %v2708 = vld [vmem:[#allocation3 + $0x58] sm:$0xf]
        %v2709 = vld [vmem:[#allocation3 + $0x68] sm:$0xf]
        %v2710 = vld [vmem:[#allocation3 + $0x78] sm:$0xf]
        %v2711 = vld [vmem:[#allocation3 + $0x88] sm:$0xf]
        %v2712 = vld [vmem:[#allocation3 + $0x98] sm:$0xf]
        %v2713 = vld [vmem:[#allocation3 + $0xa8] sm:$0xf]
        %v2714 = vld [vmem:[#allocation3 + $0xb8] sm:$0xf]
        %v2715 = vld [vmem:[#allocation3 + $0xc8] sm:$0xf]
        %v2716 = vld [vmem:[#allocation3 + $0xd8] sm:$0xf]
        %v2717 = vld [vmem:[#allocation3 + $0xe8] sm:$0xf]
        %v2718 = vld [vmem:[#allocation3 + $0xf8] sm:$0xf]
        %v2735 = vunpack.c.l.b16 %v2687
        %v2736 = vunpack.c.l.b16 %v2688
        %v2737 = vunpack.c.l.b16 %v2689
        %v2738 = vunpack.c.l.b16 %v2690
        %v2739 = vunpack.c.l.b16 %v2691
        %v2740 = vunpack.c.l.b16 %v2692
        %v2741 = vunpack.c.l.b16 %v2693
        %v2742 = vunpack.c.l.b16 %v2694
        %v2743 = vunpack.c.l.b16 %v2695
        %v2744 = vunpack.c.l.b16 %v2696
        %v2745 = vunpack.c.l.b16 %v2697
        %v2746 = vunpack.c.l.b16 %v2698
        %v2747 = vunpack.c.l.b16 %v2699
        %v2748 = vunpack.c.l.b16 %v2700
        %v2749 = vunpack.c.l.b16 %v2701
        %v2750 = vunpack.c.l.b16 %v2702
        %v2751 = vpack.c.b16 %v2736, %v2735
        %v2752 = vpack.c.b16 %v2738, %v2737
        %v2753 = vpack.c.b16 %v2740, %v2739
        %v2754 = vpack.c.b16 %v2742, %v2741
        %v2755 = vpack.c.b16 %v2744, %v2743
        %v2756 = vpack.c.b16 %v2746, %v2745
        %v2757 = vpack.c.b16 %v2748, %v2747
        %v2758 = vpack.c.b16 %v2750, %v2749
        %2767 = vmatprep.subr.bf16.mxu0 0
        %2768 = vmatpush1.bf16.xpose.msra.mxu0 %v2758
        %2769 = vmatprep.subr.bf16.mxu0 0
        %2770 = vmatpush1.bf16.xpose.msra.mxu0 %v2757
        %2771 = vmatprep.subr.bf16.mxu0 0
        %2772 = vmatpush1.bf16.xpose.msra.mxu0 %v2756
        %2773 = vmatprep.subr.bf16.mxu0 0
        %2774 = vmatpush1.bf16.xpose.msra.mxu0 %v2755
        %2775 = vmatprep.subr.bf16.mxu0 0
        %2776 = vmatpush1.bf16.xpose.msra.mxu0 %v2754
        %2777 = vmatprep.subr.bf16.mxu0 0
        %2778 = vmatpush1.bf16.xpose.msra.mxu0 %v2753
        %2779 = vmatprep.subr.bf16.mxu0 0
        %2780 = vmatpush1.bf16.xpose.msra.mxu0 %v2752
        %2781 = vmatprep.subr.bf16.mxu0 0
        %2782 = vmatpush1.bf16.xpose.msra.mxu0 %v2751
        %2783 = vmatprep.subr.bf16.mxu0 0
        %2784 = vmatpush2.bf16.xpose.msra.mxu0 0
        %2785 = vmatprep.subr.bf16.mxu0 0
        %2786 = vmatpush2.bf16.xpose.msra.mxu0 0
        %2787 = vmatprep.subr.bf16.mxu0 0
        %2788 = vmatpush2.bf16.xpose.msra.mxu0 0
        %2789 = vmatprep.subr.bf16.mxu0 0
        %2790 = vmatpush2.bf16.xpose.msra.mxu0 0
        %2791 = vmatprep.subr.bf16.mxu0 0
        %2792 = vmatpush2.bf16.xpose.msra.mxu0 0
        %2793 = vmatprep.subr.bf16.mxu0 0
        %2794 = vmatpush2.bf16.xpose.msra.mxu0 0
        %2795 = vmatprep.subr.bf16.mxu0 0
        %2796 = vmatpush2.bf16.xpose.msra.mxu0 0
        %2797 = vmatprep.subr.bf16.mxu0 0
        %2798 = vmatpush2.bf16.xpose.msra.mxu0 0
        %2799 = vmatprep.mubr.bf16.mxu0 0
        %2800 = vmatmul.mubr.bf16.gmra.mxu0 %v2203
        %v2801 = vpop.f32.mrf.mxu0
        %v2802 = vadd.f32 %v2208, %v2801
        %v2803 = vpop.f32.mrf.mxu0
        %v2804 = vpop.f32.mrf.mxu0
        %v2805 = vadd.f32 %v2208, %v2804
        %v2806 = vpop.f32.mrf.mxu0
        %2807 = vdwg.mxu0
        %2808 = vmax.xlane.f32.xlu0 %v2802
        %v2809 = vpop.xlane.xlu0 %2808
        %2810 = vmax.xlane.f32.xlu0 %v2805
        %v2811 = vpop.xlane.xlu0 %2810
        %v2812 = vsub.f32 %v2802, %v2809
        %v2813 = vsub.f32 %v2805, %v2811
        %v2814 = vmul.f32 %v2812, 1.442695
        %v2815 = vpow.pop %v2814
        %v2816 = vmul.f32 %v2813, 1.442695
        %v2817 = vpow.pop %v2816
        %2818 = vadd.xlane.f32.xlu0 %v2815
        %v2819 = vpop.xlane.xlu0 %2818
        %2820 = vadd.xlane.f32.xlu0 %v2817
        %v2821 = vpop.xlane.xlu0 %2820
        %v2822 = vpack.c.bf16 %v2817, %v2815
        %v2839 = vunpack.c.l.b16 %v2703
        %v2840 = vunpack.c.l.b16 %v2704
        %v2841 = vunpack.c.l.b16 %v2705
        %v2842 = vunpack.c.l.b16 %v2706
        %v2843 = vunpack.c.l.b16 %v2707
        %v2844 = vunpack.c.l.b16 %v2708
        %v2845 = vunpack.c.l.b16 %v2709
        %v2846 = vunpack.c.l.b16 %v2710
        %v2847 = vunpack.c.l.b16 %v2711
        %v2848 = vunpack.c.l.b16 %v2712
        %v2849 = vunpack.c.l.b16 %v2713
        %v2850 = vunpack.c.l.b16 %v2714
        %v2851 = vunpack.c.l.b16 %v2715
        %v2852 = vunpack.c.l.b16 %v2716
        %v2853 = vunpack.c.l.b16 %v2717
        %v2854 = vunpack.c.l.b16 %v2718
        %v2855 = vpack.c.b16 %v2840, %v2839
        %v2856 = vpack.c.b16 %v2842, %v2841
        %v2857 = vpack.c.b16 %v2844, %v2843
        %v2858 = vpack.c.b16 %v2846, %v2845
        %v2859 = vpack.c.b16 %v2848, %v2847
        %v2860 = vpack.c.b16 %v2850, %v2849
        %v2861 = vpack.c.b16 %v2852, %v2851
        %v2862 = vpack.c.b16 %v2854, %v2853
        %2871 = vmatprep.subr.bf16.mxu0 0
        %2872 = vmatpush1.bf16.msra.mxu0 %v2862
        %2873 = vmatprep.subr.bf16.mxu0 0
        %2874 = vmatpush1.bf16.msra.mxu0 %v2861
        %2875 = vmatprep.subr.bf16.mxu0 0
        %2876 = vmatpush1.bf16.msra.mxu0 %v2860
        %2877 = vmatprep.subr.bf16.mxu0 0
        %2878 = vmatpush1.bf16.msra.mxu0 %v2859
        %2879 = vmatprep.subr.bf16.mxu0 0
        %2880 = vmatpush1.bf16.msra.mxu0 %v2858
        %2881 = vmatprep.subr.bf16.mxu0 0
        %2882 = vmatpush1.bf16.msra.mxu0 %v2857
        %2883 = vmatprep.subr.bf16.mxu0 0
        %2884 = vmatpush1.bf16.msra.mxu0 %v2856
        %2885 = vmatprep.subr.bf16.mxu0 0
        %2886 = vmatpush1.bf16.msra.mxu0 %v2855
        %2887 = vmatprep.subr.bf16.mxu0 0
        %2888 = vmatpush2.bf16.msra.mxu0 0
        %2889 = vmatprep.subr.bf16.mxu0 0
        %2890 = vmatpush2.bf16.msra.mxu0 0
        %2891 = vmatprep.subr.bf16.mxu0 0
        %2892 = vmatpush2.bf16.msra.mxu0 0
        %2893 = vmatprep.subr.bf16.mxu0 0
        %2894 = vmatpush2.bf16.msra.mxu0 0
        %2895 = vmatprep.subr.bf16.mxu0 0
        %2896 = vmatpush2.bf16.msra.mxu0 0
        %2897 = vmatprep.subr.bf16.mxu0 0
        %2898 = vmatpush2.bf16.msra.mxu0 0
        %2899 = vmatprep.subr.bf16.mxu0 0
        %2900 = vmatpush2.bf16.msra.mxu0 0
        %2901 = vmatprep.subr.bf16.mxu0 0
        %2902 = vmatpush2.bf16.msra.mxu0 0
        %2903 = vmatprep.mubr.bf16.mxu0 0
        %2904 = vmatmul.mubr.bf16.gmra.mxu0 %v2822
        %v2905 = vpop.f32.mrf.mxu0
        %v2906 = vadd.f32 0.0, %v2905
        %v2907 = vpop.f32.mrf.mxu0
        %v2908 = vpop.f32.mrf.mxu0
        %v2909 = vadd.f32 0.0, %v2908
        %v2910 = vpop.f32.mrf.mxu0
        %2911 = vdwg.mxu0
        %v2912 = vrcp.pop %v2819
        %v2913 = vrcp.pop %v2821
        %v2914 = vmul.f32 %v2906, %v2912
        %v2915 = vmul.f32 %v2909, %v2913
        %v2916 = vpack.c.bf16 %v2915, %v2914
        %v2918 = vunpack.c.l.b16 %v2916
        %v2919 = vunpack.c.h.b16 %v2916
        %v2920 = vpack.c.b16 %v2918, %v2918
        %v2921 = vpack.c.b16 %v2919, %v2919
        %2924 = vst [vmem:[#allocation4 + $0x8] sm:$0xf] %v2920
        %2925 = vst [vmem:[#allocation4 + $0x18] sm:$0xf] %v2921
        %v2926 = vld [vmem:[#allocation2 + $0xc] sm:$0xf]
        %v2927 = vld [vmem:[#allocation2 + $0x1c] sm:$0xf]
        %v2928 = vld [vmem:[#allocation2 + $0x2c] sm:$0xf]
        %v2929 = vld [vmem:[#allocation2 + $0x3c] sm:$0xf]
        %v2930 = vld [vmem:[#allocation2 + $0x4c] sm:$0xf]
        %v2931 = vld [vmem:[#allocation2 + $0x5c] sm:$0xf]
        %v2932 = vld [vmem:[#allocation2 + $0x6c] sm:$0xf]
        %v2933 = vld [vmem:[#allocation2 + $0x7c] sm:$0xf]
        %v2934 = vld [vmem:[#allocation2 + $0x8c] sm:$0xf]
        %v2935 = vld [vmem:[#allocation2 + $0x9c] sm:$0xf]
        %v2936 = vld [vmem:[#allocation2 + $0xac] sm:$0xf]
        %v2937 = vld [vmem:[#allocation2 + $0xbc] sm:$0xf]
        %v2938 = vld [vmem:[#allocation2 + $0xcc] sm:$0xf]
        %v2939 = vld [vmem:[#allocation2 + $0xdc] sm:$0xf]
        %v2940 = vld [vmem:[#allocation2 + $0xec] sm:$0xf]
        %v2941 = vld [vmem:[#allocation2 + $0xfc] sm:$0xf]
        %v2942 = vld [vmem:[#allocation3 + $0xc] sm:$0xf]
        %v2943 = vld [vmem:[#allocation3 + $0x1c] sm:$0xf]
        %v2944 = vld [vmem:[#allocation3 + $0x2c] sm:$0xf]
        %v2945 = vld [vmem:[#allocation3 + $0x3c] sm:$0xf]
        %v2946 = vld [vmem:[#allocation3 + $0x4c] sm:$0xf]
        %v2947 = vld [vmem:[#allocation3 + $0x5c] sm:$0xf]
        %v2948 = vld [vmem:[#allocation3 + $0x6c] sm:$0xf]
        %v2949 = vld [vmem:[#allocation3 + $0x7c] sm:$0xf]
        %v2950 = vld [vmem:[#allocation3 + $0x8c] sm:$0xf]
        %v2951 = vld [vmem:[#allocation3 + $0x9c] sm:$0xf]
        %v2952 = vld [vmem:[#allocation3 + $0xac] sm:$0xf]
        %v2953 = vld [vmem:[#allocation3 + $0xbc] sm:$0xf]
        %v2954 = vld [vmem:[#allocation3 + $0xcc] sm:$0xf]
        %v2955 = vld [vmem:[#allocation3 + $0xdc] sm:$0xf]
        %v2956 = vld [vmem:[#allocation3 + $0xec] sm:$0xf]
        %v2957 = vld [vmem:[#allocation3 + $0xfc] sm:$0xf]
        %v2974 = vunpack.c.l.b16 %v2926
        %v2975 = vunpack.c.l.b16 %v2927
        %v2976 = vunpack.c.l.b16 %v2928
        %v2977 = vunpack.c.l.b16 %v2929
        %v2978 = vunpack.c.l.b16 %v2930
        %v2979 = vunpack.c.l.b16 %v2931
        %v2980 = vunpack.c.l.b16 %v2932
        %v2981 = vunpack.c.l.b16 %v2933
        %v2982 = vunpack.c.l.b16 %v2934
        %v2983 = vunpack.c.l.b16 %v2935
        %v2984 = vunpack.c.l.b16 %v2936
        %v2985 = vunpack.c.l.b16 %v2937
        %v2986 = vunpack.c.l.b16 %v2938
        %v2987 = vunpack.c.l.b16 %v2939
        %v2988 = vunpack.c.l.b16 %v2940
        %v2989 = vunpack.c.l.b16 %v2941
        %v2990 = vpack.c.b16 %v2975, %v2974
        %v2991 = vpack.c.b16 %v2977, %v2976
        %v2992 = vpack.c.b16 %v2979, %v2978
        %v2993 = vpack.c.b16 %v2981, %v2980
        %v2994 = vpack.c.b16 %v2983, %v2982
        %v2995 = vpack.c.b16 %v2985, %v2984
        %v2996 = vpack.c.b16 %v2987, %v2986
        %v2997 = vpack.c.b16 %v2989, %v2988
        %3006 = vmatprep.subr.bf16.mxu0 0
        %3007 = vmatpush1.bf16.xpose.msra.mxu0 %v2997
        %3008 = vmatprep.subr.bf16.mxu0 0
        %3009 = vmatpush1.bf16.xpose.msra.mxu0 %v2996
        %3010 = vmatprep.subr.bf16.mxu0 0
        %3011 = vmatpush1.bf16.xpose.msra.mxu0 %v2995
        %3012 = vmatprep.subr.bf16.mxu0 0
        %3013 = vmatpush1.bf16.xpose.msra.mxu0 %v2994
        %3014 = vmatprep.subr.bf16.mxu0 0
        %3015 = vmatpush1.bf16.xpose.msra.mxu0 %v2993
        %3016 = vmatprep.subr.bf16.mxu0 0
        %3017 = vmatpush1.bf16.xpose.msra.mxu0 %v2992
        %3018 = vmatprep.subr.bf16.mxu0 0
        %3019 = vmatpush1.bf16.xpose.msra.mxu0 %v2991
        %3020 = vmatprep.subr.bf16.mxu0 0
        %3021 = vmatpush1.bf16.xpose.msra.mxu0 %v2990
        %3022 = vmatprep.subr.bf16.mxu0 0
        %3023 = vmatpush2.bf16.xpose.msra.mxu0 0
        %3024 = vmatprep.subr.bf16.mxu0 0
        %3025 = vmatpush2.bf16.xpose.msra.mxu0 0
        %3026 = vmatprep.subr.bf16.mxu0 0
        %3027 = vmatpush2.bf16.xpose.msra.mxu0 0
        %3028 = vmatprep.subr.bf16.mxu0 0
        %3029 = vmatpush2.bf16.xpose.msra.mxu0 0
        %3030 = vmatprep.subr.bf16.mxu0 0
        %3031 = vmatpush2.bf16.xpose.msra.mxu0 0
        %3032 = vmatprep.subr.bf16.mxu0 0
        %3033 = vmatpush2.bf16.xpose.msra.mxu0 0
        %3034 = vmatprep.subr.bf16.mxu0 0
        %3035 = vmatpush2.bf16.xpose.msra.mxu0 0
        %3036 = vmatprep.subr.bf16.mxu0 0
        %3037 = vmatpush2.bf16.xpose.msra.mxu0 0
        %3038 = vmatprep.mubr.bf16.mxu0 0
        %3039 = vmatmul.mubr.bf16.gmra.mxu0 %v2204
        %v3040 = vpop.f32.mrf.mxu0
        %v3041 = vadd.f32 %v2208, %v3040
        %v3042 = vpop.f32.mrf.mxu0
        %v3043 = vpop.f32.mrf.mxu0
        %v3044 = vadd.f32 %v2208, %v3043
        %v3045 = vpop.f32.mrf.mxu0
        %3046 = vdwg.mxu0
        %3047 = vmax.xlane.f32.xlu0 %v3041
        %v3048 = vpop.xlane.xlu0 %3047
        %3049 = vmax.xlane.f32.xlu0 %v3044
        %v3050 = vpop.xlane.xlu0 %3049
        %v3051 = vsub.f32 %v3041, %v3048
        %v3052 = vsub.f32 %v3044, %v3050
        %v3053 = vmul.f32 %v3051, 1.442695
        %v3054 = vpow.pop %v3053
        %v3055 = vmul.f32 %v3052, 1.442695
        %v3056 = vpow.pop %v3055
        %3057 = vadd.xlane.f32.xlu0 %v3054
        %v3058 = vpop.xlane.xlu0 %3057
        %3059 = vadd.xlane.f32.xlu0 %v3056
        %v3060 = vpop.xlane.xlu0 %3059
        %v3061 = vpack.c.bf16 %v3056, %v3054
        %v3078 = vunpack.c.l.b16 %v2942
        %v3079 = vunpack.c.l.b16 %v2943
        %v3080 = vunpack.c.l.b16 %v2944
        %v3081 = vunpack.c.l.b16 %v2945
        %v3082 = vunpack.c.l.b16 %v2946
        %v3083 = vunpack.c.l.b16 %v2947
        %v3084 = vunpack.c.l.b16 %v2948
        %v3085 = vunpack.c.l.b16 %v2949
        %v3086 = vunpack.c.l.b16 %v2950
        %v3087 = vunpack.c.l.b16 %v2951
        %v3088 = vunpack.c.l.b16 %v2952
        %v3089 = vunpack.c.l.b16 %v2953
        %v3090 = vunpack.c.l.b16 %v2954
        %v3091 = vunpack.c.l.b16 %v2955
        %v3092 = vunpack.c.l.b16 %v2956
        %v3093 = vunpack.c.l.b16 %v2957
        %v3094 = vpack.c.b16 %v3079, %v3078
        %v3095 = vpack.c.b16 %v3081, %v3080
        %v3096 = vpack.c.b16 %v3083, %v3082
        %v3097 = vpack.c.b16 %v3085, %v3084
        %v3098 = vpack.c.b16 %v3087, %v3086
        %v3099 = vpack.c.b16 %v3089, %v3088
        %v3100 = vpack.c.b16 %v3091, %v3090
        %v3101 = vpack.c.b16 %v3093, %v3092
        %3110 = vmatprep.subr.bf16.mxu0 0
        %3111 = vmatpush1.bf16.msra.mxu0 %v3101
        %3112 = vmatprep.subr.bf16.mxu0 0
        %3113 = vmatpush1.bf16.msra.mxu0 %v3100
        %3114 = vmatprep.subr.bf16.mxu0 0
        %3115 = vmatpush1.bf16.msra.mxu0 %v3099
        %3116 = vmatprep.subr.bf16.mxu0 0
        %3117 = vmatpush1.bf16.msra.mxu0 %v3098
        %3118 = vmatprep.subr.bf16.mxu0 0
        %3119 = vmatpush1.bf16.msra.mxu0 %v3097
        %3120 = vmatprep.subr.bf16.mxu0 0
        %3121 = vmatpush1.bf16.msra.mxu0 %v3096
        %3122 = vmatprep.subr.bf16.mxu0 0
        %3123 = vmatpush1.bf16.msra.mxu0 %v3095
        %3124 = vmatprep.subr.bf16.mxu0 0
        %3125 = vmatpush1.bf16.msra.mxu0 %v3094
        %3126 = vmatprep.subr.bf16.mxu0 0
        %3127 = vmatpush2.bf16.msra.mxu0 0
        %3128 = vmatprep.subr.bf16.mxu0 0
        %3129 = vmatpush2.bf16.msra.mxu0 0
        %3130 = vmatprep.subr.bf16.mxu0 0
        %3131 = vmatpush2.bf16.msra.mxu0 0
        %3132 = vmatprep.subr.bf16.mxu0 0
        %3133 = vmatpush2.bf16.msra.mxu0 0
        %3134 = vmatprep.subr.bf16.mxu0 0
        %3135 = vmatpush2.bf16.msra.mxu0 0
        %3136 = vmatprep.subr.bf16.mxu0 0
        %3137 = vmatpush2.bf16.msra.mxu0 0
        %3138 = vmatprep.subr.bf16.mxu0 0
        %3139 = vmatpush2.bf16.msra.mxu0 0
        %3140 = vmatprep.subr.bf16.mxu0 0
        %3141 = vmatpush2.bf16.msra.mxu0 0
        %3142 = vmatprep.mubr.bf16.mxu0 0
        %3143 = vmatmul.mubr.bf16.gmra.mxu0 %v3061
        %v3144 = vpop.f32.mrf.mxu0
        %v3145 = vadd.f32 0.0, %v3144
        %v3146 = vpop.f32.mrf.mxu0
        %v3147 = vpop.f32.mrf.mxu0
        %v3148 = vadd.f32 0.0, %v3147
        %v3149 = vpop.f32.mrf.mxu0
        %3150 = vdwg.mxu0
        %v3151 = vrcp.pop %v3058
        %v3152 = vrcp.pop %v3060
        %v3153 = vmul.f32 %v3145, %v3151
        %v3154 = vmul.f32 %v3148, %v3152
        %v3155 = vpack.c.bf16 %v3154, %v3153
        %v3157 = vunpack.c.l.b16 %v3155
        %v3158 = vunpack.c.h.b16 %v3155
        %v3159 = vpack.c.b16 %v3157, %v3157
        %v3160 = vpack.c.b16 %v3158, %v3158
        %3163 = vst [vmem:[#allocation4 + $0xc] sm:$0xf] %v3159
        %3164 = vst [vmem:[#allocation4 + $0x1c] sm:$0xf] %v3160
        %v3165 = vld [vmem:[#allocation4] sm:$0xff]
        %v3166 = vld [vmem:[#allocation4 + $0x8] sm:$0xff]
        %v3167 = vld [vmem:[#allocation4 + $0x10] sm:$0xff]
        %v3168 = vld [vmem:[#allocation4 + $0x18] sm:$0xff]
        %v3169 = vld [vmem:[#allocation14] sm:$0xf]
        %v3170 = vld [vmem:[#allocation14 + $0x4] sm:$0xf]
        %v3171 = vld [vmem:[#allocation14 + $0x8] sm:$0xf]
        %v3172 = vld [vmem:[#allocation14 + $0xc] sm:$0xf]
        %v3173 = vld [vmem:[#allocation14 + $0x10] sm:$0xf]
        %v3174 = vld [vmem:[#allocation14 + $0x14] sm:$0xf]
        %v3175 = vld [vmem:[#allocation14 + $0x18] sm:$0xf]
        %v3176 = vld [vmem:[#allocation14 + $0x1c] sm:$0xf]
        %v3177 = vld [vmem:[#allocation14 + $0x20] sm:$0xf]
        %v3178 = vld [vmem:[#allocation14 + $0x24] sm:$0xf]
        %v3179 = vld [vmem:[#allocation14 + $0x28] sm:$0xf]
        %v3180 = vld [vmem:[#allocation14 + $0x2c] sm:$0xf]
        %v3181 = vld [vmem:[#allocation14 + $0x30] sm:$0xf]
        %v3182 = vld [vmem:[#allocation14 + $0x34] sm:$0xf]
        %v3183 = vld [vmem:[#allocation14 + $0x38] sm:$0xf]
        %v3184 = vld [vmem:[#allocation14 + $0x3c] sm:$0xf]
        %v3185 = vld [vmem:[#allocation14 + $0x40] sm:$0xf]
        %v3186 = vld [vmem:[#allocation14 + $0x44] sm:$0xf]
        %v3187 = vld [vmem:[#allocation14 + $0x48] sm:$0xf]
        %v3188 = vld [vmem:[#allocation14 + $0x4c] sm:$0xf]
        %v3189 = vld [vmem:[#allocation14 + $0x50] sm:$0xf]
        %v3190 = vld [vmem:[#allocation14 + $0x54] sm:$0xf]
        %v3191 = vld [vmem:[#allocation14 + $0x58] sm:$0xf]
        %v3192 = vld [vmem:[#allocation14 + $0x5c] sm:$0xf]
        %v3193 = vld [vmem:[#allocation14 + $0x60] sm:$0xf]
        %v3194 = vld [vmem:[#allocation14 + $0x64] sm:$0xf]
        %v3195 = vld [vmem:[#allocation14 + $0x68] sm:$0xf]
        %v3196 = vld [vmem:[#allocation14 + $0x6c] sm:$0xf]
        %v3197 = vld [vmem:[#allocation14 + $0x70] sm:$0xf]
        %v3198 = vld [vmem:[#allocation14 + $0x74] sm:$0xf]
        %v3199 = vld [vmem:[#allocation14 + $0x78] sm:$0xf]
        %v3200 = vld [vmem:[#allocation14 + $0x7c] sm:$0xf]
        %v3201 = vld [vmem:[#allocation14 + $0x80] sm:$0xf]
        %v3202 = vld [vmem:[#allocation14 + $0x84] sm:$0xf]
        %v3203 = vld [vmem:[#allocation14 + $0x88] sm:$0xf]
        %v3204 = vld [vmem:[#allocation14 + $0x8c] sm:$0xf]
        %v3205 = vld [vmem:[#allocation14 + $0x90] sm:$0xf]
        %v3206 = vld [vmem:[#allocation14 + $0x94] sm:$0xf]
        %v3207 = vld [vmem:[#allocation14 + $0x98] sm:$0xf]
        %v3208 = vld [vmem:[#allocation14 + $0x9c] sm:$0xf]
        %v3209 = vld [vmem:[#allocation14 + $0xa0] sm:$0xf]
        %v3210 = vld [vmem:[#allocation14 + $0xa4] sm:$0xf]
        %v3211 = vld [vmem:[#allocation14 + $0xa8] sm:$0xf]
        %v3212 = vld [vmem:[#allocation14 + $0xac] sm:$0xf]
        %v3213 = vld [vmem:[#allocation14 + $0xb0] sm:$0xf]
        %v3214 = vld [vmem:[#allocation14 + $0xb4] sm:$0xf]
        %v3215 = vld [vmem:[#allocation14 + $0xb8] sm:$0xf]
        %v3216 = vld [vmem:[#allocation14 + $0xbc] sm:$0xf]
        %v3217 = vld [vmem:[#allocation14 + $0xc0] sm:$0xf]
        %v3218 = vld [vmem:[#allocation14 + $0xc4] sm:$0xf]
        %v3219 = vld [vmem:[#allocation14 + $0xc8] sm:$0xf]
        %v3220 = vld [vmem:[#allocation14 + $0xcc] sm:$0xf]
        %v3221 = vld [vmem:[#allocation14 + $0xd0] sm:$0xf]
        %v3222 = vld [vmem:[#allocation14 + $0xd4] sm:$0xf]
        %v3223 = vld [vmem:[#allocation14 + $0xd8] sm:$0xf]
        %v3224 = vld [vmem:[#allocation14 + $0xdc] sm:$0xf]
        %v3225 = vld [vmem:[#allocation14 + $0xe0] sm:$0xf]
        %v3226 = vld [vmem:[#allocation14 + $0xe4] sm:$0xf]
        %v3227 = vld [vmem:[#allocation14 + $0xe8] sm:$0xf]
        %v3228 = vld [vmem:[#allocation14 + $0xec] sm:$0xf]
        %v3229 = vld [vmem:[#allocation14 + $0xf0] sm:$0xf]
        %v3230 = vld [vmem:[#allocation14 + $0xf4] sm:$0xf]
        %v3231 = vld [vmem:[#allocation14 + $0xf8] sm:$0xf]
        %v3232 = vld [vmem:[#allocation14 + $0xfc] sm:$0xf]
        %v3233 = vld [vmem:[%s9] sm:$0x1]
        %v3235 = vlaneseq
        %v3236 = vshrl.u32 %v3235, 7
        %v3237 = vsub.s32 0, %v3236
        %v3238 = vrot.slane %v3233, %v3237
        %v3244 = vunpack.c.l.b16 %v3165
        %v3245 = vunpack.c.h.b16 %v3165
        %v3246 = vunpack.c.l.b16 %v3166
        %v3247 = vunpack.c.h.b16 %v3166
        %v3248 = vunpack.c.l.b16 %v3167
        %v3249 = vunpack.c.h.b16 %v3167
        %v3250 = vunpack.c.l.b16 %v3168
        %v3251 = vunpack.c.h.b16 %v3168
        %v3252 = vpack.c.b16 %v3248, %v3244
        %v3253 = vpack.c.b16 %v3249, %v3245
        %v3254 = vpack.c.b16 %v3250, %v3246
        %v3255 = vpack.c.b16 %v3251, %v3247
        %v3324 = vunpack.c.l.b16 %v3169
        %v3325 = vunpack.c.l.b16 %v3170
        %v3326 = vunpack.c.l.b16 %v3171
        %v3327 = vunpack.c.l.b16 %v3172
        %v3328 = vunpack.c.l.b16 %v3173
        %v3329 = vunpack.c.l.b16 %v3174
        %v3330 = vunpack.c.l.b16 %v3175
        %v3331 = vunpack.c.l.b16 %v3176
        %v3332 = vunpack.c.l.b16 %v3177
        %v3333 = vunpack.c.l.b16 %v3178
        %v3334 = vunpack.c.l.b16 %v3179
        %v3335 = vunpack.c.l.b16 %v3180
        %v3336 = vunpack.c.l.b16 %v3181
        %v3337 = vunpack.c.l.b16 %v3182
        %v3338 = vunpack.c.l.b16 %v3183
        %v3339 = vunpack.c.l.b16 %v3184
        %v3340 = vunpack.c.l.b16 %v3185
        %v3341 = vunpack.c.l.b16 %v3186
        %v3342 = vunpack.c.l.b16 %v3187
        %v3343 = vunpack.c.l.b16 %v3188
        %v3344 = vunpack.c.l.b16 %v3189
        %v3345 = vunpack.c.l.b16 %v3190
        %v3346 = vunpack.c.l.b16 %v3191
        %v3347 = vunpack.c.l.b16 %v3192
        %v3348 = vunpack.c.l.b16 %v3193
        %v3349 = vunpack.c.l.b16 %v3194
        %v3350 = vunpack.c.l.b16 %v3195
        %v3351 = vunpack.c.l.b16 %v3196
        %v3352 = vunpack.c.l.b16 %v3197
        %v3353 = vunpack.c.l.b16 %v3198
        %v3354 = vunpack.c.l.b16 %v3199
        %v3355 = vunpack.c.l.b16 %v3200
        %v3356 = vunpack.c.l.b16 %v3201
        %v3357 = vunpack.c.l.b16 %v3202
        %v3358 = vunpack.c.l.b16 %v3203
        %v3359 = vunpack.c.l.b16 %v3204
        %v3360 = vunpack.c.l.b16 %v3205
        %v3361 = vunpack.c.l.b16 %v3206
        %v3362 = vunpack.c.l.b16 %v3207
        %v3363 = vunpack.c.l.b16 %v3208
        %v3364 = vunpack.c.l.b16 %v3209
        %v3365 = vunpack.c.l.b16 %v3210
        %v3366 = vunpack.c.l.b16 %v3211
        %v3367 = vunpack.c.l.b16 %v3212
        %v3368 = vunpack.c.l.b16 %v3213
        %v3369 = vunpack.c.l.b16 %v3214
        %v3370 = vunpack.c.l.b16 %v3215
        %v3371 = vunpack.c.l.b16 %v3216
        %v3372 = vunpack.c.l.b16 %v3217
        %v3373 = vunpack.c.l.b16 %v3218
        %v3374 = vunpack.c.l.b16 %v3219
        %v3375 = vunpack.c.l.b16 %v3220
        %v3376 = vunpack.c.l.b16 %v3221
        %v3377 = vunpack.c.l.b16 %v3222
        %v3378 = vunpack.c.l.b16 %v3223
        %v3379 = vunpack.c.l.b16 %v3224
        %v3380 = vunpack.c.l.b16 %v3225
        %v3381 = vunpack.c.l.b16 %v3226
        %v3382 = vunpack.c.l.b16 %v3227
        %v3383 = vunpack.c.l.b16 %v3228
        %v3384 = vunpack.c.l.b16 %v3229
        %v3385 = vunpack.c.l.b16 %v3230
        %v3386 = vunpack.c.l.b16 %v3231
        %v3387 = vunpack.c.l.b16 %v3232
        %v3388 = vpack.c.b16 %v3325, %v3324
        %v3389 = vpack.c.b16 %v3327, %v3326
        %v3390 = vpack.c.b16 %v3329, %v3328
        %v3391 = vpack.c.b16 %v3331, %v3330
        %v3392 = vpack.c.b16 %v3333, %v3332
        %v3393 = vpack.c.b16 %v3335, %v3334
        %v3394 = vpack.c.b16 %v3337, %v3336
        %v3395 = vpack.c.b16 %v3339, %v3338
        %v3396 = vpack.c.b16 %v3341, %v3340
        %v3397 = vpack.c.b16 %v3343, %v3342
        %v3398 = vpack.c.b16 %v3345, %v3344
        %v3399 = vpack.c.b16 %v3347, %v3346
        %v3400 = vpack.c.b16 %v3349, %v3348
        %v3401 = vpack.c.b16 %v3351, %v3350
        %v3402 = vpack.c.b16 %v3353, %v3352
        %v3403 = vpack.c.b16 %v3355, %v3354
        %v3404 = vpack.c.b16 %v3357, %v3356
        %v3405 = vpack.c.b16 %v3359, %v3358
        %v3406 = vpack.c.b16 %v3361, %v3360
        %v3407 = vpack.c.b16 %v3363, %v3362
        %v3408 = vpack.c.b16 %v3365, %v3364
        %v3409 = vpack.c.b16 %v3367, %v3366
        %v3410 = vpack.c.b16 %v3369, %v3368
        %v3411 = vpack.c.b16 %v3371, %v3370
        %v3412 = vpack.c.b16 %v3373, %v3372
        %v3413 = vpack.c.b16 %v3375, %v3374
        %v3414 = vpack.c.b16 %v3377, %v3376
        %v3415 = vpack.c.b16 %v3379, %v3378
        %v3416 = vpack.c.b16 %v3381, %v3380
        %v3417 = vpack.c.b16 %v3383, %v3382
        %v3418 = vpack.c.b16 %v3385, %v3384
        %v3419 = vpack.c.b16 %v3387, %v3386
        %3452 = vmatprep.subr.bf16.mxu0 0
        %3453 = vmatpush1.bf16.msra.mxu0 %v3395
        %3454 = vmatprep.subr.bf16.mxu0 0
        %3455 = vmatpush1.bf16.msra.mxu0 %v3394
        %3456 = vmatprep.subr.bf16.mxu0 0
        %3457 = vmatpush1.bf16.msra.mxu0 %v3393
        %3458 = vmatprep.subr.bf16.mxu0 0
        %3459 = vmatpush1.bf16.msra.mxu0 %v3392
        %3460 = vmatprep.subr.bf16.mxu0 0
        %3461 = vmatpush1.bf16.msra.mxu0 %v3391
        %3462 = vmatprep.subr.bf16.mxu0 0
        %3463 = vmatpush1.bf16.msra.mxu0 %v3390
        %3464 = vmatprep.subr.bf16.mxu0 0
        %3465 = vmatpush1.bf16.msra.mxu0 %v3389
        %3466 = vmatprep.subr.bf16.mxu0 0
        %3467 = vmatpush1.bf16.msra.mxu0 %v3388
        %3468 = vmatprep.subr.bf16.mxu0 0
        %3469 = vmatpush2.bf16.msra.mxu0 %v3403
        %3470 = vmatprep.subr.bf16.mxu0 0
        %3471 = vmatpush2.bf16.msra.mxu0 %v3402
        %3472 = vmatprep.subr.bf16.mxu0 0
        %3473 = vmatpush2.bf16.msra.mxu0 %v3401
        %3474 = vmatprep.subr.bf16.mxu0 0
        %3475 = vmatpush2.bf16.msra.mxu0 %v3400
        %3476 = vmatprep.subr.bf16.mxu0 0
        %3477 = vmatpush2.bf16.msra.mxu0 %v3399
        %3478 = vmatprep.subr.bf16.mxu0 0
        %3479 = vmatpush2.bf16.msra.mxu0 %v3398
        %3480 = vmatprep.subr.bf16.mxu0 0
        %3481 = vmatpush2.bf16.msra.mxu0 %v3397
        %3482 = vmatprep.subr.bf16.mxu0 0
        %3483 = vmatpush2.bf16.msra.mxu0 %v3396
        %3484 = vmatprep.mubr.bf16.mxu0 %v3253
        %3485 = vmatmul.mubr.bf16.gmra.mxu0 %v3252
        %v3486 = vpop.f32.mrf.mxu0
        %v3487 = vadd.f32 %v3238, %v3486
        %v3488 = vpop.f32.mrf.mxu0
        %v3489 = vpop.f32.mrf.mxu0
        %v3490 = vadd.f32 %v3238, %v3489
        %v3491 = vpop.f32.mrf.mxu0
        %3492 = vdwg.mxu0
        %3493 = vmatprep.subr.bf16.mxu0 0
        %3494 = vmatpush1.bf16.msra.mxu0 %v3411
        %3495 = vmatprep.subr.bf16.mxu0 0
        %3496 = vmatpush1.bf16.msra.mxu0 %v3410
        %3497 = vmatprep.subr.bf16.mxu0 0
        %3498 = vmatpush1.bf16.msra.mxu0 %v3409
        %3499 = vmatprep.subr.bf16.mxu0 0
        %3500 = vmatpush1.bf16.msra.mxu0 %v3408
        %3501 = vmatprep.subr.bf16.mxu0 0
        %3502 = vmatpush1.bf16.msra.mxu0 %v3407
        %3503 = vmatprep.subr.bf16.mxu0 0
        %3504 = vmatpush1.bf16.msra.mxu0 %v3406
        %3505 = vmatprep.subr.bf16.mxu0 0
        %3506 = vmatpush1.bf16.msra.mxu0 %v3405
        %3507 = vmatprep.subr.bf16.mxu0 0
        %3508 = vmatpush1.bf16.msra.mxu0 %v3404
        %3509 = vmatprep.subr.bf16.mxu0 0
        %3510 = vmatpush2.bf16.msra.mxu0 %v3419
        %3511 = vmatprep.subr.bf16.mxu0 0
        %3512 = vmatpush2.bf16.msra.mxu0 %v3418
        %3513 = vmatprep.subr.bf16.mxu0 0
        %3514 = vmatpush2.bf16.msra.mxu0 %v3417
        %3515 = vmatprep.subr.bf16.mxu0 0
        %3516 = vmatpush2.bf16.msra.mxu0 %v3416
        %3517 = vmatprep.subr.bf16.mxu0 0
        %3518 = vmatpush2.bf16.msra.mxu0 %v3415
        %3519 = vmatprep.subr.bf16.mxu0 0
        %3520 = vmatpush2.bf16.msra.mxu0 %v3414
        %3521 = vmatprep.subr.bf16.mxu0 0
        %3522 = vmatpush2.bf16.msra.mxu0 %v3413
        %3523 = vmatprep.subr.bf16.mxu0 0
        %3524 = vmatpush2.bf16.msra.mxu0 %v3412
        %3525 = vmatprep.mubr.bf16.mxu0 %v3255
        %3526 = vmatmul.mubr.bf16.gmra.mxu0 %v3254
        %v3527 = vpop.f32.mrf.mxu0
        %v3528 = vadd.f32 %v3487, %v3527
        %v3529 = vpop.f32.mrf.mxu0
        %v3530 = vpop.f32.mrf.mxu0
        %v3531 = vadd.f32 %v3490, %v3530
        %v3532 = vpop.f32.mrf.mxu0
        %3533 = vdwg.mxu0
        %3534 = vst [vmem:[%s493] sm:$0xff] %v3528
        %3535 = vst [vmem:[%s493 + $0x8] sm:$0xff] %v3531
        %s3536 = sand.u32 %s276, 1
        %s3537 = scalar_lea.sflag [#allocation7], %s3536
        %s3538 = sand.u32 %s276, 1
        %s3539 = smul.addr %s3538, 16
        %s3540 = scalar_lea.vmem [#allocation16], %s3539
        // Predicated region
        $region89: #{tpu_custom_call.1} parent=59 // pred_check
          %p3541 = pneg %p286
        $region90: #{tpu_custom_call.1} parent=59 // pred_check_branch
          %3543 = sbr.rel (%p3541) target = $region92
        $region91: #{tpu_custom_call.1} parent=59 // pred_region
          %s3544 = smul.u32 2, %s37
          %s3546 = ssub.s32 256, 256
          %3547 = vsyncadd %s3537, %s3546
          %s3548 = smul.addr %s36, 2
          %s3549 = sadd.s32 %s3544, %s3548
          %s3550 = smul.addr %s3549, 128
          %s3551 = scalar_lea.hbm %s10, %s3550
          %s3552 = sshll.u32 %s3540, 4
          %s3553 = int_to_ptr.vmem [resolvable:$true] %s3552
          %3558 = dma.vmem_to_hbm [thread:$0]  %s3553, 256, %s3551, %s3537, 128, 128, 8
        $region92: #{tpu_custom_call.1} parent=59 // pred_fallthru
          _
      $region60: #{tpu_custom_call.1} parent=5 // pred_fallthru
        _
      %p3559 = scmp.le.s32.totalorder 2, %s27
      // Predicated region
      $region93: #{tpu_custom_call.1} parent=5 // pred_check
        %p3560 = pneg %p3559
      $region94: #{tpu_custom_call.1} parent=5 // pred_check_branch
        %3562 = sbr.rel (%p3560) target = $region96
      $region95: #{tpu_custom_call.1} parent=5 // pred_region
        %s3563 = ssub.s32 %s27, 2
        // Predicated region
        $region97: #{tpu_custom_call.1} parent=95 // pred_check
          %p3564 = pneg %p292
        $region98: #{tpu_custom_call.1} parent=95 // pred_check_branch
          %3566 = sbr.rel (%p3564) target = $region100
        $region99: #{tpu_custom_call.1} parent=95 // pred_region
          %s3567 = sand.u32 %s277, 1
          %s3568 = scalar_lea.sflag [#allocation7], %s3567
          %s3569 = sand.u32 %s277, 1
          %s3570 = smul.addr %s3569, 16
          %s3571 = scalar_lea.vmem [#allocation16], %s3570
          %3572 = dma.done %s3568, 256
        $region100: #{tpu_custom_call.1} parent=95 // pred_fallthru
          _
      $region96: #{tpu_custom_call.1} parent=5 // pred_fallthru
        _
    $region6: #{tpu_custom_call.1} parent=1 // loop_footer
      %s31 = sadd.s32 1, %s27
    $region7: #{tpu_custom_call.1} parent=1 // loop_footer_branch
      %26 = sbr.rel target = $region3
    $region8: #{tpu_custom_call.1} parent=1 // loop_exit
      _
    %3573 = vsyncpa [#allocation6], 1
    %s3574 = scalar_lea.sflag [#allocation6], 1
    %3575 = vsyncpa %s3574, 1
    %3576 = vsyncpa [#allocation9], 1
    %s3577 = scalar_lea.sflag [#allocation9], 1
    %3578 = vsyncpa %s3577, 1
    %3579 = vsyncpa [#allocation12], 1
    %3580 = vsyncpa [#allocation15], 1
    %3581 = vsyncpa [#allocation7], 1
    %s3582 = scalar_lea.sflag [#allocation7], 1
    %3583 = vsyncpa %s3582, 1

// kernel: tpu_custom_call.1
$region0: #{tpu_custom_call.1}
  #allocation0 [shape = 'u32[]', space=smem, size = 0x4, offset = 0x4, fixed_abs, tag = 'smem constant byte address 0x4 - core index']
  #allocation1 [shape = 'u32[144,128]{1,0:T(1,128)}', space=vmem, size = 0x12000, scoped, tag = 'internal scratch']
  #allocation2 [shape = 'bf16[128,512]{1,0:T(8,128)(2,1)}', space=vmem, size = 0x20000, scoped, tag = 'scratch operand']
  #allocation3 [shape = 'bf16[128,512]{1,0:T(8,128)(2,1)}', space=vmem, size = 0x20000, scoped, tag = 'scratch operand']
  #allocation4 [shape = 'bf16[16,512]{1,0:T(8,128)(2,1)}', space=vmem, size = 0x4000, scoped, tag = 'scratch operand']
  %s0 = inlined_call_operand.hbm [shape: bf16[2,16,128], index: 0, kind: input, shape index: {}]
  %s1 = inlined_call_operand.hbm [shape: bf16[2,128,128], index: 1, kind: input, shape index: {}]
  %s2 = inlined_call_operand.hbm [shape: bf16[128,512], index: 2, kind: input, shape index: {}]
  %s3 = inlined_call_operand.vmem [shape: f32[1,512], index: 3, kind: input, shape index: {}]
  %s4 = inlined_call_operand.hbm [shape: bf16[128,512], index: 4, kind: input, shape index: {}]
  %s5 = inlined_call_operand.vmem [shape: f32[1,512], index: 5, kind: input, shape index: {}]
  %s6 = inlined_call_operand.hbm [shape: bf16[128,512], index: 6, kind: input, shape index: {}]
  %s7 = inlined_call_operand.vmem [shape: f32[1,512], index: 7, kind: input, shape index: {}]
  %s8 = inlined_call_operand.hbm [shape: bf16[512,128], index: 8, kind: input, shape index: {}]
  %s9 = inlined_call_operand.vmem [shape: f32[1,128], index: 9, kind: input, shape index: {}]
  %s10 = inlined_call_operand.hbm [shape: f32[2,16,128], index: 10, kind: output, shape index: {}]
  %s11 = sld [smem:[#allocation0]]
  $region101: #{tpu_custom_call.1} parent=0
    _
  %s13 = ssub.s32 1, %s11
  %s14 = scalar_select 0, %s13, %s11
  $region1: #{tpu_custom_call.1} parent=0
    #allocation5 [shape = 'u8[8192]{0}', space=vmem, size = 0x2000, scoped, tag = 'input window, operand 0']
    #allocation6 [shape = 's32[2]{0}', space=sflag, size = 0x8, scoped, tag = 'scoped memory for tpu_custom_call.1']
    #allocation7 [shape = 's32[2]{0}', space=sflag, size = 0x8, scoped, tag = 'scoped memory for tpu_custom_call.1']
    #allocation8 [shape = 'u8[65536]{0}', space=vmem, size = 0x10000, scoped, tag = 'input window, operand 1']
    #allocation9 [shape = 's32[2]{0}', space=sflag, size = 0x8, scoped, tag = 'scoped memory for tpu_custom_call.1']
    #allocation10 [shape = 'u8[131072]{0}', space=vmem, size = 0x20000, scoped, tag = 'input window, operand 2, single buffered']
    #allocation11 [shape = 'u8[131072]{0}', space=vmem, size = 0x20000, scoped, tag = 'input window, operand 4, single buffered']
    #allocation12 [shape = 's32[1]{0}', space=sflag, size = 0x4, scoped, tag = 'scoped memory for tpu_custom_call.1']
    #allocation13 [shape = 'u8[131072]{0}', space=vmem, size = 0x20000, scoped, tag = 'input window, operand 6, single buffered']
    #allocation14 [shape = 'u8[131072]{0}', space=vmem, size = 0x20000, scoped, tag = 'input window, operand 8, single buffered']
    #allocation15 [shape = 's32[1]{0}', space=sflag, size = 0x4, scoped, tag = 'scoped memory for tpu_custom_call.1']
    #allocation16 [shape = 'u8[16384]{0}', space=vmem, size = 0x4000, scoped, tag = 'output window, operand 0']
    %15 = vsyncpa [#allocation6], 0
    %s16 = scalar_lea.sflag [#allocation6], 1
    %17 = vsyncpa %s16, 0
    %18 = vsyncpa [#allocation9], 0
    %s19 = scalar_lea.sflag [#allocation9], 1
    %20 = vsyncpa %s19, 0
    %21 = vsyncpa [#allocation12], 0
    %22 = vsyncpa [#allocation15], 0
    %23 = vsyncpa [#allocation7], 0
    %s24 = scalar_lea.sflag [#allocation7], 1
    %25 = vsyncpa %s24, 0
    loop: start=0, step=1, limit=4
    $region2: #{tpu_custom_call.1} parent=1 // loop_pre_header
      _
    $region3: #{tpu_custom_call.1} parent=1 // loop_header
      %s27 = sphi 0, %s31
      %p28 = scmp.ge.s32.totalorder %s27, 4
      %s34 = sphi 0, %s46
      %s35 = sphi 0, %s42
      %s36 = sphi 0, %s34
      %s37 = sphi 0, %s35
      %s38 = sphi 0, %s36
      %s39 = sphi 0, %s37
      %s51 = sphi 0, %s53
      %s54 = sphi 0, %s51
      %s55 = sphi 0, %s54
      %s71 = sphi 0, %s55
      %s77 = sphi 0, %s79
      %s80 = sphi 0, %s77
      %s81 = sphi 0, %s80
      %s97 = sphi 0, %s81
      %s101 = sphi 0, %s101
      %s103 = sphi 0, %s101
      %s104 = sphi 0, %s103
      %s118 = sphi 0, %s104
      %s122 = sphi 0, %s122
      %s124 = sphi 0, %s122
      %s125 = sphi 0, %s124
      %s139 = sphi 0, %s125
      %s143 = sphi 0, %s143
      %s145 = sphi 0, %s143
      %s146 = sphi 0, %s145
      %s160 = sphi 0, %s146
      %s164 = sphi 0, %s164
      %s166 = sphi 0, %s164
      %s167 = sphi 0, %s166
      %s181 = sphi 0, %s167
      %s185 = sphi 0, %s185
      %s187 = sphi 0, %s185
      %s188 = sphi 0, %s187
      %s202 = sphi 0, %s188
      %s206 = sphi 0, %s206
      %s208 = sphi 0, %s206
      %s209 = sphi 0, %s208
      %s223 = sphi 0, %s209
      %s227 = sphi 0, %s227
      %s229 = sphi 0, %s227
      %s230 = sphi 0, %s229
      %s244 = sphi 0, %s230
      %s248 = sphi 0, %s248
      %s250 = sphi 0, %s248
      %s251 = sphi 0, %s250
      %s265 = sphi 0, %s251
      %s273 = sphi 0, %s275
      %s276 = sphi 0, %s273
      %s277 = sphi 0, %s276
      %s293 = sphi 0, %s277
    $region4: #{tpu_custom_call.1} parent=1 // loop_header_branch
      %30 = sbr.rel (%p28) target = $region8
    $region5: #{tpu_custom_call.1} parent=1 // loop_body
      %s32 = ssub.s32 %s27, 1
      %s33 = ssub.s32 %s27, 2
      %s40 = sadd.s32 1, %s35
      %p41 = scmp.ge.s32.totalorder %s40, 1
      %s42 = scalar_select %p41, 0, %s40
      %s43 = sadd.s32 1, %s34
      %s44 = scalar_select %p41, %s43, %s34
      %p45 = scmp.ge.s32.totalorder %s44, 2
      %s46 = scalar_select %p45, 0, %s44
      %s47 = ssub.s32 %s34, %s46
      %s48 = ssub.s32 %s35, %s42
      %s49 = sor.u32 %s47, %s48
      %p50 = scmp.eq.s32.totalorder %s49, 0
      %s52 = sadd.s32 %s51, 1
      %s53 = scalar_select %p50, %s51, %s52
      %p56 = pneg %p50
      %p57 = scmp.eq.s32.totalorder %s27, 1
      %p58 = por %p56, %p57
      %p59 = scmp.ne.s32.totalorder %s51, %s54
      %p60 = scmp.eq.s32.totalorder %s27, 0
      %p61 = por %p59, %p60
      %p62 = scmp.ne.s32.totalorder %s51, %s54
      %p63 = scmp.eq.s32.totalorder %s32, 1
      %p64 = por %p62, %p63
      %p65 = scmp.ne.s32.totalorder %s54, %s55
      %p66 = scmp.eq.s32.totalorder %s32, 0
      %p67 = por %p65, %p66
      %p68 = scmp.ne.s32.totalorder %s54, %s55
      %p69 = scmp.eq.s32.totalorder %s33, 1
      %p70 = por %p68, %p69
      %p72 = scmp.ne.s32.totalorder %s55, %s71
      %p73 = scmp.eq.s32.totalorder %s33, 0
      %p74 = por %p72, %p73
      %s75 = ssub.s32 %s34, %s46
      %p76 = scmp.eq.s32.totalorder %s75, 0
      %s78 = sadd.s32 %s77, 1
      %s79 = scalar_select %p76, %s77, %s78
      %p82 = pneg %p76
      %p83 = scmp.eq.s32.totalorder %s27, 1
      %p84 = por %p82, %p83
      %p85 = scmp.ne.s32.totalorder %s77, %s80
      %p86 = scmp.eq.s32.totalorder %s27, 0
      %p87 = por %p85, %p86
      %p88 = scmp.ne.s32.totalorder %s77, %s80
      %p89 = scmp.eq.s32.totalorder %s32, 1
      %p90 = por %p88, %p89
      %p91 = scmp.ne.s32.totalorder %s80, %s81
      %p92 = scmp.eq.s32.totalorder %s32, 0
      %p93 = por %p91, %p92
      %p94 = scmp.ne.s32.totalorder %s80, %s81
      %p95 = scmp.eq.s32.totalorder %s33, 1
      %p96 = por %p94, %p95
      %p98 = scmp.ne.s32.totalorder %s81, %s97
      %p99 = scmp.eq.s32.totalorder %s33, 0
      %p100 = por %p98, %p99
      %s102 = sadd.s32 %s101, 1
      %p105 = scmp.eq.s32.totalorder %s27, 1
      %p106 = scmp.ne.s32.totalorder %s101, %s103
      %p107 = scmp.eq.s32.totalorder %s27, 0
      %p108 = por %p106, %p107
      %p109 = scmp.ne.s32.totalorder %s101, %s103
      %p110 = scmp.eq.s32.totalorder %s32, 1
      %p111 = por %p109, %p110
      %p112 = scmp.ne.s32.totalorder %s103, %s104
      %p113 = scmp.eq.s32.totalorder %s32, 0
      %p114 = por %p112, %p113
      %p115 = scmp.ne.s32.totalorder %s103, %s104
      %p116 = scmp.eq.s32.totalorder %s33, 1
      %p117 = por %p115, %p116
      %p119 = scmp.ne.s32.totalorder %s104, %s118
      %p120 = scmp.eq.s32.totalorder %s33, 0
      %p121 = por %p119, %p120
      %s123 = sadd.s32 %s122, 1
      %p126 = scmp.eq.s32.totalorder %s27, 1
      %p127 = scmp.ne.s32.totalorder %s122, %s124
      %p128 = scmp.eq.s32.totalorder %s27, 0
      %p129 = por %p127, %p128
      %p130 = scmp.ne.s32.totalorder %s122, %s124
      %p131 = scmp.eq.s32.totalorder %s32, 1
      %p132 = por %p130, %p131
      %p133 = scmp.ne.s32.totalorder %s124, %s125
      %p134 = scmp.eq.s32.totalorder %s32, 0
      %p135 = por %p133, %p134
      %p136 = scmp.ne.s32.totalorder %s124, %s125
      %p137 = scmp.eq.s32.totalorder %s33, 1
      %p138 = por %p136, %p137
      %p140 = scmp.ne.s32.totalorder %s125, %s139
      %p141 = scmp.eq.s32.totalorder %s33, 0
      %p142 = por %p140, %p141
      %s144 = sadd.s32 %s143, 1
      %p147 = scmp.eq.s32.totalorder %s27, 1
      %p148 = scmp.ne.s32.totalorder %s143, %s145
      %p149 = scmp.eq.s32.totalorder %s27, 0
      %p150 = por %p148, %p149
      %p151 = scmp.ne.s32.totalorder %s143, %s145
      %p152 = scmp.eq.s32.totalorder %s32, 1
      %p153 = por %p151, %p152
      %p154 = scmp.ne.s32.totalorder %s145, %s146
      %p155 = scmp.eq.s32.totalorder %s32, 0
      %p156 = por %p154, %p155
      %p157 = scmp.ne.s32.totalorder %s145, %s146
      %p158 = scmp.eq.s32.totalorder %s33, 1
      %p159 = por %p157, %p158
      %p161 = scmp.ne.s32.totalorder %s146, %s160
      %p162 = scmp.eq.s32.totalorder %s33, 0
      %p163 = por %p161, %p162
      %s165 = sadd.s32 %s164, 1
      %p168 = scmp.eq.s32.totalorder %s27, 1
      %p169 = scmp.ne.s32.totalorder %s164, %s166
      %p170 = scmp.eq.s32.totalorder %s27, 0
      %p171 = por %p169, %p170
      %p172 = scmp.ne.s32.totalorder %s164, %s166
      %p173 = scmp.eq.s32.totalorder %s32, 1
      %p174 = por %p172, %p173
      %p175 = scmp.ne.s32.totalorder %s166, %s167
      %p176 = scmp.eq.s32.totalorder %s32, 0
      %p177 = por %p175, %p176
      %p178 = scmp.ne.s32.totalorder %s166, %s167
      %p179 = scmp.eq.s32.totalorder %s33, 1
      %p180 = por %p178, %p179
      %p182 = scmp.ne.s32.totalorder %s167, %s181
      %p183 = scmp.eq.s32.totalorder %s33, 0
      %p184 = por %p182, %p183
      %s186 = sadd.s32 %s185, 1
      %p189 = scmp.eq.s32.totalorder %s27, 1
      %p190 = scmp.ne.s32.totalorder %s185, %s187
      %p191 = scmp.eq.s32.totalorder %s27, 0
      %p192 = por %p190, %p191
      %p193 = scmp.ne.s32.totalorder %s185, %s187
      %p194 = scmp.eq.s32.totalorder %s32, 1
      %p195 = por %p193, %p194
      %p196 = scmp.ne.s32.totalorder %s187, %s188
      %p197 = scmp.eq.s32.totalorder %s32, 0
      %p198 = por %p196, %p197
      %p199 = scmp.ne.s32.totalorder %s187, %s188
      %p200 = scmp.eq.s32.totalorder %s33, 1
      %p201 = por %p199, %p200
      %p203 = scmp.ne.s32.totalorder %s188, %s202
      %p204 = scmp.eq.s32.totalorder %s33, 0
      %p205 = por %p203, %p204
      %s207 = sadd.s32 %s206, 1
      %p210 = scmp.eq.s32.totalorder %s27, 1
      %p211 = scmp.ne.s32.totalorder %s206, %s208
      %p212 = scmp.eq.s32.totalorder %s27, 0
      %p213 = por %p211, %p212
      %p214 = scmp.ne.s32.totalorder %s206, %s208
      %p215 = scmp.eq.s32.totalorder %s32, 1
      %p216 = por %p214, %p215
      %p217 = scmp.ne.s32.totalorder %s208, %s209
      %p218 = scmp.eq.s32.totalorder %s32, 0
      %p219 = por %p217, %p218
      %p220 = scmp.ne.s32.totalorder %s208, %s209
      %p221 = scmp.eq.s32.totalorder %s33, 1
      %p222 = por %p220, %p221
      %p224 = scmp.ne.s32.totalorder %s209, %s223
      %p225 = scmp.eq.s32.totalorder %s33, 0
      %p226 = por %p224, %p225
      %s228 = sadd.s32 %s227, 1
      %p231 = scmp.eq.s32.totalorder %s27, 1
      %p232 = scmp.ne.s32.totalorder %s227, %s229
      %p233 = scmp.eq.s32.totalorder %s27, 0
      %p234 = por %p232, %p233
      %p235 = scmp.ne.s32.totalorder %s227, %s229
      %p236 = scmp.eq.s32.totalorder %s32, 1
      %p237 = por %p235, %p236
      %p238 = scmp.ne.s32.totalorder %s229, %s230
      %p239 = scmp.eq.s32.totalorder %s32, 0
      %p240 = por %p238, %p239
      %p241 = scmp.ne.s32.totalorder %s229, %s230
      %p242 = scmp.eq.s32.totalorder %s33, 1
      %p243 = por %p241, %p242
      %p245 = scmp.ne.s32.totalorder %s230, %s244
      %p246 = scmp.eq.s32.totalorder %s33, 0
      %p247 = por %p245, %p246
      %s249 = sadd.s32 %s248, 1
      %p252 = scmp.eq.s32.totalorder %s27, 1
      %p253 = scmp.ne.s32.totalorder %s248, %s250
      %p254 = scmp.eq.s32.totalorder %s27, 0
      %p255 = por %p253, %p254
      %p256 = scmp.ne.s32.totalorder %s248, %s250
      %p257 = scmp.eq.s32.totalorder %s32, 1
      %p258 = por %p256, %p257
      %p259 = scmp.ne.s32.totalorder %s250, %s251
      %p260 = scmp.eq.s32.totalorder %s32, 0
      %p261 = por %p259, %p260
      %p262 = scmp.ne.s32.totalorder %s250, %s251
      %p263 = scmp.eq.s32.totalorder %s33, 1
      %p264 = por %p262, %p263
      %p266 = scmp.ne.s32.totalorder %s251, %s265
      %p267 = scmp.eq.s32.totalorder %s33, 0
      %p268 = por %p266, %p267
      %s269 = ssub.s32 %s34, %s46
      %s270 = ssub.s32 %s35, %s42
      %s271 = sor.u32 %s269, %s270
      %p272 = scmp.eq.s32.totalorder %s271, 0
      %s274 = sadd.s32 %s273, 1
      %s275 = scalar_select %p272, %s273, %s274
      %p278 = pneg %p272
      %p279 = scmp.eq.s32.totalorder %s27, 1
      %p280 = por %p278, %p279
      %p281 = scmp.ne.s32.totalorder %s273, %s276
      %p282 = scmp.eq.s32.totalorder %s27, 0
      %p283 = por %p281, %p282
      %p284 = scmp.ne.s32.totalorder %s273, %s276
      %p285 = scmp.eq.s32.totalorder %s32, 1
      %p286 = por %p284, %p285
      %p287 = scmp.ne.s32.totalorder %s276, %s277
      %p288 = scmp.eq.s32.totalorder %s32, 0
      %p289 = por %p287, %p288
      %p290 = scmp.ne.s32.totalorder %s276, %s277
      %p291 = scmp.eq.s32.totalorder %s33, 1
      %p292 = por %p290, %p291
      %p294 = scmp.ne.s32.totalorder %s277, %s293
      %p295 = scmp.eq.s32.totalorder %s33, 0
      %p296 = por %p294, %p295
      %p297 = scmp.le.s32.totalorder 1, %s27
      %p298 = scmp.lt.s32.totalorder %s27, 3
      %p299 = pnand %p297, %p298
      %p300 = pneg %p299
      // Predicated region
      $region9: #{tpu_custom_call.1} parent=5 // pred_check
        _
      $region10: #{tpu_custom_call.1} parent=5 // pred_check_branch
        %302 = sbr.rel (%p299) target = $region12
      $region11: #{tpu_custom_call.1} parent=5 // pred_region
        %s303 = ssub.s32 %s27, 1
        // Predicated region
        $region13: #{tpu_custom_call.1} parent=11 // pred_check
          %p304 = pneg %p114
        $region14: #{tpu_custom_call.1} parent=11 // pred_check_branch
          %306 = sbr.rel (%p304) target = $region16
        $region15: #{tpu_custom_call.1} parent=11 // pred_region
          %s308 = ssub.s32 4096, 4096
          %309 = vsyncadd [#allocation9], %s308
          %s310 = sshll.u32 [#allocation10], 4
          %s311 = int_to_ptr.vmem [resolvable:$true] %s310
          %316 = dma.hbm_to_vmem [thread:$0]  %s2, 4096, %s311, [#allocation9], 256, 256, 16
        $region16: #{tpu_custom_call.1} parent=11 // pred_fallthru
          _
        // Predicated region
        $region17: #{tpu_custom_call.1} parent=11 // pred_check
          %p317 = pneg %p135
        $region18: #{tpu_custom_call.1} parent=11 // pred_check_branch
          %319 = sbr.rel (%p317) target = $region20
        $region19: #{tpu_custom_call.1} parent=11 // pred_region
          _
        $region20: #{tpu_custom_call.1} parent=11 // pred_fallthru
          _
        // Predicated region
        $region21: #{tpu_custom_call.1} parent=11 // pred_check
          %p320 = pneg %p156
        $region22: #{tpu_custom_call.1} parent=11 // pred_check_branch
          %322 = sbr.rel (%p320) target = $region24
        $region23: #{tpu_custom_call.1} parent=11 // pred_region
          %s324 = ssub.s32 4096, 4096
          %325 = vsyncadd [#allocation12], %s324
          %s326 = sshll.u32 [#allocation11], 4
          %s327 = int_to_ptr.vmem [resolvable:$true] %s326
          %332 = dma.hbm_to_vmem [thread:$0]  %s4, 4096, %s327, [#allocation12], 256, 256, 16
        $region24: #{tpu_custom_call.1} parent=11 // pred_fallthru
          _
        // Predicated region
        $region25: #{tpu_custom_call.1} parent=11 // pred_check
          %p333 = pneg %p177
        $region26: #{tpu_custom_call.1} parent=11 // pred_check_branch
          %335 = sbr.rel (%p333) target = $region28
        $region27: #{tpu_custom_call.1} parent=11 // pred_region
          _
        $region28: #{tpu_custom_call.1} parent=11 // pred_fallthru
          _
        // Predicated region
        $region29: #{tpu_custom_call.1} parent=11 // pred_check
          %p336 = pneg %p198
        $region30: #{tpu_custom_call.1} parent=11 // pred_check_branch
          %338 = sbr.rel (%p336) target = $region32
        $region31: #{tpu_custom_call.1} parent=11 // pred_region
          %s340 = ssub.s32 4096, 4096
          %341 = vsyncadd [#allocation12], %s340
          %s342 = sshll.u32 [#allocation13], 4
          %s343 = int_to_ptr.vmem [resolvable:$true] %s342
          %348 = dma.hbm_to_vmem [thread:$0]  %s6, 4096, %s343, [#allocation12], 256, 256, 16
        $region32: #{tpu_custom_call.1} parent=11 // pred_fallthru
          _
        // Predicated region
        $region33: #{tpu_custom_call.1} parent=11 // pred_check
          %p349 = pneg %p219
        $region34: #{tpu_custom_call.1} parent=11 // pred_check_branch
          %351 = sbr.rel (%p349) target = $region36
        $region35: #{tpu_custom_call.1} parent=11 // pred_region
          _
        $region36: #{tpu_custom_call.1} parent=11 // pred_fallthru
          _
        // Predicated region
        $region37: #{tpu_custom_call.1} parent=11 // pred_check
          %p352 = pneg %p240
        $region38: #{tpu_custom_call.1} parent=11 // pred_check_branch
          %354 = sbr.rel (%p352) target = $region40
        $region39: #{tpu_custom_call.1} parent=11 // pred_region
          %s356 = ssub.s32 4096, 4096
          %357 = vsyncadd [#allocation15], %s356
          %s358 = sshll.u32 [#allocation14], 4
          %s359 = int_to_ptr.vmem [resolvable:$true] %s358
          %364 = dma.hbm_to_vmem [thread:$0]  %s8, 4096, %s359, [#allocation15], 64, 64, 4
        $region40: #{tpu_custom_call.1} parent=11 // pred_fallthru
          _
        // Predicated region
        $region41: #{tpu_custom_call.1} parent=11 // pred_check
          %p365 = pneg %p261
        $region42: #{tpu_custom_call.1} parent=11 // pred_check_branch
          %367 = sbr.rel (%p365) target = $region44
        $region43: #{tpu_custom_call.1} parent=11 // pred_region
          _
        $region44: #{tpu_custom_call.1} parent=11 // pred_fallthru
          _
      $region12: #{tpu_custom_call.1} parent=5 // pred_fallthru
        _
      %p368 = scmp.lt.s32.totalorder %s27, 2
      // Predicated region
      $region45: #{tpu_custom_call.1} parent=5 // pred_check
        %p369 = pneg %p368
      $region46: #{tpu_custom_call.1} parent=5 // pred_check_branch
        %371 = sbr.rel (%p369) target = $region48
      $region47: #{tpu_custom_call.1} parent=5 // pred_region
        // Predicated region
        $region49: #{tpu_custom_call.1} parent=47 // pred_check
          %p372 = pneg %p61
        $region50: #{tpu_custom_call.1} parent=47 // pred_check_branch
          %374 = sbr.rel (%p372) target = $region52
        $region51: #{tpu_custom_call.1} parent=47 // pred_region
          %s375 = sand.u32 %s51, 1
          %s376 = scalar_lea.sflag [#allocation6], %s375
          %s377 = sand.u32 %s51, 1
          %s378 = smul.addr %s377, 8
          %s379 = scalar_lea.vmem [#allocation5], %s378
          %s380 = smul.u32 2, %s35
          %s382 = ssub.s32 128, 128
          %383 = vsyncadd %s376, %s382
          %s384 = smul.addr %s34, 2
          %s385 = sadd.s32 %s380, %s384
          %s386 = smul.addr %s385, 64
          %s387 = scalar_lea.hbm %s0, %s386
          %s388 = sshll.u32 %s379, 4
          %s389 = int_to_ptr.vmem [resolvable:$true] %s388
          %394 = dma.hbm_to_vmem [thread:$0]  %s387, 128, %s389, %s376, 64, 64, 4
        $region52: #{tpu_custom_call.1} parent=47 // pred_fallthru
          _
        // Predicated region
        $region53: #{tpu_custom_call.1} parent=47 // pred_check
          %p395 = pneg %p87
        $region54: #{tpu_custom_call.1} parent=47 // pred_check_branch
          %397 = sbr.rel (%p395) target = $region56
        $region55: #{tpu_custom_call.1} parent=47 // pred_region
          %s398 = sand.u32 %s27, 1
          %s399 = scalar_lea.sflag [#allocation9], %s398
          %s400 = sand.u32 %s77, 1
          %s401 = smul.addr %s400, 64
          %s402 = scalar_lea.vmem [#allocation8], %s401
          %s404 = ssub.s32 1024, 1024
          %405 = vsyncadd %s399, %s404
          %s406 = smul.addr %s34, 16
          %s407 = smul.addr %s406, 64
          %s408 = scalar_lea.hbm %s1, %s407
          %s409 = sshll.u32 %s402, 4
          %s410 = int_to_ptr.vmem [resolvable:$true] %s409
          %415 = dma.hbm_to_vmem [thread:$0]  %s408, 1024, %s410, %s399, 64, 64, 4
        $region56: #{tpu_custom_call.1} parent=47 // pred_fallthru
          _
      $region48: #{tpu_custom_call.1} parent=5 // pred_fallthru
        _
      %p416 = scmp.le.s32.totalorder 1, %s27
      %p417 = scmp.lt.s32.totalorder %s27, 3
      %p418 = pnand %p416, %p417
      %p419 = pneg %p418
      // Predicated region
      $region57: #{tpu_custom_call.1} parent=5 // pred_check
        _
      $region58: #{tpu_custom_call.1} parent=5 // pred_check_branch
        %421 = sbr.rel (%p418) target = $region60
      $region59: #{tpu_custom_call.1} parent=5 // pred_region
        %s422 = ssub.s32 %s27, 1
        %s423 = sand.u32 %s54, 1
        %s424 = scalar_lea.sflag [#allocation6], %s423
        %s425 = sand.u32 %s54, 1
        %s426 = smul.addr %s425, 8
        %s427 = scalar_lea.vmem [#allocation5], %s426
        // Predicated region
        $region61: #{tpu_custom_call.1} parent=59 // pred_check
          %p428 = pneg %p67
        $region62: #{tpu_custom_call.1} parent=59 // pred_check_branch
          %430 = sbr.rel (%p428) target = $region64
        $region63: #{tpu_custom_call.1} parent=59 // pred_region
          %431 = dma.done %s424, 128
        $region64: #{tpu_custom_call.1} parent=59 // pred_fallthru
          _
        %s432 = sand.u32 %s32, 1
        %s433 = scalar_lea.sflag [#allocation9], %s432
        %s434 = sand.u32 %s80, 1
        %s435 = smul.addr %s434, 64
        %s436 = scalar_lea.vmem [#allocation8], %s435
        // Predicated region
        $region65: #{tpu_custom_call.1} parent=59 // pred_check
          %p437 = pneg %p93
        $region66: #{tpu_custom_call.1} parent=59 // pred_check_branch
          %439 = sbr.rel (%p437) target = $region68
        $region67: #{tpu_custom_call.1} parent=59 // pred_region
          %440 = dma.done %s433, 1024
        $region68: #{tpu_custom_call.1} parent=59 // pred_fallthru
          _
        // Predicated region
        $region69: #{tpu_custom_call.1} parent=59 // pred_check
          %p441 = pneg %p114
        $region70: #{tpu_custom_call.1} parent=59 // pred_check_branch
          %443 = sbr.rel (%p441) target = $region72
        $region71: #{tpu_custom_call.1} parent=59 // pred_region
          %444 = dma.done [#allocation9], 4096
        $region72: #{tpu_custom_call.1} parent=59 // pred_fallthru
          _
        // Predicated region
        $region73: #{tpu_custom_call.1} parent=59 // pred_check
          %p445 = pneg %p156
        $region74: #{tpu_custom_call.1} parent=59 // pred_check_branch
          %447 = sbr.rel (%p445) target = $region76
        $region75: #{tpu_custom_call.1} parent=59 // pred_region
          %448 = dma.done [#allocation12], 4096
        $region76: #{tpu_custom_call.1} parent=59 // pred_fallthru
          _
        // Predicated region
        $region77: #{tpu_custom_call.1} parent=59 // pred_check
          %p449 = pneg %p198
        $region78: #{tpu_custom_call.1} parent=59 // pred_check_branch
          %451 = sbr.rel (%p449) target = $region80
        $region79: #{tpu_custom_call.1} parent=59 // pred_region
          %452 = dma.done [#allocation12], 4096
        $region80: #{tpu_custom_call.1} parent=59 // pred_fallthru
          _
        // Predicated region
        $region81: #{tpu_custom_call.1} parent=59 // pred_check
          %p453 = pneg %p240
        $region82: #{tpu_custom_call.1} parent=59 // pred_check_branch
          %455 = sbr.rel (%p453) target = $region84
        $region83: #{tpu_custom_call.1} parent=59 // pred_region
          %456 = dma.done [#allocation15], 4096
        $region84: #{tpu_custom_call.1} parent=59 // pred_fallthru
          _
        %s457 = sand.u32 %s54, 1
        %s458 = scalar_lea.sflag [#allocation6], %s457
        %s459 = sand.u32 %s54, 1
        %s460 = smul.addr %s459, 8
        %s461 = scalar_lea.vmem [#allocation5], %s460
        %p462 = pneg %p67
        %p463 = pneg %p64
        %s464 = sand.u32 %s32, 1
        %s465 = scalar_lea.sflag [#allocation9], %s464
        %s466 = sand.u32 %s80, 1
        %s467 = smul.addr %s466, 64
        %s468 = scalar_lea.vmem [#allocation8], %s467
        %p469 = pneg %p93
        %p470 = pneg %p90
        %p471 = pneg %p114
        %p472 = pneg %p111
        %p473 = pneg %p135
        %p474 = pneg %p132
        %p475 = pneg %p156
        %p476 = pneg %p153
        %p477 = pneg %p177
        %p478 = pneg %p174
        %p479 = pneg %p198
        %p480 = pneg %p195
        %p481 = pneg %p219
        %p482 = pneg %p216
        %p483 = pneg %p240
        %p484 = pneg %p237
        %p485 = pneg %p261
        %p486 = pneg %p258
        %p487 = pneg %p289
        %p488 = pneg %p286
        %s489 = sand.u32 %s276, 1
        %s490 = scalar_lea.sflag [#allocation7], %s489
        %s491 = sand.u32 %s276, 1
        %s492 = smul.addr %s491, 16
        %s493 = scalar_lea.vmem [#allocation16], %s492
        %s494 = smul.u32 2, %s37
        %s495 = smul.u32 2, %s37
        %p497 = scmp.eq.s32.totalorder %s37, 0
        // Predicated region
        $region85: #{tpu_custom_call.1} parent=59 // pred_check
          %p498 = pneg %p497
        $region86: #{tpu_custom_call.1} parent=59 // pred_check_branch
          %500 = sbr.rel (%p498) target = $region88
        $region87: #{tpu_custom_call.1} parent=59 // pred_region
          %v501 = vld [vmem:[%s436] sm:$0xf]
          %v502 = vld [vmem:[%s436 + $0x4] sm:$0xf]
          %v503 = vld [vmem:[%s436 + $0x8] sm:$0xf]
          %v504 = vld [vmem:[%s436 + $0xc] sm:$0xf]
          %v505 = vld [vmem:[%s436 + $0x10] sm:$0xf]
          %v506 = vld [vmem:[%s436 + $0x14] sm:$0xf]
          %v507 = vld [vmem:[%s436 + $0x18] sm:$0xf]
          %v508 = vld [vmem:[%s436 + $0x1c] sm:$0xf]
          %v509 = vld [vmem:[%s436 + $0x20] sm:$0xf]
          %v510 = vld [vmem:[%s436 + $0x24] sm:$0xf]
          %v511 = vld [vmem:[%s436 + $0x28] sm:$0xf]
          %v512 = vld [vmem:[%s436 + $0x2c] sm:$0xf]
          %v513 = vld [vmem:[%s436 + $0x30] sm:$0xf]
          %v514 = vld [vmem:[%s436 + $0x34] sm:$0xf]
          %v515 = vld [vmem:[%s436 + $0x38] sm:$0xf]
          %v516 = vld [vmem:[%s436 + $0x3c] sm:$0xf]
          %v517 = vld [vmem:[#allocation11] sm:$0xff]
          %v518 = vld [vmem:[#allocation11 + $0x8] sm:$0xff]
          %v519 = vld [vmem:[#allocation11 + $0x10] sm:$0xff]
          %v520 = vld [vmem:[#allocation11 + $0x18] sm:$0xff]
          %v521 = vld [vmem:[#allocation11 + $0x20] sm:$0xff]
          %v522 = vld [vmem:[#allocation11 + $0x28] sm:$0xff]
          %v523 = vld [vmem:[#allocation11 + $0x30] sm:$0xff]
          %v524 = vld [vmem:[#allocation11 + $0x38] sm:$0xff]
          %v525 = vld [vmem:[#allocation11 + $0x40] sm:$0xff]
          %v526 = vld [vmem:[#allocation11 + $0x48] sm:$0xff]
          %v527 = vld [vmem:[#allocation11 + $0x50] sm:$0xff]
          %v528 = vld [vmem:[#allocation11 + $0x58] sm:$0xff]
          %v529 = vld [vmem:[#allocation11 + $0x60] sm:$0xff]
          %v530 = vld [vmem:[#allocation11 + $0x68] sm:$0xff]
          %v531 = vld [vmem:[#allocation11 + $0x70] sm:$0xff]
          %v532 = vld [vmem:[#allocation11 + $0x78] sm:$0xff]
          %v533 = vld [vmem:[#allocation11 + $0x80] sm:$0xff]
          %v534 = vld [vmem:[#allocation11 + $0x88] sm:$0xff]
          %v535 = vld [vmem:[#allocation11 + $0x90] sm:$0xff]
          %v536 = vld [vmem:[#allocation11 + $0x98] sm:$0xff]
          %v537 = vld [vmem:[#allocation11 + $0xa0] sm:$0xff]
          %v538 = vld [vmem:[#allocation11 + $0xa8] sm:$0xff]
          %v539 = vld [vmem:[#allocation11 + $0xb0] sm:$0xff]
          %v540 = vld [vmem:[#allocation11 + $0xb8] sm:$0xff]
          %v541 = vld [vmem:[#allocation11 + $0xc0] sm:$0xff]
          %v542 = vld [vmem:[#allocation11 + $0xc8] sm:$0xff]
          %v543 = vld [vmem:[#allocation11 + $0xd0] sm:$0xff]
          %v544 = vld [vmem:[#allocation11 + $0xd8] sm:$0xff]
          %v545 = vld [vmem:[#allocation11 + $0xe0] sm:$0xff]
          %v546 = vld [vmem:[#allocation11 + $0xe8] sm:$0xff]
          %v547 = vld [vmem:[#allocation11 + $0xf0] sm:$0xff]
          %v548 = vld [vmem:[#allocation11 + $0xf8] sm:$0xff]
          %v549 = vld [vmem:[%s5] sm:$0xf]
          %v551 = vlaneseq
          %v552 = vshrl.u32 %v551, 7
          %v553 = vsub.s32 0, %v552
          %v554 = vrot.slane %v549, %v553
          %v555 = vlaneseq
          %v556 = vshrl.u32 %v555, 7
          %v557 = vsub.s32 1, %v556
          %v558 = vrot.slane %v549, %v557
          %v559 = vlaneseq
          %v560 = vshrl.u32 %v559, 7
          %v561 = vsub.s32 2, %v560
          %v562 = vrot.slane %v549, %v561
          %v563 = vlaneseq
          %v564 = vshrl.u32 %v563, 7
          %v565 = vsub.s32 3, %v564
          %v566 = vrot.slane %v549, %v565
          %v587 = vunpack.c.l.b16 %v501
          %v588 = vunpack.c.l.b16 %v502
          %v589 = vunpack.c.l.b16 %v503
          %v590 = vunpack.c.l.b16 %v504
          %v591 = vunpack.c.l.b16 %v505
          %v592 = vunpack.c.l.b16 %v506
          %v593 = vunpack.c.l.b16 %v507
          %v594 = vunpack.c.l.b16 %v508
          %v595 = vunpack.c.l.b16 %v509
          %v596 = vunpack.c.l.b16 %v510
          %v597 = vunpack.c.l.b16 %v511
          %v598 = vunpack.c.l.b16 %v512
          %v599 = vunpack.c.l.b16 %v513
          %v600 = vunpack.c.l.b16 %v514
          %v601 = vunpack.c.l.b16 %v515
          %v602 = vunpack.c.l.b16 %v516
          %v603 = vpack.c.b16 %v588, %v587
          %v604 = vpack.c.b16 %v590, %v589
          %v605 = vpack.c.b16 %v592, %v591
          %v606 = vpack.c.b16 %v594, %v593
          %v607 = vpack.c.b16 %v596, %v595
          %v608 = vpack.c.b16 %v598, %v597
          %v609 = vpack.c.b16 %v600, %v599
          %v610 = vpack.c.b16 %v602, %v601
          %v651 = vunpack.c.l.b16 %v517
          %v652 = vunpack.c.h.b16 %v517
          %v653 = vunpack.c.l.b16 %v518
          %v654 = vunpack.c.h.b16 %v518
          %v655 = vunpack.c.l.b16 %v519
          %v656 = vunpack.c.h.b16 %v519
          %v657 = vunpack.c.l.b16 %v520
          %v658 = vunpack.c.h.b16 %v520
          %v659 = vunpack.c.l.b16 %v521
          %v660 = vunpack.c.h.b16 %v521
          %v661 = vunpack.c.l.b16 %v522
          %v662 = vunpack.c.h.b16 %v522
          %v663 = vunpack.c.l.b16 %v523
          %v664 = vunpack.c.h.b16 %v523
          %v665 = vunpack.c.l.b16 %v524
          %v666 = vunpack.c.h.b16 %v524
          %v667 = vunpack.c.l.b16 %v525
          %v668 = vunpack.c.h.b16 %v525
          %v669 = vunpack.c.l.b16 %v526
          %v670 = vunpack.c.h.b16 %v526
          %v671 = vunpack.c.l.b16 %v527
          %v672 = vunpack.c.h.b16 %v527
          %v673 = vunpack.c.l.b16 %v528
          %v674 = vunpack.c.h.b16 %v528
          %v675 = vunpack.c.l.b16 %v529
          %v676 = vunpack.c.h.b16 %v529
          %v677 = vunpack.c.l.b16 %v530
          %v678 = vunpack.c.h.b16 %v530
          %v679 = vunpack.c.l.b16 %v531
          %v680 = vunpack.c.h.b16 %v531
          %v681 = vunpack.c.l.b16 %v532
          %v682 = vunpack.c.h.b16 %v532
          %v683 = vunpack.c.l.b16 %v533
          %v684 = vunpack.c.h.b16 %v533
          %v685 = vunpack.c.l.b16 %v534
          %v686 = vunpack.c.h.b16 %v534
          %v687 = vunpack.c.l.b16 %v535
          %v688 = vunpack.c.h.b16 %v535
          %v689 = vunpack.c.l.b16 %v536
          %v690 = vunpack.c.h.b16 %v536
          %v691 = vunpack.c.l.b16 %v537
          %v692 = vunpack.c.h.b16 %v537
          %v693 = vunpack.c.l.b16 %v538
          %v694 = vunpack.c.h.b16 %v538
          %v695 = vunpack.c.l.b16 %v539
          %v696 = vunpack.c.h.b16 %v539
          %v697 = vunpack.c.l.b16 %v540
          %v698 = vunpack.c.h.b16 %v540
          %v699 = vunpack.c.l.b16 %v541
          %v700 = vunpack.c.h.b16 %v541
          %v701 = vunpack.c.l.b16 %v542
          %v702 = vunpack.c.h.b16 %v542
          %v703 = vunpack.c.l.b16 %v543
          %v704 = vunpack.c.h.b16 %v543
          %v705 = vunpack.c.l.b16 %v544
          %v706 = vunpack.c.h.b16 %v544
          %v707 = vunpack.c.l.b16 %v545
          %v708 = vunpack.c.h.b16 %v545
          %v709 = vunpack.c.l.b16 %v546
          %v710 = vunpack.c.h.b16 %v546
          %v711 = vunpack.c.l.b16 %v547
          %v712 = vunpack.c.h.b16 %v547
          %v713 = vunpack.c.l.b16 %v548
          %v714 = vunpack.c.h.b16 %v548
          %v715 = vpack.c.b16 %v655, %v651
          %v716 = vpack.c.b16 %v656, %v652
          %v717 = vpack.c.b16 %v657, %v653
          %v718 = vpack.c.b16 %v658, %v654
          %v719 = vpack.c.b16 %v663, %v659
          %v720 = vpack.c.b16 %v664, %v660
          %v721 = vpack.c.b16 %v665, %v661
          %v722 = vpack.c.b16 %v666, %v662
          %v723 = vpack.c.b16 %v671, %v667
          %v724 = vpack.c.b16 %v672, %v668
          %v725 = vpack.c.b16 %v673, %v669
          %v726 = vpack.c.b16 %v674, %v670
          %v727 = vpack.c.b16 %v679, %v675
          %v728 = vpack.c.b16 %v680, %v676
          %v729 = vpack.c.b16 %v681, %v677
          %v730 = vpack.c.b16 %v682, %v678
          %v731 = vpack.c.b16 %v687, %v683
          %v732 = vpack.c.b16 %v688, %v684
          %v733 = vpack.c.b16 %v689, %v685
          %v734 = vpack.c.b16 %v690, %v686
          %v735 = vpack.c.b16 %v695, %v691
          %v736 = vpack.c.b16 %v696, %v692
          %v737 = vpack.c.b16 %v697, %v693
          %v738 = vpack.c.b16 %v698, %v694
          %v739 = vpack.c.b16 %v703, %v699
          %v740 = vpack.c.b16 %v704, %v700
          %v741 = vpack.c.b16 %v705, %v701
          %v742 = vpack.c.b16 %v706, %v702
          %v743 = vpack.c.b16 %v711, %v707
          %v744 = vpack.c.b16 %v712, %v708
          %v745 = vpack.c.b16 %v713, %v709
          %v746 = vpack.c.b16 %v714, %v710
          %779 = vmatprep.subr.bf16.mxu0 %v744
          %780 = vmatpush1.bf16.msra.mxu0 %v743
          %781 = vmatprep.subr.bf16.mxu0 %v740
          %782 = vmatpush1.bf16.msra.mxu0 %v739
          %783 = vmatprep.subr.bf16.mxu0 %v736
          %784 = vmatpush1.bf16.msra.mxu0 %v735
          %785 = vmatprep.subr.bf16.mxu0 %v732
          %786 = vmatpush1.bf16.msra.mxu0 %v731
          %787 = vmatprep.subr.bf16.mxu0 %v728
          %788 = vmatpush1.bf16.msra.mxu0 %v727
          %789 = vmatprep.subr.bf16.mxu0 %v724
          %790 = vmatpush1.bf16.msra.mxu0 %v723
          %791 = vmatprep.subr.bf16.mxu0 %v720
          %792 = vmatpush1.bf16.msra.mxu0 %v719
          %793 = vmatprep.subr.bf16.mxu0 %v716
          %794 = vmatpush1.bf16.msra.mxu0 %v715
          %795 = vmatprep.subr.bf16.mxu0 0
          %796 = vmatpush2.bf16.msra.mxu0 0
          %797 = vmatprep.subr.bf16.mxu0 0
          %798 = vmatpush2.bf16.msra.mxu0 0
          %799 = vmatprep.subr.bf16.mxu0 0
          %800 = vmatpush2.bf16.msra.mxu0 0
          %801 = vmatprep.subr.bf16.mxu0 0
          %802 = vmatpush2.bf16.msra.mxu0 0
          %803 = vmatprep.subr.bf16.mxu0 0
          %804 = vmatpush2.bf16.msra.mxu0 0
          %805 = vmatprep.subr.bf16.mxu0 0
          %806 = vmatpush2.bf16.msra.mxu0 0
          %807 = vmatprep.subr.bf16.mxu0 0
          %808 = vmatpush2.bf16.msra.mxu0 0
          %809 = vmatprep.subr.bf16.mxu0 0
          %810 = vmatpush2.bf16.msra.mxu0 0
          %811 = vmatprep.mubr.bf16.mxu0 0
          %812 = vmatmul.mubr.bf16.gmra.mxu0 %v603
          %v813 = vpop.f32.mrf.mxu0
          %v814 = vadd.f32 %v554, %v813
          %v815 = vpop.f32.mrf.mxu0
          %v816 = vadd.f32 %v558, %v815
          %v817 = vpop.f32.mrf.mxu0
          %v818 = vadd.f32 %v554, %v817
          %v819 = vpop.f32.mrf.mxu0
          %v820 = vadd.f32 %v558, %v819
          %821 = vmatprep.mubr.bf16.mxu0 0
          %822 = vmatmul.mubr.bf16.gmra.mxu0 %v604
          %v823 = vpop.f32.mrf.mxu0
          %v824 = vadd.f32 %v554, %v823
          %v825 = vpop.f32.mrf.mxu0
          %v826 = vadd.f32 %v558, %v825
          %v827 = vpop.f32.mrf.mxu0
          %v828 = vadd.f32 %v554, %v827
          %v829 = vpop.f32.mrf.mxu0
          %v830 = vadd.f32 %v558, %v829
          %831 = vmatprep.mubr.bf16.mxu0 0
          %832 = vmatmul.mubr.bf16.gmra.mxu0 %v605
          %v833 = vpop.f32.mrf.mxu0
          %v834 = vadd.f32 %v554, %v833
          %v835 = vpop.f32.mrf.mxu0
          %v836 = vadd.f32 %v558, %v835
          %v837 = vpop.f32.mrf.mxu0
          %v838 = vadd.f32 %v554, %v837
          %v839 = vpop.f32.mrf.mxu0
          %v840 = vadd.f32 %v558, %v839
          %841 = vmatprep.mubr.bf16.mxu0 0
          %842 = vmatmul.mubr.bf16.gmra.mxu0 %v606
          %v843 = vpop.f32.mrf.mxu0
          %v844 = vadd.f32 %v554, %v843
          %v845 = vpop.f32.mrf.mxu0
          %v846 = vadd.f32 %v558, %v845
          %v847 = vpop.f32.mrf.mxu0
          %v848 = vadd.f32 %v554, %v847
          %v849 = vpop.f32.mrf.mxu0
          %v850 = vadd.f32 %v558, %v849
          %851 = vmatprep.mubr.bf16.mxu0 0
          %852 = vmatmul.mubr.bf16.gmra.mxu0 %v607
          %v853 = vpop.f32.mrf.mxu0
          %v854 = vadd.f32 %v554, %v853
          %v855 = vpop.f32.mrf.mxu0
          %v856 = vadd.f32 %v558, %v855
          %v857 = vpop.f32.mrf.mxu0
          %v858 = vadd.f32 %v554, %v857
          %v859 = vpop.f32.mrf.mxu0
          %v860 = vadd.f32 %v558, %v859
          %861 = vmatprep.mubr.bf16.mxu0 0
          %862 = vmatmul.mubr.bf16.gmra.mxu0 %v608
          %v863 = vpop.f32.mrf.mxu0
          %v864 = vadd.f32 %v554, %v863
          %v865 = vpop.f32.mrf.mxu0
          %v866 = vadd.f32 %v558, %v865
          %v867 = vpop.f32.mrf.mxu0
          %v868 = vadd.f32 %v554, %v867
          %v869 = vpop.f32.mrf.mxu0
          %v870 = vadd.f32 %v558, %v869
          %871 = vmatprep.mubr.bf16.mxu0 0
          %872 = vmatmul.mubr.bf16.gmra.mxu0 %v609
          %v873 = vpop.f32.mrf.mxu0
          %v874 = vadd.f32 %v554, %v873
          %v875 = vpop.f32.mrf.mxu0
          %v876 = vadd.f32 %v558, %v875
          %v877 = vpop.f32.mrf.mxu0
          %v878 = vadd.f32 %v554, %v877
          %v879 = vpop.f32.mrf.mxu0
          %v880 = vadd.f32 %v558, %v879
          %881 = vmatprep.mubr.bf16.mxu0 0
          %882 = vmatmul.mubr.bf16.gmra.mxu0 %v610
          %v883 = vpop.f32.mrf.mxu0
          %v884 = vadd.f32 %v554, %v883
          %v885 = vpop.f32.mrf.mxu0
          %v886 = vadd.f32 %v558, %v885
          %v887 = vpop.f32.mrf.mxu0
          %v888 = vadd.f32 %v554, %v887
          %v889 = vpop.f32.mrf.mxu0
          %v890 = vadd.f32 %v558, %v889
          %891 = vdwg.mxu0
          %892 = vmatprep.subr.bf16.mxu0 %v746
          %893 = vmatpush1.bf16.msra.mxu0 %v745
          %894 = vmatprep.subr.bf16.mxu0 %v742
          %895 = vmatpush1.bf16.msra.mxu0 %v741
          %896 = vmatprep.subr.bf16.mxu0 %v738
          %897 = vmatpush1.bf16.msra.mxu0 %v737
          %898 = vmatprep.subr.bf16.mxu0 %v734
          %899 = vmatpush1.bf16.msra.mxu0 %v733
          %900 = vmatprep.subr.bf16.mxu0 %v730
          %901 = vmatpush1.bf16.msra.mxu0 %v729
          %902 = vmatprep.subr.bf16.mxu0 %v726
          %903 = vmatpush1.bf16.msra.mxu0 %v725
          %904 = vmatprep.subr.bf16.mxu0 %v722
          %905 = vmatpush1.bf16.msra.mxu0 %v721
          %906 = vmatprep.subr.bf16.mxu0 %v718
          %907 = vmatpush1.bf16.msra.mxu0 %v717
          %908 = vmatprep.subr.bf16.mxu0 0
          %909 = vmatpush2.bf16.msra.mxu0 0
          %910 = vmatprep.subr.bf16.mxu0 0
          %911 = vmatpush2.bf16.msra.mxu0 0
          %912 = vmatprep.subr.bf16.mxu0 0
          %913 = vmatpush2.bf16.msra.mxu0 0
          %914 = vmatprep.subr.bf16.mxu0 0
          %915 = vmatpush2.bf16.msra.mxu0 0
          %916 = vmatprep.subr.bf16.mxu0 0
          %917 = vmatpush2.bf16.msra.mxu0 0
          %918 = vmatprep.subr.bf16.mxu0 0
          %919 = vmatpush2.bf16.msra.mxu0 0
          %920 = vmatprep.subr.bf16.mxu0 0
          %921 = vmatpush2.bf16.msra.mxu0 0
          %922 = vmatprep.subr.bf16.mxu0 0
          %923 = vmatpush2.bf16.msra.mxu0 0
          %924 = vmatprep.mubr.bf16.mxu0 0
          %925 = vmatmul.mubr.bf16.gmra.mxu0 %v603
          %v926 = vpop.f32.mrf.mxu0
          %v927 = vadd.f32 %v562, %v926
          %v928 = vpop.f32.mrf.mxu0
          %v929 = vadd.f32 %v566, %v928
          %v930 = vpop.f32.mrf.mxu0
          %v931 = vadd.f32 %v562, %v930
          %v932 = vpop.f32.mrf.mxu0
          %v933 = vadd.f32 %v566, %v932
          %934 = vmatprep.mubr.bf16.mxu0 0
          %935 = vmatmul.mubr.bf16.gmra.mxu0 %v604
          %v936 = vpop.f32.mrf.mxu0
          %v937 = vadd.f32 %v562, %v936
          %v938 = vpop.f32.mrf.mxu0
          %v939 = vadd.f32 %v566, %v938
          %v940 = vpop.f32.mrf.mxu0
          %v941 = vadd.f32 %v562, %v940
          %v942 = vpop.f32.mrf.mxu0
          %v943 = vadd.f32 %v566, %v942
          %944 = vmatprep.mubr.bf16.mxu0 0
          %945 = vmatmul.mubr.bf16.gmra.mxu0 %v605
          %v946 = vpop.f32.mrf.mxu0
          %v947 = vadd.f32 %v562, %v946
          %v948 = vpop.f32.mrf.mxu0
          %v949 = vadd.f32 %v566, %v948
          %v950 = vpop.f32.mrf.mxu0
          %v951 = vadd.f32 %v562, %v950
          %v952 = vpop.f32.mrf.mxu0
          %v953 = vadd.f32 %v566, %v952
          %954 = vmatprep.mubr.bf16.mxu0 0
          %955 = vmatmul.mubr.bf16.gmra.mxu0 %v606
          %v956 = vpop.f32.mrf.mxu0
          %v957 = vadd.f32 %v562, %v956
          %v958 = vpop.f32.mrf.mxu0
          %v959 = vadd.f32 %v566, %v958
          %v960 = vpop.f32.mrf.mxu0
          %v961 = vadd.f32 %v562, %v960
          %v962 = vpop.f32.mrf.mxu0
          %v963 = vadd.f32 %v566, %v962
          %964 = vmatprep.mubr.bf16.mxu0 0
          %965 = vmatmul.mubr.bf16.gmra.mxu0 %v607
          %v966 = vpop.f32.mrf.mxu0
          %v967 = vadd.f32 %v562, %v966
          %v968 = vpop.f32.mrf.mxu0
          %v969 = vadd.f32 %v566, %v968
          %v970 = vpop.f32.mrf.mxu0
          %v971 = vadd.f32 %v562, %v970
          %v972 = vpop.f32.mrf.mxu0
          %v973 = vadd.f32 %v566, %v972
          %974 = vmatprep.mubr.bf16.mxu0 0
          %975 = vmatmul.mubr.bf16.gmra.mxu0 %v608
          %v976 = vpop.f32.mrf.mxu0
          %v977 = vadd.f32 %v562, %v976
          %v978 = vpop.f32.mrf.mxu0
          %v979 = vadd.f32 %v566, %v978
          %v980 = vpop.f32.mrf.mxu0
          %v981 = vadd.f32 %v562, %v980
          %v982 = vpop.f32.mrf.mxu0
          %v983 = vadd.f32 %v566, %v982
          %984 = vmatprep.mubr.bf16.mxu0 0
          %985 = vmatmul.mubr.bf16.gmra.mxu0 %v609
          %v986 = vpop.f32.mrf.mxu0
          %v987 = vadd.f32 %v562, %v986
          %v988 = vpop.f32.mrf.mxu0
          %v989 = vadd.f32 %v566, %v988
          %v990 = vpop.f32.mrf.mxu0
          %v991 = vadd.f32 %v562, %v990
          %v992 = vpop.f32.mrf.mxu0
          %v993 = vadd.f32 %v566, %v992
          %994 = vmatprep.mubr.bf16.mxu0 0
          %995 = vmatmul.mubr.bf16.gmra.mxu0 %v610
          %v996 = vpop.f32.mrf.mxu0
          %v997 = vadd.f32 %v562, %v996
          %v998 = vpop.f32.mrf.mxu0
          %v999 = vadd.f32 %v566, %v998
          %v1000 = vpop.f32.mrf.mxu0
          %v1001 = vadd.f32 %v562, %v1000
          %v1002 = vpop.f32.mrf.mxu0
          %v1003 = vadd.f32 %v566, %v1002
          %1004 = vdwg.mxu0
          %v1005 = vld [vmem:[#allocation13] sm:$0xff]
          %v1006 = vld [vmem:[#allocation13 + $0x8] sm:$0xff]
          %v1007 = vld [vmem:[#allocation13 + $0x10] sm:$0xff]
          %v1008 = vld [vmem:[#allocation13 + $0x18] sm:$0xff]
          %v1009 = vld [vmem:[#allocation13 + $0x20] sm:$0xff]
          %v1010 = vld [vmem:[#allocation13 + $0x28] sm:$0xff]
          %v1011 = vld [vmem:[#allocation13 + $0x30] sm:$0xff]
          %v1012 = vld [vmem:[#allocation13 + $0x38] sm:$0xff]
          %v1013 = vld [vmem:[#allocation13 + $0x40] sm:$0xff]
          %v1014 = vld [vmem:[#allocation13 + $0x48] sm:$0xff]
          %v1015 = vld [vmem:[#allocation13 + $0x50] sm:$0xff]
          %v1016 = vld [vmem:[#allocation13 + $0x58] sm:$0xff]
          %v1017 = vld [vmem:[#allocation13 + $0x60] sm:$0xff]
          %v1018 = vld [vmem:[#allocation13 + $0x68] sm:$0xff]
          %v1019 = vld [vmem:[#allocation13 + $0x70] sm:$0xff]
          %v1020 = vld [vmem:[#allocation13 + $0x78] sm:$0xff]
          %v1021 = vld [vmem:[#allocation13 + $0x80] sm:$0xff]
          %v1022 = vld [vmem:[#allocation13 + $0x88] sm:$0xff]
          %v1023 = vld [vmem:[#allocation13 + $0x90] sm:$0xff]
          %v1024 = vld [vmem:[#allocation13 + $0x98] sm:$0xff]
          %v1025 = vld [vmem:[#allocation13 + $0xa0] sm:$0xff]
          %v1026 = vld [vmem:[#allocation13 + $0xa8] sm:$0xff]
          %v1027 = vld [vmem:[#allocation13 + $0xb0] sm:$0xff]
          %v1028 = vld [vmem:[#allocation13 + $0xb8] sm:$0xff]
          %v1029 = vld [vmem:[#allocation13 + $0xc0] sm:$0xff]
          %v1030 = vld [vmem:[#allocation13 + $0xc8] sm:$0xff]
          %v1031 = vld [vmem:[#allocation13 + $0xd0] sm:$0xff]
          %v1032 = vld [vmem:[#allocation13 + $0xd8] sm:$0xff]
          %v1033 = vld [vmem:[#allocation13 + $0xe0] sm:$0xff]
          %v1034 = vld [vmem:[#allocation13 + $0xe8] sm:$0xff]
          %v1035 = vld [vmem:[#allocation13 + $0xf0] sm:$0xff]
          %v1036 = vld [vmem:[#allocation13 + $0xf8] sm:$0xff]
          %v1037 = vld [vmem:[%s7] sm:$0xf]
          %v1039 = vlaneseq
          %v1040 = vshrl.u32 %v1039, 7
          %v1041 = vsub.s32 0, %v1040
          %v1042 = vrot.slane %v1037, %v1041
          %v1043 = vlaneseq
          %v1044 = vshrl.u32 %v1043, 7
          %v1045 = vsub.s32 1, %v1044
          %v1046 = vrot.slane %v1037, %v1045
          %v1047 = vlaneseq
          %v1048 = vshrl.u32 %v1047, 7
          %v1049 = vsub.s32 2, %v1048
          %v1050 = vrot.slane %v1037, %v1049
          %v1051 = vlaneseq
          %v1052 = vshrl.u32 %v1051, 7
          %v1053 = vsub.s32 3, %v1052
          %v1054 = vrot.slane %v1037, %v1053
          %v1091 = vunpack.c.l.b16 %v1005
          %v1092 = vunpack.c.h.b16 %v1005
          %v1093 = vunpack.c.l.b16 %v1006
          %v1094 = vunpack.c.h.b16 %v1006
          %v1095 = vunpack.c.l.b16 %v1007
          %v1096 = vunpack.c.h.b16 %v1007
          %v1097 = vunpack.c.l.b16 %v1008
          %v1098 = vunpack.c.h.b16 %v1008
          %v1099 = vunpack.c.l.b16 %v1009
          %v1100 = vunpack.c.h.b16 %v1009
          %v1101 = vunpack.c.l.b16 %v1010
          %v1102 = vunpack.c.h.b16 %v1010
          %v1103 = vunpack.c.l.b16 %v1011
          %v1104 = vunpack.c.h.b16 %v1011
          %v1105 = vunpack.c.l.b16 %v1012
          %v1106 = vunpack.c.h.b16 %v1012
          %v1107 = vunpack.c.l.b16 %v1013
          %v1108 = vunpack.c.h.b16 %v1013
          %v1109 = vunpack.c.l.b16 %v1014
          %v1110 = vunpack.c.h.b16 %v1014
          %v1111 = vunpack.c.l.b16 %v1015
          %v1112 = vunpack.c.h.b16 %v1015
          %v1113 = vunpack.c.l.b16 %v1016
          %v1114 = vunpack.c.h.b16 %v1016
          %v1115 = vunpack.c.l.b16 %v1017
          %v1116 = vunpack.c.h.b16 %v1017
          %v1117 = vunpack.c.l.b16 %v1018
          %v1118 = vunpack.c.h.b16 %v1018
          %v1119 = vunpack.c.l.b16 %v1019
          %v1120 = vunpack.c.h.b16 %v1019
          %v1121 = vunpack.c.l.b16 %v1020
          %v1122 = vunpack.c.h.b16 %v1020
          %v1123 = vunpack.c.l.b16 %v1021
          %v1124 = vunpack.c.h.b16 %v1021
          %v1125 = vunpack.c.l.b16 %v1022
          %v1126 = vunpack.c.h.b16 %v1022
          %v1127 = vunpack.c.l.b16 %v1023
          %v1128 = vunpack.c.h.b16 %v1023
          %v1129 = vunpack.c.l.b16 %v1024
          %v1130 = vunpack.c.h.b16 %v1024
          %v1131 = vunpack.c.l.b16 %v1025
          %v1132 = vunpack.c.h.b16 %v1025
          %v1133 = vunpack.c.l.b16 %v1026
          %v1134 = vunpack.c.h.b16 %v1026
          %v1135 = vunpack.c.l.b16 %v1027
          %v1136 = vunpack.c.h.b16 %v1027
          %v1137 = vunpack.c.l.b16 %v1028
          %v1138 = vunpack.c.h.b16 %v1028
          %v1139 = vunpack.c.l.b16 %v1029
          %v1140 = vunpack.c.h.b16 %v1029
          %v1141 = vunpack.c.l.b16 %v1030
          %v1142 = vunpack.c.h.b16 %v1030
          %v1143 = vunpack.c.l.b16 %v1031
          %v1144 = vunpack.c.h.b16 %v1031
          %v1145 = vunpack.c.l.b16 %v1032
          %v1146 = vunpack.c.h.b16 %v1032
          %v1147 = vunpack.c.l.b16 %v1033
          %v1148 = vunpack.c.h.b16 %v1033
          %v1149 = vunpack.c.l.b16 %v1034
          %v1150 = vunpack.c.h.b16 %v1034
          %v1151 = vunpack.c.l.b16 %v1035
          %v1152 = vunpack.c.h.b16 %v1035
          %v1153 = vunpack.c.l.b16 %v1036
          %v1154 = vunpack.c.h.b16 %v1036
          %v1155 = vpack.c.b16 %v1095, %v1091
          %v1156 = vpack.c.b16 %v1096, %v1092
          %v1157 = vpack.c.b16 %v1097, %v1093
          %v1158 = vpack.c.b16 %v1098, %v1094
          %v1159 = vpack.c.b16 %v1103, %v1099
          %v1160 = vpack.c.b16 %v1104, %v1100
          %v1161 = vpack.c.b16 %v1105, %v1101
          %v1162 = vpack.c.b16 %v1106, %v1102
          %v1163 = vpack.c.b16 %v1111, %v1107
          %v1164 = vpack.c.b16 %v1112, %v1108
          %v1165 = vpack.c.b16 %v1113, %v1109
          %v1166 = vpack.c.b16 %v1114, %v1110
          %v1167 = vpack.c.b16 %v1119, %v1115
          %v1168 = vpack.c.b16 %v1120, %v1116
          %v1169 = vpack.c.b16 %v1121, %v1117
          %v1170 = vpack.c.b16 %v1122, %v1118
          %v1171 = vpack.c.b16 %v1127, %v1123
          %v1172 = vpack.c.b16 %v1128, %v1124
          %v1173 = vpack.c.b16 %v1129, %v1125
          %v1174 = vpack.c.b16 %v1130, %v1126
          %v1175 = vpack.c.b16 %v1135, %v1131
          %v1176 = vpack.c.b16 %v1136, %v1132
          %v1177 = vpack.c.b16 %v1137, %v1133
          %v1178 = vpack.c.b16 %v1138, %v1134
          %v1179 = vpack.c.b16 %v1143, %v1139
          %v1180 = vpack.c.b16 %v1144, %v1140
          %v1181 = vpack.c.b16 %v1145, %v1141
          %v1182 = vpack.c.b16 %v1146, %v1142
          %v1183 = vpack.c.b16 %v1151, %v1147
          %v1184 = vpack.c.b16 %v1152, %v1148
          %v1185 = vpack.c.b16 %v1153, %v1149
          %v1186 = vpack.c.b16 %v1154, %v1150
          %1219 = vmatprep.subr.bf16.mxu0 %v1184
          %1220 = vmatpush1.bf16.msra.mxu0 %v1183
          %1221 = vmatprep.subr.bf16.mxu0 %v1180
          %1222 = vmatpush1.bf16.msra.mxu0 %v1179
          %1223 = vmatprep.subr.bf16.mxu0 %v1176
          %1224 = vmatpush1.bf16.msra.mxu0 %v1175
          %1225 = vmatprep.subr.bf16.mxu0 %v1172
          %1226 = vmatpush1.bf16.msra.mxu0 %v1171
          %1227 = vmatprep.subr.bf16.mxu0 %v1168
          %1228 = vmatpush1.bf16.msra.mxu0 %v1167
          %1229 = vmatprep.subr.bf16.mxu0 %v1164
          %1230 = vmatpush1.bf16.msra.mxu0 %v1163
          %1231 = vmatprep.subr.bf16.mxu0 %v1160
          %1232 = vmatpush1.bf16.msra.mxu0 %v1159
          %1233 = vmatprep.subr.bf16.mxu0 %v1156
          %1234 = vmatpush1.bf16.msra.mxu0 %v1155
          %1235 = vmatprep.subr.bf16.mxu0 0
          %1236 = vmatpush2.bf16.msra.mxu0 0
          %1237 = vmatprep.subr.bf16.mxu0 0
          %1238 = vmatpush2.bf16.msra.mxu0 0
          %1239 = vmatprep.subr.bf16.mxu0 0
          %1240 = vmatpush2.bf16.msra.mxu0 0
          %1241 = vmatprep.subr.bf16.mxu0 0
          %1242 = vmatpush2.bf16.msra.mxu0 0
          %1243 = vmatprep.subr.bf16.mxu0 0
          %1244 = vmatpush2.bf16.msra.mxu0 0
          %1245 = vmatprep.subr.bf16.mxu0 0
          %1246 = vmatpush2.bf16.msra.mxu0 0
          %1247 = vmatprep.subr.bf16.mxu0 0
          %1248 = vmatpush2.bf16.msra.mxu0 0
          %1249 = vmatprep.subr.bf16.mxu0 0
          %1250 = vmatpush2.bf16.msra.mxu0 0
          %1251 = vmatprep.mubr.bf16.mxu0 0
          %1252 = vmatmul.mubr.bf16.gmra.mxu0 %v603
          %v1253 = vpop.f32.mrf.mxu0
          %v1254 = vadd.f32 %v1042, %v1253
          %v1255 = vpop.f32.mrf.mxu0
          %v1256 = vadd.f32 %v1046, %v1255
          %v1257 = vpop.f32.mrf.mxu0
          %v1258 = vadd.f32 %v1042, %v1257
          %v1259 = vpop.f32.mrf.mxu0
          %v1260 = vadd.f32 %v1046, %v1259
          %1261 = vmatprep.mubr.bf16.mxu0 0
          %1262 = vmatmul.mubr.bf16.gmra.mxu0 %v604
          %v1263 = vpop.f32.mrf.mxu0
          %v1264 = vadd.f32 %v1042, %v1263
          %v1265 = vpop.f32.mrf.mxu0
          %v1266 = vadd.f32 %v1046, %v1265
          %v1267 = vpop.f32.mrf.mxu0
          %v1268 = vadd.f32 %v1042, %v1267
          %v1269 = vpop.f32.mrf.mxu0
          %v1270 = vadd.f32 %v1046, %v1269
          %1271 = vmatprep.mubr.bf16.mxu0 0
          %1272 = vmatmul.mubr.bf16.gmra.mxu0 %v605
          %v1273 = vpop.f32.mrf.mxu0
          %v1274 = vadd.f32 %v1042, %v1273
          %v1275 = vpop.f32.mrf.mxu0
          %v1276 = vadd.f32 %v1046, %v1275
          %v1277 = vpop.f32.mrf.mxu0
          %v1278 = vadd.f32 %v1042, %v1277
          %v1279 = vpop.f32.mrf.mxu0
          %v1280 = vadd.f32 %v1046, %v1279
          %1281 = vmatprep.mubr.bf16.mxu0 0
          %1282 = vmatmul.mubr.bf16.gmra.mxu0 %v606
          %v1283 = vpop.f32.mrf.mxu0
          %v1284 = vadd.f32 %v1042, %v1283
          %v1285 = vpop.f32.mrf.mxu0
          %v1286 = vadd.f32 %v1046, %v1285
          %v1287 = vpop.f32.mrf.mxu0
          %v1288 = vadd.f32 %v1042, %v1287
          %v1289 = vpop.f32.mrf.mxu0
          %v1290 = vadd.f32 %v1046, %v1289
          %1291 = vmatprep.mubr.bf16.mxu0 0
          %1292 = vmatmul.mubr.bf16.gmra.mxu0 %v607
          %v1293 = vpop.f32.mrf.mxu0
          %v1294 = vadd.f32 %v1042, %v1293
          %v1295 = vpop.f32.mrf.mxu0
          %v1296 = vadd.f32 %v1046, %v1295
          %v1297 = vpop.f32.mrf.mxu0
          %v1298 = vadd.f32 %v1042, %v1297
          %v1299 = vpop.f32.mrf.mxu0
          %v1300 = vadd.f32 %v1046, %v1299
          %1301 = vmatprep.mubr.bf16.mxu0 0
          %1302 = vmatmul.mubr.bf16.gmra.mxu0 %v608
          %v1303 = vpop.f32.mrf.mxu0
          %v1304 = vadd.f32 %v1042, %v1303
          %v1305 = vpop.f32.mrf.mxu0
          %v1306 = vadd.f32 %v1046, %v1305
          %v1307 = vpop.f32.mrf.mxu0
          %v1308 = vadd.f32 %v1042, %v1307
          %v1309 = vpop.f32.mrf.mxu0
          %v1310 = vadd.f32 %v1046, %v1309
          %1311 = vmatprep.mubr.bf16.mxu0 0
          %1312 = vmatmul.mubr.bf16.gmra.mxu0 %v609
          %v1313 = vpop.f32.mrf.mxu0
          %v1314 = vadd.f32 %v1042, %v1313
          %v1315 = vpop.f32.mrf.mxu0
          %v1316 = vadd.f32 %v1046, %v1315
          %v1317 = vpop.f32.mrf.mxu0
          %v1318 = vadd.f32 %v1042, %v1317
          %v1319 = vpop.f32.mrf.mxu0
          %v1320 = vadd.f32 %v1046, %v1319
          %1321 = vmatprep.mubr.bf16.mxu0 0
          %1322 = vmatmul.mubr.bf16.gmra.mxu0 %v610
          %v1323 = vpop.f32.mrf.mxu0
          %v1324 = vadd.f32 %v1042, %v1323
          %v1325 = vpop.f32.mrf.mxu0
          %v1326 = vadd.f32 %v1046, %v1325
          %v1327 = vpop.f32.mrf.mxu0
          %v1328 = vadd.f32 %v1042, %v1327
          %v1329 = vpop.f32.mrf.mxu0
          %v1330 = vadd.f32 %v1046, %v1329
          %1331 = vdwg.mxu0
          %1332 = vmatprep.subr.bf16.mxu0 %v1186
          %1333 = vmatpush1.bf16.msra.mxu0 %v1185
          %1334 = vmatprep.subr.bf16.mxu0 %v1182
          %1335 = vmatpush1.bf16.msra.mxu0 %v1181
          %1336 = vmatprep.subr.bf16.mxu0 %v1178
          %1337 = vmatpush1.bf16.msra.mxu0 %v1177
          %1338 = vmatprep.subr.bf16.mxu0 %v1174
          %1339 = vmatpush1.bf16.msra.mxu0 %v1173
          %1340 = vmatprep.subr.bf16.mxu0 %v1170
          %1341 = vmatpush1.bf16.msra.mxu0 %v1169
          %1342 = vmatprep.subr.bf16.mxu0 %v1166
          %1343 = vmatpush1.bf16.msra.mxu0 %v1165
          %1344 = vmatprep.subr.bf16.mxu0 %v1162
          %1345 = vmatpush1.bf16.msra.mxu0 %v1161
          %1346 = vmatprep.subr.bf16.mxu0 %v1158
          %1347 = vmatpush1.bf16.msra.mxu0 %v1157
          %1348 = vmatprep.subr.bf16.mxu0 0
          %1349 = vmatpush2.bf16.msra.mxu0 0
          %1350 = vmatprep.subr.bf16.mxu0 0
          %1351 = vmatpush2.bf16.msra.mxu0 0
          %1352 = vmatprep.subr.bf16.mxu0 0
          %1353 = vmatpush2.bf16.msra.mxu0 0
          %1354 = vmatprep.subr.bf16.mxu0 0
          %1355 = vmatpush2.bf16.msra.mxu0 0
          %1356 = vmatprep.subr.bf16.mxu0 0
          %1357 = vmatpush2.bf16.msra.mxu0 0
          %1358 = vmatprep.subr.bf16.mxu0 0
          %1359 = vmatpush2.bf16.msra.mxu0 0
          %1360 = vmatprep.subr.bf16.mxu0 0
          %1361 = vmatpush2.bf16.msra.mxu0 0
          %1362 = vmatprep.subr.bf16.mxu0 0
          %1363 = vmatpush2.bf16.msra.mxu0 0
          %1364 = vmatprep.mubr.bf16.mxu0 0
          %1365 = vmatmul.mubr.bf16.gmra.mxu0 %v603
          %v1366 = vpop.f32.mrf.mxu0
          %v1367 = vadd.f32 %v1050, %v1366
          %v1368 = vpop.f32.mrf.mxu0
          %v1369 = vadd.f32 %v1054, %v1368
          %v1370 = vpop.f32.mrf.mxu0
          %v1371 = vadd.f32 %v1050, %v1370
          %v1372 = vpop.f32.mrf.mxu0
          %v1373 = vadd.f32 %v1054, %v1372
          %1374 = vmatprep.mubr.bf16.mxu0 0
          %1375 = vmatmul.mubr.bf16.gmra.mxu0 %v604
          %v1376 = vpop.f32.mrf.mxu0
          %v1377 = vadd.f32 %v1050, %v1376
          %v1378 = vpop.f32.mrf.mxu0
          %v1379 = vadd.f32 %v1054, %v1378
          %v1380 = vpop.f32.mrf.mxu0
          %v1381 = vadd.f32 %v1050, %v1380
          %v1382 = vpop.f32.mrf.mxu0
          %v1383 = vadd.f32 %v1054, %v1382
          %1384 = vmatprep.mubr.bf16.mxu0 0
          %1385 = vmatmul.mubr.bf16.gmra.mxu0 %v605
          %v1386 = vpop.f32.mrf.mxu0
          %v1387 = vadd.f32 %v1050, %v1386
          %v1388 = vpop.f32.mrf.mxu0
          %v1389 = vadd.f32 %v1054, %v1388
          %v1390 = vpop.f32.mrf.mxu0
          %v1391 = vadd.f32 %v1050, %v1390
          %v1392 = vpop.f32.mrf.mxu0
          %v1393 = vadd.f32 %v1054, %v1392
          %1394 = vmatprep.mubr.bf16.mxu0 0
          %1395 = vmatmul.mubr.bf16.gmra.mxu0 %v606
          %v1396 = vpop.f32.mrf.mxu0
          %v1397 = vadd.f32 %v1050, %v1396
          %v1398 = vpop.f32.mrf.mxu0
          %v1399 = vadd.f32 %v1054, %v1398
          %v1400 = vpop.f32.mrf.mxu0
          %v1401 = vadd.f32 %v1050, %v1400
          %v1402 = vpop.f32.mrf.mxu0
          %v1403 = vadd.f32 %v1054, %v1402
          %1404 = vmatprep.mubr.bf16.mxu0 0
          %1405 = vmatmul.mubr.bf16.gmra.mxu0 %v607
          %v1406 = vpop.f32.mrf.mxu0
          %v1407 = vadd.f32 %v1050, %v1406
          %v1408 = vpop.f32.mrf.mxu0
          %v1409 = vadd.f32 %v1054, %v1408
          %v1410 = vpop.f32.mrf.mxu0
          %v1411 = vadd.f32 %v1050, %v1410
          %v1412 = vpop.f32.mrf.mxu0
          %v1413 = vadd.f32 %v1054, %v1412
          %1414 = vmatprep.mubr.bf16.mxu0 0
          %1415 = vmatmul.mubr.bf16.gmra.mxu0 %v608
          %v1416 = vpop.f32.mrf.mxu0
          %v1417 = vadd.f32 %v1050, %v1416
          %v1418 = vpop.f32.mrf.mxu0
          %v1419 = vadd.f32 %v1054, %v1418
          %v1420 = vpop.f32.mrf.mxu0
          %v1421 = vadd.f32 %v1050, %v1420
          %v1422 = vpop.f32.mrf.mxu0
          %v1423 = vadd.f32 %v1054, %v1422
          %1424 = vmatprep.mubr.bf16.mxu0 0
          %1425 = vmatmul.mubr.bf16.gmra.mxu0 %v609
          %v1426 = vpop.f32.mrf.mxu0
          %v1427 = vadd.f32 %v1050, %v1426
          %v1428 = vpop.f32.mrf.mxu0
          %v1429 = vadd.f32 %v1054, %v1428
          %v1430 = vpop.f32.mrf.mxu0
          %v1431 = vadd.f32 %v1050, %v1430
          %v1432 = vpop.f32.mrf.mxu0
          %v1433 = vadd.f32 %v1054, %v1432
          %1434 = vmatprep.mubr.bf16.mxu0 0
          %1435 = vmatmul.mubr.bf16.gmra.mxu0 %v610
          %v1436 = vpop.f32.mrf.mxu0
          %v1437 = vadd.f32 %v1050, %v1436
          %v1438 = vpop.f32.mrf.mxu0
          %v1439 = vadd.f32 %v1054, %v1438
          %v1440 = vpop.f32.mrf.mxu0
          %v1441 = vadd.f32 %v1050, %v1440
          %v1442 = vpop.f32.mrf.mxu0
          %v1443 = vadd.f32 %v1054, %v1442
          %1444 = vdwg.mxu0
          %v1445 = vpack.c.bf16 %v818, %v814
          %v1446 = vpack.c.bf16 %v820, %v816
          %v1447 = vpack.c.bf16 %v931, %v927
          %v1448 = vpack.c.bf16 %v933, %v929
          %v1449 = vpack.c.bf16 %v828, %v824
          %v1450 = vpack.c.bf16 %v830, %v826
          %v1451 = vpack.c.bf16 %v941, %v937
          %v1452 = vpack.c.bf16 %v943, %v939
          %v1453 = vpack.c.bf16 %v838, %v834
          %v1454 = vpack.c.bf16 %v840, %v836
          %v1455 = vpack.c.bf16 %v951, %v947
          %v1456 = vpack.c.bf16 %v953, %v949
          %v1457 = vpack.c.bf16 %v848, %v844
          %v1458 = vpack.c.bf16 %v850, %v846
          %v1459 = vpack.c.bf16 %v961, %v957
          %v1460 = vpack.c.bf16 %v963, %v959
          %v1461 = vpack.c.bf16 %v858, %v854
          %v1462 = vpack.c.bf16 %v860, %v856
          %v1463 = vpack.c.bf16 %v971, %v967
          %v1464 = vpack.c.bf16 %v973, %v969
          %v1465 = vpack.c.bf16 %v868, %v864
          %v1466 = vpack.c.bf16 %v870, %v866
          %v1467 = vpack.c.bf16 %v981, %v977
          %v1468 = vpack.c.bf16 %v983, %v979
          %v1469 = vpack.c.bf16 %v878, %v874
          %v1470 = vpack.c.bf16 %v880, %v876
          %v1471 = vpack.c.bf16 %v991, %v987
          %v1472 = vpack.c.bf16 %v993, %v989
          %v1473 = vpack.c.bf16 %v888, %v884
          %v1474 = vpack.c.bf16 %v890, %v886
          %v1475 = vpack.c.bf16 %v1001, %v997
          %v1476 = vpack.c.bf16 %v1003, %v999
          %v1509 = vunpack.c.l.b16 %v1445
          %v1510 = vunpack.c.l.b16 %v1446
          %v1511 = vunpack.c.l.b16 %v1447
          %v1512 = vunpack.c.l.b16 %v1448
          %v1513 = vunpack.c.h.b16 %v1445
          %v1514 = vunpack.c.h.b16 %v1446
          %v1515 = vunpack.c.h.b16 %v1447
          %v1516 = vunpack.c.h.b16 %v1448
          %v1517 = vunpack.c.l.b16 %v1449
          %v1518 = vunpack.c.l.b16 %v1450
          %v1519 = vunpack.c.l.b16 %v1451
          %v1520 = vunpack.c.l.b16 %v1452
          %v1521 = vunpack.c.h.b16 %v1449
          %v1522 = vunpack.c.h.b16 %v1450
          %v1523 = vunpack.c.h.b16 %v1451
          %v1524 = vunpack.c.h.b16 %v1452
          %v1525 = vunpack.c.l.b16 %v1453
          %v1526 = vunpack.c.l.b16 %v1454
          %v1527 = vunpack.c.l.b16 %v1455
          %v1528 = vunpack.c.l.b16 %v1456
          %v1529 = vunpack.c.h.b16 %v1453
          %v1530 = vunpack.c.h.b16 %v1454
          %v1531 = vunpack.c.h.b16 %v1455
          %v1532 = vunpack.c.h.b16 %v1456
          %v1533 = vunpack.c.l.b16 %v1457
          %v1534 = vunpack.c.l.b16 %v1458
          %v1535 = vunpack.c.l.b16 %v1459
          %v1536 = vunpack.c.l.b16 %v1460
          %v1537 = vunpack.c.h.b16 %v1457
          %v1538 = vunpack.c.h.b16 %v1458
          %v1539 = vunpack.c.h.b16 %v1459
          %v1540 = vunpack.c.h.b16 %v1460
          %v1541 = vunpack.c.l.b16 %v1461
          %v1542 = vunpack.c.l.b16 %v1462
          %v1543 = vunpack.c.l.b16 %v1463
          %v1544 = vunpack.c.l.b16 %v1464
          %v1545 = vunpack.c.h.b16 %v1461
          %v1546 = vunpack.c.h.b16 %v1462
          %v1547 = vunpack.c.h.b16 %v1463
          %v1548 = vunpack.c.h.b16 %v1464
          %v1549 = vunpack.c.l.b16 %v1465
          %v1550 = vunpack.c.l.b16 %v1466
          %v1551 = vunpack.c.l.b16 %v1467
          %v1552 = vunpack.c.l.b16 %v1468
          %v1553 = vunpack.c.h.b16 %v1465
          %v1554 = vunpack.c.h.b16 %v1466
          %v1555 = vunpack.c.h.b16 %v1467
          %v1556 = vunpack.c.h.b16 %v1468
          %v1557 = vunpack.c.l.b16 %v1469
          %v1558 = vunpack.c.l.b16 %v1470
          %v1559 = vunpack.c.l.b16 %v1471
          %v1560 = vunpack.c.l.b16 %v1472
          %v1561 = vunpack.c.h.b16 %v1469
          %v1562 = vunpack.c.h.b16 %v1470
          %v1563 = vunpack.c.h.b16 %v1471
          %v1564 = vunpack.c.h.b16 %v1472
          %v1565 = vunpack.c.l.b16 %v1473
          %v1566 = vunpack.c.l.b16 %v1474
          %v1567 = vunpack.c.l.b16 %v1475
          %v1568 = vunpack.c.l.b16 %v1476
          %v1569 = vunpack.c.h.b16 %v1473
          %v1570 = vunpack.c.h.b16 %v1474
          %v1571 = vunpack.c.h.b16 %v1475
          %v1572 = vunpack.c.h.b16 %v1476
          %v1573 = vpack.c.b16 %v1510, %v1509
          %v1574 = vpack.c.b16 %v1512, %v1511
          %v1575 = vpack.c.b16 %v1514, %v1513
          %v1576 = vpack.c.b16 %v1516, %v1515
          %v1577 = vpack.c.b16 %v1518, %v1517
          %v1578 = vpack.c.b16 %v1520, %v1519
          %v1579 = vpack.c.b16 %v1522, %v1521
          %v1580 = vpack.c.b16 %v1524, %v1523
          %v1581 = vpack.c.b16 %v1526, %v1525
          %v1582 = vpack.c.b16 %v1528, %v1527
          %v1583 = vpack.c.b16 %v1530, %v1529
          %v1584 = vpack.c.b16 %v1532, %v1531
          %v1585 = vpack.c.b16 %v1534, %v1533
          %v1586 = vpack.c.b16 %v1536, %v1535
          %v1587 = vpack.c.b16 %v1538, %v1537
          %v1588 = vpack.c.b16 %v1540, %v1539
          %v1589 = vpack.c.b16 %v1542, %v1541
          %v1590 = vpack.c.b16 %v1544, %v1543
          %v1591 = vpack.c.b16 %v1546, %v1545
          %v1592 = vpack.c.b16 %v1548, %v1547
          %v1593 = vpack.c.b16 %v1550, %v1549
          %v1594 = vpack.c.b16 %v1552, %v1551
          %v1595 = vpack.c.b16 %v1554, %v1553
          %v1596 = vpack.c.b16 %v1556, %v1555
          %v1597 = vpack.c.b16 %v1558, %v1557
          %v1598 = vpack.c.b16 %v1560, %v1559
          %v1599 = vpack.c.b16 %v1562, %v1561
          %v1600 = vpack.c.b16 %v1564, %v1563
          %v1601 = vpack.c.b16 %v1566, %v1565
          %v1602 = vpack.c.b16 %v1568, %v1567
          %v1603 = vpack.c.b16 %v1570, %v1569
          %v1604 = vpack.c.b16 %v1572, %v1571
          %1637 = vst [vmem:[#allocation2] sm:$0xff] %v1573
          %1638 = vst [vmem:[#allocation2 + $0x8] sm:$0xff] %v1574
          %1639 = vst [vmem:[#allocation2 + $0x10] sm:$0xff] %v1575
          %1640 = vst [vmem:[#allocation2 + $0x18] sm:$0xff] %v1576
          %1641 = vst [vmem:[#allocation2 + $0x20] sm:$0xff] %v1577
          %1642 = vst [vmem:[#allocation2 + $0x28] sm:$0xff] %v1578
          %1643 = vst [vmem:[#allocation2 + $0x30] sm:$0xff] %v1579
          %1644 = vst [vmem:[#allocation2 + $0x38] sm:$0xff] %v1580
          %1645 = vst [vmem:[#allocation2 + $0x40] sm:$0xff] %v1581
          %1646 = vst [vmem:[#allocation2 + $0x48] sm:$0xff] %v1582
          %1647 = vst [vmem:[#allocation2 + $0x50] sm:$0xff] %v1583
          %1648 = vst [vmem:[#allocation2 + $0x58] sm:$0xff] %v1584
          %1649 = vst [vmem:[#allocation2 + $0x60] sm:$0xff] %v1585
          %1650 = vst [vmem:[#allocation2 + $0x68] sm:$0xff] %v1586
          %1651 = vst [vmem:[#allocation2 + $0x70] sm:$0xff] %v1587
          %1652 = vst [vmem:[#allocation2 + $0x78] sm:$0xff] %v1588
          %1653 = vst [vmem:[#allocation2 + $0x80] sm:$0xff] %v1589
          %1654 = vst [vmem:[#allocation2 + $0x88] sm:$0xff] %v1590
          %1655 = vst [vmem:[#allocation2 + $0x90] sm:$0xff] %v1591
          %1656 = vst [vmem:[#allocation2 + $0x98] sm:$0xff] %v1592
          %1657 = vst [vmem:[#allocation2 + $0xa0] sm:$0xff] %v1593
          %1658 = vst [vmem:[#allocation2 + $0xa8] sm:$0xff] %v1594
          %1659 = vst [vmem:[#allocation2 + $0xb0] sm:$0xff] %v1595
          %1660 = vst [vmem:[#allocation2 + $0xb8] sm:$0xff] %v1596
          %1661 = vst [vmem:[#allocation2 + $0xc0] sm:$0xff] %v1597
          %1662 = vst [vmem:[#allocation2 + $0xc8] sm:$0xff] %v1598
          %1663 = vst [vmem:[#allocation2 + $0xd0] sm:$0xff] %v1599
          %1664 = vst [vmem:[#allocation2 + $0xd8] sm:$0xff] %v1600
          %1665 = vst [vmem:[#allocation2 + $0xe0] sm:$0xff] %v1601
          %1666 = vst [vmem:[#allocation2 + $0xe8] sm:$0xff] %v1602
          %1667 = vst [vmem:[#allocation2 + $0xf0] sm:$0xff] %v1603
          %1668 = vst [vmem:[#allocation2 + $0xf8] sm:$0xff] %v1604
          %v1669 = vpack.c.bf16 %v1258, %v1254
          %v1670 = vpack.c.bf16 %v1260, %v1256
          %v1671 = vpack.c.bf16 %v1371, %v1367
          %v1672 = vpack.c.bf16 %v1373, %v1369
          %v1673 = vpack.c.bf16 %v1268, %v1264
          %v1674 = vpack.c.bf16 %v1270, %v1266
          %v1675 = vpack.c.bf16 %v1381, %v1377
          %v1676 = vpack.c.bf16 %v1383, %v1379
          %v1677 = vpack.c.bf16 %v1278, %v1274
          %v1678 = vpack.c.bf16 %v1280, %v1276
          %v1679 = vpack.c.bf16 %v1391, %v1387
          %v1680 = vpack.c.bf16 %v1393, %v1389
          %v1681 = vpack.c.bf16 %v1288, %v1284
          %v1682 = vpack.c.bf16 %v1290, %v1286
          %v1683 = vpack.c.bf16 %v1401, %v1397
          %v1684 = vpack.c.bf16 %v1403, %v1399
          %v1685 = vpack.c.bf16 %v1298, %v1294
          %v1686 = vpack.c.bf16 %v1300, %v1296
          %v1687 = vpack.c.bf16 %v1411, %v1407
          %v1688 = vpack.c.bf16 %v1413, %v1409
          %v1689 = vpack.c.bf16 %v1308, %v1304
          %v1690 = vpack.c.bf16 %v1310, %v1306
          %v1691 = vpack.c.bf16 %v1421, %v1417
          %v1692 = vpack.c.bf16 %v1423, %v1419
          %v1693 = vpack.c.bf16 %v1318, %v1314
          %v1694 = vpack.c.bf16 %v1320, %v1316
          %v1695 = vpack.c.bf16 %v1431, %v1427
          %v1696 = vpack.c.bf16 %v1433, %v1429
          %v1697 = vpack.c.bf16 %v1328, %v1324
          %v1698 = vpack.c.bf16 %v1330, %v1326
          %v1699 = vpack.c.bf16 %v1441, %v1437
          %v1700 = vpack.c.bf16 %v1443, %v1439
          %v1733 = vunpack.c.l.b16 %v1669
          %v1734 = vunpack.c.l.b16 %v1670
          %v1735 = vunpack.c.l.b16 %v1671
          %v1736 = vunpack.c.l.b16 %v1672
          %v1737 = vunpack.c.h.b16 %v1669
          %v1738 = vunpack.c.h.b16 %v1670
          %v1739 = vunpack.c.h.b16 %v1671
          %v1740 = vunpack.c.h.b16 %v1672
          %v1741 = vunpack.c.l.b16 %v1673
          %v1742 = vunpack.c.l.b16 %v1674
          %v1743 = vunpack.c.l.b16 %v1675
          %v1744 = vunpack.c.l.b16 %v1676
          %v1745 = vunpack.c.h.b16 %v1673
          %v1746 = vunpack.c.h.b16 %v1674
          %v1747 = vunpack.c.h.b16 %v1675
          %v1748 = vunpack.c.h.b16 %v1676
          %v1749 = vunpack.c.l.b16 %v1677
          %v1750 = vunpack.c.l.b16 %v1678
          %v1751 = vunpack.c.l.b16 %v1679
          %v1752 = vunpack.c.l.b16 %v1680
          %v1753 = vunpack.c.h.b16 %v1677
          %v1754 = vunpack.c.h.b16 %v1678
          %v1755 = vunpack.c.h.b16 %v1679
          %v1756 = vunpack.c.h.b16 %v1680
          %v1757 = vunpack.c.l.b16 %v1681
          %v1758 = vunpack.c.l.b16 %v1682
          %v1759 = vunpack.c.l.b16 %v1683
          %v1760 = vunpack.c.l.b16 %v1684
          %v1761 = vunpack.c.h.b16 %v1681
          %v1762 = vunpack.c.h.b16 %v1682
          %v1763 = vunpack.c.h.b16 %v1683
          %v1764 = vunpack.c.h.b16 %v1684
          %v1765 = vunpack.c.l.b16 %v1685
          %v1766 = vunpack.c.l.b16 %v1686
          %v1767 = vunpack.c.l.b16 %v1687
          %v1768 = vunpack.c.l.b16 %v1688
          %v1769 = vunpack.c.h.b16 %v1685
          %v1770 = vunpack.c.h.b16 %v1686
          %v1771 = vunpack.c.h.b16 %v1687
          %v1772 = vunpack.c.h.b16 %v1688
          %v1773 = vunpack.c.l.b16 %v1689
          %v1774 = vunpack.c.l.b16 %v1690
          %v1775 = vunpack.c.l.b16 %v1691
          %v1776 = vunpack.c.l.b16 %v1692
          %v1777 = vunpack.c.h.b16 %v1689
          %v1778 = vunpack.c.h.b16 %v1690
          %v1779 = vunpack.c.h.b16 %v1691
          %v1780 = vunpack.c.h.b16 %v1692
          %v1781 = vunpack.c.l.b16 %v1693
          %v1782 = vunpack.c.l.b16 %v1694
          %v1783 = vunpack.c.l.b16 %v1695
          %v1784 = vunpack.c.l.b16 %v1696
          %v1785 = vunpack.c.h.b16 %v1693
          %v1786 = vunpack.c.h.b16 %v1694
          %v1787 = vunpack.c.h.b16 %v1695
          %v1788 = vunpack.c.h.b16 %v1696
          %v1789 = vunpack.c.l.b16 %v1697
          %v1790 = vunpack.c.l.b16 %v1698
          %v1791 = vunpack.c.l.b16 %v1699
          %v1792 = vunpack.c.l.b16 %v1700
          %v1793 = vunpack.c.h.b16 %v1697
          %v1794 = vunpack.c.h.b16 %v1698
          %v1795 = vunpack.c.h.b16 %v1699
          %v1796 = vunpack.c.h.b16 %v1700
          %v1797 = vpack.c.b16 %v1734, %v1733
          %v1798 = vpack.c.b16 %v1736, %v1735
          %v1799 = vpack.c.b16 %v1738, %v1737
          %v1800 = vpack.c.b16 %v1740, %v1739
          %v1801 = vpack.c.b16 %v1742, %v1741
          %v1802 = vpack.c.b16 %v1744, %v1743
          %v1803 = vpack.c.b16 %v1746, %v1745
          %v1804 = vpack.c.b16 %v1748, %v1747
          %v1805 = vpack.c.b16 %v1750, %v1749
          %v1806 = vpack.c.b16 %v1752, %v1751
          %v1807 = vpack.c.b16 %v1754, %v1753
          %v1808 = vpack.c.b16 %v1756, %v1755
          %v1809 = vpack.c.b16 %v1758, %v1757
          %v1810 = vpack.c.b16 %v1760, %v1759
          %v1811 = vpack.c.b16 %v1762, %v1761
          %v1812 = vpack.c.b16 %v1764, %v1763
          %v1813 = vpack.c.b16 %v1766, %v1765
          %v1814 = vpack.c.b16 %v1768, %v1767
          %v1815 = vpack.c.b16 %v1770, %v1769
          %v1816 = vpack.c.b16 %v1772, %v1771
          %v1817 = vpack.c.b16 %v1774, %v1773
          %v1818 = vpack.c.b16 %v1776, %v1775
          %v1819 = vpack.c.b16 %v1778, %v1777
          %v1820 = vpack.c.b16 %v1780, %v1779
          %v1821 = vpack.c.b16 %v1782, %v1781
          %v1822 = vpack.c.b16 %v1784, %v1783
          %v1823 = vpack.c.b16 %v1786, %v1785
          %v1824 = vpack.c.b16 %v1788, %v1787
          %v1825 = vpack.c.b16 %v1790, %v1789
          %v1826 = vpack.c.b16 %v1792, %v1791
          %v1827 = vpack.c.b16 %v1794, %v1793
          %v1828 = vpack.c.b16 %v1796, %v1795
          %1861 = vst [vmem:[#allocation3] sm:$0xff] %v1797
          %1862 = vst [vmem:[#allocation3 + $0x8] sm:$0xff] %v1798
          %1863 = vst [vmem:[#allocation3 + $0x10] sm:$0xff] %v1799
          %1864 = vst [vmem:[#allocation3 + $0x18] sm:$0xff] %v1800
          %1865 = vst [vmem:[#allocation3 + $0x20] sm:$0xff] %v1801
          %1866 = vst [vmem:[#allocation3 + $0x28] sm:$0xff] %v1802
          %1867 = vst [vmem:[#allocation3 + $0x30] sm:$0xff] %v1803
          %1868 = vst [vmem:[#allocation3 + $0x38] sm:$0xff] %v1804
          %1869 = vst [vmem:[#allocation3 + $0x40] sm:$0xff] %v1805
          %1870 = vst [vmem:[#allocation3 + $0x48] sm:$0xff] %v1806
          %1871 = vst [vmem:[#allocation3 + $0x50] sm:$0xff] %v1807
          %1872 = vst [vmem:[#allocation3 + $0x58] sm:$0xff] %v1808
          %1873 = vst [vmem:[#allocation3 + $0x60] sm:$0xff] %v1809
          %1874 = vst [vmem:[#allocation3 + $0x68] sm:$0xff] %v1810
          %1875 = vst [vmem:[#allocation3 + $0x70] sm:$0xff] %v1811
          %1876 = vst [vmem:[#allocation3 + $0x78] sm:$0xff] %v1812
          %1877 = vst [vmem:[#allocation3 + $0x80] sm:$0xff] %v1813
          %1878 = vst [vmem:[#allocation3 + $0x88] sm:$0xff] %v1814
          %1879 = vst [vmem:[#allocation3 + $0x90] sm:$0xff] %v1815
          %1880 = vst [vmem:[#allocation3 + $0x98] sm:$0xff] %v1816
          %1881 = vst [vmem:[#allocation3 + $0xa0] sm:$0xff] %v1817
          %1882 = vst [vmem:[#allocation3 + $0xa8] sm:$0xff] %v1818
          %1883 = vst [vmem:[#allocation3 + $0xb0] sm:$0xff] %v1819
          %1884 = vst [vmem:[#allocation3 + $0xb8] sm:$0xff] %v1820
          %1885 = vst [vmem:[#allocation3 + $0xc0] sm:$0xff] %v1821
          %1886 = vst [vmem:[#allocation3 + $0xc8] sm:$0xff] %v1822
          %1887 = vst [vmem:[#allocation3 + $0xd0] sm:$0xff] %v1823
          %1888 = vst [vmem:[#allocation3 + $0xd8] sm:$0xff] %v1824
          %1889 = vst [vmem:[#allocation3 + $0xe0] sm:$0xff] %v1825
          %1890 = vst [vmem:[#allocation3 + $0xe8] sm:$0xff] %v1826
          %1891 = vst [vmem:[#allocation3 + $0xf0] sm:$0xff] %v1827
          %1892 = vst [vmem:[#allocation3 + $0xf8] sm:$0xff] %v1828
        $region88: #{tpu_custom_call.1} parent=59 // pred_fallthru
          _
        %v1893 = vld [vmem:[%s427] sm:$0xf]
        %v1894 = vld [vmem:[%s427 + $0x4] sm:$0xf]
        %v1895 = vld [vmem:[#allocation10] sm:$0xff]
        %v1896 = vld [vmem:[#allocation10 + $0x8] sm:$0xff]
        %v1897 = vld [vmem:[#allocation10 + $0x10] sm:$0xff]
        %v1898 = vld [vmem:[#allocation10 + $0x18] sm:$0xff]
        %v1899 = vld [vmem:[#allocation10 + $0x20] sm:$0xff]
        %v1900 = vld [vmem:[#allocation10 + $0x28] sm:$0xff]
        %v1901 = vld [vmem:[#allocation10 + $0x30] sm:$0xff]
        %v1902 = vld [vmem:[#allocation10 + $0x38] sm:$0xff]
        %v1903 = vld [vmem:[#allocation10 + $0x40] sm:$0xff]
        %v1904 = vld [vmem:[#allocation10 + $0x48] sm:$0xff]
        %v1905 = vld [vmem:[#allocation10 + $0x50] sm:$0xff]
        %v1906 = vld [vmem:[#allocation10 + $0x58] sm:$0xff]
        %v1907 = vld [vmem:[#allocation10 + $0x60] sm:$0xff]
        %v1908 = vld [vmem:[#allocation10 + $0x68] sm:$0xff]
        %v1909 = vld [vmem:[#allocation10 + $0x70] sm:$0xff]
        %v1910 = vld [vmem:[#allocation10 + $0x78] sm:$0xff]
        %v1911 = vld [vmem:[#allocation10 + $0x80] sm:$0xff]
        %v1912 = vld [vmem:[#allocation10 + $0x88] sm:$0xff]
        %v1913 = vld [vmem:[#allocation10 + $0x90] sm:$0xff]
        %v1914 = vld [vmem:[#allocation10 + $0x98] sm:$0xff]
        %v1915 = vld [vmem:[#allocation10 + $0xa0] sm:$0xff]
        %v1916 = vld [vmem:[#allocation10 + $0xa8] sm:$0xff]
        %v1917 = vld [vmem:[#allocation10 + $0xb0] sm:$0xff]
        %v1918 = vld [vmem:[#allocation10 + $0xb8] sm:$0xff]
        %v1919 = vld [vmem:[#allocation10 + $0xc0] sm:$0xff]
        %v1920 = vld [vmem:[#allocation10 + $0xc8] sm:$0xff]
        %v1921 = vld [vmem:[#allocation10 + $0xd0] sm:$0xff]
        %v1922 = vld [vmem:[#allocation10 + $0xd8] sm:$0xff]
        %v1923 = vld [vmem:[#allocation10 + $0xe0] sm:$0xff]
        %v1924 = vld [vmem:[#allocation10 + $0xe8] sm:$0xff]
        %v1925 = vld [vmem:[#allocation10 + $0xf0] sm:$0xff]
        %v1926 = vld [vmem:[#allocation10 + $0xf8] sm:$0xff]
        %v1927 = vld [vmem:[%s3] sm:$0xf]
        %v1929 = vlaneseq
        %v1930 = vshrl.u32 %v1929, 7
        %v1931 = vsub.s32 0, %v1930
        %v1932 = vrot.slane %v1927, %v1931
        %v1933 = vlaneseq
        %v1934 = vshrl.u32 %v1933, 7
        %v1935 = vsub.s32 1, %v1934
        %v1936 = vrot.slane %v1927, %v1935
        %v1937 = vlaneseq
        %v1938 = vshrl.u32 %v1937, 7
        %v1939 = vsub.s32 2, %v1938
        %v1940 = vrot.slane %v1927, %v1939
        %v1941 = vlaneseq
        %v1942 = vshrl.u32 %v1941, 7
        %v1943 = vsub.s32 3, %v1942
        %v1944 = vrot.slane %v1927, %v1943
        %v1951 = vunpack.c.l.b16 %v1893
        %v1952 = vunpack.c.l.b16 %v1894
        %v1953 = vpack.c.b16 %v1952, %v1951
        %v1987 = vunpack.c.l.b16 %v1895
        %v1988 = vunpack.c.h.b16 %v1895
        %v1989 = vunpack.c.l.b16 %v1896
        %v1990 = vunpack.c.h.b16 %v1896
        %v1991 = vunpack.c.l.b16 %v1897
        %v1992 = vunpack.c.h.b16 %v1897
        %v1993 = vunpack.c.l.b16 %v1898
        %v1994 = vunpack.c.h.b16 %v1898
        %v1995 = vunpack.c.l.b16 %v1899
        %v1996 = vunpack.c.h.b16 %v1899
        %v1997 = vunpack.c.l.b16 %v1900
        %v1998 = vunpack.c.h.b16 %v1900
        %v1999 = vunpack.c.l.b16 %v1901
        %v2000 = vunpack.c.h.b16 %v1901
        %v2001 = vunpack.c.l.b16 %v1902
        %v2002 = vunpack.c.h.b16 %v1902
        %v2003 = vunpack.c.l.b16 %v1903
        %v2004 = vunpack.c.h.b16 %v1903
        %v2005 = vunpack.c.l.b16 %v1904
        %v2006 = vunpack.c.h.b16 %v1904
        %v2007 = vunpack.c.l.b16 %v1905
        %v2008 = vunpack.c.h.b16 %v1905
        %v2009 = vunpack.c.l.b16 %v1906
        %v2010 = vunpack.c.h.b16 %v1906
        %v2011 = vunpack.c.l.b16 %v1907
        %v2012 = vunpack.c.h.b16 %v1907
        %v2013 = vunpack.c.l.b16 %v1908
        %v2014 = vunpack.c.h.b16 %v1908
        %v2015 = vunpack.c.l.b16 %v1909
        %v2016 = vunpack.c.h.b16 %v1909
        %v2017 = vunpack.c.l.b16 %v1910
        %v2018 = vunpack.c.h.b16 %v1910
        %v2019 = vunpack.c.l.b16 %v1911
        %v2020 = vunpack.c.h.b16 %v1911
        %v2021 = vunpack.c.l.b16 %v1912
        %v2022 = vunpack.c.h.b16 %v1912
        %v2023 = vunpack.c.l.b16 %v1913
        %v2024 = vunpack.c.h.b16 %v1913
        %v2025 = vunpack.c.l.b16 %v1914
        %v2026 = vunpack.c.h.b16 %v1914
        %v2027 = vunpack.c.l.b16 %v1915
        %v2028 = vunpack.c.h.b16 %v1915
        %v2029 = vunpack.c.l.b16 %v1916
        %v2030 = vunpack.c.h.b16 %v1916
        %v2031 = vunpack.c.l.b16 %v1917
        %v2032 = vunpack.c.h.b16 %v1917
        %v2033 = vunpack.c.l.b16 %v1918
        %v2034 = vunpack.c.h.b16 %v1918
        %v2035 = vunpack.c.l.b16 %v1919
        %v2036 = vunpack.c.h.b16 %v1919
        %v2037 = vunpack.c.l.b16 %v1920
        %v2038 = vunpack.c.h.b16 %v1920
        %v2039 = vunpack.c.l.b16 %v1921
        %v2040 = vunpack.c.h.b16 %v1921
        %v2041 = vunpack.c.l.b16 %v1922
        %v2042 = vunpack.c.h.b16 %v1922
        %v2043 = vunpack.c.l.b16 %v1923
        %v2044 = vunpack.c.h.b16 %v1923
        %v2045 = vunpack.c.l.b16 %v1924
        %v2046 = vunpack.c.h.b16 %v1924
        %v2047 = vunpack.c.l.b16 %v1925
        %v2048 = vunpack.c.h.b16 %v1925
        %v2049 = vunpack.c.l.b16 %v1926
        %v2050 = vunpack.c.h.b16 %v1926
        %v2051 = vpack.c.b16 %v1991, %v1987
        %v2052 = vpack.c.b16 %v1992, %v1988
        %v2053 = vpack.c.b16 %v1993, %v1989
        %v2054 = vpack.c.b16 %v1994, %v1990
        %v2055 = vpack.c.b16 %v1999, %v1995
        %v2056 = vpack.c.b16 %v2000, %v1996
        %v2057 = vpack.c.b16 %v2001, %v1997
        %v2058 = vpack.c.b16 %v2002, %v1998
        %v2059 = vpack.c.b16 %v2007, %v2003
        %v2060 = vpack.c.b16 %v2008, %v2004
        %v2061 = vpack.c.b16 %v2009, %v2005
        %v2062 = vpack.c.b16 %v2010, %v2006
        %v2063 = vpack.c.b16 %v2015, %v2011
        %v2064 = vpack.c.b16 %v2016, %v2012
        %v2065 = vpack.c.b16 %v2017, %v2013
        %v2066 = vpack.c.b16 %v2018, %v2014
        %v2067 = vpack.c.b16 %v2023, %v2019
        %v2068 = vpack.c.b16 %v2024, %v2020
        %v2069 = vpack.c.b16 %v2025, %v2021
        %v2070 = vpack.c.b16 %v2026, %v2022
        %v2071 = vpack.c.b16 %v2031, %v2027
        %v2072 = vpack.c.b16 %v2032, %v2028
        %v2073 = vpack.c.b16 %v2033, %v2029
        %v2074 = vpack.c.b16 %v2034, %v2030
        %v2075 = vpack.c.b16 %v2039, %v2035
        %v2076 = vpack.c.b16 %v2040, %v2036
        %v2077 = vpack.c.b16 %v2041, %v2037
        %v2078 = vpack.c.b16 %v2042, %v2038
        %v2079 = vpack.c.b16 %v2047, %v2043
        %v2080 = vpack.c.b16 %v2048, %v2044
        %v2081 = vpack.c.b16 %v2049, %v2045
        %v2082 = vpack.c.b16 %v2050, %v2046
        %2115 = vmatprep.subr.bf16.mxu0 %v2080
        %2116 = vmatpush1.bf16.msra.mxu0 %v2079
        %2117 = vmatprep.subr.bf16.mxu0 %v2076
        %2118 = vmatpush1.bf16.msra.mxu0 %v2075
        %2119 = vmatprep.subr.bf16.mxu0 %v2072
        %2120 = vmatpush1.bf16.msra.mxu0 %v2071
        %2121 = vmatprep.subr.bf16.mxu0 %v2068
        %2122 = vmatpush1.bf16.msra.mxu0 %v2067
        %2123 = vmatprep.subr.bf16.mxu0 %v2064
        %2124 = vmatpush1.bf16.msra.mxu0 %v2063
        %2125 = vmatprep.subr.bf16.mxu0 %v2060
        %2126 = vmatpush1.bf16.msra.mxu0 %v2059
        %2127 = vmatprep.subr.bf16.mxu0 %v2056
        %2128 = vmatpush1.bf16.msra.mxu0 %v2055
        %2129 = vmatprep.subr.bf16.mxu0 %v2052
        %2130 = vmatpush1.bf16.msra.mxu0 %v2051
        %2131 = vmatprep.subr.bf16.mxu0 0
        %2132 = vmatpush2.bf16.msra.mxu0 0
        %2133 = vmatprep.subr.bf16.mxu0 0
        %2134 = vmatpush2.bf16.msra.mxu0 0
        %2135 = vmatprep.subr.bf16.mxu0 0
        %2136 = vmatpush2.bf16.msra.mxu0 0
        %2137 = vmatprep.subr.bf16.mxu0 0
        %2138 = vmatpush2.bf16.msra.mxu0 0
        %2139 = vmatprep.subr.bf16.mxu0 0
        %2140 = vmatpush2.bf16.msra.mxu0 0
        %2141 = vmatprep.subr.bf16.mxu0 0
        %2142 = vmatpush2.bf16.msra.mxu0 0
        %2143 = vmatprep.subr.bf16.mxu0 0
        %2144 = vmatpush2.bf16.msra.mxu0 0
        %2145 = vmatprep.subr.bf16.mxu0 0
        %2146 = vmatpush2.bf16.msra.mxu0 0
        %2147 = vmatprep.mubr.bf16.mxu0 0
        %2148 = vmatmul.mubr.bf16.gmra.mxu0 %v1953
        %v2149 = vpop.f32.mrf.mxu0
        %v2150 = vadd.f32 %v1932, %v2149
        %v2151 = vpop.f32.mrf.mxu0
        %v2152 = vadd.f32 %v1936, %v2151
        %v2153 = vpop.f32.mrf.mxu0
        %v2154 = vadd.f32 %v1932, %v2153
        %v2155 = vpop.f32.mrf.mxu0
        %v2156 = vadd.f32 %v1936, %v2155
        %2157 = vdwg.mxu0
        %2158 = vmatprep.subr.bf16.mxu0 %v2082
        %2159 = vmatpush1.bf16.msra.mxu0 %v2081
        %2160 = vmatprep.subr.bf16.mxu0 %v2078
        %2161 = vmatpush1.bf16.msra.mxu0 %v2077
        %2162 = vmatprep.subr.bf16.mxu0 %v2074
        %2163 = vmatpush1.bf16.msra.mxu0 %v2073
        %2164 = vmatprep.subr.bf16.mxu0 %v2070
        %2165 = vmatpush1.bf16.msra.mxu0 %v2069
        %2166 = vmatprep.subr.bf16.mxu0 %v2066
        %2167 = vmatpush1.bf16.msra.mxu0 %v2065
        %2168 = vmatprep.subr.bf16.mxu0 %v2062
        %2169 = vmatpush1.bf16.msra.mxu0 %v2061
        %2170 = vmatprep.subr.bf16.mxu0 %v2058
        %2171 = vmatpush1.bf16.msra.mxu0 %v2057
        %2172 = vmatprep.subr.bf16.mxu0 %v2054
        %2173 = vmatpush1.bf16.msra.mxu0 %v2053
        %2174 = vmatprep.subr.bf16.mxu0 0
        %2175 = vmatpush2.bf16.msra.mxu0 0
        %2176 = vmatprep.subr.bf16.mxu0 0
        %2177 = vmatpush2.bf16.msra.mxu0 0
        %2178 = vmatprep.subr.bf16.mxu0 0
        %2179 = vmatpush2.bf16.msra.mxu0 0
        %2180 = vmatprep.subr.bf16.mxu0 0
        %2181 = vmatpush2.bf16.msra.mxu0 0
        %2182 = vmatprep.subr.bf16.mxu0 0
        %2183 = vmatpush2.bf16.msra.mxu0 0
        %2184 = vmatprep.subr.bf16.mxu0 0
        %2185 = vmatpush2.bf16.msra.mxu0 0
        %2186 = vmatprep.subr.bf16.mxu0 0
        %2187 = vmatpush2.bf16.msra.mxu0 0
        %2188 = vmatprep.subr.bf16.mxu0 0
        %2189 = vmatpush2.bf16.msra.mxu0 0
        %2190 = vmatprep.mubr.bf16.mxu0 0
        %2191 = vmatmul.mubr.bf16.gmra.mxu0 %v1953
        %v2192 = vpop.f32.mrf.mxu0
        %v2193 = vadd.f32 %v1940, %v2192
        %v2194 = vpop.f32.mrf.mxu0
        %v2195 = vadd.f32 %v1944, %v2194
        %v2196 = vpop.f32.mrf.mxu0
        %v2197 = vadd.f32 %v1940, %v2196
        %v2198 = vpop.f32.mrf.mxu0
        %v2199 = vadd.f32 %v1944, %v2198
        %2200 = vdwg.mxu0
        %v2201 = vpack.c.bf16 %v2154, %v2150
        %v2202 = vpack.c.bf16 %v2156, %v2152
        %v2203 = vpack.c.bf16 %v2197, %v2193
        %v2204 = vpack.c.bf16 %v2199, %v2195
        %v2205 = vlaneseq
        %v2206 = vand.u32 %v2205, 127
        %vm2207 = vcmp.lt.s32.totalorder %v2206, 8
        %v2208 = vsel %vm2207, 0.0, -1e+30
        %v2209 = vld [vmem:[#allocation2] sm:$0xf]
        %v2210 = vld [vmem:[#allocation2 + $0x10] sm:$0xf]
        %v2211 = vld [vmem:[#allocation2 + $0x20] sm:$0xf]
        %v2212 = vld [vmem:[#allocation2 + $0x30] sm:$0xf]
        %v2213 = vld [vmem:[#allocation2 + $0x40] sm:$0xf]
        %v2214 = vld [vmem:[#allocation2 + $0x50] sm:$0xf]
        %v2215 = vld [vmem:[#allocation2 + $0x60] sm:$0xf]
        %v2216 = vld [vmem:[#allocation2 + $0x70] sm:$0xf]
        %v2217 = vld [vmem:[#allocation2 + $0x80] sm:$0xf]
        %v2218 = vld [vmem:[#allocation2 + $0x90] sm:$0xf]
        %v2219 = vld [vmem:[#allocation2 + $0xa0] sm:$0xf]
        %v2220 = vld [vmem:[#allocation2 + $0xb0] sm:$0xf]
        %v2221 = vld [vmem:[#allocation2 + $0xc0] sm:$0xf]
        %v2222 = vld [vmem:[#allocation2 + $0xd0] sm:$0xf]
        %v2223 = vld [vmem:[#allocation2 + $0xe0] sm:$0xf]
        %v2224 = vld [vmem:[#allocation2 + $0xf0] sm:$0xf]
        %v2225 = vld [vmem:[#allocation3] sm:$0xf]
        %v2226 = vld [vmem:[#allocation3 + $0x10] sm:$0xf]
        %v2227 = vld [vmem:[#allocation3 + $0x20] sm:$0xf]
        %v2228 = vld [vmem:[#allocation3 + $0x30] sm:$0xf]
        %v2229 = vld [vmem:[#allocation3 + $0x40] sm:$0xf]
        %v2230 = vld [vmem:[#allocation3 + $0x50] sm:$0xf]
        %v2231 = vld [vmem:[#allocation3 + $0x60] sm:$0xf]
        %v2232 = vld [vmem:[#allocation3 + $0x70] sm:$0xf]
        %v2233 = vld [vmem:[#allocation3 + $0x80] sm:$0xf]
        %v2234 = vld [vmem:[#allocation3 + $0x90] sm:$0xf]
        %v2235 = vld [vmem:[#allocation3 + $0xa0] sm:$0xf]
        %v2236 = vld [vmem:[#allocation3 + $0xb0] sm:$0xf]
        %v2237 = vld [vmem:[#allocation3 + $0xc0] sm:$0xf]
        %v2238 = vld [vmem:[#allocation3 + $0xd0] sm:$0xf]
        %v2239 = vld [vmem:[#allocation3 + $0xe0] sm:$0xf]
        %v2240 = vld [vmem:[#allocation3 + $0xf0] sm:$0xf]
        %v2257 = vunpack.c.l.b16 %v2209
        %v2258 = vunpack.c.l.b16 %v2210
        %v2259 = vunpack.c.l.b16 %v2211
        %v2260 = vunpack.c.l.b16 %v2212
        %v2261 = vunpack.c.l.b16 %v2213
        %v2262 = vunpack.c.l.b16 %v2214
        %v2263 = vunpack.c.l.b16 %v2215
        %v2264 = vunpack.c.l.b16 %v2216
        %v2265 = vunpack.c.l.b16 %v2217
        %v2266 = vunpack.c.l.b16 %v2218
        %v2267 = vunpack.c.l.b16 %v2219
        %v2268 = vunpack.c.l.b16 %v2220
        %v2269 = vunpack.c.l.b16 %v2221
        %v2270 = vunpack.c.l.b16 %v2222
        %v2271 = vunpack.c.l.b16 %v2223
        %v2272 = vunpack.c.l.b16 %v2224
        %v2273 = vpack.c.b16 %v2258, %v2257
        %v2274 = vpack.c.b16 %v2260, %v2259
        %v2275 = vpack.c.b16 %v2262, %v2261
        %v2276 = vpack.c.b16 %v2264, %v2263
        %v2277 = vpack.c.b16 %v2266, %v2265
        %v2278 = vpack.c.b16 %v2268, %v2267
        %v2279 = vpack.c.b16 %v2270, %v2269
        %v2280 = vpack.c.b16 %v2272, %v2271
        %2289 = vmatprep.subr.bf16.mxu0 0
        %2290 = vmatpush1.bf16.xpose.msra.mxu0 %v2280
        %2291 = vmatprep.subr.bf16.mxu0 0
        %2292 = vmatpush1.bf16.xpose.msra.mxu0 %v2279
        %2293 = vmatprep.subr.bf16.mxu0 0
        %2294 = vmatpush1.bf16.xpose.msra.mxu0 %v2278
        %2295 = vmatprep.subr.bf16.mxu0 0
        %2296 = vmatpush1.bf16.xpose.msra.mxu0 %v2277
        %2297 = vmatprep.subr.bf16.mxu0 0
        %2298 = vmatpush1.bf16.xpose.msra.mxu0 %v2276
        %2299 = vmatprep.subr.bf16.mxu0 0
        %2300 = vmatpush1.bf16.xpose.msra.mxu0 %v2275
        %2301 = vmatprep.subr.bf16.mxu0 0
        %2302 = vmatpush1.bf16.xpose.msra.mxu0 %v2274
        %2303 = vmatprep.subr.bf16.mxu0 0
        %2304 = vmatpush1.bf16.xpose.msra.mxu0 %v2273
        %2305 = vmatprep.subr.bf16.mxu0 0
        %2306 = vmatpush2.bf16.xpose.msra.mxu0 0
        %2307 = vmatprep.subr.bf16.mxu0 0
        %2308 = vmatpush2.bf16.xpose.msra.mxu0 0
        %2309 = vmatprep.subr.bf16.mxu0 0
        %2310 = vmatpush2.bf16.xpose.msra.mxu0 0
        %2311 = vmatprep.subr.bf16.mxu0 0
        %2312 = vmatpush2.bf16.xpose.msra.mxu0 0
        %2313 = vmatprep.subr.bf16.mxu0 0
        %2314 = vmatpush2.bf16.xpose.msra.mxu0 0
        %2315 = vmatprep.subr.bf16.mxu0 0
        %2316 = vmatpush2.bf16.xpose.msra.mxu0 0
        %2317 = vmatprep.subr.bf16.mxu0 0
        %2318 = vmatpush2.bf16.xpose.msra.mxu0 0
        %2319 = vmatprep.subr.bf16.mxu0 0
        %2320 = vmatpush2.bf16.xpose.msra.mxu0 0
        %2321 = vmatprep.mubr.bf16.mxu0 0
        %2322 = vmatmul.mubr.bf16.gmra.mxu0 %v2201
        %v2323 = vpop.f32.mrf.mxu0
        %v2324 = vadd.f32 %v2208, %v2323
        %v2325 = vpop.f32.mrf.mxu0
        %v2326 = vpop.f32.mrf.mxu0
        %v2327 = vadd.f32 %v2208, %v2326
        %v2328 = vpop.f32.mrf.mxu0
        %2329 = vdwg.mxu0
        %2330 = vmax.xlane.f32.xlu0 %v2324
        %v2331 = vpop.xlane.xlu0 %2330
        %2332 = vmax.xlane.f32.xlu0 %v2327
        %v2333 = vpop.xlane.xlu0 %2332
        %v2334 = vsub.f32 %v2324, %v2331
        %v2335 = vsub.f32 %v2327, %v2333
        %v2336 = vmul.f32 %v2334, 1.442695
        %v2337 = vpow.pop %v2336
        %v2338 = vmul.f32 %v2335, 1.442695
        %v2339 = vpow.pop %v2338
        %2340 = vadd.xlane.f32.xlu0 %v2337
        %v2341 = vpop.xlane.xlu0 %2340
        %2342 = vadd.xlane.f32.xlu0 %v2339
        %v2343 = vpop.xlane.xlu0 %2342
        %v2344 = vpack.c.bf16 %v2339, %v2337
        %v2361 = vunpack.c.l.b16 %v2225
        %v2362 = vunpack.c.l.b16 %v2226
        %v2363 = vunpack.c.l.b16 %v2227
        %v2364 = vunpack.c.l.b16 %v2228
        %v2365 = vunpack.c.l.b16 %v2229
        %v2366 = vunpack.c.l.b16 %v2230
        %v2367 = vunpack.c.l.b16 %v2231
        %v2368 = vunpack.c.l.b16 %v2232
        %v2369 = vunpack.c.l.b16 %v2233
        %v2370 = vunpack.c.l.b16 %v2234
        %v2371 = vunpack.c.l.b16 %v2235
        %v2372 = vunpack.c.l.b16 %v2236
        %v2373 = vunpack.c.l.b16 %v2237
        %v2374 = vunpack.c.l.b16 %v2238
        %v2375 = vunpack.c.l.b16 %v2239
        %v2376 = vunpack.c.l.b16 %v2240
        %v2377 = vpack.c.b16 %v2362, %v2361
        %v2378 = vpack.c.b16 %v2364, %v2363
        %v2379 = vpack.c.b16 %v2366, %v2365
        %v2380 = vpack.c.b16 %v2368, %v2367
        %v2381 = vpack.c.b16 %v2370, %v2369
        %v2382 = vpack.c.b16 %v2372, %v2371
        %v2383 = vpack.c.b16 %v2374, %v2373
        %v2384 = vpack.c.b16 %v2376, %v2375
        %2393 = vmatprep.subr.bf16.mxu0 0
        %2394 = vmatpush1.bf16.msra.mxu0 %v2384
        %2395 = vmatprep.subr.bf16.mxu0 0
        %2396 = vmatpush1.bf16.msra.mxu0 %v2383
        %2397 = vmatprep.subr.bf16.mxu0 0
        %2398 = vmatpush1.bf16.msra.mxu0 %v2382
        %2399 = vmatprep.subr.bf16.mxu0 0
        %2400 = vmatpush1.bf16.msra.mxu0 %v2381
        %2401 = vmatprep.subr.bf16.mxu0 0
        %2402 = vmatpush1.bf16.msra.mxu0 %v2380
        %2403 = vmatprep.subr.bf16.mxu0 0
        %2404 = vmatpush1.bf16.msra.mxu0 %v2379
        %2405 = vmatprep.subr.bf16.mxu0 0
        %2406 = vmatpush1.bf16.msra.mxu0 %v2378
        %2407 = vmatprep.subr.bf16.mxu0 0
        %2408 = vmatpush1.bf16.msra.mxu0 %v2377
        %2409 = vmatprep.subr.bf16.mxu0 0
        %2410 = vmatpush2.bf16.msra.mxu0 0
        %2411 = vmatprep.subr.bf16.mxu0 0
        %2412 = vmatpush2.bf16.msra.mxu0 0
        %2413 = vmatprep.subr.bf16.mxu0 0
        %2414 = vmatpush2.bf16.msra.mxu0 0
        %2415 = vmatprep.subr.bf16.mxu0 0
        %2416 = vmatpush2.bf16.msra.mxu0 0
        %2417 = vmatprep.subr.bf16.mxu0 0
        %2418 = vmatpush2.bf16.msra.mxu0 0
        %2419 = vmatprep.subr.bf16.mxu0 0
        %2420 = vmatpush2.bf16.msra.mxu0 0
        %2421 = vmatprep.subr.bf16.mxu0 0
        %2422 = vmatpush2.bf16.msra.mxu0 0
        %2423 = vmatprep.subr.bf16.mxu0 0
        %2424 = vmatpush2.bf16.msra.mxu0 0
        %2425 = vmatprep.mubr.bf16.mxu0 0
        %2426 = vmatmul.mubr.bf16.gmra.mxu0 %v2344
        %v2427 = vpop.f32.mrf.mxu0
        %v2428 = vadd.f32 0.0, %v2427
        %v2429 = vpop.f32.mrf.mxu0
        %v2430 = vpop.f32.mrf.mxu0
        %v2431 = vadd.f32 0.0, %v2430
        %v2432 = vpop.f32.mrf.mxu0
        %2433 = vdwg.mxu0
        %v2434 = vrcp.pop %v2341
        %v2435 = vrcp.pop %v2343
        %v2436 = vmul.f32 %v2428, %v2434
        %v2437 = vmul.f32 %v2431, %v2435
        %v2438 = vpack.c.bf16 %v2437, %v2436
        %v2440 = vunpack.c.l.b16 %v2438
        %v2441 = vunpack.c.h.b16 %v2438
        %v2442 = vpack.c.b16 %v2440, %v2440
        %v2443 = vpack.c.b16 %v2441, %v2441
        %2446 = vst [vmem:[#allocation4] sm:$0xf] %v2442
        %2447 = vst [vmem:[#allocation4 + $0x10] sm:$0xf] %v2443
        %v2448 = vld [vmem:[#allocation2 + $0x4] sm:$0xf]
        %v2449 = vld [vmem:[#allocation2 + $0x14] sm:$0xf]
        %v2450 = vld [vmem:[#allocation2 + $0x24] sm:$0xf]
        %v2451 = vld [vmem:[#allocation2 + $0x34] sm:$0xf]
        %v2452 = vld [vmem:[#allocation2 + $0x44] sm:$0xf]
        %v2453 = vld [vmem:[#allocation2 + $0x54] sm:$0xf]
        %v2454 = vld [vmem:[#allocation2 + $0x64] sm:$0xf]
        %v2455 = vld [vmem:[#allocation2 + $0x74] sm:$0xf]
        %v2456 = vld [vmem:[#allocation2 + $0x84] sm:$0xf]
        %v2457 = vld [vmem:[#allocation2 + $0x94] sm:$0xf]
        %v2458 = vld [vmem:[#allocation2 + $0xa4] sm:$0xf]
        %v2459 = vld [vmem:[#allocation2 + $0xb4] sm:$0xf]
        %v2460 = vld [vmem:[#allocation2 + $0xc4] sm:$0xf]
        %v2461 = vld [vmem:[#allocation2 + $0xd4] sm:$0xf]
        %v2462 = vld [vmem:[#allocation2 + $0xe4] sm:$0xf]
        %v2463 = vld [vmem:[#allocation2 + $0xf4] sm:$0xf]
        %v2464 = vld [vmem:[#allocation3 + $0x4] sm:$0xf]
        %v2465 = vld [vmem:[#allocation3 + $0x14] sm:$0xf]
        %v2466 = vld [vmem:[#allocation3 + $0x24] sm:$0xf]
        %v2467 = vld [vmem:[#allocation3 + $0x34] sm:$0xf]
        %v2468 = vld [vmem:[#allocation3 + $0x44] sm:$0xf]
        %v2469 = vld [vmem:[#allocation3 + $0x54] sm:$0xf]
        %v2470 = vld [vmem:[#allocation3 + $0x64] sm:$0xf]
        %v2471 = vld [vmem:[#allocation3 + $0x74] sm:$0xf]
        %v2472 = vld [vmem:[#allocation3 + $0x84] sm:$0xf]
        %v2473 = vld [vmem:[#allocation3 + $0x94] sm:$0xf]
        %v2474 = vld [vmem:[#allocation3 + $0xa4] sm:$0xf]
        %v2475 = vld [vmem:[#allocation3 + $0xb4] sm:$0xf]
        %v2476 = vld [vmem:[#allocation3 + $0xc4] sm:$0xf]
        %v2477 = vld [vmem:[#allocation3 + $0xd4] sm:$0xf]
        %v2478 = vld [vmem:[#allocation3 + $0xe4] sm:$0xf]
        %v2479 = vld [vmem:[#allocation3 + $0xf4] sm:$0xf]
        %v2496 = vunpack.c.l.b16 %v2448
        %v2497 = vunpack.c.l.b16 %v2449
        %v2498 = vunpack.c.l.b16 %v2450
        %v2499 = vunpack.c.l.b16 %v2451
        %v2500 = vunpack.c.l.b16 %v2452
        %v2501 = vunpack.c.l.b16 %v2453
        %v2502 = vunpack.c.l.b16 %v2454
        %v2503 = vunpack.c.l.b16 %v2455
        %v2504 = vunpack.c.l.b16 %v2456
        %v2505 = vunpack.c.l.b16 %v2457
        %v2506 = vunpack.c.l.b16 %v2458
        %v2507 = vunpack.c.l.b16 %v2459
        %v2508 = vunpack.c.l.b16 %v2460
        %v2509 = vunpack.c.l.b16 %v2461
        %v2510 = vunpack.c.l.b16 %v2462
        %v2511 = vunpack.c.l.b16 %v2463
        %v2512 = vpack.c.b16 %v2497, %v2496
        %v2513 = vpack.c.b16 %v2499, %v2498
        %v2514 = vpack.c.b16 %v2501, %v2500
        %v2515 = vpack.c.b16 %v2503, %v2502
        %v2516 = vpack.c.b16 %v2505, %v2504
        %v2517 = vpack.c.b16 %v2507, %v2506
        %v2518 = vpack.c.b16 %v2509, %v2508
        %v2519 = vpack.c.b16 %v2511, %v2510
        %2528 = vmatprep.subr.bf16.mxu0 0
        %2529 = vmatpush1.bf16.xpose.msra.mxu0 %v2519
        %2530 = vmatprep.subr.bf16.mxu0 0
        %2531 = vmatpush1.bf16.xpose.msra.mxu0 %v2518
        %2532 = vmatprep.subr.bf16.mxu0 0
        %2533 = vmatpush1.bf16.xpose.msra.mxu0 %v2517
        %2534 = vmatprep.subr.bf16.mxu0 0
        %2535 = vmatpush1.bf16.xpose.msra.mxu0 %v2516
        %2536 = vmatprep.subr.bf16.mxu0 0
        %2537 = vmatpush1.bf16.xpose.msra.mxu0 %v2515
        %2538 = vmatprep.subr.bf16.mxu0 0
        %2539 = vmatpush1.bf16.xpose.msra.mxu0 %v2514
        %2540 = vmatprep.subr.bf16.mxu0 0
        %2541 = vmatpush1.bf16.xpose.msra.mxu0 %v2513
        %2542 = vmatprep.subr.bf16.mxu0 0
        %2543 = vmatpush1.bf16.xpose.msra.mxu0 %v2512
        %2544 = vmatprep.subr.bf16.mxu0 0
        %2545 = vmatpush2.bf16.xpose.msra.mxu0 0
        %2546 = vmatprep.subr.bf16.mxu0 0
        %2547 = vmatpush2.bf16.xpose.msra.mxu0 0
        %2548 = vmatprep.subr.bf16.mxu0 0
        %2549 = vmatpush2.bf16.xpose.msra.mxu0 0
        %2550 = vmatprep.subr.bf16.mxu0 0
        %2551 = vmatpush2.bf16.xpose.msra.mxu0 0
        %2552 = vmatprep.subr.bf16.mxu0 0
        %2553 = vmatpush2.bf16.xpose.msra.mxu0 0
        %2554 = vmatprep.subr.bf16.mxu0 0
        %2555 = vmatpush2.bf16.xpose.msra.mxu0 0
        %2556 = vmatprep.subr.bf16.mxu0 0
        %2557 = vmatpush2.bf16.xpose.msra.mxu0 0
        %2558 = vmatprep.subr.bf16.mxu0 0
        %2559 = vmatpush2.bf16.xpose.msra.mxu0 0
        %2560 = vmatprep.mubr.bf16.mxu0 0
        %2561 = vmatmul.mubr.bf16.gmra.mxu0 %v2202
        %v2562 = vpop.f32.mrf.mxu0
        %v2563 = vadd.f32 %v2208, %v2562
        %v2564 = vpop.f32.mrf.mxu0
        %v2565 = vpop.f32.mrf.mxu0
        %v2566 = vadd.f32 %v2208, %v2565
        %v2567 = vpop.f32.mrf.mxu0
        %2568 = vdwg.mxu0
        %2569 = vmax.xlane.f32.xlu0 %v2563
        %v2570 = vpop.xlane.xlu0 %2569
        %2571 = vmax.xlane.f32.xlu0 %v2566
        %v2572 = vpop.xlane.xlu0 %2571
        %v2573 = vsub.f32 %v2563, %v2570
        %v2574 = vsub.f32 %v2566, %v2572
        %v2575 = vmul.f32 %v2573, 1.442695
        %v2576 = vpow.pop %v2575
        %v2577 = vmul.f32 %v2574, 1.442695
        %v2578 = vpow.pop %v2577
        %2579 = vadd.xlane.f32.xlu0 %v2576
        %v2580 = vpop.xlane.xlu0 %2579
        %2581 = vadd.xlane.f32.xlu0 %v2578
        %v2582 = vpop.xlane.xlu0 %2581
        %v2583 = vpack.c.bf16 %v2578, %v2576
        %v2600 = vunpack.c.l.b16 %v2464
        %v2601 = vunpack.c.l.b16 %v2465
        %v2602 = vunpack.c.l.b16 %v2466
        %v2603 = vunpack.c.l.b16 %v2467
        %v2604 = vunpack.c.l.b16 %v2468
        %v2605 = vunpack.c.l.b16 %v2469
        %v2606 = vunpack.c.l.b16 %v2470
        %v2607 = vunpack.c.l.b16 %v2471
        %v2608 = vunpack.c.l.b16 %v2472
        %v2609 = vunpack.c.l.b16 %v2473
        %v2610 = vunpack.c.l.b16 %v2474
        %v2611 = vunpack.c.l.b16 %v2475
        %v2612 = vunpack.c.l.b16 %v2476
        %v2613 = vunpack.c.l.b16 %v2477
        %v2614 = vunpack.c.l.b16 %v2478
        %v2615 = vunpack.c.l.b16 %v2479
        %v2616 = vpack.c.b16 %v2601, %v2600
        %v2617 = vpack.c.b16 %v2603, %v2602
        %v2618 = vpack.c.b16 %v2605, %v2604
        %v2619 = vpack.c.b16 %v2607, %v2606
        %v2620 = vpack.c.b16 %v2609, %v2608
        %v2621 = vpack.c.b16 %v2611, %v2610
        %v2622 = vpack.c.b16 %v2613, %v2612
        %v2623 = vpack.c.b16 %v2615, %v2614
        %2632 = vmatprep.subr.bf16.mxu0 0
        %2633 = vmatpush1.bf16.msra.mxu0 %v2623
        %2634 = vmatprep.subr.bf16.mxu0 0
        %2635 = vmatpush1.bf16.msra.mxu0 %v2622
        %2636 = vmatprep.subr.bf16.mxu0 0
        %2637 = vmatpush1.bf16.msra.mxu0 %v2621
        %2638 = vmatprep.subr.bf16.mxu0 0
        %2639 = vmatpush1.bf16.msra.mxu0 %v2620
        %2640 = vmatprep.subr.bf16.mxu0 0
        %2641 = vmatpush1.bf16.msra.mxu0 %v2619
        %2642 = vmatprep.subr.bf16.mxu0 0
        %2643 = vmatpush1.bf16.msra.mxu0 %v2618
        %2644 = vmatprep.subr.bf16.mxu0 0
        %2645 = vmatpush1.bf16.msra.mxu0 %v2617
        %2646 = vmatprep.subr.bf16.mxu0 0
        %2647 = vmatpush1.bf16.msra.mxu0 %v2616
        %2648 = vmatprep.subr.bf16.mxu0 0
        %2649 = vmatpush2.bf16.msra.mxu0 0
        %2650 = vmatprep.subr.bf16.mxu0 0
        %2651 = vmatpush2.bf16.msra.mxu0 0
        %2652 = vmatprep.subr.bf16.mxu0 0
        %2653 = vmatpush2.bf16.msra.mxu0 0
        %2654 = vmatprep.subr.bf16.mxu0 0
        %2655 = vmatpush2.bf16.msra.mxu0 0
        %2656 = vmatprep.subr.bf16.mxu0 0
        %2657 = vmatpush2.bf16.msra.mxu0 0
        %2658 = vmatprep.subr.bf16.mxu0 0
        %2659 = vmatpush2.bf16.msra.mxu0 0
        %2660 = vmatprep.subr.bf16.mxu0 0
        %2661 = vmatpush2.bf16.msra.mxu0 0
        %2662 = vmatprep.subr.bf16.mxu0 0
        %2663 = vmatpush2.bf16.msra.mxu0 0
        %2664 = vmatprep.mubr.bf16.mxu0 0
        %2665 = vmatmul.mubr.bf16.gmra.mxu0 %v2583
        %v2666 = vpop.f32.mrf.mxu0
        %v2667 = vadd.f32 0.0, %v2666
        %v2668 = vpop.f32.mrf.mxu0
        %v2669 = vpop.f32.mrf.mxu0
        %v2670 = vadd.f32 0.0, %v2669
        %v2671 = vpop.f32.mrf.mxu0
        %2672 = vdwg.mxu0
        %v2673 = vrcp.pop %v2580
        %v2674 = vrcp.pop %v2582
        %v2675 = vmul.f32 %v2667, %v2673
        %v2676 = vmul.f32 %v2670, %v2674
        %v2677 = vpack.c.bf16 %v2676, %v2675
        %v2679 = vunpack.c.l.b16 %v2677
        %v2680 = vunpack.c.h.b16 %v2677
        %v2681 = vpack.c.b16 %v2679, %v2679
        %v2682 = vpack.c.b16 %v2680, %v2680
        %2685 = vst [vmem:[#allocation4 + $0x4] sm:$0xf] %v2681
        %2686 = vst [vmem:[#allocation4 + $0x14] sm:$0xf] %v2682
        %v2687 = vld [vmem:[#allocation2 + $0x8] sm:$0xf]
        %v2688 = vld [vmem:[#allocation2 + $0x18] sm:$0xf]
        %v2689 = vld [vmem:[#allocation2 + $0x28] sm:$0xf]
        %v2690 = vld [vmem:[#allocation2 + $0x38] sm:$0xf]
        %v2691 = vld [vmem:[#allocation2 + $0x48] sm:$0xf]
        %v2692 = vld [vmem:[#allocation2 + $0x58] sm:$0xf]
        %v2693 = vld [vmem:[#allocation2 + $0x68] sm:$0xf]
        %v2694 = vld [vmem:[#allocation2 + $0x78] sm:$0xf]
        %v2695 = vld [vmem:[#allocation2 + $0x88] sm:$0xf]
        %v2696 = vld [vmem:[#allocation2 + $0x98] sm:$0xf]
        %v2697 = vld [vmem:[#allocation2 + $0xa8] sm:$0xf]
        %v2698 = vld [vmem:[#allocation2 + $0xb8] sm:$0xf]
        %v2699 = vld [vmem:[#allocation2 + $0xc8] sm:$0xf]
        %v2700 = vld [vmem:[#allocation2 + $0xd8] sm:$0xf]
        %v2701 = vld [vmem:[#allocation2 + $0xe8] sm:$0xf]
        %v2702 = vld [vmem:[#allocation2 + $0xf8] sm:$0xf]
        %v2703 = vld [vmem:[#allocation3 + $0x8] sm:$0xf]
        %v2704 = vld [vmem:[#allocation3 + $0x18] sm:$0xf]
        %v2705 = vld [vmem:[#allocation3 + $0x28] sm:$0xf]
        %v2706 = vld [vmem:[#allocation3 + $0x38] sm:$0xf]
        %v2707 = vld [vmem:[#allocation3 + $0x48] sm:$0xf]
        %v2708 = vld [vmem:[#allocation3 + $0x58] sm:$0xf]
        %v2709 = vld [vmem:[#allocation3 + $0x68] sm:$0xf]
        %v2710 = vld [vmem:[#allocation3 + $0x78] sm:$0xf]
        %v2711 = vld [vmem:[#allocation3 + $0x88] sm:$0xf]
        %v2712 = vld [vmem:[#allocation3 + $0x98] sm:$0xf]
        %v2713 = vld [vmem:[#allocation3 + $0xa8] sm:$0xf]
        %v2714 = vld [vmem:[#allocation3 + $0xb8] sm:$0xf]
        %v2715 = vld [vmem:[#allocation3 + $0xc8] sm:$0xf]
        %v2716 = vld [vmem:[#allocation3 + $0xd8] sm:$0xf]
        %v2717 = vld [vmem:[#allocation3 + $0xe8] sm:$0xf]
        %v2718 = vld [vmem:[#allocation3 + $0xf8] sm:$0xf]
        %v2735 = vunpack.c.l.b16 %v2687
        %v2736 = vunpack.c.l.b16 %v2688
        %v2737 = vunpack.c.l.b16 %v2689
        %v2738 = vunpack.c.l.b16 %v2690
        %v2739 = vunpack.c.l.b16 %v2691
        %v2740 = vunpack.c.l.b16 %v2692
        %v2741 = vunpack.c.l.b16 %v2693
        %v2742 = vunpack.c.l.b16 %v2694
        %v2743 = vunpack.c.l.b16 %v2695
        %v2744 = vunpack.c.l.b16 %v2696
        %v2745 = vunpack.c.l.b16 %v2697
        %v2746 = vunpack.c.l.b16 %v2698
        %v2747 = vunpack.c.l.b16 %v2699
        %v2748 = vunpack.c.l.b16 %v2700
        %v2749 = vunpack.c.l.b16 %v2701
        %v2750 = vunpack.c.l.b16 %v2702
        %v2751 = vpack.c.b16 %v2736, %v2735
        %v2752 = vpack.c.b16 %v2738, %v2737
        %v2753 = vpack.c.b16 %v2740, %v2739
        %v2754 = vpack.c.b16 %v2742, %v2741
        %v2755 = vpack.c.b16 %v2744, %v2743
        %v2756 = vpack.c.b16 %v2746, %v2745
        %v2757 = vpack.c.b16 %v2748, %v2747
        %v2758 = vpack.c.b16 %v2750, %v2749
        %2767 = vmatprep.subr.bf16.mxu0 0
        %2768 = vmatpush1.bf16.xpose.msra.mxu0 %v2758
        %2769 = vmatprep.subr.bf16.mxu0 0
        %2770 = vmatpush1.bf16.xpose.msra.mxu0 %v2757
        %2771 = vmatprep.subr.bf16.mxu0 0
        %2772 = vmatpush1.bf16.xpose.msra.mxu0 %v2756
        %2773 = vmatprep.subr.bf16.mxu0 0
        %2774 = vmatpush1.bf16.xpose.msra.mxu0 %v2755
        %2775 = vmatprep.subr.bf16.mxu0 0
        %2776 = vmatpush1.bf16.xpose.msra.mxu0 %v2754
        %2777 = vmatprep.subr.bf16.mxu0 0
        %2778 = vmatpush1.bf16.xpose.msra.mxu0 %v2753
        %2779 = vmatprep.subr.bf16.mxu0 0
        %2780 = vmatpush1.bf16.xpose.msra.mxu0 %v2752
        %2781 = vmatprep.subr.bf16.mxu0 0
        %2782 = vmatpush1.bf16.xpose.msra.mxu0 %v2751
        %2783 = vmatprep.subr.bf16.mxu0 0
        %2784 = vmatpush2.bf16.xpose.msra.mxu0 0
        %2785 = vmatprep.subr.bf16.mxu0 0
        %2786 = vmatpush2.bf16.xpose.msra.mxu0 0
        %2787 = vmatprep.subr.bf16.mxu0 0
        %2788 = vmatpush2.bf16.xpose.msra.mxu0 0
        %2789 = vmatprep.subr.bf16.mxu0 0
        %2790 = vmatpush2.bf16.xpose.msra.mxu0 0
        %2791 = vmatprep.subr.bf16.mxu0 0
        %2792 = vmatpush2.bf16.xpose.msra.mxu0 0
        %2793 = vmatprep.subr.bf16.mxu0 0
        %2794 = vmatpush2.bf16.xpose.msra.mxu0 0
        %2795 = vmatprep.subr.bf16.mxu0 0
        %2796 = vmatpush2.bf16.xpose.msra.mxu0 0
        %2797 = vmatprep.subr.bf16.mxu0 0
        %2798 = vmatpush2.bf16.xpose.msra.mxu0 0
        %2799 = vmatprep.mubr.bf16.mxu0 0
        %2800 = vmatmul.mubr.bf16.gmra.mxu0 %v2203
        %v2801 = vpop.f32.mrf.mxu0
        %v2802 = vadd.f32 %v2208, %v2801
        %v2803 = vpop.f32.mrf.mxu0
        %v2804 = vpop.f32.mrf.mxu0
        %v2805 = vadd.f32 %v2208, %v2804
        %v2806 = vpop.f32.mrf.mxu0
        %2807 = vdwg.mxu0
        %2808 = vmax.xlane.f32.xlu0 %v2802
        %v2809 = vpop.xlane.xlu0 %2808
        %2810 = vmax.xlane.f32.xlu0 %v2805
        %v2811 = vpop.xlane.xlu0 %2810
        %v2812 = vsub.f32 %v2802, %v2809
        %v2813 = vsub.f32 %v2805, %v2811
        %v2814 = vmul.f32 %v2812, 1.442695
        %v2815 = vpow.pop %v2814
        %v2816 = vmul.f32 %v2813, 1.442695
        %v2817 = vpow.pop %v2816
        %2818 = vadd.xlane.f32.xlu0 %v2815
        %v2819 = vpop.xlane.xlu0 %2818
        %2820 = vadd.xlane.f32.xlu0 %v2817
        %v2821 = vpop.xlane.xlu0 %2820
        %v2822 = vpack.c.bf16 %v2817, %v2815
        %v2839 = vunpack.c.l.b16 %v2703
        %v2840 = vunpack.c.l.b16 %v2704
        %v2841 = vunpack.c.l.b16 %v2705
        %v2842 = vunpack.c.l.b16 %v2706
        %v2843 = vunpack.c.l.b16 %v2707
        %v2844 = vunpack.c.l.b16 %v2708
        %v2845 = vunpack.c.l.b16 %v2709
        %v2846 = vunpack.c.l.b16 %v2710
        %v2847 = vunpack.c.l.b16 %v2711
        %v2848 = vunpack.c.l.b16 %v2712
        %v2849 = vunpack.c.l.b16 %v2713
        %v2850 = vunpack.c.l.b16 %v2714
        %v2851 = vunpack.c.l.b16 %v2715
        %v2852 = vunpack.c.l.b16 %v2716
        %v2853 = vunpack.c.l.b16 %v2717
        %v2854 = vunpack.c.l.b16 %v2718
        %v2855 = vpack.c.b16 %v2840, %v2839
        %v2856 = vpack.c.b16 %v2842, %v2841
        %v2857 = vpack.c.b16 %v2844, %v2843
        %v2858 = vpack.c.b16 %v2846, %v2845
        %v2859 = vpack.c.b16 %v2848, %v2847
        %v2860 = vpack.c.b16 %v2850, %v2849
        %v2861 = vpack.c.b16 %v2852, %v2851
        %v2862 = vpack.c.b16 %v2854, %v2853
        %2871 = vmatprep.subr.bf16.mxu0 0
        %2872 = vmatpush1.bf16.msra.mxu0 %v2862
        %2873 = vmatprep.subr.bf16.mxu0 0
        %2874 = vmatpush1.bf16.msra.mxu0 %v2861
        %2875 = vmatprep.subr.bf16.mxu0 0
        %2876 = vmatpush1.bf16.msra.mxu0 %v2860
        %2877 = vmatprep.subr.bf16.mxu0 0
        %2878 = vmatpush1.bf16.msra.mxu0 %v2859
        %2879 = vmatprep.subr.bf16.mxu0 0
        %2880 = vmatpush1.bf16.msra.mxu0 %v2858
        %2881 = vmatprep.subr.bf16.mxu0 0
        %2882 = vmatpush1.bf16.msra.mxu0 %v2857
        %2883 = vmatprep.subr.bf16.mxu0 0
        %2884 = vmatpush1.bf16.msra.mxu0 %v2856
        %2885 = vmatprep.subr.bf16.mxu0 0
        %2886 = vmatpush1.bf16.msra.mxu0 %v2855
        %2887 = vmatprep.subr.bf16.mxu0 0
        %2888 = vmatpush2.bf16.msra.mxu0 0
        %2889 = vmatprep.subr.bf16.mxu0 0
        %2890 = vmatpush2.bf16.msra.mxu0 0
        %2891 = vmatprep.subr.bf16.mxu0 0
        %2892 = vmatpush2.bf16.msra.mxu0 0
        %2893 = vmatprep.subr.bf16.mxu0 0
        %2894 = vmatpush2.bf16.msra.mxu0 0
        %2895 = vmatprep.subr.bf16.mxu0 0
        %2896 = vmatpush2.bf16.msra.mxu0 0
        %2897 = vmatprep.subr.bf16.mxu0 0
        %2898 = vmatpush2.bf16.msra.mxu0 0
        %2899 = vmatprep.subr.bf16.mxu0 0
        %2900 = vmatpush2.bf16.msra.mxu0 0
        %2901 = vmatprep.subr.bf16.mxu0 0
        %2902 = vmatpush2.bf16.msra.mxu0 0
        %2903 = vmatprep.mubr.bf16.mxu0 0
        %2904 = vmatmul.mubr.bf16.gmra.mxu0 %v2822
        %v2905 = vpop.f32.mrf.mxu0
        %v2906 = vadd.f32 0.0, %v2905
        %v2907 = vpop.f32.mrf.mxu0
        %v2908 = vpop.f32.mrf.mxu0
        %v2909 = vadd.f32 0.0, %v2908
        %v2910 = vpop.f32.mrf.mxu0
        %2911 = vdwg.mxu0
        %v2912 = vrcp.pop %v2819
        %v2913 = vrcp.pop %v2821
        %v2914 = vmul.f32 %v2906, %v2912
        %v2915 = vmul.f32 %v2909, %v2913
        %v2916 = vpack.c.bf16 %v2915, %v2914
        %v2918 = vunpack.c.l.b16 %v2916
        %v2919 = vunpack.c.h.b16 %v2916
        %v2920 = vpack.c.b16 %v2918, %v2918
        %v2921 = vpack.c.b16 %v2919, %v2919
        %2924 = vst [vmem:[#allocation4 + $0x8] sm:$0xf] %v2920
        %2925 = vst [vmem:[#allocation4 + $0x18] sm:$0xf] %v2921
        %v2926 = vld [vmem:[#allocation2 + $0xc] sm:$0xf]
        %v2927 = vld [vmem:[#allocation2 + $0x1c] sm:$0xf]
        %v2928 = vld [vmem:[#allocation2 + $0x2c] sm:$0xf]
        %v2929 = vld [vmem:[#allocation2 + $0x3c] sm:$0xf]
        %v2930 = vld [vmem:[#allocation2 + $0x4c] sm:$0xf]
        %v2931 = vld [vmem:[#allocation2 + $0x5c] sm:$0xf]
        %v2932 = vld [vmem:[#allocation2 + $0x6c] sm:$0xf]
        %v2933 = vld [vmem:[#allocation2 + $0x7c] sm:$0xf]
        %v2934 = vld [vmem:[#allocation2 + $0x8c] sm:$0xf]
        %v2935 = vld [vmem:[#allocation2 + $0x9c] sm:$0xf]
        %v2936 = vld [vmem:[#allocation2 + $0xac] sm:$0xf]
        %v2937 = vld [vmem:[#allocation2 + $0xbc] sm:$0xf]
        %v2938 = vld [vmem:[#allocation2 + $0xcc] sm:$0xf]
        %v2939 = vld [vmem:[#allocation2 + $0xdc] sm:$0xf]
        %v2940 = vld [vmem:[#allocation2 + $0xec] sm:$0xf]
        %v2941 = vld [vmem:[#allocation2 + $0xfc] sm:$0xf]
        %v2942 = vld [vmem:[#allocation3 + $0xc] sm:$0xf]
        %v2943 = vld [vmem:[#allocation3 + $0x1c] sm:$0xf]
        %v2944 = vld [vmem:[#allocation3 + $0x2c] sm:$0xf]
        %v2945 = vld [vmem:[#allocation3 + $0x3c] sm:$0xf]
        %v2946 = vld [vmem:[#allocation3 + $0x4c] sm:$0xf]
        %v2947 = vld [vmem:[#allocation3 + $0x5c] sm:$0xf]
        %v2948 = vld [vmem:[#allocation3 + $0x6c] sm:$0xf]
        %v2949 = vld [vmem:[#allocation3 + $0x7c] sm:$0xf]
        %v2950 = vld [vmem:[#allocation3 + $0x8c] sm:$0xf]
        %v2951 = vld [vmem:[#allocation3 + $0x9c] sm:$0xf]
        %v2952 = vld [vmem:[#allocation3 + $0xac] sm:$0xf]
        %v2953 = vld [vmem:[#allocation3 + $0xbc] sm:$0xf]
        %v2954 = vld [vmem:[#allocation3 + $0xcc] sm:$0xf]
        %v2955 = vld [vmem:[#allocation3 + $0xdc] sm:$0xf]
        %v2956 = vld [vmem:[#allocation3 + $0xec] sm:$0xf]
        %v2957 = vld [vmem:[#allocation3 + $0xfc] sm:$0xf]
        %v2974 = vunpack.c.l.b16 %v2926
        %v2975 = vunpack.c.l.b16 %v2927
        %v2976 = vunpack.c.l.b16 %v2928
        %v2977 = vunpack.c.l.b16 %v2929
        %v2978 = vunpack.c.l.b16 %v2930
        %v2979 = vunpack.c.l.b16 %v2931
        %v2980 = vunpack.c.l.b16 %v2932
        %v2981 = vunpack.c.l.b16 %v2933
        %v2982 = vunpack.c.l.b16 %v2934
        %v2983 = vunpack.c.l.b16 %v2935
        %v2984 = vunpack.c.l.b16 %v2936
        %v2985 = vunpack.c.l.b16 %v2937
        %v2986 = vunpack.c.l.b16 %v2938
        %v2987 = vunpack.c.l.b16 %v2939
        %v2988 = vunpack.c.l.b16 %v2940
        %v2989 = vunpack.c.l.b16 %v2941
        %v2990 = vpack.c.b16 %v2975, %v2974
        %v2991 = vpack.c.b16 %v2977, %v2976
        %v2992 = vpack.c.b16 %v2979, %v2978
        %v2993 = vpack.c.b16 %v2981, %v2980
        %v2994 = vpack.c.b16 %v2983, %v2982
        %v2995 = vpack.c.b16 %v2985, %v2984
        %v2996 = vpack.c.b16 %v2987, %v2986
        %v2997 = vpack.c.b16 %v2989, %v2988
        %3006 = vmatprep.subr.bf16.mxu0 0
        %3007 = vmatpush1.bf16.xpose.msra.mxu0 %v2997
        %3008 = vmatprep.subr.bf16.mxu0 0
        %3009 = vmatpush1.bf16.xpose.msra.mxu0 %v2996
        %3010 = vmatprep.subr.bf16.mxu0 0
        %3011 = vmatpush1.bf16.xpose.msra.mxu0 %v2995
        %3012 = vmatprep.subr.bf16.mxu0 0
        %3013 = vmatpush1.bf16.xpose.msra.mxu0 %v2994
        %3014 = vmatprep.subr.bf16.mxu0 0
        %3015 = vmatpush1.bf16.xpose.msra.mxu0 %v2993
        %3016 = vmatprep.subr.bf16.mxu0 0
        %3017 = vmatpush1.bf16.xpose.msra.mxu0 %v2992
        %3018 = vmatprep.subr.bf16.mxu0 0
        %3019 = vmatpush1.bf16.xpose.msra.mxu0 %v2991
        %3020 = vmatprep.subr.bf16.mxu0 0
        %3021 = vmatpush1.bf16.xpose.msra.mxu0 %v2990
        %3022 = vmatprep.subr.bf16.mxu0 0
        %3023 = vmatpush2.bf16.xpose.msra.mxu0 0
        %3024 = vmatprep.subr.bf16.mxu0 0
        %3025 = vmatpush2.bf16.xpose.msra.mxu0 0
        %3026 = vmatprep.subr.bf16.mxu0 0
        %3027 = vmatpush2.bf16.xpose.msra.mxu0 0
        %3028 = vmatprep.subr.bf16.mxu0 0
        %3029 = vmatpush2.bf16.xpose.msra.mxu0 0
        %3030 = vmatprep.subr.bf16.mxu0 0
        %3031 = vmatpush2.bf16.xpose.msra.mxu0 0
        %3032 = vmatprep.subr.bf16.mxu0 0
        %3033 = vmatpush2.bf16.xpose.msra.mxu0 0
        %3034 = vmatprep.subr.bf16.mxu0 0
        %3035 = vmatpush2.bf16.xpose.msra.mxu0 0
        %3036 = vmatprep.subr.bf16.mxu0 0
        %3037 = vmatpush2.bf16.xpose.msra.mxu0 0
        %3038 = vmatprep.mubr.bf16.mxu0 0
        %3039 = vmatmul.mubr.bf16.gmra.mxu0 %v2204
        %v3040 = vpop.f32.mrf.mxu0
        %v3041 = vadd.f32 %v2208, %v3040
        %v3042 = vpop.f32.mrf.mxu0
        %v3043 = vpop.f32.mrf.mxu0
        %v3044 = vadd.f32 %v2208, %v3043
        %v3045 = vpop.f32.mrf.mxu0
        %3046 = vdwg.mxu0
        %3047 = vmax.xlane.f32.xlu0 %v3041
        %v3048 = vpop.xlane.xlu0 %3047
        %3049 = vmax.xlane.f32.xlu0 %v3044
        %v3050 = vpop.xlane.xlu0 %3049
        %v3051 = vsub.f32 %v3041, %v3048
        %v3052 = vsub.f32 %v3044, %v3050
        %v3053 = vmul.f32 %v3051, 1.442695
        %v3054 = vpow.pop %v3053
        %v3055 = vmul.f32 %v3052, 1.442695
        %v3056 = vpow.pop %v3055
        %3057 = vadd.xlane.f32.xlu0 %v3054
        %v3058 = vpop.xlane.xlu0 %3057
        %3059 = vadd.xlane.f32.xlu0 %v3056
        %v3060 = vpop.xlane.xlu0 %3059
        %v3061 = vpack.c.bf16 %v3056, %v3054
        %v3078 = vunpack.c.l.b16 %v2942
        %v3079 = vunpack.c.l.b16 %v2943
        %v3080 = vunpack.c.l.b16 %v2944
        %v3081 = vunpack.c.l.b16 %v2945
        %v3082 = vunpack.c.l.b16 %v2946
        %v3083 = vunpack.c.l.b16 %v2947
        %v3084 = vunpack.c.l.b16 %v2948
        %v3085 = vunpack.c.l.b16 %v2949
        %v3086 = vunpack.c.l.b16 %v2950
        %v3087 = vunpack.c.l.b16 %v2951
        %v3088 = vunpack.c.l.b16 %v2952
        %v3089 = vunpack.c.l.b16 %v2953
        %v3090 = vunpack.c.l.b16 %v2954
        %v3091 = vunpack.c.l.b16 %v2955
        %v3092 = vunpack.c.l.b16 %v2956
        %v3093 = vunpack.c.l.b16 %v2957
        %v3094 = vpack.c.b16 %v3079, %v3078
        %v3095 = vpack.c.b16 %v3081, %v3080
        %v3096 = vpack.c.b16 %v3083, %v3082
        %v3097 = vpack.c.b16 %v3085, %v3084
        %v3098 = vpack.c.b16 %v3087, %v3086
        %v3099 = vpack.c.b16 %v3089, %v3088
        %v3100 = vpack.c.b16 %v3091, %v3090
        %v3101 = vpack.c.b16 %v3093, %v3092
        %3110 = vmatprep.subr.bf16.mxu0 0
        %3111 = vmatpush1.bf16.msra.mxu0 %v3101
        %3112 = vmatprep.subr.bf16.mxu0 0
        %3113 = vmatpush1.bf16.msra.mxu0 %v3100
        %3114 = vmatprep.subr.bf16.mxu0 0
        %3115 = vmatpush1.bf16.msra.mxu0 %v3099
        %3116 = vmatprep.subr.bf16.mxu0 0
        %3117 = vmatpush1.bf16.msra.mxu0 %v3098
        %3118 = vmatprep.subr.bf16.mxu0 0
        %3119 = vmatpush1.bf16.msra.mxu0 %v3097
        %3120 = vmatprep.subr.bf16.mxu0 0
        %3121 = vmatpush1.bf16.msra.mxu0 %v3096
        %3122 = vmatprep.subr.bf16.mxu0 0
        %3123 = vmatpush1.bf16.msra.mxu0 %v3095
        %3124 = vmatprep.subr.bf16.mxu0 0
        %3125 = vmatpush1.bf16.msra.mxu0 %v3094
        %3126 = vmatprep.subr.bf16.mxu0 0
        %3127 = vmatpush2.bf16.msra.mxu0 0
        %3128 = vmatprep.subr.bf16.mxu0 0
        %3129 = vmatpush2.bf16.msra.mxu0 0
        %3130 = vmatprep.subr.bf16.mxu0 0
        %3131 = vmatpush2.bf16.msra.mxu0 0
        %3132 = vmatprep.subr.bf16.mxu0 0
        %3133 = vmatpush2.bf16.msra.mxu0 0
        %3134 = vmatprep.subr.bf16.mxu0 0
        %3135 = vmatpush2.bf16.msra.mxu0 0
        %3136 = vmatprep.subr.bf16.mxu0 0
        %3137 = vmatpush2.bf16.msra.mxu0 0
        %3138 = vmatprep.subr.bf16.mxu0 0
        %3139 = vmatpush2.bf16.msra.mxu0 0
        %3140 = vmatprep.subr.bf16.mxu0 0
        %3141 = vmatpush2.bf16.msra.mxu0 0
        %3142 = vmatprep.mubr.bf16.mxu0 0
        %3143 = vmatmul.mubr.bf16.gmra.mxu0 %v3061
        %v3144 = vpop.f32.mrf.mxu0
        %v3145 = vadd.f32 0.0, %v3144
        %v3146 = vpop.f32.mrf.mxu0
        %v3147 = vpop.f32.mrf.mxu0
        %v3148 = vadd.f32 0.0, %v3147
        %v3149 = vpop.f32.mrf.mxu0
        %3150 = vdwg.mxu0
        %v3151 = vrcp.pop %v3058
        %v3152 = vrcp.pop %v3060
        %v3153 = vmul.f32 %v3145, %v3151
        %v3154 = vmul.f32 %v3148, %v3152
        %v3155 = vpack.c.bf16 %v3154, %v3153
        %v3157 = vunpack.c.l.b16 %v3155
        %v3158 = vunpack.c.h.b16 %v3155
        %v3159 = vpack.c.b16 %v3157, %v3157
        %v3160 = vpack.c.b16 %v3158, %v3158
        %3163 = vst [vmem:[#allocation4 + $0xc] sm:$0xf] %v3159
        %3164 = vst [vmem:[#allocation4 + $0x1c] sm:$0xf] %v3160
        %v3165 = vld [vmem:[#allocation4] sm:$0xff]
        %v3166 = vld [vmem:[#allocation4 + $0x8] sm:$0xff]
        %v3167 = vld [vmem:[#allocation4 + $0x10] sm:$0xff]
        %v3168 = vld [vmem:[#allocation4 + $0x18] sm:$0xff]
        %v3169 = vld [vmem:[#allocation14] sm:$0xf]
        %v3170 = vld [vmem:[#allocation14 + $0x4] sm:$0xf]
        %v3171 = vld [vmem:[#allocation14 + $0x8] sm:$0xf]
        %v3172 = vld [vmem:[#allocation14 + $0xc] sm:$0xf]
        %v3173 = vld [vmem:[#allocation14 + $0x10] sm:$0xf]
        %v3174 = vld [vmem:[#allocation14 + $0x14] sm:$0xf]
        %v3175 = vld [vmem:[#allocation14 + $0x18] sm:$0xf]
        %v3176 = vld [vmem:[#allocation14 + $0x1c] sm:$0xf]
        %v3177 = vld [vmem:[#allocation14 + $0x20] sm:$0xf]
        %v3178 = vld [vmem:[#allocation14 + $0x24] sm:$0xf]
        %v3179 = vld [vmem:[#allocation14 + $0x28] sm:$0xf]
        %v3180 = vld [vmem:[#allocation14 + $0x2c] sm:$0xf]
        %v3181 = vld [vmem:[#allocation14 + $0x30] sm:$0xf]
        %v3182 = vld [vmem:[#allocation14 + $0x34] sm:$0xf]
        %v3183 = vld [vmem:[#allocation14 + $0x38] sm:$0xf]
        %v3184 = vld [vmem:[#allocation14 + $0x3c] sm:$0xf]
        %v3185 = vld [vmem:[#allocation14 + $0x40] sm:$0xf]
        %v3186 = vld [vmem:[#allocation14 + $0x44] sm:$0xf]
        %v3187 = vld [vmem:[#allocation14 + $0x48] sm:$0xf]
        %v3188 = vld [vmem:[#allocation14 + $0x4c] sm:$0xf]
        %v3189 = vld [vmem:[#allocation14 + $0x50] sm:$0xf]
        %v3190 = vld [vmem:[#allocation14 + $0x54] sm:$0xf]
        %v3191 = vld [vmem:[#allocation14 + $0x58] sm:$0xf]
        %v3192 = vld [vmem:[#allocation14 + $0x5c] sm:$0xf]
        %v3193 = vld [vmem:[#allocation14 + $0x60] sm:$0xf]
        %v3194 = vld [vmem:[#allocation14 + $0x64] sm:$0xf]
        %v3195 = vld [vmem:[#allocation14 + $0x68] sm:$0xf]
        %v3196 = vld [vmem:[#allocation14 + $0x6c] sm:$0xf]
        %v3197 = vld [vmem:[#allocation14 + $0x70] sm:$0xf]
        %v3198 = vld [vmem:[#allocation14 + $0x74] sm:$0xf]
        %v3199 = vld [vmem:[#allocation14 + $0x78] sm:$0xf]
        %v3200 = vld [vmem:[#allocation14 + $0x7c] sm:$0xf]
        %v3201 = vld [vmem:[#allocation14 + $0x80] sm:$0xf]
        %v3202 = vld [vmem:[#allocation14 + $0x84] sm:$0xf]
        %v3203 = vld [vmem:[#allocation14 + $0x88] sm:$0xf]
        %v3204 = vld [vmem:[#allocation14 + $0x8c] sm:$0xf]
        %v3205 = vld [vmem:[#allocation14 + $0x90] sm:$0xf]
        %v3206 = vld [vmem:[#allocation14 + $0x94] sm:$0xf]
        %v3207 = vld [vmem:[#allocation14 + $0x98] sm:$0xf]
        %v3208 = vld [vmem:[#allocation14 + $0x9c] sm:$0xf]
        %v3209 = vld [vmem:[#allocation14 + $0xa0] sm:$0xf]
        %v3210 = vld [vmem:[#allocation14 + $0xa4] sm:$0xf]
        %v3211 = vld [vmem:[#allocation14 + $0xa8] sm:$0xf]
        %v3212 = vld [vmem:[#allocation14 + $0xac] sm:$0xf]
        %v3213 = vld [vmem:[#allocation14 + $0xb0] sm:$0xf]
        %v3214 = vld [vmem:[#allocation14 + $0xb4] sm:$0xf]
        %v3215 = vld [vmem:[#allocation14 + $0xb8] sm:$0xf]
        %v3216 = vld [vmem:[#allocation14 + $0xbc] sm:$0xf]
        %v3217 = vld [vmem:[#allocation14 + $0xc0] sm:$0xf]
        %v3218 = vld [vmem:[#allocation14 + $0xc4] sm:$0xf]
        %v3219 = vld [vmem:[#allocation14 + $0xc8] sm:$0xf]
        %v3220 = vld [vmem:[#allocation14 + $0xcc] sm:$0xf]
        %v3221 = vld [vmem:[#allocation14 + $0xd0] sm:$0xf]
        %v3222 = vld [vmem:[#allocation14 + $0xd4] sm:$0xf]
        %v3223 = vld [vmem:[#allocation14 + $0xd8] sm:$0xf]
        %v3224 = vld [vmem:[#allocation14 + $0xdc] sm:$0xf]
        %v3225 = vld [vmem:[#allocation14 + $0xe0] sm:$0xf]
        %v3226 = vld [vmem:[#allocation14 + $0xe4] sm:$0xf]
        %v3227 = vld [vmem:[#allocation14 + $0xe8] sm:$0xf]
        %v3228 = vld [vmem:[#allocation14 + $0xec] sm:$0xf]
        %v3229 = vld [vmem:[#allocation14 + $0xf0] sm:$0xf]
        %v3230 = vld [vmem:[#allocation14 + $0xf4] sm:$0xf]
        %v3231 = vld [vmem:[#allocation14 + $0xf8] sm:$0xf]
        %v3232 = vld [vmem:[#allocation14 + $0xfc] sm:$0xf]
        %v3233 = vld [vmem:[%s9] sm:$0x1]
        %v3235 = vlaneseq
        %v3236 = vshrl.u32 %v3235, 7
        %v3237 = vsub.s32 0, %v3236
        %v3238 = vrot.slane %v3233, %v3237
        %v3244 = vunpack.c.l.b16 %v3165
        %v3245 = vunpack.c.h.b16 %v3165
        %v3246 = vunpack.c.l.b16 %v3166
        %v3247 = vunpack.c.h.b16 %v3166
        %v3248 = vunpack.c.l.b16 %v3167
        %v3249 = vunpack.c.h.b16 %v3167
        %v3250 = vunpack.c.l.b16 %v3168
        %v3251 = vunpack.c.h.b16 %v3168
        %v3252 = vpack.c.b16 %v3248, %v3244
        %v3253 = vpack.c.b16 %v3249, %v3245
        %v3254 = vpack.c.b16 %v3250, %v3246
        %v3255 = vpack.c.b16 %v3251, %v3247
        %v3324 = vunpack.c.l.b16 %v3169
        %v3325 = vunpack.c.l.b16 %v3170
        %v3326 = vunpack.c.l.b16 %v3171
        %v3327 = vunpack.c.l.b16 %v3172
        %v3328 = vunpack.c.l.b16 %v3173
        %v3329 = vunpack.c.l.b16 %v3174
        %v3330 = vunpack.c.l.b16 %v3175
        %v3331 = vunpack.c.l.b16 %v3176
        %v3332 = vunpack.c.l.b16 %v3177
        %v3333 = vunpack.c.l.b16 %v3178
        %v3334 = vunpack.c.l.b16 %v3179
        %v3335 = vunpack.c.l.b16 %v3180
        %v3336 = vunpack.c.l.b16 %v3181
        %v3337 = vunpack.c.l.b16 %v3182
        %v3338 = vunpack.c.l.b16 %v3183
        %v3339 = vunpack.c.l.b16 %v3184
        %v3340 = vunpack.c.l.b16 %v3185
        %v3341 = vunpack.c.l.b16 %v3186
        %v3342 = vunpack.c.l.b16 %v3187
        %v3343 = vunpack.c.l.b16 %v3188
        %v3344 = vunpack.c.l.b16 %v3189
        %v3345 = vunpack.c.l.b16 %v3190
        %v3346 = vunpack.c.l.b16 %v3191
        %v3347 = vunpack.c.l.b16 %v3192
        %v3348 = vunpack.c.l.b16 %v3193
        %v3349 = vunpack.c.l.b16 %v3194
        %v3350 = vunpack.c.l.b16 %v3195
        %v3351 = vunpack.c.l.b16 %v3196
        %v3352 = vunpack.c.l.b16 %v3197
        %v3353 = vunpack.c.l.b16 %v3198
        %v3354 = vunpack.c.l.b16 %v3199
        %v3355 = vunpack.c.l.b16 %v3200
        %v3356 = vunpack.c.l.b16 %v3201
        %v3357 = vunpack.c.l.b16 %v3202
        %v3358 = vunpack.c.l.b16 %v3203
        %v3359 = vunpack.c.l.b16 %v3204
        %v3360 = vunpack.c.l.b16 %v3205
        %v3361 = vunpack.c.l.b16 %v3206
        %v3362 = vunpack.c.l.b16 %v3207
        %v3363 = vunpack.c.l.b16 %v3208
        %v3364 = vunpack.c.l.b16 %v3209
        %v3365 = vunpack.c.l.b16 %v3210
        %v3366 = vunpack.c.l.b16 %v3211
        %v3367 = vunpack.c.l.b16 %v3212
        %v3368 = vunpack.c.l.b16 %v3213
        %v3369 = vunpack.c.l.b16 %v3214
        %v3370 = vunpack.c.l.b16 %v3215
        %v3371 = vunpack.c.l.b16 %v3216
        %v3372 = vunpack.c.l.b16 %v3217
        %v3373 = vunpack.c.l.b16 %v3218
        %v3374 = vunpack.c.l.b16 %v3219
        %v3375 = vunpack.c.l.b16 %v3220
        %v3376 = vunpack.c.l.b16 %v3221
        %v3377 = vunpack.c.l.b16 %v3222
        %v3378 = vunpack.c.l.b16 %v3223
        %v3379 = vunpack.c.l.b16 %v3224
        %v3380 = vunpack.c.l.b16 %v3225
        %v3381 = vunpack.c.l.b16 %v3226
        %v3382 = vunpack.c.l.b16 %v3227
        %v3383 = vunpack.c.l.b16 %v3228
        %v3384 = vunpack.c.l.b16 %v3229
        %v3385 = vunpack.c.l.b16 %v3230
        %v3386 = vunpack.c.l.b16 %v3231
        %v3387 = vunpack.c.l.b16 %v3232
        %v3388 = vpack.c.b16 %v3325, %v3324
        %v3389 = vpack.c.b16 %v3327, %v3326
        %v3390 = vpack.c.b16 %v3329, %v3328
        %v3391 = vpack.c.b16 %v3331, %v3330
        %v3392 = vpack.c.b16 %v3333, %v3332
        %v3393 = vpack.c.b16 %v3335, %v3334
        %v3394 = vpack.c.b16 %v3337, %v3336
        %v3395 = vpack.c.b16 %v3339, %v3338
        %v3396 = vpack.c.b16 %v3341, %v3340
        %v3397 = vpack.c.b16 %v3343, %v3342
        %v3398 = vpack.c.b16 %v3345, %v3344
        %v3399 = vpack.c.b16 %v3347, %v3346
        %v3400 = vpack.c.b16 %v3349, %v3348
        %v3401 = vpack.c.b16 %v3351, %v3350
        %v3402 = vpack.c.b16 %v3353, %v3352
        %v3403 = vpack.c.b16 %v3355, %v3354
        %v3404 = vpack.c.b16 %v3357, %v3356
        %v3405 = vpack.c.b16 %v3359, %v3358
        %v3406 = vpack.c.b16 %v3361, %v3360
        %v3407 = vpack.c.b16 %v3363, %v3362
        %v3408 = vpack.c.b16 %v3365, %v3364
        %v3409 = vpack.c.b16 %v3367, %v3366
        %v3410 = vpack.c.b16 %v3369, %v3368
        %v3411 = vpack.c.b16 %v3371, %v3370
        %v3412 = vpack.c.b16 %v3373, %v3372
        %v3413 = vpack.c.b16 %v3375, %v3374
        %v3414 = vpack.c.b16 %v3377, %v3376
        %v3415 = vpack.c.b16 %v3379, %v3378
        %v3416 = vpack.c.b16 %v3381, %v3380
        %v3417 = vpack.c.b16 %v3383, %v3382
        %v3418 = vpack.c.b16 %v3385, %v3384
        %v3419 = vpack.c.b16 %v3387, %v3386
        %3452 = vmatprep.subr.bf16.mxu0 0
        %3453 = vmatpush1.bf16.msra.mxu0 %v3395
        %3454 = vmatprep.subr.bf16.mxu0 0
        %3455 = vmatpush1.bf16.msra.mxu0 %v3394
        %3456 = vmatprep.subr.bf16.mxu0 0
        %3457 = vmatpush1.bf16.msra.mxu0 %v3393
        %3458 = vmatprep.subr.bf16.mxu0 0
        %3459 = vmatpush1.bf16.msra.mxu0 %v3392
        %3460 = vmatprep.subr.bf16.mxu0 0
        %3461 = vmatpush1.bf16.msra.mxu0 %v3391
        %3462 = vmatprep.subr.bf16.mxu0 0
        %3463 = vmatpush1.bf16.msra.mxu0 %v3390
        %3464 = vmatprep.subr.bf16.mxu0 0
        %3465 = vmatpush1.bf16.msra.mxu0 %v3389
        %3466 = vmatprep.subr.bf16.mxu0 0
        %3467 = vmatpush1.bf16.msra.mxu0 %v3388
        %3468 = vmatprep.subr.bf16.mxu0 0
        %3469 = vmatpush2.bf16.msra.mxu0 %v3403
        %3470 = vmatprep.subr.bf16.mxu0 0
        %3471 = vmatpush2.bf16.msra.mxu0 %v3402
        %3472 = vmatprep.subr.bf16.mxu0 0
        %3473 = vmatpush2.bf16.msra.mxu0 %v3401
        %3474 = vmatprep.subr.bf16.mxu0 0
        %3475 = vmatpush2.bf16.msra.mxu0 %v3400
        %3476 = vmatprep.subr.bf16.mxu0 0
        %3477 = vmatpush2.bf16.msra.mxu0 %v3399
        %3478 = vmatprep.subr.bf16.mxu0 0
        %3479 = vmatpush2.bf16.msra.mxu0 %v3398
        %3480 = vmatprep.subr.bf16.mxu0 0
        %3481 = vmatpush2.bf16.msra.mxu0 %v3397
        %3482 = vmatprep.subr.bf16.mxu0 0
        %3483 = vmatpush2.bf16.msra.mxu0 %v3396
        %3484 = vmatprep.mubr.bf16.mxu0 %v3253
        %3485 = vmatmul.mubr.bf16.gmra.mxu0 %v3252
        %v3486 = vpop.f32.mrf.mxu0
        %v3487 = vadd.f32 %v3238, %v3486
        %v3488 = vpop.f32.mrf.mxu0
        %v3489 = vpop.f32.mrf.mxu0
        %v3490 = vadd.f32 %v3238, %v3489
        %v3491 = vpop.f32.mrf.mxu0
        %3492 = vdwg.mxu0
        %3493 = vmatprep.subr.bf16.mxu0 0
        %3494 = vmatpush1.bf16.msra.mxu0 %v3411
        %3495 = vmatprep.subr.bf16.mxu0 0
        %3496 = vmatpush1.bf16.msra.mxu0 %v3410
        %3497 = vmatprep.subr.bf16.mxu0 0
        %3498 = vmatpush1.bf16.msra.mxu0 %v3409
        %3499 = vmatprep.subr.bf16.mxu0 0
        %3500 = vmatpush1.bf16.msra.mxu0 %v3408
        %3501 = vmatprep.subr.bf16.mxu0 0
        %3502 = vmatpush1.bf16.msra.mxu0 %v3407
        %3503 = vmatprep.subr.bf16.mxu0 0
        %3504 = vmatpush1.bf16.msra.mxu0 %v3406
        %3505 = vmatprep.subr.bf16.mxu0 0
        %3506 = vmatpush1.bf16.msra.mxu0 %v3405
        %3507 = vmatprep.subr.bf16.mxu0 0
        %3508 = vmatpush1.bf16.msra.mxu0 %v3404
        %3509 = vmatprep.subr.bf16.mxu0 0
        %3510 = vmatpush2.bf16.msra.mxu0 %v3419
        %3511 = vmatprep.subr.bf16.mxu0 0
        %3512 = vmatpush2.bf16.msra.mxu0 %v3418
        %3513 = vmatprep.subr.bf16.mxu0 0
        %3514 = vmatpush2.bf16.msra.mxu0 %v3417
        %3515 = vmatprep.subr.bf16.mxu0 0
        %3516 = vmatpush2.bf16.msra.mxu0 %v3416
        %3517 = vmatprep.subr.bf16.mxu0 0
        %3518 = vmatpush2.bf16.msra.mxu0 %v3415
        %3519 = vmatprep.subr.bf16.mxu0 0
        %3520 = vmatpush2.bf16.msra.mxu0 %v3414
        %3521 = vmatprep.subr.bf16.mxu0 0
        %3522 = vmatpush2.bf16.msra.mxu0 %v3413
        %3523 = vmatprep.subr.bf16.mxu0 0
        %3524 = vmatpush2.bf16.msra.mxu0 %v3412
        %3525 = vmatprep.mubr.bf16.mxu0 %v3255
        %3526 = vmatmul.mubr.bf16.gmra.mxu0 %v3254
        %v3527 = vpop.f32.mrf.mxu0
        %v3528 = vadd.f32 %v3487, %v3527
        %v3529 = vpop.f32.mrf.mxu0
        %v3530 = vpop.f32.mrf.mxu0
        %v3531 = vadd.f32 %v3490, %v3530
        %v3532 = vpop.f32.mrf.mxu0
        %3533 = vdwg.mxu0
        %3534 = vst [vmem:[%s493] sm:$0xff] %v3528
        %3535 = vst [vmem:[%s493 + $0x8] sm:$0xff] %v3531
        %s3536 = sand.u32 %s276, 1
        %s3537 = scalar_lea.sflag [#allocation7], %s3536
        %s3538 = sand.u32 %s276, 1
        %s3539 = smul.addr %s3538, 16
        %s3540 = scalar_lea.vmem [#allocation16], %s3539
        // Predicated region
        $region89: #{tpu_custom_call.1} parent=59 // pred_check
          %p3541 = pneg %p286
        $region90: #{tpu_custom_call.1} parent=59 // pred_check_branch
          %3543 = sbr.rel (%p3541) target = $region92
        $region91: #{tpu_custom_call.1} parent=59 // pred_region
          %s3544 = smul.u32 2, %s37
          %s3546 = ssub.s32 256, 256
          %3547 = vsyncadd %s3537, %s3546
          %s3548 = smul.addr %s36, 2
          %s3549 = sadd.s32 %s3544, %s3548
          %s3550 = smul.addr %s3549, 128
          %s3551 = scalar_lea.hbm %s10, %s3550
          %s3552 = sshll.u32 %s3540, 4
          %s3553 = int_to_ptr.vmem [resolvable:$true] %s3552
          %3558 = dma.vmem_to_hbm [thread:$0]  %s3553, 256, %s3551, %s3537, 128, 128, 8
        $region92: #{tpu_custom_call.1} parent=59 // pred_fallthru
          _
      $region60: #{tpu_custom_call.1} parent=5 // pred_fallthru
        _
      %p3559 = scmp.le.s32.totalorder 2, %s27
      // Predicated region
      $region93: #{tpu_custom_call.1} parent=5 // pred_check
        %p3560 = pneg %p3559
      $region94: #{tpu_custom_call.1} parent=5 // pred_check_branch
        %3562 = sbr.rel (%p3560) target = $region96
      $region95: #{tpu_custom_call.1} parent=5 // pred_region
        %s3563 = ssub.s32 %s27, 2
        // Predicated region
        $region97: #{tpu_custom_call.1} parent=95 // pred_check
          %p3564 = pneg %p292
        $region98: #{tpu_custom_call.1} parent=95 // pred_check_branch
          %3566 = sbr.rel (%p3564) target = $region100
        $region99: #{tpu_custom_call.1} parent=95 // pred_region
          %s3567 = sand.u32 %s277, 1
          %s3568 = scalar_lea.sflag [#allocation7], %s3567
          %s3569 = sand.u32 %s277, 1
          %s3570 = smul.addr %s3569, 16
          %s3571 = scalar_lea.vmem [#allocation16], %s3570
          %3572 = dma.done %s3568, 256
        $region100: #{tpu_custom_call.1} parent=95 // pred_fallthru
          _
      $region96: #{tpu_custom_call.1} parent=5 // pred_fallthru
        _
    $region6: #{tpu_custom_call.1} parent=1 // loop_footer
      %s31 = sadd.s32 1, %s27
    $region7: #{tpu_custom_call.1} parent=1 // loop_footer_branch
      %26 = sbr.rel target = $region3
    $region8: #{tpu_custom_call.1} parent=1 // loop_exit
      _
    %3573 = vsyncpa [#allocation6], 1
    %s3574 = scalar_lea.sflag [#allocation6], 1
    %3575 = vsyncpa %s3574, 1
    %3576 = vsyncpa [#allocation9], 1
    %s3577 = scalar_lea.sflag [#allocation9], 1
    %3578 = vsyncpa %s3577, 1
    %3579 = vsyncpa [#allocation12], 1
    %3580 = vsyncpa [#allocation15], 1
    %3581 = vsyncpa [#allocation7], 1
    %s3582 = scalar_lea.sflag [#allocation7], 1
    %3583 = vsyncpa %s3582, 1

</llo_original>
